<compile_context>
chip_gen: v5e
topology: v5e:2x2
jax: 0.10.0
libtpu: 0.0.40
codegen_flags: <defaults>
</compile_context>

<pallas_src>
import jax
import jax.numpy as jnp
from jax.experimental import pallas as pl
from jax.experimental.pallas import tpu as pltpu

_C = 64          # CGNet hidden width (layer-1 input is zero-padded 3 -> 64)
_COUT_PAD = 128  # lane-dense padded output channels (3 real + 125 zeros)


def _make_cgnet_kernel(img_w):
    """Build the fused 3-layer kernel for images of width `img_w`."""

    def kernel(x_ref, m_ref, w1_ref, b1_ref, w2_ref, b2_ref, w3_ref, b3_ref,
               o_ref):
        # x_ref : (M, 64)      flat NHWC activations for this batch tile (M = bt*H*W)
        # m_ref : (M, 9)       per-tap border masks (1.0 in-bounds, 0.0 out-of-bounds)
        # w*_ref: (9*64, Cout) per-tap stacked HWIO weights, bf16
        # b*_ref: (1, Cout)    f32 biases
        # o_ref : (M, 128)     lane-dense output (real channels = 3)
        M, C = x_ref.shape
        masks = m_ref[...]
        tap_masks = [masks[:, k:k + 1] for k in range(9)]   # (M, 1) each

        def conv(act, w_ref, b_ref):
            cout = w_ref.shape[1]
            acc = jnp.zeros((M, cout), jnp.float32)
            for k in range(9):
                dy, dx = divmod(k, 3)
                off = (dy - 1) * img_w + (dx - 1)  # flat-index shift of this tap
                # tap[m] = act[m + off]; wrap-around across rows / batch
                # elements lands only on positions the border mask zeroes.
                tap = act if off == 0 else pltpu.roll(act, (-off) % M, 0)
                if k != 4:                          # center tap needs no mask
                    tap = tap * tap_masks[k]
                acc = acc + jnp.dot(tap.astype(jnp.bfloat16),
                                    w_ref[k * C:(k + 1) * C, :],
                                    preferred_element_type=jnp.float32)
            return acc + b_ref[...]

        h = jnp.maximum(conv(x_ref[...], w1_ref, b1_ref), 0.0)   # layer 1 + ReLU
        h = jnp.maximum(conv(h, w2_ref, b2_ref), 0.0)            # layer 2 + ReLU
        o_ref[...] = conv(h, w3_ref, b3_ref)                     # layer 3

    return kernel


def _pack_params(params):
    """Stack HWIO weights per-tap into (9*64, Cout) bf16 matrices (zero-padded)."""
    (w1, b1), (w2, b2), (w3, b3) = params
    cin = w1.shape[2]
    cout = w3.shape[3]
    w1p = jnp.zeros((3, 3, _C, _C), jnp.float32).at[:, :, :cin, :].set(w1)
    w3p = jnp.zeros((3, 3, _C, _COUT_PAD), jnp.float32).at[:, :, :, :cout].set(w3)
    b3p = jnp.zeros((_COUT_PAD,), jnp.float32).at[:cout].set(b3)
    return (w1p.reshape(9 * _C, _C).astype(jnp.bfloat16),
            b1.reshape(1, _C).astype(jnp.float32),
            w2.reshape(9 * _C, _C).astype(jnp.bfloat16),
            b2.reshape(1, _C).astype(jnp.float32),
            w3p.reshape(9 * _C, _COUT_PAD).astype(jnp.bfloat16),
            b3p.reshape(1, _COUT_PAD).astype(jnp.float32))


def _border_masks(bt, h, w):
    """(bt*h*w, 9) f32: tap k is 1.0 iff the shifted source pixel is in-bounds."""
    y = jnp.arange(h)[:, None]
    x = jnp.arange(w)[None, :]
    cols = []
    for dy in range(3):
        for dx in range(3):
            ok = ((y + dy - 1 >= 0) & (y + dy - 1 < h) &
                  (x + dx - 1 >= 0) & (x + dx - 1 < w))
            cols.append(ok.reshape(h * w))
    m = jnp.stack(cols, axis=-1).astype(jnp.float32)        # (h*w, 9)
    return jnp.tile(m, (bt, 1))                             # (bt*h*w, 9)


def _pick_batch_tile(n, hw):
    # Fold batch elements into the matmul M dim, but keep >= 2 grid steps when
    # N >= 2 (v7x has 2 TensorCores) and cap the tile to keep vreg/VMEM modest.
    best = 1
    for bt in range(1, n + 1):
        if n % bt == 0 and bt * hw <= 2048 and (n == 1 or n // bt >= 2):
            best = bt
    return best


@jax.jit
def cgnet_forward(params, x_nchw):
    """Fused CGNet forward pass; input/output are NCHW like the PyTorch module."""
    n, cin, h, w = x_nchw.shape
    cout = params[2][0].shape[3]
    w1p, b1p, w2p, b2p, w3p, b3p = _pack_params(params)

    # NCHW -> flat (N*H*W, 64): channels zero-padded 3 -> 64 in the wrapper so
    # the kernel's input block is a full-width, unmasked 64-lane load.
    x = jnp.transpose(x_nchw, (0, 2, 3, 1)).reshape(n * h * w, cin)
    x = jnp.pad(x, ((0, 0), (0, _C - cin)))

    bt = _pick_batch_tile(n, h * w)
    steps = n // bt
    m = bt * h * w
    masks = _border_masks(bt, h, w)

    out = pl.pallas_call(
        _make_cgnet_kernel(w),
        out_shape=jax.ShapeDtypeStruct((n * h * w, _COUT_PAD), jnp.float32),
        grid=(steps,),
        in_specs=[
            pl.BlockSpec((m, _C), lambda i: (i, 0)),            # activations
            pl.BlockSpec((m, 9), lambda i: (0, 0)),              # border masks
            pl.BlockSpec((9 * _C, _C), lambda i: (0, 0)),        # w1 (bf16)
            pl.BlockSpec((1, _C), lambda i: (0, 0)),             # b1
            pl.BlockSpec((9 * _C, _C), lambda i: (0, 0)),        # w2 (bf16)
            pl.BlockSpec((1, _C), lambda i: (0, 0)),             # b2
            pl.BlockSpec((9 * _C, _COUT_PAD), lambda i: (0, 0)),  # w3 (bf16)
            pl.BlockSpec((1, _COUT_PAD), lambda i: (0, 0)),       # b3
        ],
        out_specs=pl.BlockSpec((m, _COUT_PAD), lambda i: (i, 0)),
        compiler_params=pltpu.CompilerParams(
            dimension_semantics=("parallel",)),
    )(x, masks, w1p, b1p, w2p, b2p, w3p, b3p)

    # Slice the 3 real channels off the lane-dense output; back to NCHW.
    out = out[:, :cout].reshape(n, h, w, cout)
    return jnp.transpose(out, (0, 3, 1, 2))


def init_cgnet_params(key):
    """Deterministic init matching the PyTorch module's shapes (HWIO weights)."""
    def conv_init(kw, kb, cin, cout):
        fan_in = cin * 3 * 3
        bound = fan_in ** -0.5
        w = jax.random.uniform(kw, (3, 3, cin, cout), jnp.float32, -bound, bound)
        b = jax.random.uniform(kb, (cout,), jnp.float32, -bound, bound)
        return w, b

    keys = jax.random.split(key, 6)
    return (conv_init(keys[0], keys[1], 3, 64),
            conv_init(keys[2], keys[3], 64, 64),
            conv_init(keys[4], keys[5], 64, 3))


def _reference_forward(params, x_nchw):
    """Pure-JAX reference (lax.conv, f32 HIGHEST) for a correctness check."""
    (w1, b1), (w2, b2), (w3, b3) = params
    x = jnp.transpose(x_nchw, (0, 2, 3, 1))
    dn = jax.lax.conv_dimension_numbers(x.shape, (3, 3, 3, 64),
                                        ("NHWC", "HWIO", "NHWC"))

    def conv(x, w, b):
        y = jax.lax.conv_general_dilated(
            x, w, (1, 1), "SAME", dimension_numbers=dn,
            precision=jax.lax.Precision.HIGHEST)
        return y + b

    h = jax.nn.relu(conv(x, w1, b1))
    h = jax.nn.relu(conv(h, w2, b2))
    h = conv(h, w3, b3)
    return jnp.transpose(h, (0, 3, 1, 2))


if __name__ == "__main__":
    key = jax.random.PRNGKey(0)
    k_param, k_x = jax.random.split(key)

    params = init_cgnet_params(k_param)
    x = jax.random.normal(k_x, (2, 3, 16, 16), jnp.float32)  # NCHW like PyTorch

    out = jax.block_until_ready(cgnet_forward(params, x))
    ref = _reference_forward(params, x)

    assert out.shape == (2, 3, 16, 16)
    err = float(jnp.max(jnp.abs(out - ref)))
    # Kernel uses bf16 MXU operands with f32 accumulation; reference is f32 HIGHEST.
    assert err < 1e-2, f"mismatch vs reference: max abs err = {err}"
    print("KERNEL_OK")
</pallas_src>

<mosaic_0001>
module attributes {stable_mosaic.version = 11 : i64} {
  func.func @kernel(%arg0: i32, %arg1: memref<256x64xf32, #tpu.memory_space<vmem>>, %arg2: memref<256x9xf32, #tpu.memory_space<vmem>>, %arg3: memref<576x64xbf16, #tpu.memory_space<vmem>>, %arg4: memref<1x64xf32, #tpu.memory_space<vmem>>, %arg5: memref<576x64xbf16, #tpu.memory_space<vmem>>, %arg6: memref<1x64xf32, #tpu.memory_space<vmem>>, %arg7: memref<576x128xbf16, #tpu.memory_space<vmem>>, %arg8: memref<1x128xf32, #tpu.memory_space<vmem>>, %arg9: memref<256x128xf32, #tpu.memory_space<vmem>>) attributes {dimension_semantics = [#tpu.dimension_semantics<parallel>], iteration_bounds = array<i64: 2>, scalar_prefetch = 0 : i64, scratch_operands = 0 : i64, tpu.core_type = #tpu.core_type<tc>, window_params = [{transform_indices = @transform_0, window_bounds = array<i64: 256, 64>}, {pipeline_mode = #tpu.pipeline_mode<synchronous>, transform_indices = @transform_1, window_bounds = array<i64: 256, 9>}, {pipeline_mode = #tpu.pipeline_mode<synchronous>, transform_indices = @transform_2, window_bounds = array<i64: 576, 64>}, {pipeline_mode = #tpu.pipeline_mode<synchronous>, transform_indices = @transform_3, window_bounds = array<i64: 1, 64>}, {pipeline_mode = #tpu.pipeline_mode<synchronous>, transform_indices = @transform_4, window_bounds = array<i64: 576, 64>}, {pipeline_mode = #tpu.pipeline_mode<synchronous>, transform_indices = @transform_5, window_bounds = array<i64: 1, 64>}, {pipeline_mode = #tpu.pipeline_mode<synchronous>, transform_indices = @transform_6, window_bounds = array<i64: 576, 128>}, {pipeline_mode = #tpu.pipeline_mode<synchronous>, transform_indices = @transform_7, window_bounds = array<i64: 1, 128>}, {transform_indices = @transform_8, window_bounds = array<i64: 256, 128>}]} {
    %c0 = arith.constant 0 : index
    %c0_0 = arith.constant 0 : index
    %0 = vector.load %arg2[%c0, %c0_0] : memref<256x9xf32, #tpu.memory_space<vmem>>, vector<256x9xf32>
    %1 = vector.extract_strided_slice %0 {offsets = [0, 0], sizes = [256, 1], strides = [1, 1]} : vector<256x9xf32> to vector<256x1xf32>
    %2 = vector.extract_strided_slice %0 {offsets = [0, 1], sizes = [256, 1], strides = [1, 1]} : vector<256x9xf32> to vector<256x1xf32>
    %3 = vector.extract_strided_slice %0 {offsets = [0, 2], sizes = [256, 1], strides = [1, 1]} : vector<256x9xf32> to vector<256x1xf32>
    %4 = vector.extract_strided_slice %0 {offsets = [0, 3], sizes = [256, 1], strides = [1, 1]} : vector<256x9xf32> to vector<256x1xf32>
    %5 = vector.extract_strided_slice %0 {offsets = [0, 5], sizes = [256, 1], strides = [1, 1]} : vector<256x9xf32> to vector<256x1xf32>
    %6 = vector.extract_strided_slice %0 {offsets = [0, 6], sizes = [256, 1], strides = [1, 1]} : vector<256x9xf32> to vector<256x1xf32>
    %7 = vector.extract_strided_slice %0 {offsets = [0, 7], sizes = [256, 1], strides = [1, 1]} : vector<256x9xf32> to vector<256x1xf32>
    %8 = vector.extract_strided_slice %0 {offsets = [0, 8], sizes = [256, 1], strides = [1, 1]} : vector<256x9xf32> to vector<256x1xf32>
    %c0_1 = arith.constant 0 : index
    %c0_2 = arith.constant 0 : index
    %9 = vector.load %arg1[%c0_1, %c0_2] : memref<256x64xf32, #tpu.memory_space<vmem>>, vector<256x64xf32>
    %cst = arith.constant 0.000000e+00 : f32
    %10 = vector.broadcast %cst : f32 to vector<256x64xf32>
    %c17_i32 = arith.constant 17 : i32
    %11 = tpu.dynamic_rotate %9 by %c17_i32 dim 0 : vector<256x64xf32>, i32 -> vector<256x64xf32>
    %12 = vector.broadcast %1 : vector<256x1xf32> to vector<256x64xf32>
    %13 = arith.mulf %11, %12 : vector<256x64xf32>
    %14 = arith.truncf %13 : vector<256x64xf32> to vector<256x64xbf16>
    %c0_3 = arith.constant 0 : index
    %c0_4 = arith.constant 0 : index
    %15 = vector.load %arg3[%c0_3, %c0_4] : memref<576x64xbf16, #tpu.memory_space<vmem>>, vector<64x64xbf16>
    %cst_5 = arith.constant dense<0.000000e+00> : vector<256x64xf32>
    %16 = tpu.matmul %14, %15, %cst_5 {dimension_numbers = #tpu.dot_dimension_numbers<[1], [0], [0], [1], [0, 0, 1, 1], [], []>} : vector<256x64xbf16>, vector<64x64xbf16>, vector<256x64xf32> -> vector<256x64xf32>
    %17 = arith.addf %10, %16 : vector<256x64xf32>
    %c16_i32 = arith.constant 16 : i32
    %18 = tpu.dynamic_rotate %9 by %c16_i32 dim 0 : vector<256x64xf32>, i32 -> vector<256x64xf32>
    %19 = vector.broadcast %2 : vector<256x1xf32> to vector<256x64xf32>
    %20 = arith.mulf %18, %19 : vector<256x64xf32>
    %21 = arith.truncf %20 : vector<256x64xf32> to vector<256x64xbf16>
    %c64 = arith.constant 64 : index
    %c0_6 = arith.constant 0 : index
    %22 = vector.load %arg3[%c64, %c0_6] : memref<576x64xbf16, #tpu.memory_space<vmem>>, vector<64x64xbf16>
    %cst_7 = arith.constant dense<0.000000e+00> : vector<256x64xf32>
    %23 = tpu.matmul %21, %22, %cst_7 {dimension_numbers = #tpu.dot_dimension_numbers<[1], [0], [0], [1], [0, 0, 1, 1], [], []>} : vector<256x64xbf16>, vector<64x64xbf16>, vector<256x64xf32> -> vector<256x64xf32>
    %24 = arith.addf %17, %23 : vector<256x64xf32>
    %c15_i32 = arith.constant 15 : i32
    %25 = tpu.dynamic_rotate %9 by %c15_i32 dim 0 : vector<256x64xf32>, i32 -> vector<256x64xf32>
    %26 = vector.broadcast %3 : vector<256x1xf32> to vector<256x64xf32>
    %27 = arith.mulf %25, %26 : vector<256x64xf32>
    %28 = arith.truncf %27 : vector<256x64xf32> to vector<256x64xbf16>
    %c128 = arith.constant 128 : index
    %c0_8 = arith.constant 0 : index
    %29 = vector.load %arg3[%c128, %c0_8] : memref<576x64xbf16, #tpu.memory_space<vmem>>, vector<64x64xbf16>
    %cst_9 = arith.constant dense<0.000000e+00> : vector<256x64xf32>
    %30 = tpu.matmul %28, %29, %cst_9 {dimension_numbers = #tpu.dot_dimension_numbers<[1], [0], [0], [1], [0, 0, 1, 1], [], []>} : vector<256x64xbf16>, vector<64x64xbf16>, vector<256x64xf32> -> vector<256x64xf32>
    %31 = arith.addf %24, %30 : vector<256x64xf32>
    %c1_i32 = arith.constant 1 : i32
    %32 = tpu.dynamic_rotate %9 by %c1_i32 dim 0 : vector<256x64xf32>, i32 -> vector<256x64xf32>
    %33 = vector.broadcast %4 : vector<256x1xf32> to vector<256x64xf32>
    %34 = arith.mulf %32, %33 : vector<256x64xf32>
    %35 = arith.truncf %34 : vector<256x64xf32> to vector<256x64xbf16>
    %c192 = arith.constant 192 : index
    %c0_10 = arith.constant 0 : index
    %36 = vector.load %arg3[%c192, %c0_10] : memref<576x64xbf16, #tpu.memory_space<vmem>>, vector<64x64xbf16>
    %cst_11 = arith.constant dense<0.000000e+00> : vector<256x64xf32>
    %37 = tpu.matmul %35, %36, %cst_11 {dimension_numbers = #tpu.dot_dimension_numbers<[1], [0], [0], [1], [0, 0, 1, 1], [], []>} : vector<256x64xbf16>, vector<64x64xbf16>, vector<256x64xf32> -> vector<256x64xf32>
    %38 = arith.addf %31, %37 : vector<256x64xf32>
    %39 = arith.truncf %9 : vector<256x64xf32> to vector<256x64xbf16>
    %c256 = arith.constant 256 : index
    %c0_12 = arith.constant 0 : index
    %40 = vector.load %arg3[%c256, %c0_12] : memref<576x64xbf16, #tpu.memory_space<vmem>>, vector<64x64xbf16>
    %cst_13 = arith.constant dense<0.000000e+00> : vector<256x64xf32>
    %41 = tpu.matmul %39, %40, %cst_13 {dimension_numbers = #tpu.dot_dimension_numbers<[1], [0], [0], [1], [0, 0, 1, 1], [], []>} : vector<256x64xbf16>, vector<64x64xbf16>, vector<256x64xf32> -> vector<256x64xf32>
    %42 = arith.addf %38, %41 : vector<256x64xf32>
    %c255_i32 = arith.constant 255 : i32
    %43 = tpu.dynamic_rotate %9 by %c255_i32 dim 0 : vector<256x64xf32>, i32 -> vector<256x64xf32>
    %44 = vector.broadcast %5 : vector<256x1xf32> to vector<256x64xf32>
    %45 = arith.mulf %43, %44 : vector<256x64xf32>
    %46 = arith.truncf %45 : vector<256x64xf32> to vector<256x64xbf16>
    %c320 = arith.constant 320 : index
    %c0_14 = arith.constant 0 : index
    %47 = vector.load %arg3[%c320, %c0_14] : memref<576x64xbf16, #tpu.memory_space<vmem>>, vector<64x64xbf16>
    %cst_15 = arith.constant dense<0.000000e+00> : vector<256x64xf32>
    %48 = tpu.matmul %46, %47, %cst_15 {dimension_numbers = #tpu.dot_dimension_numbers<[1], [0], [0], [1], [0, 0, 1, 1], [], []>} : vector<256x64xbf16>, vector<64x64xbf16>, vector<256x64xf32> -> vector<256x64xf32>
    %49 = arith.addf %42, %48 : vector<256x64xf32>
    %c241_i32 = arith.constant 241 : i32
    %50 = tpu.dynamic_rotate %9 by %c241_i32 dim 0 : vector<256x64xf32>, i32 -> vector<256x64xf32>
    %51 = vector.broadcast %6 : vector<256x1xf32> to vector<256x64xf32>
    %52 = arith.mulf %50, %51 : vector<256x64xf32>
    %53 = arith.truncf %52 : vector<256x64xf32> to vector<256x64xbf16>
    %c384 = arith.constant 384 : index
    %c0_16 = arith.constant 0 : index
    %54 = vector.load %arg3[%c384, %c0_16] : memref<576x64xbf16, #tpu.memory_space<vmem>>, vector<64x64xbf16>
    %cst_17 = arith.constant dense<0.000000e+00> : vector<256x64xf32>
    %55 = tpu.matmul %53, %54, %cst_17 {dimension_numbers = #tpu.dot_dimension_numbers<[1], [0], [0], [1], [0, 0, 1, 1], [], []>} : vector<256x64xbf16>, vector<64x64xbf16>, vector<256x64xf32> -> vector<256x64xf32>
    %56 = arith.addf %49, %55 : vector<256x64xf32>
    %c240_i32 = arith.constant 240 : i32
    %57 = tpu.dynamic_rotate %9 by %c240_i32 dim 0 : vector<256x64xf32>, i32 -> vector<256x64xf32>
    %58 = vector.broadcast %7 : vector<256x1xf32> to vector<256x64xf32>
    %59 = arith.mulf %57, %58 : vector<256x64xf32>
    %60 = arith.truncf %59 : vector<256x64xf32> to vector<256x64xbf16>
    %c448 = arith.constant 448 : index
    %c0_18 = arith.constant 0 : index
    %61 = vector.load %arg3[%c448, %c0_18] : memref<576x64xbf16, #tpu.memory_space<vmem>>, vector<64x64xbf16>
    %cst_19 = arith.constant dense<0.000000e+00> : vector<256x64xf32>
    %62 = tpu.matmul %60, %61, %cst_19 {dimension_numbers = #tpu.dot_dimension_numbers<[1], [0], [0], [1], [0, 0, 1, 1], [], []>} : vector<256x64xbf16>, vector<64x64xbf16>, vector<256x64xf32> -> vector<256x64xf32>
    %63 = arith.addf %56, %62 : vector<256x64xf32>
    %c239_i32 = arith.constant 239 : i32
    %64 = tpu.dynamic_rotate %9 by %c239_i32 dim 0 : vector<256x64xf32>, i32 -> vector<256x64xf32>
    %65 = vector.broadcast %8 : vector<256x1xf32> to vector<256x64xf32>
    %66 = arith.mulf %64, %65 : vector<256x64xf32>
    %67 = arith.truncf %66 : vector<256x64xf32> to vector<256x64xbf16>
    %c512 = arith.constant 512 : index
    %c0_20 = arith.constant 0 : index
    %68 = vector.load %arg3[%c512, %c0_20] : memref<576x64xbf16, #tpu.memory_space<vmem>>, vector<64x64xbf16>
    %cst_21 = arith.constant dense<0.000000e+00> : vector<256x64xf32>
    %69 = tpu.matmul %67, %68, %cst_21 {dimension_numbers = #tpu.dot_dimension_numbers<[1], [0], [0], [1], [0, 0, 1, 1], [], []>} : vector<256x64xbf16>, vector<64x64xbf16>, vector<256x64xf32> -> vector<256x64xf32>
    %70 = arith.addf %63, %69 : vector<256x64xf32>
    %c0_22 = arith.constant 0 : index
    %c0_23 = arith.constant 0 : index
    %71 = vector.load %arg4[%c0_22, %c0_23] : memref<1x64xf32, #tpu.memory_space<vmem>>, vector<1x64xf32>
    %72 = vector.broadcast %71 : vector<1x64xf32> to vector<256x64xf32>
    %73 = arith.addf %70, %72 : vector<256x64xf32>
    %cst_24 = arith.constant 0.000000e+00 : f32
    %74 = vector.broadcast %cst_24 : f32 to vector<256x64xf32>
    %75 = arith.maximumf %73, %74 : vector<256x64xf32>
    %cst_25 = arith.constant 0.000000e+00 : f32
    %76 = vector.broadcast %cst_25 : f32 to vector<256x64xf32>
    %c17_i32_26 = arith.constant 17 : i32
    %77 = tpu.dynamic_rotate %75 by %c17_i32_26 dim 0 : vector<256x64xf32>, i32 -> vector<256x64xf32>
    %78 = vector.broadcast %1 : vector<256x1xf32> to vector<256x64xf32>
    %79 = arith.mulf %77, %78 : vector<256x64xf32>
    %80 = arith.truncf %79 : vector<256x64xf32> to vector<256x64xbf16>
    %c0_27 = arith.constant 0 : index
    %c0_28 = arith.constant 0 : index
    %81 = vector.load %arg5[%c0_27, %c0_28] : memref<576x64xbf16, #tpu.memory_space<vmem>>, vector<64x64xbf16>
    %cst_29 = arith.constant dense<0.000000e+00> : vector<256x64xf32>
    %82 = tpu.matmul %80, %81, %cst_29 {dimension_numbers = #tpu.dot_dimension_numbers<[1], [0], [0], [1], [0, 0, 1, 1], [], []>} : vector<256x64xbf16>, vector<64x64xbf16>, vector<256x64xf32> -> vector<256x64xf32>
    %83 = arith.addf %76, %82 : vector<256x64xf32>
    %c16_i32_30 = arith.constant 16 : i32
    %84 = tpu.dynamic_rotate %75 by %c16_i32_30 dim 0 : vector<256x64xf32>, i32 -> vector<256x64xf32>
    %85 = vector.broadcast %2 : vector<256x1xf32> to vector<256x64xf32>
    %86 = arith.mulf %84, %85 : vector<256x64xf32>
    %87 = arith.truncf %86 : vector<256x64xf32> to vector<256x64xbf16>
    %c64_31 = arith.constant 64 : index
    %c0_32 = arith.constant 0 : index
    %88 = vector.load %arg5[%c64_31, %c0_32] : memref<576x64xbf16, #tpu.memory_space<vmem>>, vector<64x64xbf16>
    %cst_33 = arith.constant dense<0.000000e+00> : vector<256x64xf32>
    %89 = tpu.matmul %87, %88, %cst_33 {dimension_numbers = #tpu.dot_dimension_numbers<[1], [0], [0], [1], [0, 0, 1, 1], [], []>} : vector<256x64xbf16>, vector<64x64xbf16>, vector<256x64xf32> -> vector<256x64xf32>
    %90 = arith.addf %83, %89 : vector<256x64xf32>
    %c15_i32_34 = arith.constant 15 : i32
    %91 = tpu.dynamic_rotate %75 by %c15_i32_34 dim 0 : vector<256x64xf32>, i32 -> vector<256x64xf32>
    %92 = vector.broadcast %3 : vector<256x1xf32> to vector<256x64xf32>
    %93 = arith.mulf %91, %92 : vector<256x64xf32>
    %94 = arith.truncf %93 : vector<256x64xf32> to vector<256x64xbf16>
    %c128_35 = arith.constant 128 : index
    %c0_36 = arith.constant 0 : index
    %95 = vector.load %arg5[%c128_35, %c0_36] : memref<576x64xbf16, #tpu.memory_space<vmem>>, vector<64x64xbf16>
    %cst_37 = arith.constant dense<0.000000e+00> : vector<256x64xf32>
    %96 = tpu.matmul %94, %95, %cst_37 {dimension_numbers = #tpu.dot_dimension_numbers<[1], [0], [0], [1], [0, 0, 1, 1], [], []>} : vector<256x64xbf16>, vector<64x64xbf16>, vector<256x64xf32> -> vector<256x64xf32>
    %97 = arith.addf %90, %96 : vector<256x64xf32>
    %c1_i32_38 = arith.constant 1 : i32
    %98 = tpu.dynamic_rotate %75 by %c1_i32_38 dim 0 : vector<256x64xf32>, i32 -> vector<256x64xf32>
    %99 = vector.broadcast %4 : vector<256x1xf32> to vector<256x64xf32>
    %100 = arith.mulf %98, %99 : vector<256x64xf32>
    %101 = arith.truncf %100 : vector<256x64xf32> to vector<256x64xbf16>
    %c192_39 = arith.constant 192 : index
    %c0_40 = arith.constant 0 : index
    %102 = vector.load %arg5[%c192_39, %c0_40] : memref<576x64xbf16, #tpu.memory_space<vmem>>, vector<64x64xbf16>
    %cst_41 = arith.constant dense<0.000000e+00> : vector<256x64xf32>
    %103 = tpu.matmul %101, %102, %cst_41 {dimension_numbers = #tpu.dot_dimension_numbers<[1], [0], [0], [1], [0, 0, 1, 1], [], []>} : vector<256x64xbf16>, vector<64x64xbf16>, vector<256x64xf32> -> vector<256x64xf32>
    %104 = arith.addf %97, %103 : vector<256x64xf32>
    %105 = arith.truncf %75 : vector<256x64xf32> to vector<256x64xbf16>
    %c256_42 = arith.constant 256 : index
    %c0_43 = arith.constant 0 : index
    %106 = vector.load %arg5[%c256_42, %c0_43] : memref<576x64xbf16, #tpu.memory_space<vmem>>, vector<64x64xbf16>
    %cst_44 = arith.constant dense<0.000000e+00> : vector<256x64xf32>
    %107 = tpu.matmul %105, %106, %cst_44 {dimension_numbers = #tpu.dot_dimension_numbers<[1], [0], [0], [1], [0, 0, 1, 1], [], []>} : vector<256x64xbf16>, vector<64x64xbf16>, vector<256x64xf32> -> vector<256x64xf32>
    %108 = arith.addf %104, %107 : vector<256x64xf32>
    %c255_i32_45 = arith.constant 255 : i32
    %109 = tpu.dynamic_rotate %75 by %c255_i32_45 dim 0 : vector<256x64xf32>, i32 -> vector<256x64xf32>
    %110 = vector.broadcast %5 : vector<256x1xf32> to vector<256x64xf32>
    %111 = arith.mulf %109, %110 : vector<256x64xf32>
    %112 = arith.truncf %111 : vector<256x64xf32> to vector<256x64xbf16>
    %c320_46 = arith.constant 320 : index
    %c0_47 = arith.constant 0 : index
    %113 = vector.load %arg5[%c320_46, %c0_47] : memref<576x64xbf16, #tpu.memory_space<vmem>>, vector<64x64xbf16>
    %cst_48 = arith.constant dense<0.000000e+00> : vector<256x64xf32>
    %114 = tpu.matmul %112, %113, %cst_48 {dimension_numbers = #tpu.dot_dimension_numbers<[1], [0], [0], [1], [0, 0, 1, 1], [], []>} : vector<256x64xbf16>, vector<64x64xbf16>, vector<256x64xf32> -> vector<256x64xf32>
    %115 = arith.addf %108, %114 : vector<256x64xf32>
    %c241_i32_49 = arith.constant 241 : i32
    %116 = tpu.dynamic_rotate %75 by %c241_i32_49 dim 0 : vector<256x64xf32>, i32 -> vector<256x64xf32>
    %117 = vector.broadcast %6 : vector<256x1xf32> to vector<256x64xf32>
    %118 = arith.mulf %116, %117 : vector<256x64xf32>
    %119 = arith.truncf %118 : vector<256x64xf32> to vector<256x64xbf16>
    %c384_50 = arith.constant 384 : index
    %c0_51 = arith.constant 0 : index
    %120 = vector.load %arg5[%c384_50, %c0_51] : memref<576x64xbf16, #tpu.memory_space<vmem>>, vector<64x64xbf16>
    %cst_52 = arith.constant dense<0.000000e+00> : vector<256x64xf32>
    %121 = tpu.matmul %119, %120, %cst_52 {dimension_numbers = #tpu.dot_dimension_numbers<[1], [0], [0], [1], [0, 0, 1, 1], [], []>} : vector<256x64xbf16>, vector<64x64xbf16>, vector<256x64xf32> -> vector<256x64xf32>
    %122 = arith.addf %115, %121 : vector<256x64xf32>
    %c240_i32_53 = arith.constant 240 : i32
    %123 = tpu.dynamic_rotate %75 by %c240_i32_53 dim 0 : vector<256x64xf32>, i32 -> vector<256x64xf32>
    %124 = vector.broadcast %7 : vector<256x1xf32> to vector<256x64xf32>
    %125 = arith.mulf %123, %124 : vector<256x64xf32>
    %126 = arith.truncf %125 : vector<256x64xf32> to vector<256x64xbf16>
    %c448_54 = arith.constant 448 : index
    %c0_55 = arith.constant 0 : index
    %127 = vector.load %arg5[%c448_54, %c0_55] : memref<576x64xbf16, #tpu.memory_space<vmem>>, vector<64x64xbf16>
    %cst_56 = arith.constant dense<0.000000e+00> : vector<256x64xf32>
    %128 = tpu.matmul %126, %127, %cst_56 {dimension_numbers = #tpu.dot_dimension_numbers<[1], [0], [0], [1], [0, 0, 1, 1], [], []>} : vector<256x64xbf16>, vector<64x64xbf16>, vector<256x64xf32> -> vector<256x64xf32>
    %129 = arith.addf %122, %128 : vector<256x64xf32>
    %c239_i32_57 = arith.constant 239 : i32
    %130 = tpu.dynamic_rotate %75 by %c239_i32_57 dim 0 : vector<256x64xf32>, i32 -> vector<256x64xf32>
    %131 = vector.broadcast %8 : vector<256x1xf32> to vector<256x64xf32>
    %132 = arith.mulf %130, %131 : vector<256x64xf32>
    %133 = arith.truncf %132 : vector<256x64xf32> to vector<256x64xbf16>
    %c512_58 = arith.constant 512 : index
    %c0_59 = arith.constant 0 : index
    %134 = vector.load %arg5[%c512_58, %c0_59] : memref<576x64xbf16, #tpu.memory_space<vmem>>, vector<64x64xbf16>
    %cst_60 = arith.constant dense<0.000000e+00> : vector<256x64xf32>
    %135 = tpu.matmul %133, %134, %cst_60 {dimension_numbers = #tpu.dot_dimension_numbers<[1], [0], [0], [1], [0, 0, 1, 1], [], []>} : vector<256x64xbf16>, vector<64x64xbf16>, vector<256x64xf32> -> vector<256x64xf32>
    %136 = arith.addf %129, %135 : vector<256x64xf32>
    %c0_61 = arith.constant 0 : index
    %c0_62 = arith.constant 0 : index
    %137 = vector.load %arg6[%c0_61, %c0_62] : memref<1x64xf32, #tpu.memory_space<vmem>>, vector<1x64xf32>
    %138 = vector.broadcast %137 : vector<1x64xf32> to vector<256x64xf32>
    %139 = arith.addf %136, %138 : vector<256x64xf32>
    %cst_63 = arith.constant 0.000000e+00 : f32
    %140 = vector.broadcast %cst_63 : f32 to vector<256x64xf32>
    %141 = arith.maximumf %139, %140 : vector<256x64xf32>
    %cst_64 = arith.constant 0.000000e+00 : f32
    %142 = vector.broadcast %cst_64 : f32 to vector<256x128xf32>
    %c17_i32_65 = arith.constant 17 : i32
    %143 = tpu.dynamic_rotate %141 by %c17_i32_65 dim 0 : vector<256x64xf32>, i32 -> vector<256x64xf32>
    %144 = vector.broadcast %1 : vector<256x1xf32> to vector<256x64xf32>
    %145 = arith.mulf %143, %144 : vector<256x64xf32>
    %146 = arith.truncf %145 : vector<256x64xf32> to vector<256x64xbf16>
    %c0_66 = arith.constant 0 : index
    %c0_67 = arith.constant 0 : index
    %147 = vector.load %arg7[%c0_66, %c0_67] : memref<576x128xbf16, #tpu.memory_space<vmem>>, vector<64x128xbf16>
    %cst_68 = arith.constant dense<0.000000e+00> : vector<256x128xf32>
    %148 = tpu.matmul %146, %147, %cst_68 {dimension_numbers = #tpu.dot_dimension_numbers<[1], [0], [0], [1], [0, 0, 1, 1], [], []>} : vector<256x64xbf16>, vector<64x128xbf16>, vector<256x128xf32> -> vector<256x128xf32>
    %149 = arith.addf %142, %148 : vector<256x128xf32>
    %c16_i32_69 = arith.constant 16 : i32
    %150 = tpu.dynamic_rotate %141 by %c16_i32_69 dim 0 : vector<256x64xf32>, i32 -> vector<256x64xf32>
    %151 = vector.broadcast %2 : vector<256x1xf32> to vector<256x64xf32>
    %152 = arith.mulf %150, %151 : vector<256x64xf32>
    %153 = arith.truncf %152 : vector<256x64xf32> to vector<256x64xbf16>
    %c64_70 = arith.constant 64 : index
    %c0_71 = arith.constant 0 : index
    %154 = vector.load %arg7[%c64_70, %c0_71] : memref<576x128xbf16, #tpu.memory_space<vmem>>, vector<64x128xbf16>
    %cst_72 = arith.constant dense<0.000000e+00> : vector<256x128xf32>
    %155 = tpu.matmul %153, %154, %cst_72 {dimension_numbers = #tpu.dot_dimension_numbers<[1], [0], [0], [1], [0, 0, 1, 1], [], []>} : vector<256x64xbf16>, vector<64x128xbf16>, vector<256x128xf32> -> vector<256x128xf32>
    %156 = arith.addf %149, %155 : vector<256x128xf32>
    %c15_i32_73 = arith.constant 15 : i32
    %157 = tpu.dynamic_rotate %141 by %c15_i32_73 dim 0 : vector<256x64xf32>, i32 -> vector<256x64xf32>
    %158 = vector.broadcast %3 : vector<256x1xf32> to vector<256x64xf32>
    %159 = arith.mulf %157, %158 : vector<256x64xf32>
    %160 = arith.truncf %159 : vector<256x64xf32> to vector<256x64xbf16>
    %c128_74 = arith.constant 128 : index
    %c0_75 = arith.constant 0 : index
    %161 = vector.load %arg7[%c128_74, %c0_75] : memref<576x128xbf16, #tpu.memory_space<vmem>>, vector<64x128xbf16>
    %cst_76 = arith.constant dense<0.000000e+00> : vector<256x128xf32>
    %162 = tpu.matmul %160, %161, %cst_76 {dimension_numbers = #tpu.dot_dimension_numbers<[1], [0], [0], [1], [0, 0, 1, 1], [], []>} : vector<256x64xbf16>, vector<64x128xbf16>, vector<256x128xf32> -> vector<256x128xf32>
    %163 = arith.addf %156, %162 : vector<256x128xf32>
    %c1_i32_77 = arith.constant 1 : i32
    %164 = tpu.dynamic_rotate %141 by %c1_i32_77 dim 0 : vector<256x64xf32>, i32 -> vector<256x64xf32>
    %165 = vector.broadcast %4 : vector<256x1xf32> to vector<256x64xf32>
    %166 = arith.mulf %164, %165 : vector<256x64xf32>
    %167 = arith.truncf %166 : vector<256x64xf32> to vector<256x64xbf16>
    %c192_78 = arith.constant 192 : index
    %c0_79 = arith.constant 0 : index
    %168 = vector.load %arg7[%c192_78, %c0_79] : memref<576x128xbf16, #tpu.memory_space<vmem>>, vector<64x128xbf16>
    %cst_80 = arith.constant dense<0.000000e+00> : vector<256x128xf32>
    %169 = tpu.matmul %167, %168, %cst_80 {dimension_numbers = #tpu.dot_dimension_numbers<[1], [0], [0], [1], [0, 0, 1, 1], [], []>} : vector<256x64xbf16>, vector<64x128xbf16>, vector<256x128xf32> -> vector<256x128xf32>
    %170 = arith.addf %163, %169 : vector<256x128xf32>
    %171 = arith.truncf %141 : vector<256x64xf32> to vector<256x64xbf16>
    %c256_81 = arith.constant 256 : index
    %c0_82 = arith.constant 0 : index
    %172 = vector.load %arg7[%c256_81, %c0_82] : memref<576x128xbf16, #tpu.memory_space<vmem>>, vector<64x128xbf16>
    %cst_83 = arith.constant dense<0.000000e+00> : vector<256x128xf32>
    %173 = tpu.matmul %171, %172, %cst_83 {dimension_numbers = #tpu.dot_dimension_numbers<[1], [0], [0], [1], [0, 0, 1, 1], [], []>} : vector<256x64xbf16>, vector<64x128xbf16>, vector<256x128xf32> -> vector<256x128xf32>
    %174 = arith.addf %170, %173 : vector<256x128xf32>
    %c255_i32_84 = arith.constant 255 : i32
    %175 = tpu.dynamic_rotate %141 by %c255_i32_84 dim 0 : vector<256x64xf32>, i32 -> vector<256x64xf32>
    %176 = vector.broadcast %5 : vector<256x1xf32> to vector<256x64xf32>
    %177 = arith.mulf %175, %176 : vector<256x64xf32>
    %178 = arith.truncf %177 : vector<256x64xf32> to vector<256x64xbf16>
    %c320_85 = arith.constant 320 : index
    %c0_86 = arith.constant 0 : index
    %179 = vector.load %arg7[%c320_85, %c0_86] : memref<576x128xbf16, #tpu.memory_space<vmem>>, vector<64x128xbf16>
    %cst_87 = arith.constant dense<0.000000e+00> : vector<256x128xf32>
    %180 = tpu.matmul %178, %179, %cst_87 {dimension_numbers = #tpu.dot_dimension_numbers<[1], [0], [0], [1], [0, 0, 1, 1], [], []>} : vector<256x64xbf16>, vector<64x128xbf16>, vector<256x128xf32> -> vector<256x128xf32>
    %181 = arith.addf %174, %180 : vector<256x128xf32>
    %c241_i32_88 = arith.constant 241 : i32
    %182 = tpu.dynamic_rotate %141 by %c241_i32_88 dim 0 : vector<256x64xf32>, i32 -> vector<256x64xf32>
    %183 = vector.broadcast %6 : vector<256x1xf32> to vector<256x64xf32>
    %184 = arith.mulf %182, %183 : vector<256x64xf32>
    %185 = arith.truncf %184 : vector<256x64xf32> to vector<256x64xbf16>
    %c384_89 = arith.constant 384 : index
    %c0_90 = arith.constant 0 : index
    %186 = vector.load %arg7[%c384_89, %c0_90] : memref<576x128xbf16, #tpu.memory_space<vmem>>, vector<64x128xbf16>
    %cst_91 = arith.constant dense<0.000000e+00> : vector<256x128xf32>
    %187 = tpu.matmul %185, %186, %cst_91 {dimension_numbers = #tpu.dot_dimension_numbers<[1], [0], [0], [1], [0, 0, 1, 1], [], []>} : vector<256x64xbf16>, vector<64x128xbf16>, vector<256x128xf32> -> vector<256x128xf32>
    %188 = arith.addf %181, %187 : vector<256x128xf32>
    %c240_i32_92 = arith.constant 240 : i32
    %189 = tpu.dynamic_rotate %141 by %c240_i32_92 dim 0 : vector<256x64xf32>, i32 -> vector<256x64xf32>
    %190 = vector.broadcast %7 : vector<256x1xf32> to vector<256x64xf32>
    %191 = arith.mulf %189, %190 : vector<256x64xf32>
    %192 = arith.truncf %191 : vector<256x64xf32> to vector<256x64xbf16>
    %c448_93 = arith.constant 448 : index
    %c0_94 = arith.constant 0 : index
    %193 = vector.load %arg7[%c448_93, %c0_94] : memref<576x128xbf16, #tpu.memory_space<vmem>>, vector<64x128xbf16>
    %cst_95 = arith.constant dense<0.000000e+00> : vector<256x128xf32>
    %194 = tpu.matmul %192, %193, %cst_95 {dimension_numbers = #tpu.dot_dimension_numbers<[1], [0], [0], [1], [0, 0, 1, 1], [], []>} : vector<256x64xbf16>, vector<64x128xbf16>, vector<256x128xf32> -> vector<256x128xf32>
    %195 = arith.addf %188, %194 : vector<256x128xf32>
    %c239_i32_96 = arith.constant 239 : i32
    %196 = tpu.dynamic_rotate %141 by %c239_i32_96 dim 0 : vector<256x64xf32>, i32 -> vector<256x64xf32>
    %197 = vector.broadcast %8 : vector<256x1xf32> to vector<256x64xf32>
    %198 = arith.mulf %196, %197 : vector<256x64xf32>
    %199 = arith.truncf %198 : vector<256x64xf32> to vector<256x64xbf16>
    %c512_97 = arith.constant 512 : index
    %c0_98 = arith.constant 0 : index
    %200 = vector.load %arg7[%c512_97, %c0_98] : memref<576x128xbf16, #tpu.memory_space<vmem>>, vector<64x128xbf16>
    %cst_99 = arith.constant dense<0.000000e+00> : vector<256x128xf32>
    %201 = tpu.matmul %199, %200, %cst_99 {dimension_numbers = #tpu.dot_dimension_numbers<[1], [0], [0], [1], [0, 0, 1, 1], [], []>} : vector<256x64xbf16>, vector<64x128xbf16>, vector<256x128xf32> -> vector<256x128xf32>
    %202 = arith.addf %195, %201 : vector<256x128xf32>
    %c0_100 = arith.constant 0 : index
    %c0_101 = arith.constant 0 : index
    %203 = vector.load %arg8[%c0_100, %c0_101] : memref<1x128xf32, #tpu.memory_space<vmem>>, vector<1x128xf32>
    %204 = vector.broadcast %203 : vector<1x128xf32> to vector<256x128xf32>
    %205 = arith.addf %202, %204 : vector<256x128xf32>
    %c0_102 = arith.constant 0 : index
    %c0_103 = arith.constant 0 : index
    %206 = vector.load %arg9[%c0_102, %c0_103] : memref<256x128xf32, #tpu.memory_space<vmem>>, vector<256x128xf32>
    tpu.vector_store %arg9[%c0_102, %c0_103], %205 {strides = array<i32>} : memref<256x128xf32, #tpu.memory_space<vmem>>, vector<256x128xf32>,
    return
  }
  func.func @transform_0(%arg0: i32) -> (i32, i32) {
    %c0_i32 = arith.constant 0 : i32
    %c0_i32_0 = arith.constant 0 : i32
    return %arg0, %c0_i32 : i32, i32
  }
  func.func @transform_1(%arg0: i32) -> (i32, i32) {
    %c0_i32 = arith.constant 0 : i32
    %c0_i32_0 = arith.constant 0 : i32
    %c0_i32_1 = arith.constant 0 : i32
    return %c0_i32, %c0_i32_0 : i32, i32
  }
  func.func @transform_2(%arg0: i32) -> (i32, i32) {
    %c0_i32 = arith.constant 0 : i32
    %c0_i32_0 = arith.constant 0 : i32
    %c0_i32_1 = arith.constant 0 : i32
    return %c0_i32, %c0_i32_0 : i32, i32
  }
  func.func @transform_3(%arg0: i32) -> (i32, i32) {
    %c0_i32 = arith.constant 0 : i32
    %c0_i32_0 = arith.constant 0 : i32
    %c0_i32_1 = arith.constant 0 : i32
    return %c0_i32, %c0_i32_0 : i32, i32
  }
  func.func @transform_4(%arg0: i32) -> (i32, i32) {
    %c0_i32 = arith.constant 0 : i32
    %c0_i32_0 = arith.constant 0 : i32
    %c0_i32_1 = arith.constant 0 : i32
    return %c0_i32, %c0_i32_0 : i32, i32
  }
  func.func @transform_5(%arg0: i32) -> (i32, i32) {
    %c0_i32 = arith.constant 0 : i32
    %c0_i32_0 = arith.constant 0 : i32
    %c0_i32_1 = arith.constant 0 : i32
    return %c0_i32, %c0_i32_0 : i32, i32
  }
  func.func @transform_6(%arg0: i32) -> (i32, i32) {
    %c0_i32 = arith.constant 0 : i32
    %c0_i32_0 = arith.constant 0 : i32
    %c0_i32_1 = arith.constant 0 : i32
    return %c0_i32, %c0_i32_0 : i32, i32
  }
  func.func @transform_7(%arg0: i32) -> (i32, i32) {
    %c0_i32 = arith.constant 0 : i32
    %c0_i32_0 = arith.constant 0 : i32
    %c0_i32_1 = arith.constant 0 : i32
    return %c0_i32, %c0_i32_0 : i32, i32
  }
  func.func @transform_8(%arg0: i32) -> (i32, i32) {
    %c0_i32 = arith.constant 0 : i32
    %c0_i32_0 = arith.constant 0 : i32
    return %arg0, %c0_i32 : i32, i32
  }
}

</mosaic_0001>

<llo_original>
// kernel: cgnet_forward.1
$region0: #{cgnet_forward.1}
  #allocation0 [shape = 'u32[]', space=smem, size = 0x4, offset = 0x4, fixed_abs, tag = 'smem constant byte address 0x4 - core index']
  #allocation1 [shape = 'u32[72,128]{1,0:T(1,128)}', space=vmem, size = 0x9000, scoped, tag = 'internal scratch']
  %s0 = inlined_call_operand.vmem [shape: f32[512,64], index: 0, kind: input, shape index: {}]
  %s1 = inlined_call_operand.vmem [shape: f32[256,9], index: 1, kind: input, shape index: {}]
  %s2 = inlined_call_operand.vmem [shape: bf16[576,64], index: 2, kind: input, shape index: {}]
  %s3 = inlined_call_operand.vmem [shape: f32[1,64], index: 3, kind: input, shape index: {}]
  %s4 = inlined_call_operand.vmem [shape: bf16[576,64], index: 4, kind: input, shape index: {}]
  %s5 = inlined_call_operand.vmem [shape: f32[1,64], index: 5, kind: input, shape index: {}]
  %s6 = inlined_call_operand.vmem [shape: bf16[576,128], index: 6, kind: input, shape index: {}]
  %s7 = inlined_call_operand.vmem [shape: f32[1,128], index: 7, kind: input, shape index: {}]
  %s8 = inlined_call_operand.vmem [shape: f32[512,128], index: 8, kind: output, shape index: {}]
  %s9 = sld [smem:[#allocation0]]
  $region65: #{cgnet_forward.1} parent=0
    _
  %s11 = ssub.s32 1, %s9
  %s12 = scalar_select 0, %s11, %s9
  loop: start=0, step=1, limit=4
  $region2: #{cgnet_forward.1} parent=0 // loop_pre_header
    _
  $region3: #{cgnet_forward.1} parent=0 // loop_header
    %s14 = sphi 0, %s18
    %p15 = scmp.ge.s32.totalorder %s14, 4
    %s24 = sphi 0, %s26
    %s27 = sphi 0, %s24
    %s28 = sphi 0, %s27
    %s44 = sphi 0, %s28
    %s48 = sphi 0, %s48
    %s50 = sphi 0, %s48
    %s51 = sphi 0, %s50
    %s65 = sphi 0, %s51
    %s69 = sphi 0, %s69
    %s71 = sphi 0, %s69
    %s72 = sphi 0, %s71
    %s86 = sphi 0, %s72
    %s90 = sphi 0, %s90
    %s92 = sphi 0, %s90
    %s93 = sphi 0, %s92
    %s107 = sphi 0, %s93
    %s111 = sphi 0, %s111
    %s113 = sphi 0, %s111
    %s114 = sphi 0, %s113
    %s128 = sphi 0, %s114
    %s132 = sphi 0, %s132
    %s134 = sphi 0, %s132
    %s135 = sphi 0, %s134
    %s149 = sphi 0, %s135
    %s153 = sphi 0, %s153
    %s155 = sphi 0, %s153
    %s156 = sphi 0, %s155
    %s170 = sphi 0, %s156
    %s174 = sphi 0, %s174
    %s176 = sphi 0, %s174
    %s177 = sphi 0, %s176
    %s191 = sphi 0, %s177
    %s197 = sphi 0, %s199
    %s200 = sphi 0, %s197
    %s201 = sphi 0, %s200
    %s217 = sphi 0, %s201
  $region4: #{cgnet_forward.1} parent=0 // loop_header_branch
    %17 = sbr.rel (%p15) target = $region8
  $region5: #{cgnet_forward.1} parent=0 // loop_body
    %s19 = ssub.s32 %s14, 1
    %s20 = ssub.s32 %s14, 2
    %s21 = sadd.s32 %s14, 1
    %s22 = ssub.s32 %s14, %s21
    %p23 = scmp.eq.s32.totalorder %s22, 0
    %s25 = sadd.s32 %s24, 1
    %s26 = scalar_select %p23, %s24, %s25
    %p29 = pneg %p23
    %p30 = scmp.eq.s32.totalorder %s14, 1
    %p31 = por %p29, %p30
    %p32 = scmp.ne.s32.totalorder %s24, %s27
    %p33 = scmp.eq.s32.totalorder %s14, 0
    %p34 = por %p32, %p33
    %p35 = scmp.ne.s32.totalorder %s24, %s27
    %p36 = scmp.eq.s32.totalorder %s19, 1
    %p37 = por %p35, %p36
    %p38 = scmp.ne.s32.totalorder %s27, %s28
    %p39 = scmp.eq.s32.totalorder %s19, 0
    %p40 = por %p38, %p39
    %p41 = scmp.ne.s32.totalorder %s27, %s28
    %p42 = scmp.eq.s32.totalorder %s20, 1
    %p43 = por %p41, %p42
    %p45 = scmp.ne.s32.totalorder %s28, %s44
    %p46 = scmp.eq.s32.totalorder %s20, 0
    %p47 = por %p45, %p46
    %s49 = sadd.s32 %s48, 1
    %p52 = scmp.eq.s32.totalorder %s14, 1
    %p53 = scmp.ne.s32.totalorder %s48, %s50
    %p54 = scmp.eq.s32.totalorder %s14, 0
    %p55 = por %p53, %p54
    %p56 = scmp.ne.s32.totalorder %s48, %s50
    %p57 = scmp.eq.s32.totalorder %s19, 1
    %p58 = por %p56, %p57
    %p59 = scmp.ne.s32.totalorder %s50, %s51
    %p60 = scmp.eq.s32.totalorder %s19, 0
    %p61 = por %p59, %p60
    %p62 = scmp.ne.s32.totalorder %s50, %s51
    %p63 = scmp.eq.s32.totalorder %s20, 1
    %p64 = por %p62, %p63
    %p66 = scmp.ne.s32.totalorder %s51, %s65
    %p67 = scmp.eq.s32.totalorder %s20, 0
    %p68 = por %p66, %p67
    %s70 = sadd.s32 %s69, 1
    %p73 = scmp.eq.s32.totalorder %s14, 1
    %p74 = scmp.ne.s32.totalorder %s69, %s71
    %p75 = scmp.eq.s32.totalorder %s14, 0
    %p76 = por %p74, %p75
    %p77 = scmp.ne.s32.totalorder %s69, %s71
    %p78 = scmp.eq.s32.totalorder %s19, 1
    %p79 = por %p77, %p78
    %p80 = scmp.ne.s32.totalorder %s71, %s72
    %p81 = scmp.eq.s32.totalorder %s19, 0
    %p82 = por %p80, %p81
    %p83 = scmp.ne.s32.totalorder %s71, %s72
    %p84 = scmp.eq.s32.totalorder %s20, 1
    %p85 = por %p83, %p84
    %p87 = scmp.ne.s32.totalorder %s72, %s86
    %p88 = scmp.eq.s32.totalorder %s20, 0
    %p89 = por %p87, %p88
    %s91 = sadd.s32 %s90, 1
    %p94 = scmp.eq.s32.totalorder %s14, 1
    %p95 = scmp.ne.s32.totalorder %s90, %s92
    %p96 = scmp.eq.s32.totalorder %s14, 0
    %p97 = por %p95, %p96
    %p98 = scmp.ne.s32.totalorder %s90, %s92
    %p99 = scmp.eq.s32.totalorder %s19, 1
    %p100 = por %p98, %p99
    %p101 = scmp.ne.s32.totalorder %s92, %s93
    %p102 = scmp.eq.s32.totalorder %s19, 0
    %p103 = por %p101, %p102
    %p104 = scmp.ne.s32.totalorder %s92, %s93
    %p105 = scmp.eq.s32.totalorder %s20, 1
    %p106 = por %p104, %p105
    %p108 = scmp.ne.s32.totalorder %s93, %s107
    %p109 = scmp.eq.s32.totalorder %s20, 0
    %p110 = por %p108, %p109
    %s112 = sadd.s32 %s111, 1
    %p115 = scmp.eq.s32.totalorder %s14, 1
    %p116 = scmp.ne.s32.totalorder %s111, %s113
    %p117 = scmp.eq.s32.totalorder %s14, 0
    %p118 = por %p116, %p117
    %p119 = scmp.ne.s32.totalorder %s111, %s113
    %p120 = scmp.eq.s32.totalorder %s19, 1
    %p121 = por %p119, %p120
    %p122 = scmp.ne.s32.totalorder %s113, %s114
    %p123 = scmp.eq.s32.totalorder %s19, 0
    %p124 = por %p122, %p123
    %p125 = scmp.ne.s32.totalorder %s113, %s114
    %p126 = scmp.eq.s32.totalorder %s20, 1
    %p127 = por %p125, %p126
    %p129 = scmp.ne.s32.totalorder %s114, %s128
    %p130 = scmp.eq.s32.totalorder %s20, 0
    %p131 = por %p129, %p130
    %s133 = sadd.s32 %s132, 1
    %p136 = scmp.eq.s32.totalorder %s14, 1
    %p137 = scmp.ne.s32.totalorder %s132, %s134
    %p138 = scmp.eq.s32.totalorder %s14, 0
    %p139 = por %p137, %p138
    %p140 = scmp.ne.s32.totalorder %s132, %s134
    %p141 = scmp.eq.s32.totalorder %s19, 1
    %p142 = por %p140, %p141
    %p143 = scmp.ne.s32.totalorder %s134, %s135
    %p144 = scmp.eq.s32.totalorder %s19, 0
    %p145 = por %p143, %p144
    %p146 = scmp.ne.s32.totalorder %s134, %s135
    %p147 = scmp.eq.s32.totalorder %s20, 1
    %p148 = por %p146, %p147
    %p150 = scmp.ne.s32.totalorder %s135, %s149
    %p151 = scmp.eq.s32.totalorder %s20, 0
    %p152 = por %p150, %p151
    %s154 = sadd.s32 %s153, 1
    %p157 = scmp.eq.s32.totalorder %s14, 1
    %p158 = scmp.ne.s32.totalorder %s153, %s155
    %p159 = scmp.eq.s32.totalorder %s14, 0
    %p160 = por %p158, %p159
    %p161 = scmp.ne.s32.totalorder %s153, %s155
    %p162 = scmp.eq.s32.totalorder %s19, 1
    %p163 = por %p161, %p162
    %p164 = scmp.ne.s32.totalorder %s155, %s156
    %p165 = scmp.eq.s32.totalorder %s19, 0
    %p166 = por %p164, %p165
    %p167 = scmp.ne.s32.totalorder %s155, %s156
    %p168 = scmp.eq.s32.totalorder %s20, 1
    %p169 = por %p167, %p168
    %p171 = scmp.ne.s32.totalorder %s156, %s170
    %p172 = scmp.eq.s32.totalorder %s20, 0
    %p173 = por %p171, %p172
    %s175 = sadd.s32 %s174, 1
    %p178 = scmp.eq.s32.totalorder %s14, 1
    %p179 = scmp.ne.s32.totalorder %s174, %s176
    %p180 = scmp.eq.s32.totalorder %s14, 0
    %p181 = por %p179, %p180
    %p182 = scmp.ne.s32.totalorder %s174, %s176
    %p183 = scmp.eq.s32.totalorder %s19, 1
    %p184 = por %p182, %p183
    %p185 = scmp.ne.s32.totalorder %s176, %s177
    %p186 = scmp.eq.s32.totalorder %s19, 0
    %p187 = por %p185, %p186
    %p188 = scmp.ne.s32.totalorder %s176, %s177
    %p189 = scmp.eq.s32.totalorder %s20, 1
    %p190 = por %p188, %p189
    %p192 = scmp.ne.s32.totalorder %s177, %s191
    %p193 = scmp.eq.s32.totalorder %s20, 0
    %p194 = por %p192, %p193
    %s195 = ssub.s32 %s14, %s21
    %p196 = scmp.eq.s32.totalorder %s195, 0
    %s198 = sadd.s32 %s197, 1
    %s199 = scalar_select %p196, %s197, %s198
    %p202 = pneg %p196
    %p203 = scmp.eq.s32.totalorder %s14, 1
    %p204 = por %p202, %p203
    %p205 = scmp.ne.s32.totalorder %s197, %s200
    %p206 = scmp.eq.s32.totalorder %s14, 0
    %p207 = por %p205, %p206
    %p208 = scmp.ne.s32.totalorder %s197, %s200
    %p209 = scmp.eq.s32.totalorder %s19, 1
    %p210 = por %p208, %p209
    %p211 = scmp.ne.s32.totalorder %s200, %s201
    %p212 = scmp.eq.s32.totalorder %s19, 0
    %p213 = por %p211, %p212
    %p214 = scmp.ne.s32.totalorder %s200, %s201
    %p215 = scmp.eq.s32.totalorder %s20, 1
    %p216 = por %p214, %p215
    %p218 = scmp.ne.s32.totalorder %s201, %s217
    %p219 = scmp.eq.s32.totalorder %s20, 0
    %p220 = por %p218, %p219
    %p221 = scmp.le.s32.totalorder 1, %s14
    %p222 = scmp.lt.s32.totalorder %s14, 3
    %p223 = pnand %p221, %p222
    %p224 = pneg %p223
    // Predicated region
    $region9: #{cgnet_forward.1} parent=5 // pred_check
      _
    $region10: #{cgnet_forward.1} parent=5 // pred_check_branch
      %226 = sbr.rel (%p223) target = $region12
    $region11: #{cgnet_forward.1} parent=5 // pred_region
      %s227 = ssub.s32 %s14, 1
      // Predicated region
      $region13: #{cgnet_forward.1} parent=11 // pred_check
        %p228 = pneg %p61
      $region14: #{cgnet_forward.1} parent=11 // pred_check_branch
        %230 = sbr.rel (%p228) target = $region16
      $region15: #{cgnet_forward.1} parent=11 // pred_region
        _
      $region16: #{cgnet_forward.1} parent=11 // pred_fallthru
        _
      // Predicated region
      $region17: #{cgnet_forward.1} parent=11 // pred_check
        %p231 = pneg %p82
      $region18: #{cgnet_forward.1} parent=11 // pred_check_branch
        %233 = sbr.rel (%p231) target = $region20
      $region19: #{cgnet_forward.1} parent=11 // pred_region
        _
      $region20: #{cgnet_forward.1} parent=11 // pred_fallthru
        _
      // Predicated region
      $region21: #{cgnet_forward.1} parent=11 // pred_check
        %p234 = pneg %p103
      $region22: #{cgnet_forward.1} parent=11 // pred_check_branch
        %236 = sbr.rel (%p234) target = $region24
      $region23: #{cgnet_forward.1} parent=11 // pred_region
        _
      $region24: #{cgnet_forward.1} parent=11 // pred_fallthru
        _
      // Predicated region
      $region25: #{cgnet_forward.1} parent=11 // pred_check
        %p237 = pneg %p124
      $region26: #{cgnet_forward.1} parent=11 // pred_check_branch
        %239 = sbr.rel (%p237) target = $region28
      $region27: #{cgnet_forward.1} parent=11 // pred_region
        _
      $region28: #{cgnet_forward.1} parent=11 // pred_fallthru
        _
      // Predicated region
      $region29: #{cgnet_forward.1} parent=11 // pred_check
        %p240 = pneg %p145
      $region30: #{cgnet_forward.1} parent=11 // pred_check_branch
        %242 = sbr.rel (%p240) target = $region32
      $region31: #{cgnet_forward.1} parent=11 // pred_region
        _
      $region32: #{cgnet_forward.1} parent=11 // pred_fallthru
        _
      // Predicated region
      $region33: #{cgnet_forward.1} parent=11 // pred_check
        %p243 = pneg %p166
      $region34: #{cgnet_forward.1} parent=11 // pred_check_branch
        %245 = sbr.rel (%p243) target = $region36
      $region35: #{cgnet_forward.1} parent=11 // pred_region
        _
      $region36: #{cgnet_forward.1} parent=11 // pred_fallthru
        _
      // Predicated region
      $region37: #{cgnet_forward.1} parent=11 // pred_check
        %p246 = pneg %p187
      $region38: #{cgnet_forward.1} parent=11 // pred_check_branch
        %248 = sbr.rel (%p246) target = $region40
      $region39: #{cgnet_forward.1} parent=11 // pred_region
        _
      $region40: #{cgnet_forward.1} parent=11 // pred_fallthru
        _
    $region12: #{cgnet_forward.1} parent=5 // pred_fallthru
      _
    %p249 = scmp.lt.s32.totalorder %s14, 2
    // Predicated region
    $region41: #{cgnet_forward.1} parent=5 // pred_check
      %p250 = pneg %p249
    $region42: #{cgnet_forward.1} parent=5 // pred_check_branch
      %252 = sbr.rel (%p250) target = $region44
    $region43: #{cgnet_forward.1} parent=5 // pred_region
      // Predicated region
      $region45: #{cgnet_forward.1} parent=43 // pred_check
        %p253 = pneg %p34
      $region46: #{cgnet_forward.1} parent=43 // pred_check_branch
        %255 = sbr.rel (%p253) target = $region48
      $region47: #{cgnet_forward.1} parent=43 // pred_region
        %s256 = smul.u32 32, %s14
        %p257 = scmp.lt.s32.totalorder %s256, 63
        %s258 = scalar_select %p257, %s256, 63
        %s259 = smul.addr %s258, 8
        %s260 = scalar_lea.vmem %s0, %s259
        %s261 = smul.u32 32, %s14
      $region48: #{cgnet_forward.1} parent=43 // pred_fallthru
        _
    $region44: #{cgnet_forward.1} parent=5 // pred_fallthru
      _
    %p262 = scmp.le.s32.totalorder 1, %s14
    %p263 = scmp.lt.s32.totalorder %s14, 3
    %p264 = pnand %p262, %p263
    %p265 = pneg %p264
    // Predicated region
    $region49: #{cgnet_forward.1} parent=5 // pred_check
      _
    $region50: #{cgnet_forward.1} parent=5 // pred_check_branch
      %267 = sbr.rel (%p264) target = $region52
    $region51: #{cgnet_forward.1} parent=5 // pred_region
      %s268 = ssub.s32 %s14, 1
      %s269 = smul.u32 32, %s19
      %p270 = scmp.lt.s32.totalorder %s269, 63
      %s271 = scalar_select %p270, %s269, 63
      %s272 = smul.addr %s271, 8
      %s273 = scalar_lea.vmem %s0, %s272
      %p274 = pneg %p40
      %p275 = pneg %p37
      %p276 = pneg %p61
      %p277 = pneg %p58
      %p278 = pneg %p82
      %p279 = pneg %p79
      %p280 = pneg %p103
      %p281 = pneg %p100
      %p282 = pneg %p124
      %p283 = pneg %p121
      %p284 = pneg %p145
      %p285 = pneg %p142
      %p286 = pneg %p166
      %p287 = pneg %p163
      %p288 = pneg %p187
      %p289 = pneg %p184
      %p290 = pneg %p213
      %p291 = pneg %p210
      %s292 = smul.u32 32, %s19
      %p293 = scmp.lt.s32.totalorder %s292, 63
      %s294 = scalar_select %p293, %s292, 63
      %s295 = smul.addr %s294, 8
      %s296 = scalar_lea.vmem %s8, %s295
      %s297 = smul.u32 32, %s19
      %p298 = scmp.lt.s32.totalorder %s297, 63
      %s299 = scalar_select %p298, %s297, 63
      %s300 = smul.addr %s299, 8
      %s301 = scalar_lea.vmem %s0, %s300
      %s302 = smul.u32 32, %s19
      %s303 = smul.u32 32, %s19
      %p304 = scmp.lt.s32.totalorder %s303, 63
      %s305 = scalar_select %p304, %s303, 63
      %s306 = smul.addr %s305, 8
      %s307 = scalar_lea.vmem %s8, %s306
      %s308 = smul.u32 32, %s19
      %v310 = vld [vmem:[%s1] sm:$0xff]
      %v311 = vld [vmem:[%s1 + $0x8] sm:$0xff]
      %v312 = vld [vmem:[%s1 + $0x10] sm:$0xff]
      %v313 = vld [vmem:[%s1 + $0x18] sm:$0xff]
      %v314 = vld [vmem:[%s1 + $0x20] sm:$0xff]
      %v315 = vld [vmem:[%s1 + $0x28] sm:$0xff]
      %v316 = vld [vmem:[%s1 + $0x30] sm:$0xff]
      %v317 = vld [vmem:[%s1 + $0x38] sm:$0xff]
      %v318 = vld [vmem:[%s1 + $0x40] sm:$0xff]
      %v319 = vld [vmem:[%s1 + $0x48] sm:$0xff]
      %v320 = vld [vmem:[%s1 + $0x50] sm:$0xff]
      %v321 = vld [vmem:[%s1 + $0x58] sm:$0xff]
      %v322 = vld [vmem:[%s1 + $0x60] sm:$0xff]
      %v323 = vld [vmem:[%s1 + $0x68] sm:$0xff]
      %v324 = vld [vmem:[%s1 + $0x70] sm:$0xff]
      %v325 = vld [vmem:[%s1 + $0x78] sm:$0xff]
      %v326 = vld [vmem:[%s1 + $0x80] sm:$0xff]
      %v327 = vld [vmem:[%s1 + $0x88] sm:$0xff]
      %v328 = vld [vmem:[%s1 + $0x90] sm:$0xff]
      %v329 = vld [vmem:[%s1 + $0x98] sm:$0xff]
      %v330 = vld [vmem:[%s1 + $0xa0] sm:$0xff]
      %v331 = vld [vmem:[%s1 + $0xa8] sm:$0xff]
      %v332 = vld [vmem:[%s1 + $0xb0] sm:$0xff]
      %v333 = vld [vmem:[%s1 + $0xb8] sm:$0xff]
      %v334 = vld [vmem:[%s1 + $0xc0] sm:$0xff]
      %v335 = vld [vmem:[%s1 + $0xc8] sm:$0xff]
      %v336 = vld [vmem:[%s1 + $0xd0] sm:$0xff]
      %v337 = vld [vmem:[%s1 + $0xd8] sm:$0xff]
      %v338 = vld [vmem:[%s1 + $0xe0] sm:$0xff]
      %v339 = vld [vmem:[%s1 + $0xe8] sm:$0xff]
      %v340 = vld [vmem:[%s1 + $0xf0] sm:$0xff]
      %v341 = vld [vmem:[%s1 + $0xf8] sm:$0xff]
      %v342 = vld [vmem:[%s301] sm:$0xff]
      %v343 = vld [vmem:[%s301 + $0x8] sm:$0xff]
      %v344 = vld [vmem:[%s301 + $0x10] sm:$0xff]
      %v345 = vld [vmem:[%s301 + $0x18] sm:$0xff]
      %v346 = vld [vmem:[%s301 + $0x20] sm:$0xff]
      %v347 = vld [vmem:[%s301 + $0x28] sm:$0xff]
      %v348 = vld [vmem:[%s301 + $0x30] sm:$0xff]
      %v349 = vld [vmem:[%s301 + $0x38] sm:$0xff]
      %v350 = vld [vmem:[%s301 + $0x40] sm:$0xff]
      %v351 = vld [vmem:[%s301 + $0x48] sm:$0xff]
      %v352 = vld [vmem:[%s301 + $0x50] sm:$0xff]
      %v353 = vld [vmem:[%s301 + $0x58] sm:$0xff]
      %v354 = vld [vmem:[%s301 + $0x60] sm:$0xff]
      %v355 = vld [vmem:[%s301 + $0x68] sm:$0xff]
      %v356 = vld [vmem:[%s301 + $0x70] sm:$0xff]
      %v357 = vld [vmem:[%s301 + $0x78] sm:$0xff]
      %v358 = vld [vmem:[%s301 + $0x80] sm:$0xff]
      %v359 = vld [vmem:[%s301 + $0x88] sm:$0xff]
      %v360 = vld [vmem:[%s301 + $0x90] sm:$0xff]
      %v361 = vld [vmem:[%s301 + $0x98] sm:$0xff]
      %v362 = vld [vmem:[%s301 + $0xa0] sm:$0xff]
      %v363 = vld [vmem:[%s301 + $0xa8] sm:$0xff]
      %v364 = vld [vmem:[%s301 + $0xb0] sm:$0xff]
      %v365 = vld [vmem:[%s301 + $0xb8] sm:$0xff]
      %v366 = vld [vmem:[%s301 + $0xc0] sm:$0xff]
      %v367 = vld [vmem:[%s301 + $0xc8] sm:$0xff]
      %v368 = vld [vmem:[%s301 + $0xd0] sm:$0xff]
      %v369 = vld [vmem:[%s301 + $0xd8] sm:$0xff]
      %v370 = vld [vmem:[%s301 + $0xe0] sm:$0xff]
      %v371 = vld [vmem:[%s301 + $0xe8] sm:$0xff]
      %v372 = vld [vmem:[%s301 + $0xf0] sm:$0xff]
      %v373 = vld [vmem:[%s301 + $0xf8] sm:$0xff]
      %v374 = vrot.slane %v342, 7
      %v375 = vrot.slane %v343, 7
      %v376 = vrot.slane %v344, 7
      %v377 = vrot.slane %v345, 7
      %v378 = vrot.slane %v346, 7
      %v379 = vrot.slane %v347, 7
      %v380 = vrot.slane %v348, 7
      %v381 = vrot.slane %v349, 7
      %v382 = vrot.slane %v350, 7
      %v383 = vrot.slane %v351, 7
      %v384 = vrot.slane %v352, 7
      %v385 = vrot.slane %v353, 7
      %v386 = vrot.slane %v354, 7
      %v387 = vrot.slane %v355, 7
      %v388 = vrot.slane %v356, 7
      %v389 = vrot.slane %v357, 7
      %v390 = vrot.slane %v358, 7
      %v391 = vrot.slane %v359, 7
      %v392 = vrot.slane %v360, 7
      %v393 = vrot.slane %v361, 7
      %v394 = vrot.slane %v362, 7
      %v395 = vrot.slane %v363, 7
      %v396 = vrot.slane %v364, 7
      %v397 = vrot.slane %v365, 7
      %v398 = vrot.slane %v366, 7
      %v399 = vrot.slane %v367, 7
      %v400 = vrot.slane %v368, 7
      %v401 = vrot.slane %v369, 7
      %v402 = vrot.slane %v370, 7
      %v403 = vrot.slane %v371, 7
      %v404 = vrot.slane %v372, 7
      %v405 = vrot.slane %v373, 7
      %v406 = vlaneseq
      %v407 = vshrl.u32 %v406, 7
      %vm408 = vcmp.lt.s32.totalorder %v407, 1
      %v409 = vsel %vm408, %v404, %v405
      %v410 = vsel %vm408, %v403, %v404
      %v411 = vsel %vm408, %v402, %v403
      %v412 = vsel %vm408, %v401, %v402
      %v413 = vsel %vm408, %v400, %v401
      %v414 = vsel %vm408, %v399, %v400
      %v415 = vsel %vm408, %v398, %v399
      %v416 = vsel %vm408, %v397, %v398
      %v417 = vsel %vm408, %v396, %v397
      %v418 = vsel %vm408, %v395, %v396
      %v419 = vsel %vm408, %v394, %v395
      %v420 = vsel %vm408, %v393, %v394
      %v421 = vsel %vm408, %v392, %v393
      %v422 = vsel %vm408, %v391, %v392
      %v423 = vsel %vm408, %v390, %v391
      %v424 = vsel %vm408, %v389, %v390
      %v425 = vsel %vm408, %v388, %v389
      %v426 = vsel %vm408, %v387, %v388
      %v427 = vsel %vm408, %v386, %v387
      %v428 = vsel %vm408, %v385, %v386
      %v429 = vsel %vm408, %v384, %v385
      %v430 = vsel %vm408, %v383, %v384
      %v431 = vsel %vm408, %v382, %v383
      %v432 = vsel %vm408, %v381, %v382
      %v433 = vsel %vm408, %v380, %v381
      %v434 = vsel %vm408, %v379, %v380
      %v435 = vsel %vm408, %v378, %v379
      %v436 = vsel %vm408, %v377, %v378
      %v437 = vsel %vm408, %v376, %v377
      %v438 = vsel %vm408, %v375, %v376
      %v439 = vsel %vm408, %v374, %v375
      %v440 = vsel %vm408, %v405, %v374
      %442 = vset.pattern.permute.xlu0 0
      %443 = vperm.xlu0 %442, %v310
      %v444 = vpop.permute.xlu0 %443
      %447 = vset.pattern.permute.xlu0 0
      %448 = vperm.xlu0 %447, %v311
      %v449 = vpop.permute.xlu0 %448
      %452 = vset.pattern.permute.xlu0 0
      %453 = vperm.xlu0 %452, %v312
      %v454 = vpop.permute.xlu0 %453
      %457 = vset.pattern.permute.xlu0 0
      %458 = vperm.xlu0 %457, %v313
      %v459 = vpop.permute.xlu0 %458
      %462 = vset.pattern.permute.xlu0 0
      %463 = vperm.xlu0 %462, %v314
      %v464 = vpop.permute.xlu0 %463
      %467 = vset.pattern.permute.xlu0 0
      %468 = vperm.xlu0 %467, %v315
      %v469 = vpop.permute.xlu0 %468
      %472 = vset.pattern.permute.xlu0 0
      %473 = vperm.xlu0 %472, %v316
      %v474 = vpop.permute.xlu0 %473
      %477 = vset.pattern.permute.xlu0 0
      %478 = vperm.xlu0 %477, %v317
      %v479 = vpop.permute.xlu0 %478
      %482 = vset.pattern.permute.xlu0 0
      %483 = vperm.xlu0 %482, %v318
      %v484 = vpop.permute.xlu0 %483
      %487 = vset.pattern.permute.xlu0 0
      %488 = vperm.xlu0 %487, %v319
      %v489 = vpop.permute.xlu0 %488
      %492 = vset.pattern.permute.xlu0 0
      %493 = vperm.xlu0 %492, %v320
      %v494 = vpop.permute.xlu0 %493
      %497 = vset.pattern.permute.xlu0 0
      %498 = vperm.xlu0 %497, %v321
      %v499 = vpop.permute.xlu0 %498
      %502 = vset.pattern.permute.xlu0 0
      %503 = vperm.xlu0 %502, %v322
      %v504 = vpop.permute.xlu0 %503
      %507 = vset.pattern.permute.xlu0 0
      %508 = vperm.xlu0 %507, %v323
      %v509 = vpop.permute.xlu0 %508
      %512 = vset.pattern.permute.xlu0 0
      %513 = vperm.xlu0 %512, %v324
      %v514 = vpop.permute.xlu0 %513
      %517 = vset.pattern.permute.xlu0 0
      %518 = vperm.xlu0 %517, %v325
      %v519 = vpop.permute.xlu0 %518
      %522 = vset.pattern.permute.xlu0 0
      %523 = vperm.xlu0 %522, %v326
      %v524 = vpop.permute.xlu0 %523
      %527 = vset.pattern.permute.xlu0 0
      %528 = vperm.xlu0 %527, %v327
      %v529 = vpop.permute.xlu0 %528
      %532 = vset.pattern.permute.xlu0 0
      %533 = vperm.xlu0 %532, %v328
      %v534 = vpop.permute.xlu0 %533
      %537 = vset.pattern.permute.xlu0 0
      %538 = vperm.xlu0 %537, %v329
      %v539 = vpop.permute.xlu0 %538
      %542 = vset.pattern.permute.xlu0 0
      %543 = vperm.xlu0 %542, %v330
      %v544 = vpop.permute.xlu0 %543
      %547 = vset.pattern.permute.xlu0 0
      %548 = vperm.xlu0 %547, %v331
      %v549 = vpop.permute.xlu0 %548
      %552 = vset.pattern.permute.xlu0 0
      %553 = vperm.xlu0 %552, %v332
      %v554 = vpop.permute.xlu0 %553
      %557 = vset.pattern.permute.xlu0 0
      %558 = vperm.xlu0 %557, %v333
      %v559 = vpop.permute.xlu0 %558
      %562 = vset.pattern.permute.xlu0 0
      %563 = vperm.xlu0 %562, %v334
      %v564 = vpop.permute.xlu0 %563
      %567 = vset.pattern.permute.xlu0 0
      %568 = vperm.xlu0 %567, %v335
      %v569 = vpop.permute.xlu0 %568
      %572 = vset.pattern.permute.xlu0 0
      %573 = vperm.xlu0 %572, %v336
      %v574 = vpop.permute.xlu0 %573
      %577 = vset.pattern.permute.xlu0 0
      %578 = vperm.xlu0 %577, %v337
      %v579 = vpop.permute.xlu0 %578
      %582 = vset.pattern.permute.xlu0 0
      %583 = vperm.xlu0 %582, %v338
      %v584 = vpop.permute.xlu0 %583
      %587 = vset.pattern.permute.xlu0 0
      %588 = vperm.xlu0 %587, %v339
      %v589 = vpop.permute.xlu0 %588
      %592 = vset.pattern.permute.xlu0 0
      %593 = vperm.xlu0 %592, %v340
      %v594 = vpop.permute.xlu0 %593
      %597 = vset.pattern.permute.xlu0 0
      %598 = vperm.xlu0 %597, %v341
      %v599 = vpop.permute.xlu0 %598
      %v601 = vmul.f32 %v410, %v444
      %v602 = vmul.f32 %v409, %v449
      %v603 = vmul.f32 %v440, %v454
      %v604 = vmul.f32 %v439, %v459
      %v605 = vmul.f32 %v438, %v464
      %v606 = vmul.f32 %v437, %v469
      %v607 = vmul.f32 %v436, %v474
      %v608 = vmul.f32 %v435, %v479
      %v609 = vmul.f32 %v434, %v484
      %v610 = vmul.f32 %v433, %v489
      %v611 = vmul.f32 %v432, %v494
      %v612 = vmul.f32 %v431, %v499
      %v613 = vmul.f32 %v430, %v504
      %v614 = vmul.f32 %v429, %v509
      %v615 = vmul.f32 %v428, %v514
      %v616 = vmul.f32 %v427, %v519
      %v617 = vmul.f32 %v426, %v524
      %v618 = vmul.f32 %v425, %v529
      %v619 = vmul.f32 %v424, %v534
      %v620 = vmul.f32 %v423, %v539
      %v621 = vmul.f32 %v422, %v544
      %v622 = vmul.f32 %v421, %v549
      %v623 = vmul.f32 %v420, %v554
      %v624 = vmul.f32 %v419, %v559
      %v625 = vmul.f32 %v418, %v564
      %v626 = vmul.f32 %v417, %v569
      %v627 = vmul.f32 %v416, %v574
      %v628 = vmul.f32 %v415, %v579
      %v629 = vmul.f32 %v414, %v584
      %v630 = vmul.f32 %v413, %v589
      %v631 = vmul.f32 %v412, %v594
      %v632 = vmul.f32 %v411, %v599
      %v633 = vpack.c.bf16 %v602, %v601
      %v634 = vpack.c.bf16 %v604, %v603
      %v635 = vpack.c.bf16 %v606, %v605
      %v636 = vpack.c.bf16 %v608, %v607
      %v637 = vpack.c.bf16 %v610, %v609
      %v638 = vpack.c.bf16 %v612, %v611
      %v639 = vpack.c.bf16 %v614, %v613
      %v640 = vpack.c.bf16 %v616, %v615
      %v641 = vpack.c.bf16 %v618, %v617
      %v642 = vpack.c.bf16 %v620, %v619
      %v643 = vpack.c.bf16 %v622, %v621
      %v644 = vpack.c.bf16 %v624, %v623
      %v645 = vpack.c.bf16 %v626, %v625
      %v646 = vpack.c.bf16 %v628, %v627
      %v647 = vpack.c.bf16 %v630, %v629
      %v648 = vpack.c.bf16 %v632, %v631
      %v649 = vld [vmem:[%s2] sm:$0xf]
      %v650 = vld [vmem:[%s2 + $0x4] sm:$0xf]
      %v651 = vld [vmem:[%s2 + $0x8] sm:$0xf]
      %v652 = vld [vmem:[%s2 + $0xc] sm:$0xf]
      %v653 = vld [vmem:[%s2 + $0x10] sm:$0xf]
      %v654 = vld [vmem:[%s2 + $0x14] sm:$0xf]
      %v655 = vld [vmem:[%s2 + $0x18] sm:$0xf]
      %v656 = vld [vmem:[%s2 + $0x1c] sm:$0xf]
      %657 = vset.pattern.permute.xlu0 1
      %658 = vperm.xlu0 %657, %v310
      %v659 = vpop.permute.xlu0 %658
      %661 = vset.pattern.permute.xlu0 1
      %662 = vperm.xlu0 %661, %v311
      %v663 = vpop.permute.xlu0 %662
      %665 = vset.pattern.permute.xlu0 1
      %666 = vperm.xlu0 %665, %v312
      %v667 = vpop.permute.xlu0 %666
      %669 = vset.pattern.permute.xlu0 1
      %670 = vperm.xlu0 %669, %v313
      %v671 = vpop.permute.xlu0 %670
      %673 = vset.pattern.permute.xlu0 1
      %674 = vperm.xlu0 %673, %v314
      %v675 = vpop.permute.xlu0 %674
      %677 = vset.pattern.permute.xlu0 1
      %678 = vperm.xlu0 %677, %v315
      %v679 = vpop.permute.xlu0 %678
      %681 = vset.pattern.permute.xlu0 1
      %682 = vperm.xlu0 %681, %v316
      %v683 = vpop.permute.xlu0 %682
      %685 = vset.pattern.permute.xlu0 1
      %686 = vperm.xlu0 %685, %v317
      %v687 = vpop.permute.xlu0 %686
      %689 = vset.pattern.permute.xlu0 1
      %690 = vperm.xlu0 %689, %v318
      %v691 = vpop.permute.xlu0 %690
      %693 = vset.pattern.permute.xlu0 1
      %694 = vperm.xlu0 %693, %v319
      %v695 = vpop.permute.xlu0 %694
      %697 = vset.pattern.permute.xlu0 1
      %698 = vperm.xlu0 %697, %v320
      %v699 = vpop.permute.xlu0 %698
      %701 = vset.pattern.permute.xlu0 1
      %702 = vperm.xlu0 %701, %v321
      %v703 = vpop.permute.xlu0 %702
      %705 = vset.pattern.permute.xlu0 1
      %706 = vperm.xlu0 %705, %v322
      %v707 = vpop.permute.xlu0 %706
      %709 = vset.pattern.permute.xlu0 1
      %710 = vperm.xlu0 %709, %v323
      %v711 = vpop.permute.xlu0 %710
      %713 = vset.pattern.permute.xlu0 1
      %714 = vperm.xlu0 %713, %v324
      %v715 = vpop.permute.xlu0 %714
      %717 = vset.pattern.permute.xlu0 1
      %718 = vperm.xlu0 %717, %v325
      %v719 = vpop.permute.xlu0 %718
      %721 = vset.pattern.permute.xlu0 1
      %722 = vperm.xlu0 %721, %v326
      %v723 = vpop.permute.xlu0 %722
      %725 = vset.pattern.permute.xlu0 1
      %726 = vperm.xlu0 %725, %v327
      %v727 = vpop.permute.xlu0 %726
      %729 = vset.pattern.permute.xlu0 1
      %730 = vperm.xlu0 %729, %v328
      %v731 = vpop.permute.xlu0 %730
      %733 = vset.pattern.permute.xlu0 1
      %734 = vperm.xlu0 %733, %v329
      %v735 = vpop.permute.xlu0 %734
      %737 = vset.pattern.permute.xlu0 1
      %738 = vperm.xlu0 %737, %v330
      %v739 = vpop.permute.xlu0 %738
      %741 = vset.pattern.permute.xlu0 1
      %742 = vperm.xlu0 %741, %v331
      %v743 = vpop.permute.xlu0 %742
      %745 = vset.pattern.permute.xlu0 1
      %746 = vperm.xlu0 %745, %v332
      %v747 = vpop.permute.xlu0 %746
      %749 = vset.pattern.permute.xlu0 1
      %750 = vperm.xlu0 %749, %v333
      %v751 = vpop.permute.xlu0 %750
      %753 = vset.pattern.permute.xlu0 1
      %754 = vperm.xlu0 %753, %v334
      %v755 = vpop.permute.xlu0 %754
      %757 = vset.pattern.permute.xlu0 1
      %758 = vperm.xlu0 %757, %v335
      %v759 = vpop.permute.xlu0 %758
      %761 = vset.pattern.permute.xlu0 1
      %762 = vperm.xlu0 %761, %v336
      %v763 = vpop.permute.xlu0 %762
      %765 = vset.pattern.permute.xlu0 1
      %766 = vperm.xlu0 %765, %v337
      %v767 = vpop.permute.xlu0 %766
      %769 = vset.pattern.permute.xlu0 1
      %770 = vperm.xlu0 %769, %v338
      %v771 = vpop.permute.xlu0 %770
      %773 = vset.pattern.permute.xlu0 1
      %774 = vperm.xlu0 %773, %v339
      %v775 = vpop.permute.xlu0 %774
      %777 = vset.pattern.permute.xlu0 1
      %778 = vperm.xlu0 %777, %v340
      %v779 = vpop.permute.xlu0 %778
      %781 = vset.pattern.permute.xlu0 1
      %782 = vperm.xlu0 %781, %v341
      %v783 = vpop.permute.xlu0 %782
      %v785 = vmul.f32 %v372, %v659
      %v786 = vmul.f32 %v373, %v663
      %v787 = vmul.f32 %v342, %v667
      %v788 = vmul.f32 %v343, %v671
      %v789 = vmul.f32 %v344, %v675
      %v790 = vmul.f32 %v345, %v679
      %v791 = vmul.f32 %v346, %v683
      %v792 = vmul.f32 %v347, %v687
      %v793 = vmul.f32 %v348, %v691
      %v794 = vmul.f32 %v349, %v695
      %v795 = vmul.f32 %v350, %v699
      %v796 = vmul.f32 %v351, %v703
      %v797 = vmul.f32 %v352, %v707
      %v798 = vmul.f32 %v353, %v711
      %v799 = vmul.f32 %v354, %v715
      %v800 = vmul.f32 %v355, %v719
      %v801 = vmul.f32 %v356, %v723
      %v802 = vmul.f32 %v357, %v727
      %v803 = vmul.f32 %v358, %v731
      %v804 = vmul.f32 %v359, %v735
      %v805 = vmul.f32 %v360, %v739
      %v806 = vmul.f32 %v361, %v743
      %v807 = vmul.f32 %v362, %v747
      %v808 = vmul.f32 %v363, %v751
      %v809 = vmul.f32 %v364, %v755
      %v810 = vmul.f32 %v365, %v759
      %v811 = vmul.f32 %v366, %v763
      %v812 = vmul.f32 %v367, %v767
      %v813 = vmul.f32 %v368, %v771
      %v814 = vmul.f32 %v369, %v775
      %v815 = vmul.f32 %v370, %v779
      %v816 = vmul.f32 %v371, %v783
      %v817 = vpack.c.bf16 %v786, %v785
      %v818 = vpack.c.bf16 %v788, %v787
      %v819 = vpack.c.bf16 %v790, %v789
      %v820 = vpack.c.bf16 %v792, %v791
      %v821 = vpack.c.bf16 %v794, %v793
      %v822 = vpack.c.bf16 %v796, %v795
      %v823 = vpack.c.bf16 %v798, %v797
      %v824 = vpack.c.bf16 %v800, %v799
      %v825 = vpack.c.bf16 %v802, %v801
      %v826 = vpack.c.bf16 %v804, %v803
      %v827 = vpack.c.bf16 %v806, %v805
      %v828 = vpack.c.bf16 %v808, %v807
      %v829 = vpack.c.bf16 %v810, %v809
      %v830 = vpack.c.bf16 %v812, %v811
      %v831 = vpack.c.bf16 %v814, %v813
      %v832 = vpack.c.bf16 %v816, %v815
      %v833 = vld [vmem:[%s2 + $0x20] sm:$0xf]
      %v834 = vld [vmem:[%s2 + $0x24] sm:$0xf]
      %v835 = vld [vmem:[%s2 + $0x28] sm:$0xf]
      %v836 = vld [vmem:[%s2 + $0x2c] sm:$0xf]
      %v837 = vld [vmem:[%s2 + $0x30] sm:$0xf]
      %v838 = vld [vmem:[%s2 + $0x34] sm:$0xf]
      %v839 = vld [vmem:[%s2 + $0x38] sm:$0xf]
      %v840 = vld [vmem:[%s2 + $0x3c] sm:$0xf]
      %v849 = vunpack.c.l.b16 %v833
      %v850 = vunpack.c.l.b16 %v834
      %v851 = vunpack.c.l.b16 %v835
      %v852 = vunpack.c.l.b16 %v836
      %v853 = vunpack.c.l.b16 %v837
      %v854 = vunpack.c.l.b16 %v838
      %v855 = vunpack.c.l.b16 %v839
      %v856 = vunpack.c.l.b16 %v840
      %v857 = vpack.c.b16 %v850, %v849
      %v858 = vpack.c.b16 %v852, %v851
      %v859 = vpack.c.b16 %v854, %v853
      %v860 = vpack.c.b16 %v856, %v855
      %vm865 = vcmask 523264
      %v867 = vsel %vm865, %v817, 0
      %v870 = vsel %vm865, %v818, 0
      %v873 = vsel %vm865, %v819, 0
      %v876 = vsel %vm865, %v820, 0
      %v879 = vsel %vm865, %v821, 0
      %v882 = vsel %vm865, %v822, 0
      %v885 = vsel %vm865, %v823, 0
      %v888 = vsel %vm865, %v824, 0
      %v891 = vsel %vm865, %v825, 0
      %v894 = vsel %vm865, %v826, 0
      %v897 = vsel %vm865, %v827, 0
      %v900 = vsel %vm865, %v828, 0
      %v903 = vsel %vm865, %v829, 0
      %v906 = vsel %vm865, %v830, 0
      %v909 = vsel %vm865, %v831, 0
      %v912 = vsel %vm865, %v832, 0
      %914 = vmatpush.bf16.msra.mxu0 0
      %915 = vmatpush.bf16.msra.mxu0 0
      %916 = vmatpush.bf16.msra.mxu0 0
      %917 = vmatpush.bf16.msra.mxu0 0
      %918 = vmatpush.bf16.msra.mxu0 %v860
      %919 = vmatpush.bf16.msra.mxu0 %v859
      %920 = vmatpush.bf16.msra.mxu0 %v858
      %921 = vmatpush.bf16.msra.mxu0 %v857
      %922 = vmatmul.bf16.gmra.mxu0 %v867
      %v923 = vpop.f32.mrf.mxu0
      %v924 = vadd.f32 0.0, %v923
      %v925 = vpop.f32.mrf.mxu0
      %v926 = vadd.f32 0.0, %v925
      %927 = vmatmul.bf16.gmra.mxu0 %v870
      %v928 = vpop.f32.mrf.mxu0
      %v929 = vadd.f32 0.0, %v928
      %v930 = vpop.f32.mrf.mxu0
      %v931 = vadd.f32 0.0, %v930
      %932 = vmatmul.bf16.gmra.mxu0 %v873
      %v933 = vpop.f32.mrf.mxu0
      %v934 = vadd.f32 0.0, %v933
      %v935 = vpop.f32.mrf.mxu0
      %v936 = vadd.f32 0.0, %v935
      %937 = vmatmul.bf16.gmra.mxu0 %v876
      %v938 = vpop.f32.mrf.mxu0
      %v939 = vadd.f32 0.0, %v938
      %v940 = vpop.f32.mrf.mxu0
      %v941 = vadd.f32 0.0, %v940
      %942 = vmatmul.bf16.gmra.mxu0 %v879
      %v943 = vpop.f32.mrf.mxu0
      %v944 = vadd.f32 0.0, %v943
      %v945 = vpop.f32.mrf.mxu0
      %v946 = vadd.f32 0.0, %v945
      %947 = vmatmul.bf16.gmra.mxu0 %v882
      %v948 = vpop.f32.mrf.mxu0
      %v949 = vadd.f32 0.0, %v948
      %v950 = vpop.f32.mrf.mxu0
      %v951 = vadd.f32 0.0, %v950
      %952 = vmatmul.bf16.gmra.mxu0 %v885
      %v953 = vpop.f32.mrf.mxu0
      %v954 = vadd.f32 0.0, %v953
      %v955 = vpop.f32.mrf.mxu0
      %v956 = vadd.f32 0.0, %v955
      %957 = vmatmul.bf16.gmra.mxu0 %v888
      %v958 = vpop.f32.mrf.mxu0
      %v959 = vadd.f32 0.0, %v958
      %v960 = vpop.f32.mrf.mxu0
      %v961 = vadd.f32 0.0, %v960
      %962 = vmatmul.bf16.gmra.mxu0 %v891
      %v963 = vpop.f32.mrf.mxu0
      %v964 = vadd.f32 0.0, %v963
      %v965 = vpop.f32.mrf.mxu0
      %v966 = vadd.f32 0.0, %v965
      %967 = vmatmul.bf16.gmra.mxu0 %v894
      %v968 = vpop.f32.mrf.mxu0
      %v969 = vadd.f32 0.0, %v968
      %v970 = vpop.f32.mrf.mxu0
      %v971 = vadd.f32 0.0, %v970
      %972 = vmatmul.bf16.gmra.mxu0 %v897
      %v973 = vpop.f32.mrf.mxu0
      %v974 = vadd.f32 0.0, %v973
      %v975 = vpop.f32.mrf.mxu0
      %v976 = vadd.f32 0.0, %v975
      %977 = vmatmul.bf16.gmra.mxu0 %v900
      %v978 = vpop.f32.mrf.mxu0
      %v979 = vadd.f32 0.0, %v978
      %v980 = vpop.f32.mrf.mxu0
      %v981 = vadd.f32 0.0, %v980
      %982 = vmatmul.bf16.gmra.mxu0 %v903
      %v983 = vpop.f32.mrf.mxu0
      %v984 = vadd.f32 0.0, %v983
      %v985 = vpop.f32.mrf.mxu0
      %v986 = vadd.f32 0.0, %v985
      %987 = vmatmul.bf16.gmra.mxu0 %v906
      %v988 = vpop.f32.mrf.mxu0
      %v989 = vadd.f32 0.0, %v988
      %v990 = vpop.f32.mrf.mxu0
      %v991 = vadd.f32 0.0, %v990
      %992 = vmatmul.bf16.gmra.mxu0 %v909
      %v993 = vpop.f32.mrf.mxu0
      %v994 = vadd.f32 0.0, %v993
      %v995 = vpop.f32.mrf.mxu0
      %v996 = vadd.f32 0.0, %v995
      %997 = vmatmul.bf16.gmra.mxu0 %v912
      %v998 = vpop.f32.mrf.mxu0
      %v999 = vadd.f32 0.0, %v998
      %v1000 = vpop.f32.mrf.mxu0
      %v1001 = vadd.f32 0.0, %v1000
      %1002 = vdwg.mxu0
      %v1011 = vunpack.c.l.b16 %v649
      %v1012 = vunpack.c.l.b16 %v650
      %v1013 = vunpack.c.l.b16 %v651
      %v1014 = vunpack.c.l.b16 %v652
      %v1015 = vunpack.c.l.b16 %v653
      %v1016 = vunpack.c.l.b16 %v654
      %v1017 = vunpack.c.l.b16 %v655
      %v1018 = vunpack.c.l.b16 %v656
      %v1019 = vpack.c.b16 %v1012, %v1011
      %v1020 = vpack.c.b16 %v1014, %v1013
      %v1021 = vpack.c.b16 %v1016, %v1015
      %v1022 = vpack.c.b16 %v1018, %v1017
      %v1028 = vsel %vm865, %v633, 0
      %v1031 = vsel %vm865, %v634, 0
      %v1034 = vsel %vm865, %v635, 0
      %v1037 = vsel %vm865, %v636, 0
      %v1040 = vsel %vm865, %v637, 0
      %v1043 = vsel %vm865, %v638, 0
      %v1046 = vsel %vm865, %v639, 0
      %v1049 = vsel %vm865, %v640, 0
      %v1052 = vsel %vm865, %v641, 0
      %v1055 = vsel %vm865, %v642, 0
      %v1058 = vsel %vm865, %v643, 0
      %v1061 = vsel %vm865, %v644, 0
      %v1064 = vsel %vm865, %v645, 0
      %v1067 = vsel %vm865, %v646, 0
      %v1070 = vsel %vm865, %v647, 0
      %v1073 = vsel %vm865, %v648, 0
      %1075 = vmatpush.bf16.msra.mxu0 0
      %1076 = vmatpush.bf16.msra.mxu0 0
      %1077 = vmatpush.bf16.msra.mxu0 0
      %1078 = vmatpush.bf16.msra.mxu0 0
      %1079 = vmatpush.bf16.msra.mxu0 %v1022
      %1080 = vmatpush.bf16.msra.mxu0 %v1021
      %1081 = vmatpush.bf16.msra.mxu0 %v1020
      %1082 = vmatpush.bf16.msra.mxu0 %v1019
      %1083 = vmatmul.bf16.gmra.mxu0 %v1028
      %v1084 = vpop.f32.mrf.mxu0
      %v1085 = vadd.f32 %v924, %v1084
      %v1086 = vpop.f32.mrf.mxu0
      %v1087 = vadd.f32 %v926, %v1086
      %1088 = vmatmul.bf16.gmra.mxu0 %v1031
      %v1089 = vpop.f32.mrf.mxu0
      %v1090 = vadd.f32 %v929, %v1089
      %v1091 = vpop.f32.mrf.mxu0
      %v1092 = vadd.f32 %v931, %v1091
      %1093 = vmatmul.bf16.gmra.mxu0 %v1034
      %v1094 = vpop.f32.mrf.mxu0
      %v1095 = vadd.f32 %v934, %v1094
      %v1096 = vpop.f32.mrf.mxu0
      %v1097 = vadd.f32 %v936, %v1096
      %1098 = vmatmul.bf16.gmra.mxu0 %v1037
      %v1099 = vpop.f32.mrf.mxu0
      %v1100 = vadd.f32 %v939, %v1099
      %v1101 = vpop.f32.mrf.mxu0
      %v1102 = vadd.f32 %v941, %v1101
      %1103 = vmatmul.bf16.gmra.mxu0 %v1040
      %v1104 = vpop.f32.mrf.mxu0
      %v1105 = vadd.f32 %v944, %v1104
      %v1106 = vpop.f32.mrf.mxu0
      %v1107 = vadd.f32 %v946, %v1106
      %1108 = vmatmul.bf16.gmra.mxu0 %v1043
      %v1109 = vpop.f32.mrf.mxu0
      %v1110 = vadd.f32 %v949, %v1109
      %v1111 = vpop.f32.mrf.mxu0
      %v1112 = vadd.f32 %v951, %v1111
      %1113 = vmatmul.bf16.gmra.mxu0 %v1046
      %v1114 = vpop.f32.mrf.mxu0
      %v1115 = vadd.f32 %v954, %v1114
      %v1116 = vpop.f32.mrf.mxu0
      %v1117 = vadd.f32 %v956, %v1116
      %1118 = vmatmul.bf16.gmra.mxu0 %v1049
      %v1119 = vpop.f32.mrf.mxu0
      %v1120 = vadd.f32 %v959, %v1119
      %v1121 = vpop.f32.mrf.mxu0
      %v1122 = vadd.f32 %v961, %v1121
      %1123 = vmatmul.bf16.gmra.mxu0 %v1052
      %v1124 = vpop.f32.mrf.mxu0
      %v1125 = vadd.f32 %v964, %v1124
      %v1126 = vpop.f32.mrf.mxu0
      %v1127 = vadd.f32 %v966, %v1126
      %1128 = vmatmul.bf16.gmra.mxu0 %v1055
      %v1129 = vpop.f32.mrf.mxu0
      %v1130 = vadd.f32 %v969, %v1129
      %v1131 = vpop.f32.mrf.mxu0
      %v1132 = vadd.f32 %v971, %v1131
      %1133 = vmatmul.bf16.gmra.mxu0 %v1058
      %v1134 = vpop.f32.mrf.mxu0
      %v1135 = vadd.f32 %v974, %v1134
      %v1136 = vpop.f32.mrf.mxu0
      %v1137 = vadd.f32 %v976, %v1136
      %1138 = vmatmul.bf16.gmra.mxu0 %v1061
      %v1139 = vpop.f32.mrf.mxu0
      %v1140 = vadd.f32 %v979, %v1139
      %v1141 = vpop.f32.mrf.mxu0
      %v1142 = vadd.f32 %v981, %v1141
      %1143 = vmatmul.bf16.gmra.mxu0 %v1064
      %v1144 = vpop.f32.mrf.mxu0
      %v1145 = vadd.f32 %v984, %v1144
      %v1146 = vpop.f32.mrf.mxu0
      %v1147 = vadd.f32 %v986, %v1146
      %1148 = vmatmul.bf16.gmra.mxu0 %v1067
      %v1149 = vpop.f32.mrf.mxu0
      %v1150 = vadd.f32 %v989, %v1149
      %v1151 = vpop.f32.mrf.mxu0
      %v1152 = vadd.f32 %v991, %v1151
      %1153 = vmatmul.bf16.gmra.mxu0 %v1070
      %v1154 = vpop.f32.mrf.mxu0
      %v1155 = vadd.f32 %v994, %v1154
      %v1156 = vpop.f32.mrf.mxu0
      %v1157 = vadd.f32 %v996, %v1156
      %1158 = vmatmul.bf16.gmra.mxu0 %v1073
      %v1159 = vpop.f32.mrf.mxu0
      %v1160 = vadd.f32 %v999, %v1159
      %v1161 = vpop.f32.mrf.mxu0
      %v1162 = vadd.f32 %v1001, %v1161
      %1163 = vdwg.mxu0
      %v1164 = vrot.slane %v342, 1
      %v1165 = vrot.slane %v343, 1
      %v1166 = vrot.slane %v344, 1
      %v1167 = vrot.slane %v345, 1
      %v1168 = vrot.slane %v346, 1
      %v1169 = vrot.slane %v347, 1
      %v1170 = vrot.slane %v348, 1
      %v1171 = vrot.slane %v349, 1
      %v1172 = vrot.slane %v350, 1
      %v1173 = vrot.slane %v351, 1
      %v1174 = vrot.slane %v352, 1
      %v1175 = vrot.slane %v353, 1
      %v1176 = vrot.slane %v354, 1
      %v1177 = vrot.slane %v355, 1
      %v1178 = vrot.slane %v356, 1
      %v1179 = vrot.slane %v357, 1
      %v1180 = vrot.slane %v358, 1
      %v1181 = vrot.slane %v359, 1
      %v1182 = vrot.slane %v360, 1
      %v1183 = vrot.slane %v361, 1
      %v1184 = vrot.slane %v362, 1
      %v1185 = vrot.slane %v363, 1
      %v1186 = vrot.slane %v364, 1
      %v1187 = vrot.slane %v365, 1
      %v1188 = vrot.slane %v366, 1
      %v1189 = vrot.slane %v367, 1
      %v1190 = vrot.slane %v368, 1
      %v1191 = vrot.slane %v369, 1
      %v1192 = vrot.slane %v370, 1
      %v1193 = vrot.slane %v371, 1
      %v1194 = vrot.slane %v372, 1
      %v1195 = vrot.slane %v373, 1
      %vm1196 = vcmp.lt.s32.totalorder %v407, 7
      %v1197 = vsel %vm1196, %v1194, %v1195
      %v1198 = vsel %vm1196, %v1193, %v1194
      %v1199 = vsel %vm1196, %v1192, %v1193
      %v1200 = vsel %vm1196, %v1191, %v1192
      %v1201 = vsel %vm1196, %v1190, %v1191
      %v1202 = vsel %vm1196, %v1189, %v1190
      %v1203 = vsel %vm1196, %v1188, %v1189
      %v1204 = vsel %vm1196, %v1187, %v1188
      %v1205 = vsel %vm1196, %v1186, %v1187
      %v1206 = vsel %vm1196, %v1185, %v1186
      %v1207 = vsel %vm1196, %v1184, %v1185
      %v1208 = vsel %vm1196, %v1183, %v1184
      %v1209 = vsel %vm1196, %v1182, %v1183
      %v1210 = vsel %vm1196, %v1181, %v1182
      %v1211 = vsel %vm1196, %v1180, %v1181
      %v1212 = vsel %vm1196, %v1179, %v1180
      %v1213 = vsel %vm1196, %v1178, %v1179
      %v1214 = vsel %vm1196, %v1177, %v1178
      %v1215 = vsel %vm1196, %v1176, %v1177
      %v1216 = vsel %vm1196, %v1175, %v1176
      %v1217 = vsel %vm1196, %v1174, %v1175
      %v1218 = vsel %vm1196, %v1173, %v1174
      %v1219 = vsel %vm1196, %v1172, %v1173
      %v1220 = vsel %vm1196, %v1171, %v1172
      %v1221 = vsel %vm1196, %v1170, %v1171
      %v1222 = vsel %vm1196, %v1169, %v1170
      %v1223 = vsel %vm1196, %v1168, %v1169
      %v1224 = vsel %vm1196, %v1167, %v1168
      %v1225 = vsel %vm1196, %v1166, %v1167
      %v1226 = vsel %vm1196, %v1165, %v1166
      %v1227 = vsel %vm1196, %v1164, %v1165
      %v1228 = vsel %vm1196, %v1195, %v1164
      %1229 = vset.pattern.permute.xlu0 2
      %1230 = vperm.xlu0 %1229, %v310
      %v1231 = vpop.permute.xlu0 %1230
      %1233 = vset.pattern.permute.xlu0 2
      %1234 = vperm.xlu0 %1233, %v311
      %v1235 = vpop.permute.xlu0 %1234
      %1237 = vset.pattern.permute.xlu0 2
      %1238 = vperm.xlu0 %1237, %v312
      %v1239 = vpop.permute.xlu0 %1238
      %1241 = vset.pattern.permute.xlu0 2
      %1242 = vperm.xlu0 %1241, %v313
      %v1243 = vpop.permute.xlu0 %1242
      %1245 = vset.pattern.permute.xlu0 2
      %1246 = vperm.xlu0 %1245, %v314
      %v1247 = vpop.permute.xlu0 %1246
      %1249 = vset.pattern.permute.xlu0 2
      %1250 = vperm.xlu0 %1249, %v315
      %v1251 = vpop.permute.xlu0 %1250
      %1253 = vset.pattern.permute.xlu0 2
      %1254 = vperm.xlu0 %1253, %v316
      %v1255 = vpop.permute.xlu0 %1254
      %1257 = vset.pattern.permute.xlu0 2
      %1258 = vperm.xlu0 %1257, %v317
      %v1259 = vpop.permute.xlu0 %1258
      %1261 = vset.pattern.permute.xlu0 2
      %1262 = vperm.xlu0 %1261, %v318
      %v1263 = vpop.permute.xlu0 %1262
      %1265 = vset.pattern.permute.xlu0 2
      %1266 = vperm.xlu0 %1265, %v319
      %v1267 = vpop.permute.xlu0 %1266
      %1269 = vset.pattern.permute.xlu0 2
      %1270 = vperm.xlu0 %1269, %v320
      %v1271 = vpop.permute.xlu0 %1270
      %1273 = vset.pattern.permute.xlu0 2
      %1274 = vperm.xlu0 %1273, %v321
      %v1275 = vpop.permute.xlu0 %1274
      %1277 = vset.pattern.permute.xlu0 2
      %1278 = vperm.xlu0 %1277, %v322
      %v1279 = vpop.permute.xlu0 %1278
      %1281 = vset.pattern.permute.xlu0 2
      %1282 = vperm.xlu0 %1281, %v323
      %v1283 = vpop.permute.xlu0 %1282
      %1285 = vset.pattern.permute.xlu0 2
      %1286 = vperm.xlu0 %1285, %v324
      %v1287 = vpop.permute.xlu0 %1286
      %1289 = vset.pattern.permute.xlu0 2
      %1290 = vperm.xlu0 %1289, %v325
      %v1291 = vpop.permute.xlu0 %1290
      %1293 = vset.pattern.permute.xlu0 2
      %1294 = vperm.xlu0 %1293, %v326
      %v1295 = vpop.permute.xlu0 %1294
      %1297 = vset.pattern.permute.xlu0 2
      %1298 = vperm.xlu0 %1297, %v327
      %v1299 = vpop.permute.xlu0 %1298
      %1301 = vset.pattern.permute.xlu0 2
      %1302 = vperm.xlu0 %1301, %v328
      %v1303 = vpop.permute.xlu0 %1302
      %1305 = vset.pattern.permute.xlu0 2
      %1306 = vperm.xlu0 %1305, %v329
      %v1307 = vpop.permute.xlu0 %1306
      %1309 = vset.pattern.permute.xlu0 2
      %1310 = vperm.xlu0 %1309, %v330
      %v1311 = vpop.permute.xlu0 %1310
      %1313 = vset.pattern.permute.xlu0 2
      %1314 = vperm.xlu0 %1313, %v331
      %v1315 = vpop.permute.xlu0 %1314
      %1317 = vset.pattern.permute.xlu0 2
      %1318 = vperm.xlu0 %1317, %v332
      %v1319 = vpop.permute.xlu0 %1318
      %1321 = vset.pattern.permute.xlu0 2
      %1322 = vperm.xlu0 %1321, %v333
      %v1323 = vpop.permute.xlu0 %1322
      %1325 = vset.pattern.permute.xlu0 2
      %1326 = vperm.xlu0 %1325, %v334
      %v1327 = vpop.permute.xlu0 %1326
      %1329 = vset.pattern.permute.xlu0 2
      %1330 = vperm.xlu0 %1329, %v335
      %v1331 = vpop.permute.xlu0 %1330
      %1333 = vset.pattern.permute.xlu0 2
      %1334 = vperm.xlu0 %1333, %v336
      %v1335 = vpop.permute.xlu0 %1334
      %1337 = vset.pattern.permute.xlu0 2
      %1338 = vperm.xlu0 %1337, %v337
      %v1339 = vpop.permute.xlu0 %1338
      %1341 = vset.pattern.permute.xlu0 2
      %1342 = vperm.xlu0 %1341, %v338
      %v1343 = vpop.permute.xlu0 %1342
      %1345 = vset.pattern.permute.xlu0 2
      %1346 = vperm.xlu0 %1345, %v339
      %v1347 = vpop.permute.xlu0 %1346
      %1349 = vset.pattern.permute.xlu0 2
      %1350 = vperm.xlu0 %1349, %v340
      %v1351 = vpop.permute.xlu0 %1350
      %1353 = vset.pattern.permute.xlu0 2
      %1354 = vperm.xlu0 %1353, %v341
      %v1355 = vpop.permute.xlu0 %1354
      %v1357 = vmul.f32 %v1197, %v1231
      %v1358 = vmul.f32 %v1228, %v1235
      %v1359 = vmul.f32 %v1227, %v1239
      %v1360 = vmul.f32 %v1226, %v1243
      %v1361 = vmul.f32 %v1225, %v1247
      %v1362 = vmul.f32 %v1224, %v1251
      %v1363 = vmul.f32 %v1223, %v1255
      %v1364 = vmul.f32 %v1222, %v1259
      %v1365 = vmul.f32 %v1221, %v1263
      %v1366 = vmul.f32 %v1220, %v1267
      %v1367 = vmul.f32 %v1219, %v1271
      %v1368 = vmul.f32 %v1218, %v1275
      %v1369 = vmul.f32 %v1217, %v1279
      %v1370 = vmul.f32 %v1216, %v1283
      %v1371 = vmul.f32 %v1215, %v1287
      %v1372 = vmul.f32 %v1214, %v1291
      %v1373 = vmul.f32 %v1213, %v1295
      %v1374 = vmul.f32 %v1212, %v1299
      %v1375 = vmul.f32 %v1211, %v1303
      %v1376 = vmul.f32 %v1210, %v1307
      %v1377 = vmul.f32 %v1209, %v1311
      %v1378 = vmul.f32 %v1208, %v1315
      %v1379 = vmul.f32 %v1207, %v1319
      %v1380 = vmul.f32 %v1206, %v1323
      %v1381 = vmul.f32 %v1205, %v1327
      %v1382 = vmul.f32 %v1204, %v1331
      %v1383 = vmul.f32 %v1203, %v1335
      %v1384 = vmul.f32 %v1202, %v1339
      %v1385 = vmul.f32 %v1201, %v1343
      %v1386 = vmul.f32 %v1200, %v1347
      %v1387 = vmul.f32 %v1199, %v1351
      %v1388 = vmul.f32 %v1198, %v1355
      %v1389 = vpack.c.bf16 %v1358, %v1357
      %v1390 = vpack.c.bf16 %v1360, %v1359
      %v1391 = vpack.c.bf16 %v1362, %v1361
      %v1392 = vpack.c.bf16 %v1364, %v1363
      %v1393 = vpack.c.bf16 %v1366, %v1365
      %v1394 = vpack.c.bf16 %v1368, %v1367
      %v1395 = vpack.c.bf16 %v1370, %v1369
      %v1396 = vpack.c.bf16 %v1372, %v1371
      %v1397 = vpack.c.bf16 %v1374, %v1373
      %v1398 = vpack.c.bf16 %v1376, %v1375
      %v1399 = vpack.c.bf16 %v1378, %v1377
      %v1400 = vpack.c.bf16 %v1380, %v1379
      %v1401 = vpack.c.bf16 %v1382, %v1381
      %v1402 = vpack.c.bf16 %v1384, %v1383
      %v1403 = vpack.c.bf16 %v1386, %v1385
      %v1404 = vpack.c.bf16 %v1388, %v1387
      %v1405 = vld [vmem:[%s2 + $0x40] sm:$0xf]
      %v1406 = vld [vmem:[%s2 + $0x44] sm:$0xf]
      %v1407 = vld [vmem:[%s2 + $0x48] sm:$0xf]
      %v1408 = vld [vmem:[%s2 + $0x4c] sm:$0xf]
      %v1409 = vld [vmem:[%s2 + $0x50] sm:$0xf]
      %v1410 = vld [vmem:[%s2 + $0x54] sm:$0xf]
      %v1411 = vld [vmem:[%s2 + $0x58] sm:$0xf]
      %v1412 = vld [vmem:[%s2 + $0x5c] sm:$0xf]
      %v1421 = vunpack.c.l.b16 %v1405
      %v1422 = vunpack.c.l.b16 %v1406
      %v1423 = vunpack.c.l.b16 %v1407
      %v1424 = vunpack.c.l.b16 %v1408
      %v1425 = vunpack.c.l.b16 %v1409
      %v1426 = vunpack.c.l.b16 %v1410
      %v1427 = vunpack.c.l.b16 %v1411
      %v1428 = vunpack.c.l.b16 %v1412
      %v1429 = vpack.c.b16 %v1422, %v1421
      %v1430 = vpack.c.b16 %v1424, %v1423
      %v1431 = vpack.c.b16 %v1426, %v1425
      %v1432 = vpack.c.b16 %v1428, %v1427
      %v1438 = vsel %vm865, %v1389, 0
      %v1441 = vsel %vm865, %v1390, 0
      %v1444 = vsel %vm865, %v1391, 0
      %v1447 = vsel %vm865, %v1392, 0
      %v1450 = vsel %vm865, %v1393, 0
      %v1453 = vsel %vm865, %v1394, 0
      %v1456 = vsel %vm865, %v1395, 0
      %v1459 = vsel %vm865, %v1396, 0
      %v1462 = vsel %vm865, %v1397, 0
      %v1465 = vsel %vm865, %v1398, 0
      %v1468 = vsel %vm865, %v1399, 0
      %v1471 = vsel %vm865, %v1400, 0
      %v1474 = vsel %vm865, %v1401, 0
      %v1477 = vsel %vm865, %v1402, 0
      %v1480 = vsel %vm865, %v1403, 0
      %v1483 = vsel %vm865, %v1404, 0
      %1485 = vmatpush.bf16.msra.mxu0 0
      %1486 = vmatpush.bf16.msra.mxu0 0
      %1487 = vmatpush.bf16.msra.mxu0 0
      %1488 = vmatpush.bf16.msra.mxu0 0
      %1489 = vmatpush.bf16.msra.mxu0 %v1432
      %1490 = vmatpush.bf16.msra.mxu0 %v1431
      %1491 = vmatpush.bf16.msra.mxu0 %v1430
      %1492 = vmatpush.bf16.msra.mxu0 %v1429
      %1493 = vmatmul.bf16.gmra.mxu0 %v1438
      %v1494 = vpop.f32.mrf.mxu0
      %v1495 = vadd.f32 0.0, %v1494
      %v1496 = vpop.f32.mrf.mxu0
      %v1497 = vadd.f32 0.0, %v1496
      %1498 = vmatmul.bf16.gmra.mxu0 %v1441
      %v1499 = vpop.f32.mrf.mxu0
      %v1500 = vadd.f32 0.0, %v1499
      %v1501 = vpop.f32.mrf.mxu0
      %v1502 = vadd.f32 0.0, %v1501
      %1503 = vmatmul.bf16.gmra.mxu0 %v1444
      %v1504 = vpop.f32.mrf.mxu0
      %v1505 = vadd.f32 0.0, %v1504
      %v1506 = vpop.f32.mrf.mxu0
      %v1507 = vadd.f32 0.0, %v1506
      %1508 = vmatmul.bf16.gmra.mxu0 %v1447
      %v1509 = vpop.f32.mrf.mxu0
      %v1510 = vadd.f32 0.0, %v1509
      %v1511 = vpop.f32.mrf.mxu0
      %v1512 = vadd.f32 0.0, %v1511
      %1513 = vmatmul.bf16.gmra.mxu0 %v1450
      %v1514 = vpop.f32.mrf.mxu0
      %v1515 = vadd.f32 0.0, %v1514
      %v1516 = vpop.f32.mrf.mxu0
      %v1517 = vadd.f32 0.0, %v1516
      %1518 = vmatmul.bf16.gmra.mxu0 %v1453
      %v1519 = vpop.f32.mrf.mxu0
      %v1520 = vadd.f32 0.0, %v1519
      %v1521 = vpop.f32.mrf.mxu0
      %v1522 = vadd.f32 0.0, %v1521
      %1523 = vmatmul.bf16.gmra.mxu0 %v1456
      %v1524 = vpop.f32.mrf.mxu0
      %v1525 = vadd.f32 0.0, %v1524
      %v1526 = vpop.f32.mrf.mxu0
      %v1527 = vadd.f32 0.0, %v1526
      %1528 = vmatmul.bf16.gmra.mxu0 %v1459
      %v1529 = vpop.f32.mrf.mxu0
      %v1530 = vadd.f32 0.0, %v1529
      %v1531 = vpop.f32.mrf.mxu0
      %v1532 = vadd.f32 0.0, %v1531
      %1533 = vmatmul.bf16.gmra.mxu0 %v1462
      %v1534 = vpop.f32.mrf.mxu0
      %v1535 = vadd.f32 0.0, %v1534
      %v1536 = vpop.f32.mrf.mxu0
      %v1537 = vadd.f32 0.0, %v1536
      %1538 = vmatmul.bf16.gmra.mxu0 %v1465
      %v1539 = vpop.f32.mrf.mxu0
      %v1540 = vadd.f32 0.0, %v1539
      %v1541 = vpop.f32.mrf.mxu0
      %v1542 = vadd.f32 0.0, %v1541
      %1543 = vmatmul.bf16.gmra.mxu0 %v1468
      %v1544 = vpop.f32.mrf.mxu0
      %v1545 = vadd.f32 0.0, %v1544
      %v1546 = vpop.f32.mrf.mxu0
      %v1547 = vadd.f32 0.0, %v1546
      %1548 = vmatmul.bf16.gmra.mxu0 %v1471
      %v1549 = vpop.f32.mrf.mxu0
      %v1550 = vadd.f32 0.0, %v1549
      %v1551 = vpop.f32.mrf.mxu0
      %v1552 = vadd.f32 0.0, %v1551
      %1553 = vmatmul.bf16.gmra.mxu0 %v1474
      %v1554 = vpop.f32.mrf.mxu0
      %v1555 = vadd.f32 0.0, %v1554
      %v1556 = vpop.f32.mrf.mxu0
      %v1557 = vadd.f32 0.0, %v1556
      %1558 = vmatmul.bf16.gmra.mxu0 %v1477
      %v1559 = vpop.f32.mrf.mxu0
      %v1560 = vadd.f32 0.0, %v1559
      %v1561 = vpop.f32.mrf.mxu0
      %v1562 = vadd.f32 0.0, %v1561
      %1563 = vmatmul.bf16.gmra.mxu0 %v1480
      %v1564 = vpop.f32.mrf.mxu0
      %v1565 = vadd.f32 0.0, %v1564
      %v1566 = vpop.f32.mrf.mxu0
      %v1567 = vadd.f32 0.0, %v1566
      %1568 = vmatmul.bf16.gmra.mxu0 %v1483
      %v1569 = vpop.f32.mrf.mxu0
      %v1570 = vadd.f32 0.0, %v1569
      %v1571 = vpop.f32.mrf.mxu0
      %v1572 = vadd.f32 0.0, %v1571
      %1573 = vdwg.mxu0
      %v1574 = vadd.f32 %v1085, %v1495
      %v1575 = vadd.f32 %v1087, %v1497
      %v1576 = vadd.f32 %v1090, %v1500
      %v1577 = vadd.f32 %v1092, %v1502
      %v1578 = vadd.f32 %v1095, %v1505
      %v1579 = vadd.f32 %v1097, %v1507
      %v1580 = vadd.f32 %v1100, %v1510
      %v1581 = vadd.f32 %v1102, %v1512
      %v1582 = vadd.f32 %v1105, %v1515
      %v1583 = vadd.f32 %v1107, %v1517
      %v1584 = vadd.f32 %v1110, %v1520
      %v1585 = vadd.f32 %v1112, %v1522
      %v1586 = vadd.f32 %v1115, %v1525
      %v1587 = vadd.f32 %v1117, %v1527
      %v1588 = vadd.f32 %v1120, %v1530
      %v1589 = vadd.f32 %v1122, %v1532
      %v1590 = vadd.f32 %v1125, %v1535
      %v1591 = vadd.f32 %v1127, %v1537
      %v1592 = vadd.f32 %v1130, %v1540
      %v1593 = vadd.f32 %v1132, %v1542
      %v1594 = vadd.f32 %v1135, %v1545
      %v1595 = vadd.f32 %v1137, %v1547
      %v1596 = vadd.f32 %v1140, %v1550
      %v1597 = vadd.f32 %v1142, %v1552
      %v1598 = vadd.f32 %v1145, %v1555
      %v1599 = vadd.f32 %v1147, %v1557
      %v1600 = vadd.f32 %v1150, %v1560
      %v1601 = vadd.f32 %v1152, %v1562
      %v1602 = vadd.f32 %v1155, %v1565
      %v1603 = vadd.f32 %v1157, %v1567
      %v1604 = vadd.f32 %v1160, %v1570
      %v1605 = vadd.f32 %v1162, %v1572
      %1606 = vset.pattern.permute.xlu0 3
      %1607 = vperm.xlu0 %1606, %v310
      %v1608 = vpop.permute.xlu0 %1607
      %1610 = vset.pattern.permute.xlu0 3
      %1611 = vperm.xlu0 %1610, %v311
      %v1612 = vpop.permute.xlu0 %1611
      %1614 = vset.pattern.permute.xlu0 3
      %1615 = vperm.xlu0 %1614, %v312
      %v1616 = vpop.permute.xlu0 %1615
      %1618 = vset.pattern.permute.xlu0 3
      %1619 = vperm.xlu0 %1618, %v313
      %v1620 = vpop.permute.xlu0 %1619
      %1622 = vset.pattern.permute.xlu0 3
      %1623 = vperm.xlu0 %1622, %v314
      %v1624 = vpop.permute.xlu0 %1623
      %1626 = vset.pattern.permute.xlu0 3
      %1627 = vperm.xlu0 %1626, %v315
      %v1628 = vpop.permute.xlu0 %1627
      %1630 = vset.pattern.permute.xlu0 3
      %1631 = vperm.xlu0 %1630, %v316
      %v1632 = vpop.permute.xlu0 %1631
      %1634 = vset.pattern.permute.xlu0 3
      %1635 = vperm.xlu0 %1634, %v317
      %v1636 = vpop.permute.xlu0 %1635
      %1638 = vset.pattern.permute.xlu0 3
      %1639 = vperm.xlu0 %1638, %v318
      %v1640 = vpop.permute.xlu0 %1639
      %1642 = vset.pattern.permute.xlu0 3
      %1643 = vperm.xlu0 %1642, %v319
      %v1644 = vpop.permute.xlu0 %1643
      %1646 = vset.pattern.permute.xlu0 3
      %1647 = vperm.xlu0 %1646, %v320
      %v1648 = vpop.permute.xlu0 %1647
      %1650 = vset.pattern.permute.xlu0 3
      %1651 = vperm.xlu0 %1650, %v321
      %v1652 = vpop.permute.xlu0 %1651
      %1654 = vset.pattern.permute.xlu0 3
      %1655 = vperm.xlu0 %1654, %v322
      %v1656 = vpop.permute.xlu0 %1655
      %1658 = vset.pattern.permute.xlu0 3
      %1659 = vperm.xlu0 %1658, %v323
      %v1660 = vpop.permute.xlu0 %1659
      %1662 = vset.pattern.permute.xlu0 3
      %1663 = vperm.xlu0 %1662, %v324
      %v1664 = vpop.permute.xlu0 %1663
      %1666 = vset.pattern.permute.xlu0 3
      %1667 = vperm.xlu0 %1666, %v325
      %v1668 = vpop.permute.xlu0 %1667
      %1670 = vset.pattern.permute.xlu0 3
      %1671 = vperm.xlu0 %1670, %v326
      %v1672 = vpop.permute.xlu0 %1671
      %1674 = vset.pattern.permute.xlu0 3
      %1675 = vperm.xlu0 %1674, %v327
      %v1676 = vpop.permute.xlu0 %1675
      %1678 = vset.pattern.permute.xlu0 3
      %1679 = vperm.xlu0 %1678, %v328
      %v1680 = vpop.permute.xlu0 %1679
      %1682 = vset.pattern.permute.xlu0 3
      %1683 = vperm.xlu0 %1682, %v329
      %v1684 = vpop.permute.xlu0 %1683
      %1686 = vset.pattern.permute.xlu0 3
      %1687 = vperm.xlu0 %1686, %v330
      %v1688 = vpop.permute.xlu0 %1687
      %1690 = vset.pattern.permute.xlu0 3
      %1691 = vperm.xlu0 %1690, %v331
      %v1692 = vpop.permute.xlu0 %1691
      %1694 = vset.pattern.permute.xlu0 3
      %1695 = vperm.xlu0 %1694, %v332
      %v1696 = vpop.permute.xlu0 %1695
      %1698 = vset.pattern.permute.xlu0 3
      %1699 = vperm.xlu0 %1698, %v333
      %v1700 = vpop.permute.xlu0 %1699
      %1702 = vset.pattern.permute.xlu0 3
      %1703 = vperm.xlu0 %1702, %v334
      %v1704 = vpop.permute.xlu0 %1703
      %1706 = vset.pattern.permute.xlu0 3
      %1707 = vperm.xlu0 %1706, %v335
      %v1708 = vpop.permute.xlu0 %1707
      %1710 = vset.pattern.permute.xlu0 3
      %1711 = vperm.xlu0 %1710, %v336
      %v1712 = vpop.permute.xlu0 %1711
      %1714 = vset.pattern.permute.xlu0 3
      %1715 = vperm.xlu0 %1714, %v337
      %v1716 = vpop.permute.xlu0 %1715
      %1718 = vset.pattern.permute.xlu0 3
      %1719 = vperm.xlu0 %1718, %v338
      %v1720 = vpop.permute.xlu0 %1719
      %1722 = vset.pattern.permute.xlu0 3
      %1723 = vperm.xlu0 %1722, %v339
      %v1724 = vpop.permute.xlu0 %1723
      %1726 = vset.pattern.permute.xlu0 3
      %1727 = vperm.xlu0 %1726, %v340
      %v1728 = vpop.permute.xlu0 %1727
      %1730 = vset.pattern.permute.xlu0 3
      %1731 = vperm.xlu0 %1730, %v341
      %v1732 = vpop.permute.xlu0 %1731
      %v1734 = vmul.f32 %v440, %v1608
      %v1735 = vmul.f32 %v439, %v1612
      %v1736 = vmul.f32 %v438, %v1616
      %v1737 = vmul.f32 %v437, %v1620
      %v1738 = vmul.f32 %v436, %v1624
      %v1739 = vmul.f32 %v435, %v1628
      %v1740 = vmul.f32 %v434, %v1632
      %v1741 = vmul.f32 %v433, %v1636
      %v1742 = vmul.f32 %v432, %v1640
      %v1743 = vmul.f32 %v431, %v1644
      %v1744 = vmul.f32 %v430, %v1648
      %v1745 = vmul.f32 %v429, %v1652
      %v1746 = vmul.f32 %v428, %v1656
      %v1747 = vmul.f32 %v427, %v1660
      %v1748 = vmul.f32 %v426, %v1664
      %v1749 = vmul.f32 %v425, %v1668
      %v1750 = vmul.f32 %v424, %v1672
      %v1751 = vmul.f32 %v423, %v1676
      %v1752 = vmul.f32 %v422, %v1680
      %v1753 = vmul.f32 %v421, %v1684
      %v1754 = vmul.f32 %v420, %v1688
      %v1755 = vmul.f32 %v419, %v1692
      %v1756 = vmul.f32 %v418, %v1696
      %v1757 = vmul.f32 %v417, %v1700
      %v1758 = vmul.f32 %v416, %v1704
      %v1759 = vmul.f32 %v415, %v1708
      %v1760 = vmul.f32 %v414, %v1712
      %v1761 = vmul.f32 %v413, %v1716
      %v1762 = vmul.f32 %v412, %v1720
      %v1763 = vmul.f32 %v411, %v1724
      %v1764 = vmul.f32 %v410, %v1728
      %v1765 = vmul.f32 %v409, %v1732
      %v1766 = vpack.c.bf16 %v1735, %v1734
      %v1767 = vpack.c.bf16 %v1737, %v1736
      %v1768 = vpack.c.bf16 %v1739, %v1738
      %v1769 = vpack.c.bf16 %v1741, %v1740
      %v1770 = vpack.c.bf16 %v1743, %v1742
      %v1771 = vpack.c.bf16 %v1745, %v1744
      %v1772 = vpack.c.bf16 %v1747, %v1746
      %v1773 = vpack.c.bf16 %v1749, %v1748
      %v1774 = vpack.c.bf16 %v1751, %v1750
      %v1775 = vpack.c.bf16 %v1753, %v1752
      %v1776 = vpack.c.bf16 %v1755, %v1754
      %v1777 = vpack.c.bf16 %v1757, %v1756
      %v1778 = vpack.c.bf16 %v1759, %v1758
      %v1779 = vpack.c.bf16 %v1761, %v1760
      %v1780 = vpack.c.bf16 %v1763, %v1762
      %v1781 = vpack.c.bf16 %v1765, %v1764
      %v1782 = vld [vmem:[%s2 + $0x60] sm:$0xf]
      %v1783 = vld [vmem:[%s2 + $0x64] sm:$0xf]
      %v1784 = vld [vmem:[%s2 + $0x68] sm:$0xf]
      %v1785 = vld [vmem:[%s2 + $0x6c] sm:$0xf]
      %v1786 = vld [vmem:[%s2 + $0x70] sm:$0xf]
      %v1787 = vld [vmem:[%s2 + $0x74] sm:$0xf]
      %v1788 = vld [vmem:[%s2 + $0x78] sm:$0xf]
      %v1789 = vld [vmem:[%s2 + $0x7c] sm:$0xf]
      %v1798 = vunpack.c.l.b16 %v1782
      %v1799 = vunpack.c.l.b16 %v1783
      %v1800 = vunpack.c.l.b16 %v1784
      %v1801 = vunpack.c.l.b16 %v1785
      %v1802 = vunpack.c.l.b16 %v1786
      %v1803 = vunpack.c.l.b16 %v1787
      %v1804 = vunpack.c.l.b16 %v1788
      %v1805 = vunpack.c.l.b16 %v1789
      %v1806 = vpack.c.b16 %v1799, %v1798
      %v1807 = vpack.c.b16 %v1801, %v1800
      %v1808 = vpack.c.b16 %v1803, %v1802
      %v1809 = vpack.c.b16 %v1805, %v1804
      %v1815 = vsel %vm865, %v1766, 0
      %v1818 = vsel %vm865, %v1767, 0
      %v1821 = vsel %vm865, %v1768, 0
      %v1824 = vsel %vm865, %v1769, 0
      %v1827 = vsel %vm865, %v1770, 0
      %v1830 = vsel %vm865, %v1771, 0
      %v1833 = vsel %vm865, %v1772, 0
      %v1836 = vsel %vm865, %v1773, 0
      %v1839 = vsel %vm865, %v1774, 0
      %v1842 = vsel %vm865, %v1775, 0
      %v1845 = vsel %vm865, %v1776, 0
      %v1848 = vsel %vm865, %v1777, 0
      %v1851 = vsel %vm865, %v1778, 0
      %v1854 = vsel %vm865, %v1779, 0
      %v1857 = vsel %vm865, %v1780, 0
      %v1860 = vsel %vm865, %v1781, 0
      %1862 = vmatpush.bf16.msra.mxu0 0
      %1863 = vmatpush.bf16.msra.mxu0 0
      %1864 = vmatpush.bf16.msra.mxu0 0
      %1865 = vmatpush.bf16.msra.mxu0 0
      %1866 = vmatpush.bf16.msra.mxu0 %v1809
      %1867 = vmatpush.bf16.msra.mxu0 %v1808
      %1868 = vmatpush.bf16.msra.mxu0 %v1807
      %1869 = vmatpush.bf16.msra.mxu0 %v1806
      %1870 = vmatmul.bf16.gmra.mxu0 %v1815
      %v1871 = vpop.f32.mrf.mxu0
      %v1872 = vadd.f32 0.0, %v1871
      %v1873 = vpop.f32.mrf.mxu0
      %v1874 = vadd.f32 0.0, %v1873
      %1875 = vmatmul.bf16.gmra.mxu0 %v1818
      %v1876 = vpop.f32.mrf.mxu0
      %v1877 = vadd.f32 0.0, %v1876
      %v1878 = vpop.f32.mrf.mxu0
      %v1879 = vadd.f32 0.0, %v1878
      %1880 = vmatmul.bf16.gmra.mxu0 %v1821
      %v1881 = vpop.f32.mrf.mxu0
      %v1882 = vadd.f32 0.0, %v1881
      %v1883 = vpop.f32.mrf.mxu0
      %v1884 = vadd.f32 0.0, %v1883
      %1885 = vmatmul.bf16.gmra.mxu0 %v1824
      %v1886 = vpop.f32.mrf.mxu0
      %v1887 = vadd.f32 0.0, %v1886
      %v1888 = vpop.f32.mrf.mxu0
      %v1889 = vadd.f32 0.0, %v1888
      %1890 = vmatmul.bf16.gmra.mxu0 %v1827
      %v1891 = vpop.f32.mrf.mxu0
      %v1892 = vadd.f32 0.0, %v1891
      %v1893 = vpop.f32.mrf.mxu0
      %v1894 = vadd.f32 0.0, %v1893
      %1895 = vmatmul.bf16.gmra.mxu0 %v1830
      %v1896 = vpop.f32.mrf.mxu0
      %v1897 = vadd.f32 0.0, %v1896
      %v1898 = vpop.f32.mrf.mxu0
      %v1899 = vadd.f32 0.0, %v1898
      %1900 = vmatmul.bf16.gmra.mxu0 %v1833
      %v1901 = vpop.f32.mrf.mxu0
      %v1902 = vadd.f32 0.0, %v1901
      %v1903 = vpop.f32.mrf.mxu0
      %v1904 = vadd.f32 0.0, %v1903
      %1905 = vmatmul.bf16.gmra.mxu0 %v1836
      %v1906 = vpop.f32.mrf.mxu0
      %v1907 = vadd.f32 0.0, %v1906
      %v1908 = vpop.f32.mrf.mxu0
      %v1909 = vadd.f32 0.0, %v1908
      %1910 = vmatmul.bf16.gmra.mxu0 %v1839
      %v1911 = vpop.f32.mrf.mxu0
      %v1912 = vadd.f32 0.0, %v1911
      %v1913 = vpop.f32.mrf.mxu0
      %v1914 = vadd.f32 0.0, %v1913
      %1915 = vmatmul.bf16.gmra.mxu0 %v1842
      %v1916 = vpop.f32.mrf.mxu0
      %v1917 = vadd.f32 0.0, %v1916
      %v1918 = vpop.f32.mrf.mxu0
      %v1919 = vadd.f32 0.0, %v1918
      %1920 = vmatmul.bf16.gmra.mxu0 %v1845
      %v1921 = vpop.f32.mrf.mxu0
      %v1922 = vadd.f32 0.0, %v1921
      %v1923 = vpop.f32.mrf.mxu0
      %v1924 = vadd.f32 0.0, %v1923
      %1925 = vmatmul.bf16.gmra.mxu0 %v1848
      %v1926 = vpop.f32.mrf.mxu0
      %v1927 = vadd.f32 0.0, %v1926
      %v1928 = vpop.f32.mrf.mxu0
      %v1929 = vadd.f32 0.0, %v1928
      %1930 = vmatmul.bf16.gmra.mxu0 %v1851
      %v1931 = vpop.f32.mrf.mxu0
      %v1932 = vadd.f32 0.0, %v1931
      %v1933 = vpop.f32.mrf.mxu0
      %v1934 = vadd.f32 0.0, %v1933
      %1935 = vmatmul.bf16.gmra.mxu0 %v1854
      %v1936 = vpop.f32.mrf.mxu0
      %v1937 = vadd.f32 0.0, %v1936
      %v1938 = vpop.f32.mrf.mxu0
      %v1939 = vadd.f32 0.0, %v1938
      %1940 = vmatmul.bf16.gmra.mxu0 %v1857
      %v1941 = vpop.f32.mrf.mxu0
      %v1942 = vadd.f32 0.0, %v1941
      %v1943 = vpop.f32.mrf.mxu0
      %v1944 = vadd.f32 0.0, %v1943
      %1945 = vmatmul.bf16.gmra.mxu0 %v1860
      %v1946 = vpop.f32.mrf.mxu0
      %v1947 = vadd.f32 0.0, %v1946
      %v1948 = vpop.f32.mrf.mxu0
      %v1949 = vadd.f32 0.0, %v1948
      %1950 = vdwg.mxu0
      %v1951 = vadd.f32 %v1574, %v1872
      %v1952 = vadd.f32 %v1575, %v1874
      %v1953 = vadd.f32 %v1576, %v1877
      %v1954 = vadd.f32 %v1577, %v1879
      %v1955 = vadd.f32 %v1578, %v1882
      %v1956 = vadd.f32 %v1579, %v1884
      %v1957 = vadd.f32 %v1580, %v1887
      %v1958 = vadd.f32 %v1581, %v1889
      %v1959 = vadd.f32 %v1582, %v1892
      %v1960 = vadd.f32 %v1583, %v1894
      %v1961 = vadd.f32 %v1584, %v1897
      %v1962 = vadd.f32 %v1585, %v1899
      %v1963 = vadd.f32 %v1586, %v1902
      %v1964 = vadd.f32 %v1587, %v1904
      %v1965 = vadd.f32 %v1588, %v1907
      %v1966 = vadd.f32 %v1589, %v1909
      %v1967 = vadd.f32 %v1590, %v1912
      %v1968 = vadd.f32 %v1591, %v1914
      %v1969 = vadd.f32 %v1592, %v1917
      %v1970 = vadd.f32 %v1593, %v1919
      %v1971 = vadd.f32 %v1594, %v1922
      %v1972 = vadd.f32 %v1595, %v1924
      %v1973 = vadd.f32 %v1596, %v1927
      %v1974 = vadd.f32 %v1597, %v1929
      %v1975 = vadd.f32 %v1598, %v1932
      %v1976 = vadd.f32 %v1599, %v1934
      %v1977 = vadd.f32 %v1600, %v1937
      %v1978 = vadd.f32 %v1601, %v1939
      %v1979 = vadd.f32 %v1602, %v1942
      %v1980 = vadd.f32 %v1603, %v1944
      %v1981 = vadd.f32 %v1604, %v1947
      %v1982 = vadd.f32 %v1605, %v1949
      %v1983 = vpack.c.bf16 %v343, %v342
      %v1984 = vpack.c.bf16 %v345, %v344
      %v1985 = vpack.c.bf16 %v347, %v346
      %v1986 = vpack.c.bf16 %v349, %v348
      %v1987 = vpack.c.bf16 %v351, %v350
      %v1988 = vpack.c.bf16 %v353, %v352
      %v1989 = vpack.c.bf16 %v355, %v354
      %v1990 = vpack.c.bf16 %v357, %v356
      %v1991 = vpack.c.bf16 %v359, %v358
      %v1992 = vpack.c.bf16 %v361, %v360
      %v1993 = vpack.c.bf16 %v363, %v362
      %v1994 = vpack.c.bf16 %v365, %v364
      %v1995 = vpack.c.bf16 %v367, %v366
      %v1996 = vpack.c.bf16 %v369, %v368
      %v1997 = vpack.c.bf16 %v371, %v370
      %v1998 = vpack.c.bf16 %v373, %v372
      %v1999 = vld [vmem:[%s2 + $0x80] sm:$0xf]
      %v2000 = vld [vmem:[%s2 + $0x84] sm:$0xf]
      %v2001 = vld [vmem:[%s2 + $0x88] sm:$0xf]
      %v2002 = vld [vmem:[%s2 + $0x8c] sm:$0xf]
      %v2003 = vld [vmem:[%s2 + $0x90] sm:$0xf]
      %v2004 = vld [vmem:[%s2 + $0x94] sm:$0xf]
      %v2005 = vld [vmem:[%s2 + $0x98] sm:$0xf]
      %v2006 = vld [vmem:[%s2 + $0x9c] sm:$0xf]
      %v2015 = vunpack.c.l.b16 %v1999
      %v2016 = vunpack.c.l.b16 %v2000
      %v2017 = vunpack.c.l.b16 %v2001
      %v2018 = vunpack.c.l.b16 %v2002
      %v2019 = vunpack.c.l.b16 %v2003
      %v2020 = vunpack.c.l.b16 %v2004
      %v2021 = vunpack.c.l.b16 %v2005
      %v2022 = vunpack.c.l.b16 %v2006
      %v2023 = vpack.c.b16 %v2016, %v2015
      %v2024 = vpack.c.b16 %v2018, %v2017
      %v2025 = vpack.c.b16 %v2020, %v2019
      %v2026 = vpack.c.b16 %v2022, %v2021
      %v2032 = vsel %vm865, %v1983, 0
      %v2035 = vsel %vm865, %v1984, 0
      %v2038 = vsel %vm865, %v1985, 0
      %v2041 = vsel %vm865, %v1986, 0
      %v2044 = vsel %vm865, %v1987, 0
      %v2047 = vsel %vm865, %v1988, 0
      %v2050 = vsel %vm865, %v1989, 0
      %v2053 = vsel %vm865, %v1990, 0
      %v2056 = vsel %vm865, %v1991, 0
      %v2059 = vsel %vm865, %v1992, 0
      %v2062 = vsel %vm865, %v1993, 0
      %v2065 = vsel %vm865, %v1994, 0
      %v2068 = vsel %vm865, %v1995, 0
      %v2071 = vsel %vm865, %v1996, 0
      %v2074 = vsel %vm865, %v1997, 0
      %v2077 = vsel %vm865, %v1998, 0
      %2079 = vmatpush.bf16.msra.mxu0 0
      %2080 = vmatpush.bf16.msra.mxu0 0
      %2081 = vmatpush.bf16.msra.mxu0 0
      %2082 = vmatpush.bf16.msra.mxu0 0
      %2083 = vmatpush.bf16.msra.mxu0 %v2026
      %2084 = vmatpush.bf16.msra.mxu0 %v2025
      %2085 = vmatpush.bf16.msra.mxu0 %v2024
      %2086 = vmatpush.bf16.msra.mxu0 %v2023
      %2087 = vmatmul.bf16.gmra.mxu0 %v2032
      %v2088 = vpop.f32.mrf.mxu0
      %v2089 = vadd.f32 0.0, %v2088
      %v2090 = vpop.f32.mrf.mxu0
      %v2091 = vadd.f32 0.0, %v2090
      %2092 = vmatmul.bf16.gmra.mxu0 %v2035
      %v2093 = vpop.f32.mrf.mxu0
      %v2094 = vadd.f32 0.0, %v2093
      %v2095 = vpop.f32.mrf.mxu0
      %v2096 = vadd.f32 0.0, %v2095
      %2097 = vmatmul.bf16.gmra.mxu0 %v2038
      %v2098 = vpop.f32.mrf.mxu0
      %v2099 = vadd.f32 0.0, %v2098
      %v2100 = vpop.f32.mrf.mxu0
      %v2101 = vadd.f32 0.0, %v2100
      %2102 = vmatmul.bf16.gmra.mxu0 %v2041
      %v2103 = vpop.f32.mrf.mxu0
      %v2104 = vadd.f32 0.0, %v2103
      %v2105 = vpop.f32.mrf.mxu0
      %v2106 = vadd.f32 0.0, %v2105
      %2107 = vmatmul.bf16.gmra.mxu0 %v2044
      %v2108 = vpop.f32.mrf.mxu0
      %v2109 = vadd.f32 0.0, %v2108
      %v2110 = vpop.f32.mrf.mxu0
      %v2111 = vadd.f32 0.0, %v2110
      %2112 = vmatmul.bf16.gmra.mxu0 %v2047
      %v2113 = vpop.f32.mrf.mxu0
      %v2114 = vadd.f32 0.0, %v2113
      %v2115 = vpop.f32.mrf.mxu0
      %v2116 = vadd.f32 0.0, %v2115
      %2117 = vmatmul.bf16.gmra.mxu0 %v2050
      %v2118 = vpop.f32.mrf.mxu0
      %v2119 = vadd.f32 0.0, %v2118
      %v2120 = vpop.f32.mrf.mxu0
      %v2121 = vadd.f32 0.0, %v2120
      %2122 = vmatmul.bf16.gmra.mxu0 %v2053
      %v2123 = vpop.f32.mrf.mxu0
      %v2124 = vadd.f32 0.0, %v2123
      %v2125 = vpop.f32.mrf.mxu0
      %v2126 = vadd.f32 0.0, %v2125
      %2127 = vmatmul.bf16.gmra.mxu0 %v2056
      %v2128 = vpop.f32.mrf.mxu0
      %v2129 = vadd.f32 0.0, %v2128
      %v2130 = vpop.f32.mrf.mxu0
      %v2131 = vadd.f32 0.0, %v2130
      %2132 = vmatmul.bf16.gmra.mxu0 %v2059
      %v2133 = vpop.f32.mrf.mxu0
      %v2134 = vadd.f32 0.0, %v2133
      %v2135 = vpop.f32.mrf.mxu0
      %v2136 = vadd.f32 0.0, %v2135
      %2137 = vmatmul.bf16.gmra.mxu0 %v2062
      %v2138 = vpop.f32.mrf.mxu0
      %v2139 = vadd.f32 0.0, %v2138
      %v2140 = vpop.f32.mrf.mxu0
      %v2141 = vadd.f32 0.0, %v2140
      %2142 = vmatmul.bf16.gmra.mxu0 %v2065
      %v2143 = vpop.f32.mrf.mxu0
      %v2144 = vadd.f32 0.0, %v2143
      %v2145 = vpop.f32.mrf.mxu0
      %v2146 = vadd.f32 0.0, %v2145
      %2147 = vmatmul.bf16.gmra.mxu0 %v2068
      %v2148 = vpop.f32.mrf.mxu0
      %v2149 = vadd.f32 0.0, %v2148
      %v2150 = vpop.f32.mrf.mxu0
      %v2151 = vadd.f32 0.0, %v2150
      %2152 = vmatmul.bf16.gmra.mxu0 %v2071
      %v2153 = vpop.f32.mrf.mxu0
      %v2154 = vadd.f32 0.0, %v2153
      %v2155 = vpop.f32.mrf.mxu0
      %v2156 = vadd.f32 0.0, %v2155
      %2157 = vmatmul.bf16.gmra.mxu0 %v2074
      %v2158 = vpop.f32.mrf.mxu0
      %v2159 = vadd.f32 0.0, %v2158
      %v2160 = vpop.f32.mrf.mxu0
      %v2161 = vadd.f32 0.0, %v2160
      %2162 = vmatmul.bf16.gmra.mxu0 %v2077
      %v2163 = vpop.f32.mrf.mxu0
      %v2164 = vadd.f32 0.0, %v2163
      %v2165 = vpop.f32.mrf.mxu0
      %v2166 = vadd.f32 0.0, %v2165
      %2167 = vdwg.mxu0
      %v2168 = vadd.f32 %v1951, %v2089
      %v2169 = vadd.f32 %v1952, %v2091
      %v2170 = vadd.f32 %v1953, %v2094
      %v2171 = vadd.f32 %v1954, %v2096
      %v2172 = vadd.f32 %v1955, %v2099
      %v2173 = vadd.f32 %v1956, %v2101
      %v2174 = vadd.f32 %v1957, %v2104
      %v2175 = vadd.f32 %v1958, %v2106
      %v2176 = vadd.f32 %v1959, %v2109
      %v2177 = vadd.f32 %v1960, %v2111
      %v2178 = vadd.f32 %v1961, %v2114
      %v2179 = vadd.f32 %v1962, %v2116
      %v2180 = vadd.f32 %v1963, %v2119
      %v2181 = vadd.f32 %v1964, %v2121
      %v2182 = vadd.f32 %v1965, %v2124
      %v2183 = vadd.f32 %v1966, %v2126
      %v2184 = vadd.f32 %v1967, %v2129
      %v2185 = vadd.f32 %v1968, %v2131
      %v2186 = vadd.f32 %v1969, %v2134
      %v2187 = vadd.f32 %v1970, %v2136
      %v2188 = vadd.f32 %v1971, %v2139
      %v2189 = vadd.f32 %v1972, %v2141
      %v2190 = vadd.f32 %v1973, %v2144
      %v2191 = vadd.f32 %v1974, %v2146
      %v2192 = vadd.f32 %v1975, %v2149
      %v2193 = vadd.f32 %v1976, %v2151
      %v2194 = vadd.f32 %v1977, %v2154
      %v2195 = vadd.f32 %v1978, %v2156
      %v2196 = vadd.f32 %v1979, %v2159
      %v2197 = vadd.f32 %v1980, %v2161
      %v2198 = vadd.f32 %v1981, %v2164
      %v2199 = vadd.f32 %v1982, %v2166
      %2200 = vset.pattern.permute.xlu0 5
      %2201 = vperm.xlu0 %2200, %v310
      %v2202 = vpop.permute.xlu0 %2201
      %2204 = vset.pattern.permute.xlu0 5
      %2205 = vperm.xlu0 %2204, %v311
      %v2206 = vpop.permute.xlu0 %2205
      %2208 = vset.pattern.permute.xlu0 5
      %2209 = vperm.xlu0 %2208, %v312
      %v2210 = vpop.permute.xlu0 %2209
      %2212 = vset.pattern.permute.xlu0 5
      %2213 = vperm.xlu0 %2212, %v313
      %v2214 = vpop.permute.xlu0 %2213
      %2216 = vset.pattern.permute.xlu0 5
      %2217 = vperm.xlu0 %2216, %v314
      %v2218 = vpop.permute.xlu0 %2217
      %2220 = vset.pattern.permute.xlu0 5
      %2221 = vperm.xlu0 %2220, %v315
      %v2222 = vpop.permute.xlu0 %2221
      %2224 = vset.pattern.permute.xlu0 5
      %2225 = vperm.xlu0 %2224, %v316
      %v2226 = vpop.permute.xlu0 %2225
      %2228 = vset.pattern.permute.xlu0 5
      %2229 = vperm.xlu0 %2228, %v317
      %v2230 = vpop.permute.xlu0 %2229
      %2232 = vset.pattern.permute.xlu0 5
      %2233 = vperm.xlu0 %2232, %v318
      %v2234 = vpop.permute.xlu0 %2233
      %2236 = vset.pattern.permute.xlu0 5
      %2237 = vperm.xlu0 %2236, %v319
      %v2238 = vpop.permute.xlu0 %2237
      %2240 = vset.pattern.permute.xlu0 5
      %2241 = vperm.xlu0 %2240, %v320
      %v2242 = vpop.permute.xlu0 %2241
      %2244 = vset.pattern.permute.xlu0 5
      %2245 = vperm.xlu0 %2244, %v321
      %v2246 = vpop.permute.xlu0 %2245
      %2248 = vset.pattern.permute.xlu0 5
      %2249 = vperm.xlu0 %2248, %v322
      %v2250 = vpop.permute.xlu0 %2249
      %2252 = vset.pattern.permute.xlu0 5
      %2253 = vperm.xlu0 %2252, %v323
      %v2254 = vpop.permute.xlu0 %2253
      %2256 = vset.pattern.permute.xlu0 5
      %2257 = vperm.xlu0 %2256, %v324
      %v2258 = vpop.permute.xlu0 %2257
      %2260 = vset.pattern.permute.xlu0 5
      %2261 = vperm.xlu0 %2260, %v325
      %v2262 = vpop.permute.xlu0 %2261
      %2264 = vset.pattern.permute.xlu0 5
      %2265 = vperm.xlu0 %2264, %v326
      %v2266 = vpop.permute.xlu0 %2265
      %2268 = vset.pattern.permute.xlu0 5
      %2269 = vperm.xlu0 %2268, %v327
      %v2270 = vpop.permute.xlu0 %2269
      %2272 = vset.pattern.permute.xlu0 5
      %2273 = vperm.xlu0 %2272, %v328
      %v2274 = vpop.permute.xlu0 %2273
      %2276 = vset.pattern.permute.xlu0 5
      %2277 = vperm.xlu0 %2276, %v329
      %v2278 = vpop.permute.xlu0 %2277
      %2280 = vset.pattern.permute.xlu0 5
      %2281 = vperm.xlu0 %2280, %v330
      %v2282 = vpop.permute.xlu0 %2281
      %2284 = vset.pattern.permute.xlu0 5
      %2285 = vperm.xlu0 %2284, %v331
      %v2286 = vpop.permute.xlu0 %2285
      %2288 = vset.pattern.permute.xlu0 5
      %2289 = vperm.xlu0 %2288, %v332
      %v2290 = vpop.permute.xlu0 %2289
      %2292 = vset.pattern.permute.xlu0 5
      %2293 = vperm.xlu0 %2292, %v333
      %v2294 = vpop.permute.xlu0 %2293
      %2296 = vset.pattern.permute.xlu0 5
      %2297 = vperm.xlu0 %2296, %v334
      %v2298 = vpop.permute.xlu0 %2297
      %2300 = vset.pattern.permute.xlu0 5
      %2301 = vperm.xlu0 %2300, %v335
      %v2302 = vpop.permute.xlu0 %2301
      %2304 = vset.pattern.permute.xlu0 5
      %2305 = vperm.xlu0 %2304, %v336
      %v2306 = vpop.permute.xlu0 %2305
      %2308 = vset.pattern.permute.xlu0 5
      %2309 = vperm.xlu0 %2308, %v337
      %v2310 = vpop.permute.xlu0 %2309
      %2312 = vset.pattern.permute.xlu0 5
      %2313 = vperm.xlu0 %2312, %v338
      %v2314 = vpop.permute.xlu0 %2313
      %2316 = vset.pattern.permute.xlu0 5
      %2317 = vperm.xlu0 %2316, %v339
      %v2318 = vpop.permute.xlu0 %2317
      %2320 = vset.pattern.permute.xlu0 5
      %2321 = vperm.xlu0 %2320, %v340
      %v2322 = vpop.permute.xlu0 %2321
      %2324 = vset.pattern.permute.xlu0 5
      %2325 = vperm.xlu0 %2324, %v341
      %v2326 = vpop.permute.xlu0 %2325
      %v2328 = vmul.f32 %v1227, %v2202
      %v2329 = vmul.f32 %v1226, %v2206
      %v2330 = vmul.f32 %v1225, %v2210
      %v2331 = vmul.f32 %v1224, %v2214
      %v2332 = vmul.f32 %v1223, %v2218
      %v2333 = vmul.f32 %v1222, %v2222
      %v2334 = vmul.f32 %v1221, %v2226
      %v2335 = vmul.f32 %v1220, %v2230
      %v2336 = vmul.f32 %v1219, %v2234
      %v2337 = vmul.f32 %v1218, %v2238
      %v2338 = vmul.f32 %v1217, %v2242
      %v2339 = vmul.f32 %v1216, %v2246
      %v2340 = vmul.f32 %v1215, %v2250
      %v2341 = vmul.f32 %v1214, %v2254
      %v2342 = vmul.f32 %v1213, %v2258
      %v2343 = vmul.f32 %v1212, %v2262
      %v2344 = vmul.f32 %v1211, %v2266
      %v2345 = vmul.f32 %v1210, %v2270
      %v2346 = vmul.f32 %v1209, %v2274
      %v2347 = vmul.f32 %v1208, %v2278
      %v2348 = vmul.f32 %v1207, %v2282
      %v2349 = vmul.f32 %v1206, %v2286
      %v2350 = vmul.f32 %v1205, %v2290
      %v2351 = vmul.f32 %v1204, %v2294
      %v2352 = vmul.f32 %v1203, %v2298
      %v2353 = vmul.f32 %v1202, %v2302
      %v2354 = vmul.f32 %v1201, %v2306
      %v2355 = vmul.f32 %v1200, %v2310
      %v2356 = vmul.f32 %v1199, %v2314
      %v2357 = vmul.f32 %v1198, %v2318
      %v2358 = vmul.f32 %v1197, %v2322
      %v2359 = vmul.f32 %v1228, %v2326
      %v2360 = vpack.c.bf16 %v2329, %v2328
      %v2361 = vpack.c.bf16 %v2331, %v2330
      %v2362 = vpack.c.bf16 %v2333, %v2332
      %v2363 = vpack.c.bf16 %v2335, %v2334
      %v2364 = vpack.c.bf16 %v2337, %v2336
      %v2365 = vpack.c.bf16 %v2339, %v2338
      %v2366 = vpack.c.bf16 %v2341, %v2340
      %v2367 = vpack.c.bf16 %v2343, %v2342
      %v2368 = vpack.c.bf16 %v2345, %v2344
      %v2369 = vpack.c.bf16 %v2347, %v2346
      %v2370 = vpack.c.bf16 %v2349, %v2348
      %v2371 = vpack.c.bf16 %v2351, %v2350
      %v2372 = vpack.c.bf16 %v2353, %v2352
      %v2373 = vpack.c.bf16 %v2355, %v2354
      %v2374 = vpack.c.bf16 %v2357, %v2356
      %v2375 = vpack.c.bf16 %v2359, %v2358
      %v2376 = vld [vmem:[%s2 + $0xa0] sm:$0xf]
      %v2377 = vld [vmem:[%s2 + $0xa4] sm:$0xf]
      %v2378 = vld [vmem:[%s2 + $0xa8] sm:$0xf]
      %v2379 = vld [vmem:[%s2 + $0xac] sm:$0xf]
      %v2380 = vld [vmem:[%s2 + $0xb0] sm:$0xf]
      %v2381 = vld [vmem:[%s2 + $0xb4] sm:$0xf]
      %v2382 = vld [vmem:[%s2 + $0xb8] sm:$0xf]
      %v2383 = vld [vmem:[%s2 + $0xbc] sm:$0xf]
      %v2392 = vunpack.c.l.b16 %v2376
      %v2393 = vunpack.c.l.b16 %v2377
      %v2394 = vunpack.c.l.b16 %v2378
      %v2395 = vunpack.c.l.b16 %v2379
      %v2396 = vunpack.c.l.b16 %v2380
      %v2397 = vunpack.c.l.b16 %v2381
      %v2398 = vunpack.c.l.b16 %v2382
      %v2399 = vunpack.c.l.b16 %v2383
      %v2400 = vpack.c.b16 %v2393, %v2392
      %v2401 = vpack.c.b16 %v2395, %v2394
      %v2402 = vpack.c.b16 %v2397, %v2396
      %v2403 = vpack.c.b16 %v2399, %v2398
      %v2409 = vsel %vm865, %v2360, 0
      %v2412 = vsel %vm865, %v2361, 0
      %v2415 = vsel %vm865, %v2362, 0
      %v2418 = vsel %vm865, %v2363, 0
      %v2421 = vsel %vm865, %v2364, 0
      %v2424 = vsel %vm865, %v2365, 0
      %v2427 = vsel %vm865, %v2366, 0
      %v2430 = vsel %vm865, %v2367, 0
      %v2433 = vsel %vm865, %v2368, 0
      %v2436 = vsel %vm865, %v2369, 0
      %v2439 = vsel %vm865, %v2370, 0
      %v2442 = vsel %vm865, %v2371, 0
      %v2445 = vsel %vm865, %v2372, 0
      %v2448 = vsel %vm865, %v2373, 0
      %v2451 = vsel %vm865, %v2374, 0
      %v2454 = vsel %vm865, %v2375, 0
      %2456 = vmatpush.bf16.msra.mxu0 0
      %2457 = vmatpush.bf16.msra.mxu0 0
      %2458 = vmatpush.bf16.msra.mxu0 0
      %2459 = vmatpush.bf16.msra.mxu0 0
      %2460 = vmatpush.bf16.msra.mxu0 %v2403
      %2461 = vmatpush.bf16.msra.mxu0 %v2402
      %2462 = vmatpush.bf16.msra.mxu0 %v2401
      %2463 = vmatpush.bf16.msra.mxu0 %v2400
      %2464 = vmatmul.bf16.gmra.mxu0 %v2409
      %v2465 = vpop.f32.mrf.mxu0
      %v2466 = vadd.f32 0.0, %v2465
      %v2467 = vpop.f32.mrf.mxu0
      %v2468 = vadd.f32 0.0, %v2467
      %2469 = vmatmul.bf16.gmra.mxu0 %v2412
      %v2470 = vpop.f32.mrf.mxu0
      %v2471 = vadd.f32 0.0, %v2470
      %v2472 = vpop.f32.mrf.mxu0
      %v2473 = vadd.f32 0.0, %v2472
      %2474 = vmatmul.bf16.gmra.mxu0 %v2415
      %v2475 = vpop.f32.mrf.mxu0
      %v2476 = vadd.f32 0.0, %v2475
      %v2477 = vpop.f32.mrf.mxu0
      %v2478 = vadd.f32 0.0, %v2477
      %2479 = vmatmul.bf16.gmra.mxu0 %v2418
      %v2480 = vpop.f32.mrf.mxu0
      %v2481 = vadd.f32 0.0, %v2480
      %v2482 = vpop.f32.mrf.mxu0
      %v2483 = vadd.f32 0.0, %v2482
      %2484 = vmatmul.bf16.gmra.mxu0 %v2421
      %v2485 = vpop.f32.mrf.mxu0
      %v2486 = vadd.f32 0.0, %v2485
      %v2487 = vpop.f32.mrf.mxu0
      %v2488 = vadd.f32 0.0, %v2487
      %2489 = vmatmul.bf16.gmra.mxu0 %v2424
      %v2490 = vpop.f32.mrf.mxu0
      %v2491 = vadd.f32 0.0, %v2490
      %v2492 = vpop.f32.mrf.mxu0
      %v2493 = vadd.f32 0.0, %v2492
      %2494 = vmatmul.bf16.gmra.mxu0 %v2427
      %v2495 = vpop.f32.mrf.mxu0
      %v2496 = vadd.f32 0.0, %v2495
      %v2497 = vpop.f32.mrf.mxu0
      %v2498 = vadd.f32 0.0, %v2497
      %2499 = vmatmul.bf16.gmra.mxu0 %v2430
      %v2500 = vpop.f32.mrf.mxu0
      %v2501 = vadd.f32 0.0, %v2500
      %v2502 = vpop.f32.mrf.mxu0
      %v2503 = vadd.f32 0.0, %v2502
      %2504 = vmatmul.bf16.gmra.mxu0 %v2433
      %v2505 = vpop.f32.mrf.mxu0
      %v2506 = vadd.f32 0.0, %v2505
      %v2507 = vpop.f32.mrf.mxu0
      %v2508 = vadd.f32 0.0, %v2507
      %2509 = vmatmul.bf16.gmra.mxu0 %v2436
      %v2510 = vpop.f32.mrf.mxu0
      %v2511 = vadd.f32 0.0, %v2510
      %v2512 = vpop.f32.mrf.mxu0
      %v2513 = vadd.f32 0.0, %v2512
      %2514 = vmatmul.bf16.gmra.mxu0 %v2439
      %v2515 = vpop.f32.mrf.mxu0
      %v2516 = vadd.f32 0.0, %v2515
      %v2517 = vpop.f32.mrf.mxu0
      %v2518 = vadd.f32 0.0, %v2517
      %2519 = vmatmul.bf16.gmra.mxu0 %v2442
      %v2520 = vpop.f32.mrf.mxu0
      %v2521 = vadd.f32 0.0, %v2520
      %v2522 = vpop.f32.mrf.mxu0
      %v2523 = vadd.f32 0.0, %v2522
      %2524 = vmatmul.bf16.gmra.mxu0 %v2445
      %v2525 = vpop.f32.mrf.mxu0
      %v2526 = vadd.f32 0.0, %v2525
      %v2527 = vpop.f32.mrf.mxu0
      %v2528 = vadd.f32 0.0, %v2527
      %2529 = vmatmul.bf16.gmra.mxu0 %v2448
      %v2530 = vpop.f32.mrf.mxu0
      %v2531 = vadd.f32 0.0, %v2530
      %v2532 = vpop.f32.mrf.mxu0
      %v2533 = vadd.f32 0.0, %v2532
      %2534 = vmatmul.bf16.gmra.mxu0 %v2451
      %v2535 = vpop.f32.mrf.mxu0
      %v2536 = vadd.f32 0.0, %v2535
      %v2537 = vpop.f32.mrf.mxu0
      %v2538 = vadd.f32 0.0, %v2537
      %2539 = vmatmul.bf16.gmra.mxu0 %v2454
      %v2540 = vpop.f32.mrf.mxu0
      %v2541 = vadd.f32 0.0, %v2540
      %v2542 = vpop.f32.mrf.mxu0
      %v2543 = vadd.f32 0.0, %v2542
      %2544 = vdwg.mxu0
      %v2545 = vadd.f32 %v2168, %v2466
      %v2546 = vadd.f32 %v2169, %v2468
      %v2547 = vadd.f32 %v2170, %v2471
      %v2548 = vadd.f32 %v2171, %v2473
      %v2549 = vadd.f32 %v2172, %v2476
      %v2550 = vadd.f32 %v2173, %v2478
      %v2551 = vadd.f32 %v2174, %v2481
      %v2552 = vadd.f32 %v2175, %v2483
      %v2553 = vadd.f32 %v2176, %v2486
      %v2554 = vadd.f32 %v2177, %v2488
      %v2555 = vadd.f32 %v2178, %v2491
      %v2556 = vadd.f32 %v2179, %v2493
      %v2557 = vadd.f32 %v2180, %v2496
      %v2558 = vadd.f32 %v2181, %v2498
      %v2559 = vadd.f32 %v2182, %v2501
      %v2560 = vadd.f32 %v2183, %v2503
      %v2561 = vadd.f32 %v2184, %v2506
      %v2562 = vadd.f32 %v2185, %v2508
      %v2563 = vadd.f32 %v2186, %v2511
      %v2564 = vadd.f32 %v2187, %v2513
      %v2565 = vadd.f32 %v2188, %v2516
      %v2566 = vadd.f32 %v2189, %v2518
      %v2567 = vadd.f32 %v2190, %v2521
      %v2568 = vadd.f32 %v2191, %v2523
      %v2569 = vadd.f32 %v2192, %v2526
      %v2570 = vadd.f32 %v2193, %v2528
      %v2571 = vadd.f32 %v2194, %v2531
      %v2572 = vadd.f32 %v2195, %v2533
      %v2573 = vadd.f32 %v2196, %v2536
      %v2574 = vadd.f32 %v2197, %v2538
      %v2575 = vadd.f32 %v2198, %v2541
      %v2576 = vadd.f32 %v2199, %v2543
      %2577 = vset.pattern.permute.xlu0 6
      %2578 = vperm.xlu0 %2577, %v310
      %v2579 = vpop.permute.xlu0 %2578
      %2581 = vset.pattern.permute.xlu0 6
      %2582 = vperm.xlu0 %2581, %v311
      %v2583 = vpop.permute.xlu0 %2582
      %2585 = vset.pattern.permute.xlu0 6
      %2586 = vperm.xlu0 %2585, %v312
      %v2587 = vpop.permute.xlu0 %2586
      %2589 = vset.pattern.permute.xlu0 6
      %2590 = vperm.xlu0 %2589, %v313
      %v2591 = vpop.permute.xlu0 %2590
      %2593 = vset.pattern.permute.xlu0 6
      %2594 = vperm.xlu0 %2593, %v314
      %v2595 = vpop.permute.xlu0 %2594
      %2597 = vset.pattern.permute.xlu0 6
      %2598 = vperm.xlu0 %2597, %v315
      %v2599 = vpop.permute.xlu0 %2598
      %2601 = vset.pattern.permute.xlu0 6
      %2602 = vperm.xlu0 %2601, %v316
      %v2603 = vpop.permute.xlu0 %2602
      %2605 = vset.pattern.permute.xlu0 6
      %2606 = vperm.xlu0 %2605, %v317
      %v2607 = vpop.permute.xlu0 %2606
      %2609 = vset.pattern.permute.xlu0 6
      %2610 = vperm.xlu0 %2609, %v318
      %v2611 = vpop.permute.xlu0 %2610
      %2613 = vset.pattern.permute.xlu0 6
      %2614 = vperm.xlu0 %2613, %v319
      %v2615 = vpop.permute.xlu0 %2614
      %2617 = vset.pattern.permute.xlu0 6
      %2618 = vperm.xlu0 %2617, %v320
      %v2619 = vpop.permute.xlu0 %2618
      %2621 = vset.pattern.permute.xlu0 6
      %2622 = vperm.xlu0 %2621, %v321
      %v2623 = vpop.permute.xlu0 %2622
      %2625 = vset.pattern.permute.xlu0 6
      %2626 = vperm.xlu0 %2625, %v322
      %v2627 = vpop.permute.xlu0 %2626
      %2629 = vset.pattern.permute.xlu0 6
      %2630 = vperm.xlu0 %2629, %v323
      %v2631 = vpop.permute.xlu0 %2630
      %2633 = vset.pattern.permute.xlu0 6
      %2634 = vperm.xlu0 %2633, %v324
      %v2635 = vpop.permute.xlu0 %2634
      %2637 = vset.pattern.permute.xlu0 6
      %2638 = vperm.xlu0 %2637, %v325
      %v2639 = vpop.permute.xlu0 %2638
      %2641 = vset.pattern.permute.xlu0 6
      %2642 = vperm.xlu0 %2641, %v326
      %v2643 = vpop.permute.xlu0 %2642
      %2645 = vset.pattern.permute.xlu0 6
      %2646 = vperm.xlu0 %2645, %v327
      %v2647 = vpop.permute.xlu0 %2646
      %2649 = vset.pattern.permute.xlu0 6
      %2650 = vperm.xlu0 %2649, %v328
      %v2651 = vpop.permute.xlu0 %2650
      %2653 = vset.pattern.permute.xlu0 6
      %2654 = vperm.xlu0 %2653, %v329
      %v2655 = vpop.permute.xlu0 %2654
      %2657 = vset.pattern.permute.xlu0 6
      %2658 = vperm.xlu0 %2657, %v330
      %v2659 = vpop.permute.xlu0 %2658
      %2661 = vset.pattern.permute.xlu0 6
      %2662 = vperm.xlu0 %2661, %v331
      %v2663 = vpop.permute.xlu0 %2662
      %2665 = vset.pattern.permute.xlu0 6
      %2666 = vperm.xlu0 %2665, %v332
      %v2667 = vpop.permute.xlu0 %2666
      %2669 = vset.pattern.permute.xlu0 6
      %2670 = vperm.xlu0 %2669, %v333
      %v2671 = vpop.permute.xlu0 %2670
      %2673 = vset.pattern.permute.xlu0 6
      %2674 = vperm.xlu0 %2673, %v334
      %v2675 = vpop.permute.xlu0 %2674
      %2677 = vset.pattern.permute.xlu0 6
      %2678 = vperm.xlu0 %2677, %v335
      %v2679 = vpop.permute.xlu0 %2678
      %2681 = vset.pattern.permute.xlu0 6
      %2682 = vperm.xlu0 %2681, %v336
      %v2683 = vpop.permute.xlu0 %2682
      %2685 = vset.pattern.permute.xlu0 6
      %2686 = vperm.xlu0 %2685, %v337
      %v2687 = vpop.permute.xlu0 %2686
      %2689 = vset.pattern.permute.xlu0 6
      %2690 = vperm.xlu0 %2689, %v338
      %v2691 = vpop.permute.xlu0 %2690
      %2693 = vset.pattern.permute.xlu0 6
      %2694 = vperm.xlu0 %2693, %v339
      %v2695 = vpop.permute.xlu0 %2694
      %2697 = vset.pattern.permute.xlu0 6
      %2698 = vperm.xlu0 %2697, %v340
      %v2699 = vpop.permute.xlu0 %2698
      %2701 = vset.pattern.permute.xlu0 6
      %2702 = vperm.xlu0 %2701, %v341
      %v2703 = vpop.permute.xlu0 %2702
      %v2705 = vmul.f32 %v438, %v2579
      %v2706 = vmul.f32 %v437, %v2583
      %v2707 = vmul.f32 %v436, %v2587
      %v2708 = vmul.f32 %v435, %v2591
      %v2709 = vmul.f32 %v434, %v2595
      %v2710 = vmul.f32 %v433, %v2599
      %v2711 = vmul.f32 %v432, %v2603
      %v2712 = vmul.f32 %v431, %v2607
      %v2713 = vmul.f32 %v430, %v2611
      %v2714 = vmul.f32 %v429, %v2615
      %v2715 = vmul.f32 %v428, %v2619
      %v2716 = vmul.f32 %v427, %v2623
      %v2717 = vmul.f32 %v426, %v2627
      %v2718 = vmul.f32 %v425, %v2631
      %v2719 = vmul.f32 %v424, %v2635
      %v2720 = vmul.f32 %v423, %v2639
      %v2721 = vmul.f32 %v422, %v2643
      %v2722 = vmul.f32 %v421, %v2647
      %v2723 = vmul.f32 %v420, %v2651
      %v2724 = vmul.f32 %v419, %v2655
      %v2725 = vmul.f32 %v418, %v2659
      %v2726 = vmul.f32 %v417, %v2663
      %v2727 = vmul.f32 %v416, %v2667
      %v2728 = vmul.f32 %v415, %v2671
      %v2729 = vmul.f32 %v414, %v2675
      %v2730 = vmul.f32 %v413, %v2679
      %v2731 = vmul.f32 %v412, %v2683
      %v2732 = vmul.f32 %v411, %v2687
      %v2733 = vmul.f32 %v410, %v2691
      %v2734 = vmul.f32 %v409, %v2695
      %v2735 = vmul.f32 %v440, %v2699
      %v2736 = vmul.f32 %v439, %v2703
      %v2737 = vpack.c.bf16 %v2706, %v2705
      %v2738 = vpack.c.bf16 %v2708, %v2707
      %v2739 = vpack.c.bf16 %v2710, %v2709
      %v2740 = vpack.c.bf16 %v2712, %v2711
      %v2741 = vpack.c.bf16 %v2714, %v2713
      %v2742 = vpack.c.bf16 %v2716, %v2715
      %v2743 = vpack.c.bf16 %v2718, %v2717
      %v2744 = vpack.c.bf16 %v2720, %v2719
      %v2745 = vpack.c.bf16 %v2722, %v2721
      %v2746 = vpack.c.bf16 %v2724, %v2723
      %v2747 = vpack.c.bf16 %v2726, %v2725
      %v2748 = vpack.c.bf16 %v2728, %v2727
      %v2749 = vpack.c.bf16 %v2730, %v2729
      %v2750 = vpack.c.bf16 %v2732, %v2731
      %v2751 = vpack.c.bf16 %v2734, %v2733
      %v2752 = vpack.c.bf16 %v2736, %v2735
      %v2753 = vld [vmem:[%s2 + $0xc0] sm:$0xf]
      %v2754 = vld [vmem:[%s2 + $0xc4] sm:$0xf]
      %v2755 = vld [vmem:[%s2 + $0xc8] sm:$0xf]
      %v2756 = vld [vmem:[%s2 + $0xcc] sm:$0xf]
      %v2757 = vld [vmem:[%s2 + $0xd0] sm:$0xf]
      %v2758 = vld [vmem:[%s2 + $0xd4] sm:$0xf]
      %v2759 = vld [vmem:[%s2 + $0xd8] sm:$0xf]
      %v2760 = vld [vmem:[%s2 + $0xdc] sm:$0xf]
      %v2769 = vunpack.c.l.b16 %v2753
      %v2770 = vunpack.c.l.b16 %v2754
      %v2771 = vunpack.c.l.b16 %v2755
      %v2772 = vunpack.c.l.b16 %v2756
      %v2773 = vunpack.c.l.b16 %v2757
      %v2774 = vunpack.c.l.b16 %v2758
      %v2775 = vunpack.c.l.b16 %v2759
      %v2776 = vunpack.c.l.b16 %v2760
      %v2777 = vpack.c.b16 %v2770, %v2769
      %v2778 = vpack.c.b16 %v2772, %v2771
      %v2779 = vpack.c.b16 %v2774, %v2773
      %v2780 = vpack.c.b16 %v2776, %v2775
      %v2786 = vsel %vm865, %v2737, 0
      %v2789 = vsel %vm865, %v2738, 0
      %v2792 = vsel %vm865, %v2739, 0
      %v2795 = vsel %vm865, %v2740, 0
      %v2798 = vsel %vm865, %v2741, 0
      %v2801 = vsel %vm865, %v2742, 0
      %v2804 = vsel %vm865, %v2743, 0
      %v2807 = vsel %vm865, %v2744, 0
      %v2810 = vsel %vm865, %v2745, 0
      %v2813 = vsel %vm865, %v2746, 0
      %v2816 = vsel %vm865, %v2747, 0
      %v2819 = vsel %vm865, %v2748, 0
      %v2822 = vsel %vm865, %v2749, 0
      %v2825 = vsel %vm865, %v2750, 0
      %v2828 = vsel %vm865, %v2751, 0
      %v2831 = vsel %vm865, %v2752, 0
      %2833 = vmatpush.bf16.msra.mxu0 0
      %2834 = vmatpush.bf16.msra.mxu0 0
      %2835 = vmatpush.bf16.msra.mxu0 0
      %2836 = vmatpush.bf16.msra.mxu0 0
      %2837 = vmatpush.bf16.msra.mxu0 %v2780
      %2838 = vmatpush.bf16.msra.mxu0 %v2779
      %2839 = vmatpush.bf16.msra.mxu0 %v2778
      %2840 = vmatpush.bf16.msra.mxu0 %v2777
      %2841 = vmatmul.bf16.gmra.mxu0 %v2786
      %v2842 = vpop.f32.mrf.mxu0
      %v2843 = vadd.f32 0.0, %v2842
      %v2844 = vpop.f32.mrf.mxu0
      %v2845 = vadd.f32 0.0, %v2844
      %2846 = vmatmul.bf16.gmra.mxu0 %v2789
      %v2847 = vpop.f32.mrf.mxu0
      %v2848 = vadd.f32 0.0, %v2847
      %v2849 = vpop.f32.mrf.mxu0
      %v2850 = vadd.f32 0.0, %v2849
      %2851 = vmatmul.bf16.gmra.mxu0 %v2792
      %v2852 = vpop.f32.mrf.mxu0
      %v2853 = vadd.f32 0.0, %v2852
      %v2854 = vpop.f32.mrf.mxu0
      %v2855 = vadd.f32 0.0, %v2854
      %2856 = vmatmul.bf16.gmra.mxu0 %v2795
      %v2857 = vpop.f32.mrf.mxu0
      %v2858 = vadd.f32 0.0, %v2857
      %v2859 = vpop.f32.mrf.mxu0
      %v2860 = vadd.f32 0.0, %v2859
      %2861 = vmatmul.bf16.gmra.mxu0 %v2798
      %v2862 = vpop.f32.mrf.mxu0
      %v2863 = vadd.f32 0.0, %v2862
      %v2864 = vpop.f32.mrf.mxu0
      %v2865 = vadd.f32 0.0, %v2864
      %2866 = vmatmul.bf16.gmra.mxu0 %v2801
      %v2867 = vpop.f32.mrf.mxu0
      %v2868 = vadd.f32 0.0, %v2867
      %v2869 = vpop.f32.mrf.mxu0
      %v2870 = vadd.f32 0.0, %v2869
      %2871 = vmatmul.bf16.gmra.mxu0 %v2804
      %v2872 = vpop.f32.mrf.mxu0
      %v2873 = vadd.f32 0.0, %v2872
      %v2874 = vpop.f32.mrf.mxu0
      %v2875 = vadd.f32 0.0, %v2874
      %2876 = vmatmul.bf16.gmra.mxu0 %v2807
      %v2877 = vpop.f32.mrf.mxu0
      %v2878 = vadd.f32 0.0, %v2877
      %v2879 = vpop.f32.mrf.mxu0
      %v2880 = vadd.f32 0.0, %v2879
      %2881 = vmatmul.bf16.gmra.mxu0 %v2810
      %v2882 = vpop.f32.mrf.mxu0
      %v2883 = vadd.f32 0.0, %v2882
      %v2884 = vpop.f32.mrf.mxu0
      %v2885 = vadd.f32 0.0, %v2884
      %2886 = vmatmul.bf16.gmra.mxu0 %v2813
      %v2887 = vpop.f32.mrf.mxu0
      %v2888 = vadd.f32 0.0, %v2887
      %v2889 = vpop.f32.mrf.mxu0
      %v2890 = vadd.f32 0.0, %v2889
      %2891 = vmatmul.bf16.gmra.mxu0 %v2816
      %v2892 = vpop.f32.mrf.mxu0
      %v2893 = vadd.f32 0.0, %v2892
      %v2894 = vpop.f32.mrf.mxu0
      %v2895 = vadd.f32 0.0, %v2894
      %2896 = vmatmul.bf16.gmra.mxu0 %v2819
      %v2897 = vpop.f32.mrf.mxu0
      %v2898 = vadd.f32 0.0, %v2897
      %v2899 = vpop.f32.mrf.mxu0
      %v2900 = vadd.f32 0.0, %v2899
      %2901 = vmatmul.bf16.gmra.mxu0 %v2822
      %v2902 = vpop.f32.mrf.mxu0
      %v2903 = vadd.f32 0.0, %v2902
      %v2904 = vpop.f32.mrf.mxu0
      %v2905 = vadd.f32 0.0, %v2904
      %2906 = vmatmul.bf16.gmra.mxu0 %v2825
      %v2907 = vpop.f32.mrf.mxu0
      %v2908 = vadd.f32 0.0, %v2907
      %v2909 = vpop.f32.mrf.mxu0
      %v2910 = vadd.f32 0.0, %v2909
      %2911 = vmatmul.bf16.gmra.mxu0 %v2828
      %v2912 = vpop.f32.mrf.mxu0
      %v2913 = vadd.f32 0.0, %v2912
      %v2914 = vpop.f32.mrf.mxu0
      %v2915 = vadd.f32 0.0, %v2914
      %2916 = vmatmul.bf16.gmra.mxu0 %v2831
      %v2917 = vpop.f32.mrf.mxu0
      %v2918 = vadd.f32 0.0, %v2917
      %v2919 = vpop.f32.mrf.mxu0
      %v2920 = vadd.f32 0.0, %v2919
      %2921 = vdwg.mxu0
      %v2922 = vadd.f32 %v2545, %v2843
      %v2923 = vadd.f32 %v2546, %v2845
      %v2924 = vadd.f32 %v2547, %v2848
      %v2925 = vadd.f32 %v2548, %v2850
      %v2926 = vadd.f32 %v2549, %v2853
      %v2927 = vadd.f32 %v2550, %v2855
      %v2928 = vadd.f32 %v2551, %v2858
      %v2929 = vadd.f32 %v2552, %v2860
      %v2930 = vadd.f32 %v2553, %v2863
      %v2931 = vadd.f32 %v2554, %v2865
      %v2932 = vadd.f32 %v2555, %v2868
      %v2933 = vadd.f32 %v2556, %v2870
      %v2934 = vadd.f32 %v2557, %v2873
      %v2935 = vadd.f32 %v2558, %v2875
      %v2936 = vadd.f32 %v2559, %v2878
      %v2937 = vadd.f32 %v2560, %v2880
      %v2938 = vadd.f32 %v2561, %v2883
      %v2939 = vadd.f32 %v2562, %v2885
      %v2940 = vadd.f32 %v2563, %v2888
      %v2941 = vadd.f32 %v2564, %v2890
      %v2942 = vadd.f32 %v2565, %v2893
      %v2943 = vadd.f32 %v2566, %v2895
      %v2944 = vadd.f32 %v2567, %v2898
      %v2945 = vadd.f32 %v2568, %v2900
      %v2946 = vadd.f32 %v2569, %v2903
      %v2947 = vadd.f32 %v2570, %v2905
      %v2948 = vadd.f32 %v2571, %v2908
      %v2949 = vadd.f32 %v2572, %v2910
      %v2950 = vadd.f32 %v2573, %v2913
      %v2951 = vadd.f32 %v2574, %v2915
      %v2952 = vadd.f32 %v2575, %v2918
      %v2953 = vadd.f32 %v2576, %v2920
      %2954 = vset.pattern.permute.xlu0 7
      %2955 = vperm.xlu0 %2954, %v310
      %v2956 = vpop.permute.xlu0 %2955
      %2958 = vset.pattern.permute.xlu0 7
      %2959 = vperm.xlu0 %2958, %v311
      %v2960 = vpop.permute.xlu0 %2959
      %2962 = vset.pattern.permute.xlu0 7
      %2963 = vperm.xlu0 %2962, %v312
      %v2964 = vpop.permute.xlu0 %2963
      %2966 = vset.pattern.permute.xlu0 7
      %2967 = vperm.xlu0 %2966, %v313
      %v2968 = vpop.permute.xlu0 %2967
      %2970 = vset.pattern.permute.xlu0 7
      %2971 = vperm.xlu0 %2970, %v314
      %v2972 = vpop.permute.xlu0 %2971
      %2974 = vset.pattern.permute.xlu0 7
      %2975 = vperm.xlu0 %2974, %v315
      %v2976 = vpop.permute.xlu0 %2975
      %2978 = vset.pattern.permute.xlu0 7
      %2979 = vperm.xlu0 %2978, %v316
      %v2980 = vpop.permute.xlu0 %2979
      %2982 = vset.pattern.permute.xlu0 7
      %2983 = vperm.xlu0 %2982, %v317
      %v2984 = vpop.permute.xlu0 %2983
      %2986 = vset.pattern.permute.xlu0 7
      %2987 = vperm.xlu0 %2986, %v318
      %v2988 = vpop.permute.xlu0 %2987
      %2990 = vset.pattern.permute.xlu0 7
      %2991 = vperm.xlu0 %2990, %v319
      %v2992 = vpop.permute.xlu0 %2991
      %2994 = vset.pattern.permute.xlu0 7
      %2995 = vperm.xlu0 %2994, %v320
      %v2996 = vpop.permute.xlu0 %2995
      %2998 = vset.pattern.permute.xlu0 7
      %2999 = vperm.xlu0 %2998, %v321
      %v3000 = vpop.permute.xlu0 %2999
      %3002 = vset.pattern.permute.xlu0 7
      %3003 = vperm.xlu0 %3002, %v322
      %v3004 = vpop.permute.xlu0 %3003
      %3006 = vset.pattern.permute.xlu0 7
      %3007 = vperm.xlu0 %3006, %v323
      %v3008 = vpop.permute.xlu0 %3007
      %3010 = vset.pattern.permute.xlu0 7
      %3011 = vperm.xlu0 %3010, %v324
      %v3012 = vpop.permute.xlu0 %3011
      %3014 = vset.pattern.permute.xlu0 7
      %3015 = vperm.xlu0 %3014, %v325
      %v3016 = vpop.permute.xlu0 %3015
      %3018 = vset.pattern.permute.xlu0 7
      %3019 = vperm.xlu0 %3018, %v326
      %v3020 = vpop.permute.xlu0 %3019
      %3022 = vset.pattern.permute.xlu0 7
      %3023 = vperm.xlu0 %3022, %v327
      %v3024 = vpop.permute.xlu0 %3023
      %3026 = vset.pattern.permute.xlu0 7
      %3027 = vperm.xlu0 %3026, %v328
      %v3028 = vpop.permute.xlu0 %3027
      %3030 = vset.pattern.permute.xlu0 7
      %3031 = vperm.xlu0 %3030, %v329
      %v3032 = vpop.permute.xlu0 %3031
      %3034 = vset.pattern.permute.xlu0 7
      %3035 = vperm.xlu0 %3034, %v330
      %v3036 = vpop.permute.xlu0 %3035
      %3038 = vset.pattern.permute.xlu0 7
      %3039 = vperm.xlu0 %3038, %v331
      %v3040 = vpop.permute.xlu0 %3039
      %3042 = vset.pattern.permute.xlu0 7
      %3043 = vperm.xlu0 %3042, %v332
      %v3044 = vpop.permute.xlu0 %3043
      %3046 = vset.pattern.permute.xlu0 7
      %3047 = vperm.xlu0 %3046, %v333
      %v3048 = vpop.permute.xlu0 %3047
      %3050 = vset.pattern.permute.xlu0 7
      %3051 = vperm.xlu0 %3050, %v334
      %v3052 = vpop.permute.xlu0 %3051
      %3054 = vset.pattern.permute.xlu0 7
      %3055 = vperm.xlu0 %3054, %v335
      %v3056 = vpop.permute.xlu0 %3055
      %3058 = vset.pattern.permute.xlu0 7
      %3059 = vperm.xlu0 %3058, %v336
      %v3060 = vpop.permute.xlu0 %3059
      %3062 = vset.pattern.permute.xlu0 7
      %3063 = vperm.xlu0 %3062, %v337
      %v3064 = vpop.permute.xlu0 %3063
      %3066 = vset.pattern.permute.xlu0 7
      %3067 = vperm.xlu0 %3066, %v338
      %v3068 = vpop.permute.xlu0 %3067
      %3070 = vset.pattern.permute.xlu0 7
      %3071 = vperm.xlu0 %3070, %v339
      %v3072 = vpop.permute.xlu0 %3071
      %3074 = vset.pattern.permute.xlu0 7
      %3075 = vperm.xlu0 %3074, %v340
      %v3076 = vpop.permute.xlu0 %3075
      %3078 = vset.pattern.permute.xlu0 7
      %3079 = vperm.xlu0 %3078, %v341
      %v3080 = vpop.permute.xlu0 %3079
      %v3082 = vmul.f32 %v344, %v2956
      %v3083 = vmul.f32 %v345, %v2960
      %v3084 = vmul.f32 %v346, %v2964
      %v3085 = vmul.f32 %v347, %v2968
      %v3086 = vmul.f32 %v348, %v2972
      %v3087 = vmul.f32 %v349, %v2976
      %v3088 = vmul.f32 %v350, %v2980
      %v3089 = vmul.f32 %v351, %v2984
      %v3090 = vmul.f32 %v352, %v2988
      %v3091 = vmul.f32 %v353, %v2992
      %v3092 = vmul.f32 %v354, %v2996
      %v3093 = vmul.f32 %v355, %v3000
      %v3094 = vmul.f32 %v356, %v3004
      %v3095 = vmul.f32 %v357, %v3008
      %v3096 = vmul.f32 %v358, %v3012
      %v3097 = vmul.f32 %v359, %v3016
      %v3098 = vmul.f32 %v360, %v3020
      %v3099 = vmul.f32 %v361, %v3024
      %v3100 = vmul.f32 %v362, %v3028
      %v3101 = vmul.f32 %v363, %v3032
      %v3102 = vmul.f32 %v364, %v3036
      %v3103 = vmul.f32 %v365, %v3040
      %v3104 = vmul.f32 %v366, %v3044
      %v3105 = vmul.f32 %v367, %v3048
      %v3106 = vmul.f32 %v368, %v3052
      %v3107 = vmul.f32 %v369, %v3056
      %v3108 = vmul.f32 %v370, %v3060
      %v3109 = vmul.f32 %v371, %v3064
      %v3110 = vmul.f32 %v372, %v3068
      %v3111 = vmul.f32 %v373, %v3072
      %v3112 = vmul.f32 %v342, %v3076
      %v3113 = vmul.f32 %v343, %v3080
      %v3114 = vpack.c.bf16 %v3083, %v3082
      %v3115 = vpack.c.bf16 %v3085, %v3084
      %v3116 = vpack.c.bf16 %v3087, %v3086
      %v3117 = vpack.c.bf16 %v3089, %v3088
      %v3118 = vpack.c.bf16 %v3091, %v3090
      %v3119 = vpack.c.bf16 %v3093, %v3092
      %v3120 = vpack.c.bf16 %v3095, %v3094
      %v3121 = vpack.c.bf16 %v3097, %v3096
      %v3122 = vpack.c.bf16 %v3099, %v3098
      %v3123 = vpack.c.bf16 %v3101, %v3100
      %v3124 = vpack.c.bf16 %v3103, %v3102
      %v3125 = vpack.c.bf16 %v3105, %v3104
      %v3126 = vpack.c.bf16 %v3107, %v3106
      %v3127 = vpack.c.bf16 %v3109, %v3108
      %v3128 = vpack.c.bf16 %v3111, %v3110
      %v3129 = vpack.c.bf16 %v3113, %v3112
      %v3130 = vld [vmem:[%s2 + $0xe0] sm:$0xf]
      %v3131 = vld [vmem:[%s2 + $0xe4] sm:$0xf]
      %v3132 = vld [vmem:[%s2 + $0xe8] sm:$0xf]
      %v3133 = vld [vmem:[%s2 + $0xec] sm:$0xf]
      %v3134 = vld [vmem:[%s2 + $0xf0] sm:$0xf]
      %v3135 = vld [vmem:[%s2 + $0xf4] sm:$0xf]
      %v3136 = vld [vmem:[%s2 + $0xf8] sm:$0xf]
      %v3137 = vld [vmem:[%s2 + $0xfc] sm:$0xf]
      %v3146 = vunpack.c.l.b16 %v3130
      %v3147 = vunpack.c.l.b16 %v3131
      %v3148 = vunpack.c.l.b16 %v3132
      %v3149 = vunpack.c.l.b16 %v3133
      %v3150 = vunpack.c.l.b16 %v3134
      %v3151 = vunpack.c.l.b16 %v3135
      %v3152 = vunpack.c.l.b16 %v3136
      %v3153 = vunpack.c.l.b16 %v3137
      %v3154 = vpack.c.b16 %v3147, %v3146
      %v3155 = vpack.c.b16 %v3149, %v3148
      %v3156 = vpack.c.b16 %v3151, %v3150
      %v3157 = vpack.c.b16 %v3153, %v3152
      %v3163 = vsel %vm865, %v3114, 0
      %v3166 = vsel %vm865, %v3115, 0
      %v3169 = vsel %vm865, %v3116, 0
      %v3172 = vsel %vm865, %v3117, 0
      %v3175 = vsel %vm865, %v3118, 0
      %v3178 = vsel %vm865, %v3119, 0
      %v3181 = vsel %vm865, %v3120, 0
      %v3184 = vsel %vm865, %v3121, 0
      %v3187 = vsel %vm865, %v3122, 0
      %v3190 = vsel %vm865, %v3123, 0
      %v3193 = vsel %vm865, %v3124, 0
      %v3196 = vsel %vm865, %v3125, 0
      %v3199 = vsel %vm865, %v3126, 0
      %v3202 = vsel %vm865, %v3127, 0
      %v3205 = vsel %vm865, %v3128, 0
      %v3208 = vsel %vm865, %v3129, 0
      %3210 = vmatpush.bf16.msra.mxu0 0
      %3211 = vmatpush.bf16.msra.mxu0 0
      %3212 = vmatpush.bf16.msra.mxu0 0
      %3213 = vmatpush.bf16.msra.mxu0 0
      %3214 = vmatpush.bf16.msra.mxu0 %v3157
      %3215 = vmatpush.bf16.msra.mxu0 %v3156
      %3216 = vmatpush.bf16.msra.mxu0 %v3155
      %3217 = vmatpush.bf16.msra.mxu0 %v3154
      %3218 = vmatmul.bf16.gmra.mxu0 %v3163
      %v3219 = vpop.f32.mrf.mxu0
      %v3220 = vadd.f32 0.0, %v3219
      %v3221 = vpop.f32.mrf.mxu0
      %v3222 = vadd.f32 0.0, %v3221
      %3223 = vmatmul.bf16.gmra.mxu0 %v3166
      %v3224 = vpop.f32.mrf.mxu0
      %v3225 = vadd.f32 0.0, %v3224
      %v3226 = vpop.f32.mrf.mxu0
      %v3227 = vadd.f32 0.0, %v3226
      %3228 = vmatmul.bf16.gmra.mxu0 %v3169
      %v3229 = vpop.f32.mrf.mxu0
      %v3230 = vadd.f32 0.0, %v3229
      %v3231 = vpop.f32.mrf.mxu0
      %v3232 = vadd.f32 0.0, %v3231
      %3233 = vmatmul.bf16.gmra.mxu0 %v3172
      %v3234 = vpop.f32.mrf.mxu0
      %v3235 = vadd.f32 0.0, %v3234
      %v3236 = vpop.f32.mrf.mxu0
      %v3237 = vadd.f32 0.0, %v3236
      %3238 = vmatmul.bf16.gmra.mxu0 %v3175
      %v3239 = vpop.f32.mrf.mxu0
      %v3240 = vadd.f32 0.0, %v3239
      %v3241 = vpop.f32.mrf.mxu0
      %v3242 = vadd.f32 0.0, %v3241
      %3243 = vmatmul.bf16.gmra.mxu0 %v3178
      %v3244 = vpop.f32.mrf.mxu0
      %v3245 = vadd.f32 0.0, %v3244
      %v3246 = vpop.f32.mrf.mxu0
      %v3247 = vadd.f32 0.0, %v3246
      %3248 = vmatmul.bf16.gmra.mxu0 %v3181
      %v3249 = vpop.f32.mrf.mxu0
      %v3250 = vadd.f32 0.0, %v3249
      %v3251 = vpop.f32.mrf.mxu0
      %v3252 = vadd.f32 0.0, %v3251
      %3253 = vmatmul.bf16.gmra.mxu0 %v3184
      %v3254 = vpop.f32.mrf.mxu0
      %v3255 = vadd.f32 0.0, %v3254
      %v3256 = vpop.f32.mrf.mxu0
      %v3257 = vadd.f32 0.0, %v3256
      %3258 = vmatmul.bf16.gmra.mxu0 %v3187
      %v3259 = vpop.f32.mrf.mxu0
      %v3260 = vadd.f32 0.0, %v3259
      %v3261 = vpop.f32.mrf.mxu0
      %v3262 = vadd.f32 0.0, %v3261
      %3263 = vmatmul.bf16.gmra.mxu0 %v3190
      %v3264 = vpop.f32.mrf.mxu0
      %v3265 = vadd.f32 0.0, %v3264
      %v3266 = vpop.f32.mrf.mxu0
      %v3267 = vadd.f32 0.0, %v3266
      %3268 = vmatmul.bf16.gmra.mxu0 %v3193
      %v3269 = vpop.f32.mrf.mxu0
      %v3270 = vadd.f32 0.0, %v3269
      %v3271 = vpop.f32.mrf.mxu0
      %v3272 = vadd.f32 0.0, %v3271
      %3273 = vmatmul.bf16.gmra.mxu0 %v3196
      %v3274 = vpop.f32.mrf.mxu0
      %v3275 = vadd.f32 0.0, %v3274
      %v3276 = vpop.f32.mrf.mxu0
      %v3277 = vadd.f32 0.0, %v3276
      %3278 = vmatmul.bf16.gmra.mxu0 %v3199
      %v3279 = vpop.f32.mrf.mxu0
      %v3280 = vadd.f32 0.0, %v3279
      %v3281 = vpop.f32.mrf.mxu0
      %v3282 = vadd.f32 0.0, %v3281
      %3283 = vmatmul.bf16.gmra.mxu0 %v3202
      %v3284 = vpop.f32.mrf.mxu0
      %v3285 = vadd.f32 0.0, %v3284
      %v3286 = vpop.f32.mrf.mxu0
      %v3287 = vadd.f32 0.0, %v3286
      %3288 = vmatmul.bf16.gmra.mxu0 %v3205
      %v3289 = vpop.f32.mrf.mxu0
      %v3290 = vadd.f32 0.0, %v3289
      %v3291 = vpop.f32.mrf.mxu0
      %v3292 = vadd.f32 0.0, %v3291
      %3293 = vmatmul.bf16.gmra.mxu0 %v3208
      %v3294 = vpop.f32.mrf.mxu0
      %v3295 = vadd.f32 0.0, %v3294
      %v3296 = vpop.f32.mrf.mxu0
      %v3297 = vadd.f32 0.0, %v3296
      %3298 = vdwg.mxu0
      %v3299 = vadd.f32 %v2922, %v3220
      %v3300 = vadd.f32 %v2923, %v3222
      %v3301 = vadd.f32 %v2924, %v3225
      %v3302 = vadd.f32 %v2925, %v3227
      %v3303 = vadd.f32 %v2926, %v3230
      %v3304 = vadd.f32 %v2927, %v3232
      %v3305 = vadd.f32 %v2928, %v3235
      %v3306 = vadd.f32 %v2929, %v3237
      %v3307 = vadd.f32 %v2930, %v3240
      %v3308 = vadd.f32 %v2931, %v3242
      %v3309 = vadd.f32 %v2932, %v3245
      %v3310 = vadd.f32 %v2933, %v3247
      %v3311 = vadd.f32 %v2934, %v3250
      %v3312 = vadd.f32 %v2935, %v3252
      %v3313 = vadd.f32 %v2936, %v3255
      %v3314 = vadd.f32 %v2937, %v3257
      %v3315 = vadd.f32 %v2938, %v3260
      %v3316 = vadd.f32 %v2939, %v3262
      %v3317 = vadd.f32 %v2940, %v3265
      %v3318 = vadd.f32 %v2941, %v3267
      %v3319 = vadd.f32 %v2942, %v3270
      %v3320 = vadd.f32 %v2943, %v3272
      %v3321 = vadd.f32 %v2944, %v3275
      %v3322 = vadd.f32 %v2945, %v3277
      %v3323 = vadd.f32 %v2946, %v3280
      %v3324 = vadd.f32 %v2947, %v3282
      %v3325 = vadd.f32 %v2948, %v3285
      %v3326 = vadd.f32 %v2949, %v3287
      %v3327 = vadd.f32 %v2950, %v3290
      %v3328 = vadd.f32 %v2951, %v3292
      %v3329 = vadd.f32 %v2952, %v3295
      %v3330 = vadd.f32 %v2953, %v3297
      %3331 = vset.pattern.permute.xlu0 8
      %3332 = vperm.xlu0 %3331, %v310
      %v3333 = vpop.permute.xlu0 %3332
      %3335 = vset.pattern.permute.xlu0 8
      %3336 = vperm.xlu0 %3335, %v311
      %v3337 = vpop.permute.xlu0 %3336
      %3339 = vset.pattern.permute.xlu0 8
      %3340 = vperm.xlu0 %3339, %v312
      %v3341 = vpop.permute.xlu0 %3340
      %3343 = vset.pattern.permute.xlu0 8
      %3344 = vperm.xlu0 %3343, %v313
      %v3345 = vpop.permute.xlu0 %3344
      %3347 = vset.pattern.permute.xlu0 8
      %3348 = vperm.xlu0 %3347, %v314
      %v3349 = vpop.permute.xlu0 %3348
      %3351 = vset.pattern.permute.xlu0 8
      %3352 = vperm.xlu0 %3351, %v315
      %v3353 = vpop.permute.xlu0 %3352
      %3355 = vset.pattern.permute.xlu0 8
      %3356 = vperm.xlu0 %3355, %v316
      %v3357 = vpop.permute.xlu0 %3356
      %3359 = vset.pattern.permute.xlu0 8
      %3360 = vperm.xlu0 %3359, %v317
      %v3361 = vpop.permute.xlu0 %3360
      %3363 = vset.pattern.permute.xlu0 8
      %3364 = vperm.xlu0 %3363, %v318
      %v3365 = vpop.permute.xlu0 %3364
      %3367 = vset.pattern.permute.xlu0 8
      %3368 = vperm.xlu0 %3367, %v319
      %v3369 = vpop.permute.xlu0 %3368
      %3371 = vset.pattern.permute.xlu0 8
      %3372 = vperm.xlu0 %3371, %v320
      %v3373 = vpop.permute.xlu0 %3372
      %3375 = vset.pattern.permute.xlu0 8
      %3376 = vperm.xlu0 %3375, %v321
      %v3377 = vpop.permute.xlu0 %3376
      %3379 = vset.pattern.permute.xlu0 8
      %3380 = vperm.xlu0 %3379, %v322
      %v3381 = vpop.permute.xlu0 %3380
      %3383 = vset.pattern.permute.xlu0 8
      %3384 = vperm.xlu0 %3383, %v323
      %v3385 = vpop.permute.xlu0 %3384
      %3387 = vset.pattern.permute.xlu0 8
      %3388 = vperm.xlu0 %3387, %v324
      %v3389 = vpop.permute.xlu0 %3388
      %3391 = vset.pattern.permute.xlu0 8
      %3392 = vperm.xlu0 %3391, %v325
      %v3393 = vpop.permute.xlu0 %3392
      %3395 = vset.pattern.permute.xlu0 8
      %3396 = vperm.xlu0 %3395, %v326
      %v3397 = vpop.permute.xlu0 %3396
      %3399 = vset.pattern.permute.xlu0 8
      %3400 = vperm.xlu0 %3399, %v327
      %v3401 = vpop.permute.xlu0 %3400
      %3403 = vset.pattern.permute.xlu0 8
      %3404 = vperm.xlu0 %3403, %v328
      %v3405 = vpop.permute.xlu0 %3404
      %3407 = vset.pattern.permute.xlu0 8
      %3408 = vperm.xlu0 %3407, %v329
      %v3409 = vpop.permute.xlu0 %3408
      %3411 = vset.pattern.permute.xlu0 8
      %3412 = vperm.xlu0 %3411, %v330
      %v3413 = vpop.permute.xlu0 %3412
      %3415 = vset.pattern.permute.xlu0 8
      %3416 = vperm.xlu0 %3415, %v331
      %v3417 = vpop.permute.xlu0 %3416
      %3419 = vset.pattern.permute.xlu0 8
      %3420 = vperm.xlu0 %3419, %v332
      %v3421 = vpop.permute.xlu0 %3420
      %3423 = vset.pattern.permute.xlu0 8
      %3424 = vperm.xlu0 %3423, %v333
      %v3425 = vpop.permute.xlu0 %3424
      %3427 = vset.pattern.permute.xlu0 8
      %3428 = vperm.xlu0 %3427, %v334
      %v3429 = vpop.permute.xlu0 %3428
      %3431 = vset.pattern.permute.xlu0 8
      %3432 = vperm.xlu0 %3431, %v335
      %v3433 = vpop.permute.xlu0 %3432
      %3435 = vset.pattern.permute.xlu0 8
      %3436 = vperm.xlu0 %3435, %v336
      %v3437 = vpop.permute.xlu0 %3436
      %3439 = vset.pattern.permute.xlu0 8
      %3440 = vperm.xlu0 %3439, %v337
      %v3441 = vpop.permute.xlu0 %3440
      %3443 = vset.pattern.permute.xlu0 8
      %3444 = vperm.xlu0 %3443, %v338
      %v3445 = vpop.permute.xlu0 %3444
      %3447 = vset.pattern.permute.xlu0 8
      %3448 = vperm.xlu0 %3447, %v339
      %v3449 = vpop.permute.xlu0 %3448
      %3451 = vset.pattern.permute.xlu0 8
      %3452 = vperm.xlu0 %3451, %v340
      %v3453 = vpop.permute.xlu0 %3452
      %3455 = vset.pattern.permute.xlu0 8
      %3456 = vperm.xlu0 %3455, %v341
      %v3457 = vpop.permute.xlu0 %3456
      %v3459 = vmul.f32 %v1225, %v3333
      %v3460 = vmul.f32 %v1224, %v3337
      %v3461 = vmul.f32 %v1223, %v3341
      %v3462 = vmul.f32 %v1222, %v3345
      %v3463 = vmul.f32 %v1221, %v3349
      %v3464 = vmul.f32 %v1220, %v3353
      %v3465 = vmul.f32 %v1219, %v3357
      %v3466 = vmul.f32 %v1218, %v3361
      %v3467 = vmul.f32 %v1217, %v3365
      %v3468 = vmul.f32 %v1216, %v3369
      %v3469 = vmul.f32 %v1215, %v3373
      %v3470 = vmul.f32 %v1214, %v3377
      %v3471 = vmul.f32 %v1213, %v3381
      %v3472 = vmul.f32 %v1212, %v3385
      %v3473 = vmul.f32 %v1211, %v3389
      %v3474 = vmul.f32 %v1210, %v3393
      %v3475 = vmul.f32 %v1209, %v3397
      %v3476 = vmul.f32 %v1208, %v3401
      %v3477 = vmul.f32 %v1207, %v3405
      %v3478 = vmul.f32 %v1206, %v3409
      %v3479 = vmul.f32 %v1205, %v3413
      %v3480 = vmul.f32 %v1204, %v3417
      %v3481 = vmul.f32 %v1203, %v3421
      %v3482 = vmul.f32 %v1202, %v3425
      %v3483 = vmul.f32 %v1201, %v3429
      %v3484 = vmul.f32 %v1200, %v3433
      %v3485 = vmul.f32 %v1199, %v3437
      %v3486 = vmul.f32 %v1198, %v3441
      %v3487 = vmul.f32 %v1197, %v3445
      %v3488 = vmul.f32 %v1228, %v3449
      %v3489 = vmul.f32 %v1227, %v3453
      %v3490 = vmul.f32 %v1226, %v3457
      %v3491 = vpack.c.bf16 %v3460, %v3459
      %v3492 = vpack.c.bf16 %v3462, %v3461
      %v3493 = vpack.c.bf16 %v3464, %v3463
      %v3494 = vpack.c.bf16 %v3466, %v3465
      %v3495 = vpack.c.bf16 %v3468, %v3467
      %v3496 = vpack.c.bf16 %v3470, %v3469
      %v3497 = vpack.c.bf16 %v3472, %v3471
      %v3498 = vpack.c.bf16 %v3474, %v3473
      %v3499 = vpack.c.bf16 %v3476, %v3475
      %v3500 = vpack.c.bf16 %v3478, %v3477
      %v3501 = vpack.c.bf16 %v3480, %v3479
      %v3502 = vpack.c.bf16 %v3482, %v3481
      %v3503 = vpack.c.bf16 %v3484, %v3483
      %v3504 = vpack.c.bf16 %v3486, %v3485
      %v3505 = vpack.c.bf16 %v3488, %v3487
      %v3506 = vpack.c.bf16 %v3490, %v3489
      %v3507 = vld [vmem:[%s2 + $0x100] sm:$0xf]
      %v3508 = vld [vmem:[%s2 + $0x104] sm:$0xf]
      %v3509 = vld [vmem:[%s2 + $0x108] sm:$0xf]
      %v3510 = vld [vmem:[%s2 + $0x10c] sm:$0xf]
      %v3511 = vld [vmem:[%s2 + $0x110] sm:$0xf]
      %v3512 = vld [vmem:[%s2 + $0x114] sm:$0xf]
      %v3513 = vld [vmem:[%s2 + $0x118] sm:$0xf]
      %v3514 = vld [vmem:[%s2 + $0x11c] sm:$0xf]
      %v3523 = vunpack.c.l.b16 %v3507
      %v3524 = vunpack.c.l.b16 %v3508
      %v3525 = vunpack.c.l.b16 %v3509
      %v3526 = vunpack.c.l.b16 %v3510
      %v3527 = vunpack.c.l.b16 %v3511
      %v3528 = vunpack.c.l.b16 %v3512
      %v3529 = vunpack.c.l.b16 %v3513
      %v3530 = vunpack.c.l.b16 %v3514
      %v3531 = vpack.c.b16 %v3524, %v3523
      %v3532 = vpack.c.b16 %v3526, %v3525
      %v3533 = vpack.c.b16 %v3528, %v3527
      %v3534 = vpack.c.b16 %v3530, %v3529
      %v3540 = vsel %vm865, %v3491, 0
      %v3543 = vsel %vm865, %v3492, 0
      %v3546 = vsel %vm865, %v3493, 0
      %v3549 = vsel %vm865, %v3494, 0
      %v3552 = vsel %vm865, %v3495, 0
      %v3555 = vsel %vm865, %v3496, 0
      %v3558 = vsel %vm865, %v3497, 0
      %v3561 = vsel %vm865, %v3498, 0
      %v3564 = vsel %vm865, %v3499, 0
      %v3567 = vsel %vm865, %v3500, 0
      %v3570 = vsel %vm865, %v3501, 0
      %v3573 = vsel %vm865, %v3502, 0
      %v3576 = vsel %vm865, %v3503, 0
      %v3579 = vsel %vm865, %v3504, 0
      %v3582 = vsel %vm865, %v3505, 0
      %v3585 = vsel %vm865, %v3506, 0
      %3587 = vmatpush.bf16.msra.mxu0 0
      %3588 = vmatpush.bf16.msra.mxu0 0
      %3589 = vmatpush.bf16.msra.mxu0 0
      %3590 = vmatpush.bf16.msra.mxu0 0
      %3591 = vmatpush.bf16.msra.mxu0 %v3534
      %3592 = vmatpush.bf16.msra.mxu0 %v3533
      %3593 = vmatpush.bf16.msra.mxu0 %v3532
      %3594 = vmatpush.bf16.msra.mxu0 %v3531
      %3595 = vmatmul.bf16.gmra.mxu0 %v3540
      %v3596 = vpop.f32.mrf.mxu0
      %v3597 = vadd.f32 0.0, %v3596
      %v3598 = vpop.f32.mrf.mxu0
      %v3599 = vadd.f32 0.0, %v3598
      %3600 = vmatmul.bf16.gmra.mxu0 %v3543
      %v3601 = vpop.f32.mrf.mxu0
      %v3602 = vadd.f32 0.0, %v3601
      %v3603 = vpop.f32.mrf.mxu0
      %v3604 = vadd.f32 0.0, %v3603
      %3605 = vmatmul.bf16.gmra.mxu0 %v3546
      %v3606 = vpop.f32.mrf.mxu0
      %v3607 = vadd.f32 0.0, %v3606
      %v3608 = vpop.f32.mrf.mxu0
      %v3609 = vadd.f32 0.0, %v3608
      %3610 = vmatmul.bf16.gmra.mxu0 %v3549
      %v3611 = vpop.f32.mrf.mxu0
      %v3612 = vadd.f32 0.0, %v3611
      %v3613 = vpop.f32.mrf.mxu0
      %v3614 = vadd.f32 0.0, %v3613
      %3615 = vmatmul.bf16.gmra.mxu0 %v3552
      %v3616 = vpop.f32.mrf.mxu0
      %v3617 = vadd.f32 0.0, %v3616
      %v3618 = vpop.f32.mrf.mxu0
      %v3619 = vadd.f32 0.0, %v3618
      %3620 = vmatmul.bf16.gmra.mxu0 %v3555
      %v3621 = vpop.f32.mrf.mxu0
      %v3622 = vadd.f32 0.0, %v3621
      %v3623 = vpop.f32.mrf.mxu0
      %v3624 = vadd.f32 0.0, %v3623
      %3625 = vmatmul.bf16.gmra.mxu0 %v3558
      %v3626 = vpop.f32.mrf.mxu0
      %v3627 = vadd.f32 0.0, %v3626
      %v3628 = vpop.f32.mrf.mxu0
      %v3629 = vadd.f32 0.0, %v3628
      %3630 = vmatmul.bf16.gmra.mxu0 %v3561
      %v3631 = vpop.f32.mrf.mxu0
      %v3632 = vadd.f32 0.0, %v3631
      %v3633 = vpop.f32.mrf.mxu0
      %v3634 = vadd.f32 0.0, %v3633
      %3635 = vmatmul.bf16.gmra.mxu0 %v3564
      %v3636 = vpop.f32.mrf.mxu0
      %v3637 = vadd.f32 0.0, %v3636
      %v3638 = vpop.f32.mrf.mxu0
      %v3639 = vadd.f32 0.0, %v3638
      %3640 = vmatmul.bf16.gmra.mxu0 %v3567
      %v3641 = vpop.f32.mrf.mxu0
      %v3642 = vadd.f32 0.0, %v3641
      %v3643 = vpop.f32.mrf.mxu0
      %v3644 = vadd.f32 0.0, %v3643
      %3645 = vmatmul.bf16.gmra.mxu0 %v3570
      %v3646 = vpop.f32.mrf.mxu0
      %v3647 = vadd.f32 0.0, %v3646
      %v3648 = vpop.f32.mrf.mxu0
      %v3649 = vadd.f32 0.0, %v3648
      %3650 = vmatmul.bf16.gmra.mxu0 %v3573
      %v3651 = vpop.f32.mrf.mxu0
      %v3652 = vadd.f32 0.0, %v3651
      %v3653 = vpop.f32.mrf.mxu0
      %v3654 = vadd.f32 0.0, %v3653
      %3655 = vmatmul.bf16.gmra.mxu0 %v3576
      %v3656 = vpop.f32.mrf.mxu0
      %v3657 = vadd.f32 0.0, %v3656
      %v3658 = vpop.f32.mrf.mxu0
      %v3659 = vadd.f32 0.0, %v3658
      %3660 = vmatmul.bf16.gmra.mxu0 %v3579
      %v3661 = vpop.f32.mrf.mxu0
      %v3662 = vadd.f32 0.0, %v3661
      %v3663 = vpop.f32.mrf.mxu0
      %v3664 = vadd.f32 0.0, %v3663
      %3665 = vmatmul.bf16.gmra.mxu0 %v3582
      %v3666 = vpop.f32.mrf.mxu0
      %v3667 = vadd.f32 0.0, %v3666
      %v3668 = vpop.f32.mrf.mxu0
      %v3669 = vadd.f32 0.0, %v3668
      %3670 = vmatmul.bf16.gmra.mxu0 %v3585
      %v3671 = vpop.f32.mrf.mxu0
      %v3672 = vadd.f32 0.0, %v3671
      %v3673 = vpop.f32.mrf.mxu0
      %v3674 = vadd.f32 0.0, %v3673
      %3675 = vdwg.mxu0
      %v3676 = vadd.f32 %v3299, %v3597
      %v3677 = vadd.f32 %v3300, %v3599
      %v3678 = vadd.f32 %v3301, %v3602
      %v3679 = vadd.f32 %v3302, %v3604
      %v3680 = vadd.f32 %v3303, %v3607
      %v3681 = vadd.f32 %v3304, %v3609
      %v3682 = vadd.f32 %v3305, %v3612
      %v3683 = vadd.f32 %v3306, %v3614
      %v3684 = vadd.f32 %v3307, %v3617
      %v3685 = vadd.f32 %v3308, %v3619
      %v3686 = vadd.f32 %v3309, %v3622
      %v3687 = vadd.f32 %v3310, %v3624
      %v3688 = vadd.f32 %v3311, %v3627
      %v3689 = vadd.f32 %v3312, %v3629
      %v3690 = vadd.f32 %v3313, %v3632
      %v3691 = vadd.f32 %v3314, %v3634
      %v3692 = vadd.f32 %v3315, %v3637
      %v3693 = vadd.f32 %v3316, %v3639
      %v3694 = vadd.f32 %v3317, %v3642
      %v3695 = vadd.f32 %v3318, %v3644
      %v3696 = vadd.f32 %v3319, %v3647
      %v3697 = vadd.f32 %v3320, %v3649
      %v3698 = vadd.f32 %v3321, %v3652
      %v3699 = vadd.f32 %v3322, %v3654
      %v3700 = vadd.f32 %v3323, %v3657
      %v3701 = vadd.f32 %v3324, %v3659
      %v3702 = vadd.f32 %v3325, %v3662
      %v3703 = vadd.f32 %v3326, %v3664
      %v3704 = vadd.f32 %v3327, %v3667
      %v3705 = vadd.f32 %v3328, %v3669
      %v3706 = vadd.f32 %v3329, %v3672
      %v3707 = vadd.f32 %v3330, %v3674
      %v3708 = vld [vmem:[%s3] sm:$0x1]
      %v3710 = vperm.slane %v3708, 0
      %v3712 = vadd.f32 %v3676, %v3710
      %v3713 = vadd.f32 %v3677, %v3710
      %v3714 = vadd.f32 %v3678, %v3710
      %v3715 = vadd.f32 %v3679, %v3710
      %v3716 = vadd.f32 %v3680, %v3710
      %v3717 = vadd.f32 %v3681, %v3710
      %v3718 = vadd.f32 %v3682, %v3710
      %v3719 = vadd.f32 %v3683, %v3710
      %v3720 = vadd.f32 %v3684, %v3710
      %v3721 = vadd.f32 %v3685, %v3710
      %v3722 = vadd.f32 %v3686, %v3710
      %v3723 = vadd.f32 %v3687, %v3710
      %v3724 = vadd.f32 %v3688, %v3710
      %v3725 = vadd.f32 %v3689, %v3710
      %v3726 = vadd.f32 %v3690, %v3710
      %v3727 = vadd.f32 %v3691, %v3710
      %v3728 = vadd.f32 %v3692, %v3710
      %v3729 = vadd.f32 %v3693, %v3710
      %v3730 = vadd.f32 %v3694, %v3710
      %v3731 = vadd.f32 %v3695, %v3710
      %v3732 = vadd.f32 %v3696, %v3710
      %v3733 = vadd.f32 %v3697, %v3710
      %v3734 = vadd.f32 %v3698, %v3710
      %v3735 = vadd.f32 %v3699, %v3710
      %v3736 = vadd.f32 %v3700, %v3710
      %v3737 = vadd.f32 %v3701, %v3710
      %v3738 = vadd.f32 %v3702, %v3710
      %v3739 = vadd.f32 %v3703, %v3710
      %v3740 = vadd.f32 %v3704, %v3710
      %v3741 = vadd.f32 %v3705, %v3710
      %v3742 = vadd.f32 %v3706, %v3710
      %v3743 = vadd.f32 %v3707, %v3710
      %v3744 = vmax.f32 %v3712, 0.0
      %v3745 = vmax.f32 %v3713, 0.0
      %v3746 = vmax.f32 %v3714, 0.0
      %v3747 = vmax.f32 %v3715, 0.0
      %v3748 = vmax.f32 %v3716, 0.0
      %v3749 = vmax.f32 %v3717, 0.0
      %v3750 = vmax.f32 %v3718, 0.0
      %v3751 = vmax.f32 %v3719, 0.0
      %v3752 = vmax.f32 %v3720, 0.0
      %v3753 = vmax.f32 %v3721, 0.0
      %v3754 = vmax.f32 %v3722, 0.0
      %v3755 = vmax.f32 %v3723, 0.0
      %v3756 = vmax.f32 %v3724, 0.0
      %v3757 = vmax.f32 %v3725, 0.0
      %v3758 = vmax.f32 %v3726, 0.0
      %v3759 = vmax.f32 %v3727, 0.0
      %v3760 = vmax.f32 %v3728, 0.0
      %v3761 = vmax.f32 %v3729, 0.0
      %v3762 = vmax.f32 %v3730, 0.0
      %v3763 = vmax.f32 %v3731, 0.0
      %v3764 = vmax.f32 %v3732, 0.0
      %v3765 = vmax.f32 %v3733, 0.0
      %v3766 = vmax.f32 %v3734, 0.0
      %v3767 = vmax.f32 %v3735, 0.0
      %v3768 = vmax.f32 %v3736, 0.0
      %v3769 = vmax.f32 %v3737, 0.0
      %v3770 = vmax.f32 %v3738, 0.0
      %v3771 = vmax.f32 %v3739, 0.0
      %v3772 = vmax.f32 %v3740, 0.0
      %v3773 = vmax.f32 %v3741, 0.0
      %v3774 = vmax.f32 %v3742, 0.0
      %v3775 = vmax.f32 %v3743, 0.0
      %v3776 = vrot.slane %v3744, 7
      %v3777 = vrot.slane %v3745, 7
      %v3778 = vrot.slane %v3746, 7
      %v3779 = vrot.slane %v3747, 7
      %v3780 = vrot.slane %v3748, 7
      %v3781 = vrot.slane %v3749, 7
      %v3782 = vrot.slane %v3750, 7
      %v3783 = vrot.slane %v3751, 7
      %v3784 = vrot.slane %v3752, 7
      %v3785 = vrot.slane %v3753, 7
      %v3786 = vrot.slane %v3754, 7
      %v3787 = vrot.slane %v3755, 7
      %v3788 = vrot.slane %v3756, 7
      %v3789 = vrot.slane %v3757, 7
      %v3790 = vrot.slane %v3758, 7
      %v3791 = vrot.slane %v3759, 7
      %v3792 = vrot.slane %v3760, 7
      %v3793 = vrot.slane %v3761, 7
      %v3794 = vrot.slane %v3762, 7
      %v3795 = vrot.slane %v3763, 7
      %v3796 = vrot.slane %v3764, 7
      %v3797 = vrot.slane %v3765, 7
      %v3798 = vrot.slane %v3766, 7
      %v3799 = vrot.slane %v3767, 7
      %v3800 = vrot.slane %v3768, 7
      %v3801 = vrot.slane %v3769, 7
      %v3802 = vrot.slane %v3770, 7
      %v3803 = vrot.slane %v3771, 7
      %v3804 = vrot.slane %v3772, 7
      %v3805 = vrot.slane %v3773, 7
      %v3806 = vrot.slane %v3774, 7
      %v3807 = vrot.slane %v3775, 7
      %v3808 = vsel %vm408, %v3806, %v3807
      %v3809 = vsel %vm408, %v3805, %v3806
      %v3810 = vsel %vm408, %v3804, %v3805
      %v3811 = vsel %vm408, %v3803, %v3804
      %v3812 = vsel %vm408, %v3802, %v3803
      %v3813 = vsel %vm408, %v3801, %v3802
      %v3814 = vsel %vm408, %v3800, %v3801
      %v3815 = vsel %vm408, %v3799, %v3800
      %v3816 = vsel %vm408, %v3798, %v3799
      %v3817 = vsel %vm408, %v3797, %v3798
      %v3818 = vsel %vm408, %v3796, %v3797
      %v3819 = vsel %vm408, %v3795, %v3796
      %v3820 = vsel %vm408, %v3794, %v3795
      %v3821 = vsel %vm408, %v3793, %v3794
      %v3822 = vsel %vm408, %v3792, %v3793
      %v3823 = vsel %vm408, %v3791, %v3792
      %v3824 = vsel %vm408, %v3790, %v3791
      %v3825 = vsel %vm408, %v3789, %v3790
      %v3826 = vsel %vm408, %v3788, %v3789
      %v3827 = vsel %vm408, %v3787, %v3788
      %v3828 = vsel %vm408, %v3786, %v3787
      %v3829 = vsel %vm408, %v3785, %v3786
      %v3830 = vsel %vm408, %v3784, %v3785
      %v3831 = vsel %vm408, %v3783, %v3784
      %v3832 = vsel %vm408, %v3782, %v3783
      %v3833 = vsel %vm408, %v3781, %v3782
      %v3834 = vsel %vm408, %v3780, %v3781
      %v3835 = vsel %vm408, %v3779, %v3780
      %v3836 = vsel %vm408, %v3778, %v3779
      %v3837 = vsel %vm408, %v3777, %v3778
      %v3838 = vsel %vm408, %v3776, %v3777
      %v3839 = vsel %vm408, %v3807, %v3776
      %v3840 = vmul.f32 %v3809, %v444
      %v3841 = vmul.f32 %v3808, %v449
      %v3842 = vmul.f32 %v3839, %v454
      %v3843 = vmul.f32 %v3838, %v459
      %v3844 = vmul.f32 %v3837, %v464
      %v3845 = vmul.f32 %v3836, %v469
      %v3846 = vmul.f32 %v3835, %v474
      %v3847 = vmul.f32 %v3834, %v479
      %v3848 = vmul.f32 %v3833, %v484
      %v3849 = vmul.f32 %v3832, %v489
      %v3850 = vmul.f32 %v3831, %v494
      %v3851 = vmul.f32 %v3830, %v499
      %v3852 = vmul.f32 %v3829, %v504
      %v3853 = vmul.f32 %v3828, %v509
      %v3854 = vmul.f32 %v3827, %v514
      %v3855 = vmul.f32 %v3826, %v519
      %v3856 = vmul.f32 %v3825, %v524
      %v3857 = vmul.f32 %v3824, %v529
      %v3858 = vmul.f32 %v3823, %v534
      %v3859 = vmul.f32 %v3822, %v539
      %v3860 = vmul.f32 %v3821, %v544
      %v3861 = vmul.f32 %v3820, %v549
      %v3862 = vmul.f32 %v3819, %v554
      %v3863 = vmul.f32 %v3818, %v559
      %v3864 = vmul.f32 %v3817, %v564
      %v3865 = vmul.f32 %v3816, %v569
      %v3866 = vmul.f32 %v3815, %v574
      %v3867 = vmul.f32 %v3814, %v579
      %v3868 = vmul.f32 %v3813, %v584
      %v3869 = vmul.f32 %v3812, %v589
      %v3870 = vmul.f32 %v3811, %v594
      %v3871 = vmul.f32 %v3810, %v599
      %v3872 = vpack.c.bf16 %v3841, %v3840
      %v3873 = vpack.c.bf16 %v3843, %v3842
      %v3874 = vpack.c.bf16 %v3845, %v3844
      %v3875 = vpack.c.bf16 %v3847, %v3846
      %v3876 = vpack.c.bf16 %v3849, %v3848
      %v3877 = vpack.c.bf16 %v3851, %v3850
      %v3878 = vpack.c.bf16 %v3853, %v3852
      %v3879 = vpack.c.bf16 %v3855, %v3854
      %v3880 = vpack.c.bf16 %v3857, %v3856
      %v3881 = vpack.c.bf16 %v3859, %v3858
      %v3882 = vpack.c.bf16 %v3861, %v3860
      %v3883 = vpack.c.bf16 %v3863, %v3862
      %v3884 = vpack.c.bf16 %v3865, %v3864
      %v3885 = vpack.c.bf16 %v3867, %v3866
      %v3886 = vpack.c.bf16 %v3869, %v3868
      %v3887 = vpack.c.bf16 %v3871, %v3870
      %v3888 = vld [vmem:[%s4] sm:$0xf]
      %v3889 = vld [vmem:[%s4 + $0x4] sm:$0xf]
      %v3890 = vld [vmem:[%s4 + $0x8] sm:$0xf]
      %v3891 = vld [vmem:[%s4 + $0xc] sm:$0xf]
      %v3892 = vld [vmem:[%s4 + $0x10] sm:$0xf]
      %v3893 = vld [vmem:[%s4 + $0x14] sm:$0xf]
      %v3894 = vld [vmem:[%s4 + $0x18] sm:$0xf]
      %v3895 = vld [vmem:[%s4 + $0x1c] sm:$0xf]
      %v3896 = vmul.f32 %v3774, %v659
      %v3897 = vmul.f32 %v3775, %v663
      %v3898 = vmul.f32 %v3744, %v667
      %v3899 = vmul.f32 %v3745, %v671
      %v3900 = vmul.f32 %v3746, %v675
      %v3901 = vmul.f32 %v3747, %v679
      %v3902 = vmul.f32 %v3748, %v683
      %v3903 = vmul.f32 %v3749, %v687
      %v3904 = vmul.f32 %v3750, %v691
      %v3905 = vmul.f32 %v3751, %v695
      %v3906 = vmul.f32 %v3752, %v699
      %v3907 = vmul.f32 %v3753, %v703
      %v3908 = vmul.f32 %v3754, %v707
      %v3909 = vmul.f32 %v3755, %v711
      %v3910 = vmul.f32 %v3756, %v715
      %v3911 = vmul.f32 %v3757, %v719
      %v3912 = vmul.f32 %v3758, %v723
      %v3913 = vmul.f32 %v3759, %v727
      %v3914 = vmul.f32 %v3760, %v731
      %v3915 = vmul.f32 %v3761, %v735
      %v3916 = vmul.f32 %v3762, %v739
      %v3917 = vmul.f32 %v3763, %v743
      %v3918 = vmul.f32 %v3764, %v747
      %v3919 = vmul.f32 %v3765, %v751
      %v3920 = vmul.f32 %v3766, %v755
      %v3921 = vmul.f32 %v3767, %v759
      %v3922 = vmul.f32 %v3768, %v763
      %v3923 = vmul.f32 %v3769, %v767
      %v3924 = vmul.f32 %v3770, %v771
      %v3925 = vmul.f32 %v3771, %v775
      %v3926 = vmul.f32 %v3772, %v779
      %v3927 = vmul.f32 %v3773, %v783
      %v3928 = vpack.c.bf16 %v3897, %v3896
      %v3929 = vpack.c.bf16 %v3899, %v3898
      %v3930 = vpack.c.bf16 %v3901, %v3900
      %v3931 = vpack.c.bf16 %v3903, %v3902
      %v3932 = vpack.c.bf16 %v3905, %v3904
      %v3933 = vpack.c.bf16 %v3907, %v3906
      %v3934 = vpack.c.bf16 %v3909, %v3908
      %v3935 = vpack.c.bf16 %v3911, %v3910
      %v3936 = vpack.c.bf16 %v3913, %v3912
      %v3937 = vpack.c.bf16 %v3915, %v3914
      %v3938 = vpack.c.bf16 %v3917, %v3916
      %v3939 = vpack.c.bf16 %v3919, %v3918
      %v3940 = vpack.c.bf16 %v3921, %v3920
      %v3941 = vpack.c.bf16 %v3923, %v3922
      %v3942 = vpack.c.bf16 %v3925, %v3924
      %v3943 = vpack.c.bf16 %v3927, %v3926
      %v3944 = vld [vmem:[%s4 + $0x20] sm:$0xf]
      %v3945 = vld [vmem:[%s4 + $0x24] sm:$0xf]
      %v3946 = vld [vmem:[%s4 + $0x28] sm:$0xf]
      %v3947 = vld [vmem:[%s4 + $0x2c] sm:$0xf]
      %v3948 = vld [vmem:[%s4 + $0x30] sm:$0xf]
      %v3949 = vld [vmem:[%s4 + $0x34] sm:$0xf]
      %v3950 = vld [vmem:[%s4 + $0x38] sm:$0xf]
      %v3951 = vld [vmem:[%s4 + $0x3c] sm:$0xf]
      %v3960 = vunpack.c.l.b16 %v3944
      %v3961 = vunpack.c.l.b16 %v3945
      %v3962 = vunpack.c.l.b16 %v3946
      %v3963 = vunpack.c.l.b16 %v3947
      %v3964 = vunpack.c.l.b16 %v3948
      %v3965 = vunpack.c.l.b16 %v3949
      %v3966 = vunpack.c.l.b16 %v3950
      %v3967 = vunpack.c.l.b16 %v3951
      %v3968 = vpack.c.b16 %v3961, %v3960
      %v3969 = vpack.c.b16 %v3963, %v3962
      %v3970 = vpack.c.b16 %v3965, %v3964
      %v3971 = vpack.c.b16 %v3967, %v3966
      %v3977 = vsel %vm865, %v3928, 0
      %v3980 = vsel %vm865, %v3929, 0
      %v3983 = vsel %vm865, %v3930, 0
      %v3986 = vsel %vm865, %v3931, 0
      %v3989 = vsel %vm865, %v3932, 0
      %v3992 = vsel %vm865, %v3933, 0
      %v3995 = vsel %vm865, %v3934, 0
      %v3998 = vsel %vm865, %v3935, 0
      %v4001 = vsel %vm865, %v3936, 0
      %v4004 = vsel %vm865, %v3937, 0
      %v4007 = vsel %vm865, %v3938, 0
      %v4010 = vsel %vm865, %v3939, 0
      %v4013 = vsel %vm865, %v3940, 0
      %v4016 = vsel %vm865, %v3941, 0
      %v4019 = vsel %vm865, %v3942, 0
      %v4022 = vsel %vm865, %v3943, 0
      %4024 = vmatpush.bf16.msra.mxu0 0
      %4025 = vmatpush.bf16.msra.mxu0 0
      %4026 = vmatpush.bf16.msra.mxu0 0
      %4027 = vmatpush.bf16.msra.mxu0 0
      %4028 = vmatpush.bf16.msra.mxu0 %v3971
      %4029 = vmatpush.bf16.msra.mxu0 %v3970
      %4030 = vmatpush.bf16.msra.mxu0 %v3969
      %4031 = vmatpush.bf16.msra.mxu0 %v3968
      %4032 = vmatmul.bf16.gmra.mxu0 %v3977
      %v4033 = vpop.f32.mrf.mxu0
      %v4034 = vadd.f32 0.0, %v4033
      %v4035 = vpop.f32.mrf.mxu0
      %v4036 = vadd.f32 0.0, %v4035
      %4037 = vmatmul.bf16.gmra.mxu0 %v3980
      %v4038 = vpop.f32.mrf.mxu0
      %v4039 = vadd.f32 0.0, %v4038
      %v4040 = vpop.f32.mrf.mxu0
      %v4041 = vadd.f32 0.0, %v4040
      %4042 = vmatmul.bf16.gmra.mxu0 %v3983
      %v4043 = vpop.f32.mrf.mxu0
      %v4044 = vadd.f32 0.0, %v4043
      %v4045 = vpop.f32.mrf.mxu0
      %v4046 = vadd.f32 0.0, %v4045
      %4047 = vmatmul.bf16.gmra.mxu0 %v3986
      %v4048 = vpop.f32.mrf.mxu0
      %v4049 = vadd.f32 0.0, %v4048
      %v4050 = vpop.f32.mrf.mxu0
      %v4051 = vadd.f32 0.0, %v4050
      %4052 = vmatmul.bf16.gmra.mxu0 %v3989
      %v4053 = vpop.f32.mrf.mxu0
      %v4054 = vadd.f32 0.0, %v4053
      %v4055 = vpop.f32.mrf.mxu0
      %v4056 = vadd.f32 0.0, %v4055
      %4057 = vmatmul.bf16.gmra.mxu0 %v3992
      %v4058 = vpop.f32.mrf.mxu0
      %v4059 = vadd.f32 0.0, %v4058
      %v4060 = vpop.f32.mrf.mxu0
      %v4061 = vadd.f32 0.0, %v4060
      %4062 = vmatmul.bf16.gmra.mxu0 %v3995
      %v4063 = vpop.f32.mrf.mxu0
      %v4064 = vadd.f32 0.0, %v4063
      %v4065 = vpop.f32.mrf.mxu0
      %v4066 = vadd.f32 0.0, %v4065
      %4067 = vmatmul.bf16.gmra.mxu0 %v3998
      %v4068 = vpop.f32.mrf.mxu0
      %v4069 = vadd.f32 0.0, %v4068
      %v4070 = vpop.f32.mrf.mxu0
      %v4071 = vadd.f32 0.0, %v4070
      %4072 = vmatmul.bf16.gmra.mxu0 %v4001
      %v4073 = vpop.f32.mrf.mxu0
      %v4074 = vadd.f32 0.0, %v4073
      %v4075 = vpop.f32.mrf.mxu0
      %v4076 = vadd.f32 0.0, %v4075
      %4077 = vmatmul.bf16.gmra.mxu0 %v4004
      %v4078 = vpop.f32.mrf.mxu0
      %v4079 = vadd.f32 0.0, %v4078
      %v4080 = vpop.f32.mrf.mxu0
      %v4081 = vadd.f32 0.0, %v4080
      %4082 = vmatmul.bf16.gmra.mxu0 %v4007
      %v4083 = vpop.f32.mrf.mxu0
      %v4084 = vadd.f32 0.0, %v4083
      %v4085 = vpop.f32.mrf.mxu0
      %v4086 = vadd.f32 0.0, %v4085
      %4087 = vmatmul.bf16.gmra.mxu0 %v4010
      %v4088 = vpop.f32.mrf.mxu0
      %v4089 = vadd.f32 0.0, %v4088
      %v4090 = vpop.f32.mrf.mxu0
      %v4091 = vadd.f32 0.0, %v4090
      %4092 = vmatmul.bf16.gmra.mxu0 %v4013
      %v4093 = vpop.f32.mrf.mxu0
      %v4094 = vadd.f32 0.0, %v4093
      %v4095 = vpop.f32.mrf.mxu0
      %v4096 = vadd.f32 0.0, %v4095
      %4097 = vmatmul.bf16.gmra.mxu0 %v4016
      %v4098 = vpop.f32.mrf.mxu0
      %v4099 = vadd.f32 0.0, %v4098
      %v4100 = vpop.f32.mrf.mxu0
      %v4101 = vadd.f32 0.0, %v4100
      %4102 = vmatmul.bf16.gmra.mxu0 %v4019
      %v4103 = vpop.f32.mrf.mxu0
      %v4104 = vadd.f32 0.0, %v4103
      %v4105 = vpop.f32.mrf.mxu0
      %v4106 = vadd.f32 0.0, %v4105
      %4107 = vmatmul.bf16.gmra.mxu0 %v4022
      %v4108 = vpop.f32.mrf.mxu0
      %v4109 = vadd.f32 0.0, %v4108
      %v4110 = vpop.f32.mrf.mxu0
      %v4111 = vadd.f32 0.0, %v4110
      %4112 = vdwg.mxu0
      %v4121 = vunpack.c.l.b16 %v3888
      %v4122 = vunpack.c.l.b16 %v3889
      %v4123 = vunpack.c.l.b16 %v3890
      %v4124 = vunpack.c.l.b16 %v3891
      %v4125 = vunpack.c.l.b16 %v3892
      %v4126 = vunpack.c.l.b16 %v3893
      %v4127 = vunpack.c.l.b16 %v3894
      %v4128 = vunpack.c.l.b16 %v3895
      %v4129 = vpack.c.b16 %v4122, %v4121
      %v4130 = vpack.c.b16 %v4124, %v4123
      %v4131 = vpack.c.b16 %v4126, %v4125
      %v4132 = vpack.c.b16 %v4128, %v4127
      %v4138 = vsel %vm865, %v3872, 0
      %v4141 = vsel %vm865, %v3873, 0
      %v4144 = vsel %vm865, %v3874, 0
      %v4147 = vsel %vm865, %v3875, 0
      %v4150 = vsel %vm865, %v3876, 0
      %v4153 = vsel %vm865, %v3877, 0
      %v4156 = vsel %vm865, %v3878, 0
      %v4159 = vsel %vm865, %v3879, 0
      %v4162 = vsel %vm865, %v3880, 0
      %v4165 = vsel %vm865, %v3881, 0
      %v4168 = vsel %vm865, %v3882, 0
      %v4171 = vsel %vm865, %v3883, 0
      %v4174 = vsel %vm865, %v3884, 0
      %v4177 = vsel %vm865, %v3885, 0
      %v4180 = vsel %vm865, %v3886, 0
      %v4183 = vsel %vm865, %v3887, 0
      %4185 = vmatpush.bf16.msra.mxu0 0
      %4186 = vmatpush.bf16.msra.mxu0 0
      %4187 = vmatpush.bf16.msra.mxu0 0
      %4188 = vmatpush.bf16.msra.mxu0 0
      %4189 = vmatpush.bf16.msra.mxu0 %v4132
      %4190 = vmatpush.bf16.msra.mxu0 %v4131
      %4191 = vmatpush.bf16.msra.mxu0 %v4130
      %4192 = vmatpush.bf16.msra.mxu0 %v4129
      %4193 = vmatmul.bf16.gmra.mxu0 %v4138
      %v4194 = vpop.f32.mrf.mxu0
      %v4195 = vadd.f32 %v4034, %v4194
      %v4196 = vpop.f32.mrf.mxu0
      %v4197 = vadd.f32 %v4036, %v4196
      %4198 = vmatmul.bf16.gmra.mxu0 %v4141
      %v4199 = vpop.f32.mrf.mxu0
      %v4200 = vadd.f32 %v4039, %v4199
      %v4201 = vpop.f32.mrf.mxu0
      %v4202 = vadd.f32 %v4041, %v4201
      %4203 = vmatmul.bf16.gmra.mxu0 %v4144
      %v4204 = vpop.f32.mrf.mxu0
      %v4205 = vadd.f32 %v4044, %v4204
      %v4206 = vpop.f32.mrf.mxu0
      %v4207 = vadd.f32 %v4046, %v4206
      %4208 = vmatmul.bf16.gmra.mxu0 %v4147
      %v4209 = vpop.f32.mrf.mxu0
      %v4210 = vadd.f32 %v4049, %v4209
      %v4211 = vpop.f32.mrf.mxu0
      %v4212 = vadd.f32 %v4051, %v4211
      %4213 = vmatmul.bf16.gmra.mxu0 %v4150
      %v4214 = vpop.f32.mrf.mxu0
      %v4215 = vadd.f32 %v4054, %v4214
      %v4216 = vpop.f32.mrf.mxu0
      %v4217 = vadd.f32 %v4056, %v4216
      %4218 = vmatmul.bf16.gmra.mxu0 %v4153
      %v4219 = vpop.f32.mrf.mxu0
      %v4220 = vadd.f32 %v4059, %v4219
      %v4221 = vpop.f32.mrf.mxu0
      %v4222 = vadd.f32 %v4061, %v4221
      %4223 = vmatmul.bf16.gmra.mxu0 %v4156
      %v4224 = vpop.f32.mrf.mxu0
      %v4225 = vadd.f32 %v4064, %v4224
      %v4226 = vpop.f32.mrf.mxu0
      %v4227 = vadd.f32 %v4066, %v4226
      %4228 = vmatmul.bf16.gmra.mxu0 %v4159
      %v4229 = vpop.f32.mrf.mxu0
      %v4230 = vadd.f32 %v4069, %v4229
      %v4231 = vpop.f32.mrf.mxu0
      %v4232 = vadd.f32 %v4071, %v4231
      %4233 = vmatmul.bf16.gmra.mxu0 %v4162
      %v4234 = vpop.f32.mrf.mxu0
      %v4235 = vadd.f32 %v4074, %v4234
      %v4236 = vpop.f32.mrf.mxu0
      %v4237 = vadd.f32 %v4076, %v4236
      %4238 = vmatmul.bf16.gmra.mxu0 %v4165
      %v4239 = vpop.f32.mrf.mxu0
      %v4240 = vadd.f32 %v4079, %v4239
      %v4241 = vpop.f32.mrf.mxu0
      %v4242 = vadd.f32 %v4081, %v4241
      %4243 = vmatmul.bf16.gmra.mxu0 %v4168
      %v4244 = vpop.f32.mrf.mxu0
      %v4245 = vadd.f32 %v4084, %v4244
      %v4246 = vpop.f32.mrf.mxu0
      %v4247 = vadd.f32 %v4086, %v4246
      %4248 = vmatmul.bf16.gmra.mxu0 %v4171
      %v4249 = vpop.f32.mrf.mxu0
      %v4250 = vadd.f32 %v4089, %v4249
      %v4251 = vpop.f32.mrf.mxu0
      %v4252 = vadd.f32 %v4091, %v4251
      %4253 = vmatmul.bf16.gmra.mxu0 %v4174
      %v4254 = vpop.f32.mrf.mxu0
      %v4255 = vadd.f32 %v4094, %v4254
      %v4256 = vpop.f32.mrf.mxu0
      %v4257 = vadd.f32 %v4096, %v4256
      %4258 = vmatmul.bf16.gmra.mxu0 %v4177
      %v4259 = vpop.f32.mrf.mxu0
      %v4260 = vadd.f32 %v4099, %v4259
      %v4261 = vpop.f32.mrf.mxu0
      %v4262 = vadd.f32 %v4101, %v4261
      %4263 = vmatmul.bf16.gmra.mxu0 %v4180
      %v4264 = vpop.f32.mrf.mxu0
      %v4265 = vadd.f32 %v4104, %v4264
      %v4266 = vpop.f32.mrf.mxu0
      %v4267 = vadd.f32 %v4106, %v4266
      %4268 = vmatmul.bf16.gmra.mxu0 %v4183
      %v4269 = vpop.f32.mrf.mxu0
      %v4270 = vadd.f32 %v4109, %v4269
      %v4271 = vpop.f32.mrf.mxu0
      %v4272 = vadd.f32 %v4111, %v4271
      %4273 = vdwg.mxu0
      %v4274 = vrot.slane %v3744, 1
      %v4275 = vrot.slane %v3745, 1
      %v4276 = vrot.slane %v3746, 1
      %v4277 = vrot.slane %v3747, 1
      %v4278 = vrot.slane %v3748, 1
      %v4279 = vrot.slane %v3749, 1
      %v4280 = vrot.slane %v3750, 1
      %v4281 = vrot.slane %v3751, 1
      %v4282 = vrot.slane %v3752, 1
      %v4283 = vrot.slane %v3753, 1
      %v4284 = vrot.slane %v3754, 1
      %v4285 = vrot.slane %v3755, 1
      %v4286 = vrot.slane %v3756, 1
      %v4287 = vrot.slane %v3757, 1
      %v4288 = vrot.slane %v3758, 1
      %v4289 = vrot.slane %v3759, 1
      %v4290 = vrot.slane %v3760, 1
      %v4291 = vrot.slane %v3761, 1
      %v4292 = vrot.slane %v3762, 1
      %v4293 = vrot.slane %v3763, 1
      %v4294 = vrot.slane %v3764, 1
      %v4295 = vrot.slane %v3765, 1
      %v4296 = vrot.slane %v3766, 1
      %v4297 = vrot.slane %v3767, 1
      %v4298 = vrot.slane %v3768, 1
      %v4299 = vrot.slane %v3769, 1
      %v4300 = vrot.slane %v3770, 1
      %v4301 = vrot.slane %v3771, 1
      %v4302 = vrot.slane %v3772, 1
      %v4303 = vrot.slane %v3773, 1
      %v4304 = vrot.slane %v3774, 1
      %v4305 = vrot.slane %v3775, 1
      %v4306 = vsel %vm1196, %v4304, %v4305
      %v4307 = vsel %vm1196, %v4303, %v4304
      %v4308 = vsel %vm1196, %v4302, %v4303
      %v4309 = vsel %vm1196, %v4301, %v4302
      %v4310 = vsel %vm1196, %v4300, %v4301
      %v4311 = vsel %vm1196, %v4299, %v4300
      %v4312 = vsel %vm1196, %v4298, %v4299
      %v4313 = vsel %vm1196, %v4297, %v4298
      %v4314 = vsel %vm1196, %v4296, %v4297
      %v4315 = vsel %vm1196, %v4295, %v4296
      %v4316 = vsel %vm1196, %v4294, %v4295
      %v4317 = vsel %vm1196, %v4293, %v4294
      %v4318 = vsel %vm1196, %v4292, %v4293
      %v4319 = vsel %vm1196, %v4291, %v4292
      %v4320 = vsel %vm1196, %v4290, %v4291
      %v4321 = vsel %vm1196, %v4289, %v4290
      %v4322 = vsel %vm1196, %v4288, %v4289
      %v4323 = vsel %vm1196, %v4287, %v4288
      %v4324 = vsel %vm1196, %v4286, %v4287
      %v4325 = vsel %vm1196, %v4285, %v4286
      %v4326 = vsel %vm1196, %v4284, %v4285
      %v4327 = vsel %vm1196, %v4283, %v4284
      %v4328 = vsel %vm1196, %v4282, %v4283
      %v4329 = vsel %vm1196, %v4281, %v4282
      %v4330 = vsel %vm1196, %v4280, %v4281
      %v4331 = vsel %vm1196, %v4279, %v4280
      %v4332 = vsel %vm1196, %v4278, %v4279
      %v4333 = vsel %vm1196, %v4277, %v4278
      %v4334 = vsel %vm1196, %v4276, %v4277
      %v4335 = vsel %vm1196, %v4275, %v4276
      %v4336 = vsel %vm1196, %v4274, %v4275
      %v4337 = vsel %vm1196, %v4305, %v4274
      %v4338 = vmul.f32 %v4306, %v1231
      %v4339 = vmul.f32 %v4337, %v1235
      %v4340 = vmul.f32 %v4336, %v1239
      %v4341 = vmul.f32 %v4335, %v1243
      %v4342 = vmul.f32 %v4334, %v1247
      %v4343 = vmul.f32 %v4333, %v1251
      %v4344 = vmul.f32 %v4332, %v1255
      %v4345 = vmul.f32 %v4331, %v1259
      %v4346 = vmul.f32 %v4330, %v1263
      %v4347 = vmul.f32 %v4329, %v1267
      %v4348 = vmul.f32 %v4328, %v1271
      %v4349 = vmul.f32 %v4327, %v1275
      %v4350 = vmul.f32 %v4326, %v1279
      %v4351 = vmul.f32 %v4325, %v1283
      %v4352 = vmul.f32 %v4324, %v1287
      %v4353 = vmul.f32 %v4323, %v1291
      %v4354 = vmul.f32 %v4322, %v1295
      %v4355 = vmul.f32 %v4321, %v1299
      %v4356 = vmul.f32 %v4320, %v1303
      %v4357 = vmul.f32 %v4319, %v1307
      %v4358 = vmul.f32 %v4318, %v1311
      %v4359 = vmul.f32 %v4317, %v1315
      %v4360 = vmul.f32 %v4316, %v1319
      %v4361 = vmul.f32 %v4315, %v1323
      %v4362 = vmul.f32 %v4314, %v1327
      %v4363 = vmul.f32 %v4313, %v1331
      %v4364 = vmul.f32 %v4312, %v1335
      %v4365 = vmul.f32 %v4311, %v1339
      %v4366 = vmul.f32 %v4310, %v1343
      %v4367 = vmul.f32 %v4309, %v1347
      %v4368 = vmul.f32 %v4308, %v1351
      %v4369 = vmul.f32 %v4307, %v1355
      %v4370 = vpack.c.bf16 %v4339, %v4338
      %v4371 = vpack.c.bf16 %v4341, %v4340
      %v4372 = vpack.c.bf16 %v4343, %v4342
      %v4373 = vpack.c.bf16 %v4345, %v4344
      %v4374 = vpack.c.bf16 %v4347, %v4346
      %v4375 = vpack.c.bf16 %v4349, %v4348
      %v4376 = vpack.c.bf16 %v4351, %v4350
      %v4377 = vpack.c.bf16 %v4353, %v4352
      %v4378 = vpack.c.bf16 %v4355, %v4354
      %v4379 = vpack.c.bf16 %v4357, %v4356
      %v4380 = vpack.c.bf16 %v4359, %v4358
      %v4381 = vpack.c.bf16 %v4361, %v4360
      %v4382 = vpack.c.bf16 %v4363, %v4362
      %v4383 = vpack.c.bf16 %v4365, %v4364
      %v4384 = vpack.c.bf16 %v4367, %v4366
      %v4385 = vpack.c.bf16 %v4369, %v4368
      %v4386 = vld [vmem:[%s4 + $0x40] sm:$0xf]
      %v4387 = vld [vmem:[%s4 + $0x44] sm:$0xf]
      %v4388 = vld [vmem:[%s4 + $0x48] sm:$0xf]
      %v4389 = vld [vmem:[%s4 + $0x4c] sm:$0xf]
      %v4390 = vld [vmem:[%s4 + $0x50] sm:$0xf]
      %v4391 = vld [vmem:[%s4 + $0x54] sm:$0xf]
      %v4392 = vld [vmem:[%s4 + $0x58] sm:$0xf]
      %v4393 = vld [vmem:[%s4 + $0x5c] sm:$0xf]
      %v4402 = vunpack.c.l.b16 %v4386
      %v4403 = vunpack.c.l.b16 %v4387
      %v4404 = vunpack.c.l.b16 %v4388
      %v4405 = vunpack.c.l.b16 %v4389
      %v4406 = vunpack.c.l.b16 %v4390
      %v4407 = vunpack.c.l.b16 %v4391
      %v4408 = vunpack.c.l.b16 %v4392
      %v4409 = vunpack.c.l.b16 %v4393
      %v4410 = vpack.c.b16 %v4403, %v4402
      %v4411 = vpack.c.b16 %v4405, %v4404
      %v4412 = vpack.c.b16 %v4407, %v4406
      %v4413 = vpack.c.b16 %v4409, %v4408
      %v4419 = vsel %vm865, %v4370, 0
      %v4422 = vsel %vm865, %v4371, 0
      %v4425 = vsel %vm865, %v4372, 0
      %v4428 = vsel %vm865, %v4373, 0
      %v4431 = vsel %vm865, %v4374, 0
      %v4434 = vsel %vm865, %v4375, 0
      %v4437 = vsel %vm865, %v4376, 0
      %v4440 = vsel %vm865, %v4377, 0
      %v4443 = vsel %vm865, %v4378, 0
      %v4446 = vsel %vm865, %v4379, 0
      %v4449 = vsel %vm865, %v4380, 0
      %v4452 = vsel %vm865, %v4381, 0
      %v4455 = vsel %vm865, %v4382, 0
      %v4458 = vsel %vm865, %v4383, 0
      %v4461 = vsel %vm865, %v4384, 0
      %v4464 = vsel %vm865, %v4385, 0
      %4466 = vmatpush.bf16.msra.mxu0 0
      %4467 = vmatpush.bf16.msra.mxu0 0
      %4468 = vmatpush.bf16.msra.mxu0 0
      %4469 = vmatpush.bf16.msra.mxu0 0
      %4470 = vmatpush.bf16.msra.mxu0 %v4413
      %4471 = vmatpush.bf16.msra.mxu0 %v4412
      %4472 = vmatpush.bf16.msra.mxu0 %v4411
      %4473 = vmatpush.bf16.msra.mxu0 %v4410
      %4474 = vmatmul.bf16.gmra.mxu0 %v4419
      %v4475 = vpop.f32.mrf.mxu0
      %v4476 = vadd.f32 0.0, %v4475
      %v4477 = vpop.f32.mrf.mxu0
      %v4478 = vadd.f32 0.0, %v4477
      %4479 = vmatmul.bf16.gmra.mxu0 %v4422
      %v4480 = vpop.f32.mrf.mxu0
      %v4481 = vadd.f32 0.0, %v4480
      %v4482 = vpop.f32.mrf.mxu0
      %v4483 = vadd.f32 0.0, %v4482
      %4484 = vmatmul.bf16.gmra.mxu0 %v4425
      %v4485 = vpop.f32.mrf.mxu0
      %v4486 = vadd.f32 0.0, %v4485
      %v4487 = vpop.f32.mrf.mxu0
      %v4488 = vadd.f32 0.0, %v4487
      %4489 = vmatmul.bf16.gmra.mxu0 %v4428
      %v4490 = vpop.f32.mrf.mxu0
      %v4491 = vadd.f32 0.0, %v4490
      %v4492 = vpop.f32.mrf.mxu0
      %v4493 = vadd.f32 0.0, %v4492
      %4494 = vmatmul.bf16.gmra.mxu0 %v4431
      %v4495 = vpop.f32.mrf.mxu0
      %v4496 = vadd.f32 0.0, %v4495
      %v4497 = vpop.f32.mrf.mxu0
      %v4498 = vadd.f32 0.0, %v4497
      %4499 = vmatmul.bf16.gmra.mxu0 %v4434
      %v4500 = vpop.f32.mrf.mxu0
      %v4501 = vadd.f32 0.0, %v4500
      %v4502 = vpop.f32.mrf.mxu0
      %v4503 = vadd.f32 0.0, %v4502
      %4504 = vmatmul.bf16.gmra.mxu0 %v4437
      %v4505 = vpop.f32.mrf.mxu0
      %v4506 = vadd.f32 0.0, %v4505
      %v4507 = vpop.f32.mrf.mxu0
      %v4508 = vadd.f32 0.0, %v4507
      %4509 = vmatmul.bf16.gmra.mxu0 %v4440
      %v4510 = vpop.f32.mrf.mxu0
      %v4511 = vadd.f32 0.0, %v4510
      %v4512 = vpop.f32.mrf.mxu0
      %v4513 = vadd.f32 0.0, %v4512
      %4514 = vmatmul.bf16.gmra.mxu0 %v4443
      %v4515 = vpop.f32.mrf.mxu0
      %v4516 = vadd.f32 0.0, %v4515
      %v4517 = vpop.f32.mrf.mxu0
      %v4518 = vadd.f32 0.0, %v4517
      %4519 = vmatmul.bf16.gmra.mxu0 %v4446
      %v4520 = vpop.f32.mrf.mxu0
      %v4521 = vadd.f32 0.0, %v4520
      %v4522 = vpop.f32.mrf.mxu0
      %v4523 = vadd.f32 0.0, %v4522
      %4524 = vmatmul.bf16.gmra.mxu0 %v4449
      %v4525 = vpop.f32.mrf.mxu0
      %v4526 = vadd.f32 0.0, %v4525
      %v4527 = vpop.f32.mrf.mxu0
      %v4528 = vadd.f32 0.0, %v4527
      %4529 = vmatmul.bf16.gmra.mxu0 %v4452
      %v4530 = vpop.f32.mrf.mxu0
      %v4531 = vadd.f32 0.0, %v4530
      %v4532 = vpop.f32.mrf.mxu0
      %v4533 = vadd.f32 0.0, %v4532
      %4534 = vmatmul.bf16.gmra.mxu0 %v4455
      %v4535 = vpop.f32.mrf.mxu0
      %v4536 = vadd.f32 0.0, %v4535
      %v4537 = vpop.f32.mrf.mxu0
      %v4538 = vadd.f32 0.0, %v4537
      %4539 = vmatmul.bf16.gmra.mxu0 %v4458
      %v4540 = vpop.f32.mrf.mxu0
      %v4541 = vadd.f32 0.0, %v4540
      %v4542 = vpop.f32.mrf.mxu0
      %v4543 = vadd.f32 0.0, %v4542
      %4544 = vmatmul.bf16.gmra.mxu0 %v4461
      %v4545 = vpop.f32.mrf.mxu0
      %v4546 = vadd.f32 0.0, %v4545
      %v4547 = vpop.f32.mrf.mxu0
      %v4548 = vadd.f32 0.0, %v4547
      %4549 = vmatmul.bf16.gmra.mxu0 %v4464
      %v4550 = vpop.f32.mrf.mxu0
      %v4551 = vadd.f32 0.0, %v4550
      %v4552 = vpop.f32.mrf.mxu0
      %v4553 = vadd.f32 0.0, %v4552
      %4554 = vdwg.mxu0
      %v4555 = vadd.f32 %v4195, %v4476
      %v4556 = vadd.f32 %v4197, %v4478
      %v4557 = vadd.f32 %v4200, %v4481
      %v4558 = vadd.f32 %v4202, %v4483
      %v4559 = vadd.f32 %v4205, %v4486
      %v4560 = vadd.f32 %v4207, %v4488
      %v4561 = vadd.f32 %v4210, %v4491
      %v4562 = vadd.f32 %v4212, %v4493
      %v4563 = vadd.f32 %v4215, %v4496
      %v4564 = vadd.f32 %v4217, %v4498
      %v4565 = vadd.f32 %v4220, %v4501
      %v4566 = vadd.f32 %v4222, %v4503
      %v4567 = vadd.f32 %v4225, %v4506
      %v4568 = vadd.f32 %v4227, %v4508
      %v4569 = vadd.f32 %v4230, %v4511
      %v4570 = vadd.f32 %v4232, %v4513
      %v4571 = vadd.f32 %v4235, %v4516
      %v4572 = vadd.f32 %v4237, %v4518
      %v4573 = vadd.f32 %v4240, %v4521
      %v4574 = vadd.f32 %v4242, %v4523
      %v4575 = vadd.f32 %v4245, %v4526
      %v4576 = vadd.f32 %v4247, %v4528
      %v4577 = vadd.f32 %v4250, %v4531
      %v4578 = vadd.f32 %v4252, %v4533
      %v4579 = vadd.f32 %v4255, %v4536
      %v4580 = vadd.f32 %v4257, %v4538
      %v4581 = vadd.f32 %v4260, %v4541
      %v4582 = vadd.f32 %v4262, %v4543
      %v4583 = vadd.f32 %v4265, %v4546
      %v4584 = vadd.f32 %v4267, %v4548
      %v4585 = vadd.f32 %v4270, %v4551
      %v4586 = vadd.f32 %v4272, %v4553
      %v4587 = vmul.f32 %v3839, %v1608
      %v4588 = vmul.f32 %v3838, %v1612
      %v4589 = vmul.f32 %v3837, %v1616
      %v4590 = vmul.f32 %v3836, %v1620
      %v4591 = vmul.f32 %v3835, %v1624
      %v4592 = vmul.f32 %v3834, %v1628
      %v4593 = vmul.f32 %v3833, %v1632
      %v4594 = vmul.f32 %v3832, %v1636
      %v4595 = vmul.f32 %v3831, %v1640
      %v4596 = vmul.f32 %v3830, %v1644
      %v4597 = vmul.f32 %v3829, %v1648
      %v4598 = vmul.f32 %v3828, %v1652
      %v4599 = vmul.f32 %v3827, %v1656
      %v4600 = vmul.f32 %v3826, %v1660
      %v4601 = vmul.f32 %v3825, %v1664
      %v4602 = vmul.f32 %v3824, %v1668
      %v4603 = vmul.f32 %v3823, %v1672
      %v4604 = vmul.f32 %v3822, %v1676
      %v4605 = vmul.f32 %v3821, %v1680
      %v4606 = vmul.f32 %v3820, %v1684
      %v4607 = vmul.f32 %v3819, %v1688
      %v4608 = vmul.f32 %v3818, %v1692
      %v4609 = vmul.f32 %v3817, %v1696
      %v4610 = vmul.f32 %v3816, %v1700
      %v4611 = vmul.f32 %v3815, %v1704
      %v4612 = vmul.f32 %v3814, %v1708
      %v4613 = vmul.f32 %v3813, %v1712
      %v4614 = vmul.f32 %v3812, %v1716
      %v4615 = vmul.f32 %v3811, %v1720
      %v4616 = vmul.f32 %v3810, %v1724
      %v4617 = vmul.f32 %v3809, %v1728
      %v4618 = vmul.f32 %v3808, %v1732
      %v4619 = vpack.c.bf16 %v4588, %v4587
      %v4620 = vpack.c.bf16 %v4590, %v4589
      %v4621 = vpack.c.bf16 %v4592, %v4591
      %v4622 = vpack.c.bf16 %v4594, %v4593
      %v4623 = vpack.c.bf16 %v4596, %v4595
      %v4624 = vpack.c.bf16 %v4598, %v4597
      %v4625 = vpack.c.bf16 %v4600, %v4599
      %v4626 = vpack.c.bf16 %v4602, %v4601
      %v4627 = vpack.c.bf16 %v4604, %v4603
      %v4628 = vpack.c.bf16 %v4606, %v4605
      %v4629 = vpack.c.bf16 %v4608, %v4607
      %v4630 = vpack.c.bf16 %v4610, %v4609
      %v4631 = vpack.c.bf16 %v4612, %v4611
      %v4632 = vpack.c.bf16 %v4614, %v4613
      %v4633 = vpack.c.bf16 %v4616, %v4615
      %v4634 = vpack.c.bf16 %v4618, %v4617
      %v4635 = vld [vmem:[%s4 + $0x60] sm:$0xf]
      %v4636 = vld [vmem:[%s4 + $0x64] sm:$0xf]
      %v4637 = vld [vmem:[%s4 + $0x68] sm:$0xf]
      %v4638 = vld [vmem:[%s4 + $0x6c] sm:$0xf]
      %v4639 = vld [vmem:[%s4 + $0x70] sm:$0xf]
      %v4640 = vld [vmem:[%s4 + $0x74] sm:$0xf]
      %v4641 = vld [vmem:[%s4 + $0x78] sm:$0xf]
      %v4642 = vld [vmem:[%s4 + $0x7c] sm:$0xf]
      %v4651 = vunpack.c.l.b16 %v4635
      %v4652 = vunpack.c.l.b16 %v4636
      %v4653 = vunpack.c.l.b16 %v4637
      %v4654 = vunpack.c.l.b16 %v4638
      %v4655 = vunpack.c.l.b16 %v4639
      %v4656 = vunpack.c.l.b16 %v4640
      %v4657 = vunpack.c.l.b16 %v4641
      %v4658 = vunpack.c.l.b16 %v4642
      %v4659 = vpack.c.b16 %v4652, %v4651
      %v4660 = vpack.c.b16 %v4654, %v4653
      %v4661 = vpack.c.b16 %v4656, %v4655
      %v4662 = vpack.c.b16 %v4658, %v4657
      %v4668 = vsel %vm865, %v4619, 0
      %v4671 = vsel %vm865, %v4620, 0
      %v4674 = vsel %vm865, %v4621, 0
      %v4677 = vsel %vm865, %v4622, 0
      %v4680 = vsel %vm865, %v4623, 0
      %v4683 = vsel %vm865, %v4624, 0
      %v4686 = vsel %vm865, %v4625, 0
      %v4689 = vsel %vm865, %v4626, 0
      %v4692 = vsel %vm865, %v4627, 0
      %v4695 = vsel %vm865, %v4628, 0
      %v4698 = vsel %vm865, %v4629, 0
      %v4701 = vsel %vm865, %v4630, 0
      %v4704 = vsel %vm865, %v4631, 0
      %v4707 = vsel %vm865, %v4632, 0
      %v4710 = vsel %vm865, %v4633, 0
      %v4713 = vsel %vm865, %v4634, 0
      %4715 = vmatpush.bf16.msra.mxu0 0
      %4716 = vmatpush.bf16.msra.mxu0 0
      %4717 = vmatpush.bf16.msra.mxu0 0
      %4718 = vmatpush.bf16.msra.mxu0 0
      %4719 = vmatpush.bf16.msra.mxu0 %v4662
      %4720 = vmatpush.bf16.msra.mxu0 %v4661
      %4721 = vmatpush.bf16.msra.mxu0 %v4660
      %4722 = vmatpush.bf16.msra.mxu0 %v4659
      %4723 = vmatmul.bf16.gmra.mxu0 %v4668
      %v4724 = vpop.f32.mrf.mxu0
      %v4725 = vadd.f32 0.0, %v4724
      %v4726 = vpop.f32.mrf.mxu0
      %v4727 = vadd.f32 0.0, %v4726
      %4728 = vmatmul.bf16.gmra.mxu0 %v4671
      %v4729 = vpop.f32.mrf.mxu0
      %v4730 = vadd.f32 0.0, %v4729
      %v4731 = vpop.f32.mrf.mxu0
      %v4732 = vadd.f32 0.0, %v4731
      %4733 = vmatmul.bf16.gmra.mxu0 %v4674
      %v4734 = vpop.f32.mrf.mxu0
      %v4735 = vadd.f32 0.0, %v4734
      %v4736 = vpop.f32.mrf.mxu0
      %v4737 = vadd.f32 0.0, %v4736
      %4738 = vmatmul.bf16.gmra.mxu0 %v4677
      %v4739 = vpop.f32.mrf.mxu0
      %v4740 = vadd.f32 0.0, %v4739
      %v4741 = vpop.f32.mrf.mxu0
      %v4742 = vadd.f32 0.0, %v4741
      %4743 = vmatmul.bf16.gmra.mxu0 %v4680
      %v4744 = vpop.f32.mrf.mxu0
      %v4745 = vadd.f32 0.0, %v4744
      %v4746 = vpop.f32.mrf.mxu0
      %v4747 = vadd.f32 0.0, %v4746
      %4748 = vmatmul.bf16.gmra.mxu0 %v4683
      %v4749 = vpop.f32.mrf.mxu0
      %v4750 = vadd.f32 0.0, %v4749
      %v4751 = vpop.f32.mrf.mxu0
      %v4752 = vadd.f32 0.0, %v4751
      %4753 = vmatmul.bf16.gmra.mxu0 %v4686
      %v4754 = vpop.f32.mrf.mxu0
      %v4755 = vadd.f32 0.0, %v4754
      %v4756 = vpop.f32.mrf.mxu0
      %v4757 = vadd.f32 0.0, %v4756
      %4758 = vmatmul.bf16.gmra.mxu0 %v4689
      %v4759 = vpop.f32.mrf.mxu0
      %v4760 = vadd.f32 0.0, %v4759
      %v4761 = vpop.f32.mrf.mxu0
      %v4762 = vadd.f32 0.0, %v4761
      %4763 = vmatmul.bf16.gmra.mxu0 %v4692
      %v4764 = vpop.f32.mrf.mxu0
      %v4765 = vadd.f32 0.0, %v4764
      %v4766 = vpop.f32.mrf.mxu0
      %v4767 = vadd.f32 0.0, %v4766
      %4768 = vmatmul.bf16.gmra.mxu0 %v4695
      %v4769 = vpop.f32.mrf.mxu0
      %v4770 = vadd.f32 0.0, %v4769
      %v4771 = vpop.f32.mrf.mxu0
      %v4772 = vadd.f32 0.0, %v4771
      %4773 = vmatmul.bf16.gmra.mxu0 %v4698
      %v4774 = vpop.f32.mrf.mxu0
      %v4775 = vadd.f32 0.0, %v4774
      %v4776 = vpop.f32.mrf.mxu0
      %v4777 = vadd.f32 0.0, %v4776
      %4778 = vmatmul.bf16.gmra.mxu0 %v4701
      %v4779 = vpop.f32.mrf.mxu0
      %v4780 = vadd.f32 0.0, %v4779
      %v4781 = vpop.f32.mrf.mxu0
      %v4782 = vadd.f32 0.0, %v4781
      %4783 = vmatmul.bf16.gmra.mxu0 %v4704
      %v4784 = vpop.f32.mrf.mxu0
      %v4785 = vadd.f32 0.0, %v4784
      %v4786 = vpop.f32.mrf.mxu0
      %v4787 = vadd.f32 0.0, %v4786
      %4788 = vmatmul.bf16.gmra.mxu0 %v4707
      %v4789 = vpop.f32.mrf.mxu0
      %v4790 = vadd.f32 0.0, %v4789
      %v4791 = vpop.f32.mrf.mxu0
      %v4792 = vadd.f32 0.0, %v4791
      %4793 = vmatmul.bf16.gmra.mxu0 %v4710
      %v4794 = vpop.f32.mrf.mxu0
      %v4795 = vadd.f32 0.0, %v4794
      %v4796 = vpop.f32.mrf.mxu0
      %v4797 = vadd.f32 0.0, %v4796
      %4798 = vmatmul.bf16.gmra.mxu0 %v4713
      %v4799 = vpop.f32.mrf.mxu0
      %v4800 = vadd.f32 0.0, %v4799
      %v4801 = vpop.f32.mrf.mxu0
      %v4802 = vadd.f32 0.0, %v4801
      %4803 = vdwg.mxu0
      %v4804 = vadd.f32 %v4555, %v4725
      %v4805 = vadd.f32 %v4556, %v4727
      %v4806 = vadd.f32 %v4557, %v4730
      %v4807 = vadd.f32 %v4558, %v4732
      %v4808 = vadd.f32 %v4559, %v4735
      %v4809 = vadd.f32 %v4560, %v4737
      %v4810 = vadd.f32 %v4561, %v4740
      %v4811 = vadd.f32 %v4562, %v4742
      %v4812 = vadd.f32 %v4563, %v4745
      %v4813 = vadd.f32 %v4564, %v4747
      %v4814 = vadd.f32 %v4565, %v4750
      %v4815 = vadd.f32 %v4566, %v4752
      %v4816 = vadd.f32 %v4567, %v4755
      %v4817 = vadd.f32 %v4568, %v4757
      %v4818 = vadd.f32 %v4569, %v4760
      %v4819 = vadd.f32 %v4570, %v4762
      %v4820 = vadd.f32 %v4571, %v4765
      %v4821 = vadd.f32 %v4572, %v4767
      %v4822 = vadd.f32 %v4573, %v4770
      %v4823 = vadd.f32 %v4574, %v4772
      %v4824 = vadd.f32 %v4575, %v4775
      %v4825 = vadd.f32 %v4576, %v4777
      %v4826 = vadd.f32 %v4577, %v4780
      %v4827 = vadd.f32 %v4578, %v4782
      %v4828 = vadd.f32 %v4579, %v4785
      %v4829 = vadd.f32 %v4580, %v4787
      %v4830 = vadd.f32 %v4581, %v4790
      %v4831 = vadd.f32 %v4582, %v4792
      %v4832 = vadd.f32 %v4583, %v4795
      %v4833 = vadd.f32 %v4584, %v4797
      %v4834 = vadd.f32 %v4585, %v4800
      %v4835 = vadd.f32 %v4586, %v4802
      %v4836 = vpack.c.bf16 %v3745, %v3744
      %v4837 = vpack.c.bf16 %v3747, %v3746
      %v4838 = vpack.c.bf16 %v3749, %v3748
      %v4839 = vpack.c.bf16 %v3751, %v3750
      %v4840 = vpack.c.bf16 %v3753, %v3752
      %v4841 = vpack.c.bf16 %v3755, %v3754
      %v4842 = vpack.c.bf16 %v3757, %v3756
      %v4843 = vpack.c.bf16 %v3759, %v3758
      %v4844 = vpack.c.bf16 %v3761, %v3760
      %v4845 = vpack.c.bf16 %v3763, %v3762
      %v4846 = vpack.c.bf16 %v3765, %v3764
      %v4847 = vpack.c.bf16 %v3767, %v3766
      %v4848 = vpack.c.bf16 %v3769, %v3768
      %v4849 = vpack.c.bf16 %v3771, %v3770
      %v4850 = vpack.c.bf16 %v3773, %v3772
      %v4851 = vpack.c.bf16 %v3775, %v3774
      %v4852 = vld [vmem:[%s4 + $0x80] sm:$0xf]
      %v4853 = vld [vmem:[%s4 + $0x84] sm:$0xf]
      %v4854 = vld [vmem:[%s4 + $0x88] sm:$0xf]
      %v4855 = vld [vmem:[%s4 + $0x8c] sm:$0xf]
      %v4856 = vld [vmem:[%s4 + $0x90] sm:$0xf]
      %v4857 = vld [vmem:[%s4 + $0x94] sm:$0xf]
      %v4858 = vld [vmem:[%s4 + $0x98] sm:$0xf]
      %v4859 = vld [vmem:[%s4 + $0x9c] sm:$0xf]
      %v4868 = vunpack.c.l.b16 %v4852
      %v4869 = vunpack.c.l.b16 %v4853
      %v4870 = vunpack.c.l.b16 %v4854
      %v4871 = vunpack.c.l.b16 %v4855
      %v4872 = vunpack.c.l.b16 %v4856
      %v4873 = vunpack.c.l.b16 %v4857
      %v4874 = vunpack.c.l.b16 %v4858
      %v4875 = vunpack.c.l.b16 %v4859
      %v4876 = vpack.c.b16 %v4869, %v4868
      %v4877 = vpack.c.b16 %v4871, %v4870
      %v4878 = vpack.c.b16 %v4873, %v4872
      %v4879 = vpack.c.b16 %v4875, %v4874
      %v4885 = vsel %vm865, %v4836, 0
      %v4888 = vsel %vm865, %v4837, 0
      %v4891 = vsel %vm865, %v4838, 0
      %v4894 = vsel %vm865, %v4839, 0
      %v4897 = vsel %vm865, %v4840, 0
      %v4900 = vsel %vm865, %v4841, 0
      %v4903 = vsel %vm865, %v4842, 0
      %v4906 = vsel %vm865, %v4843, 0
      %v4909 = vsel %vm865, %v4844, 0
      %v4912 = vsel %vm865, %v4845, 0
      %v4915 = vsel %vm865, %v4846, 0
      %v4918 = vsel %vm865, %v4847, 0
      %v4921 = vsel %vm865, %v4848, 0
      %v4924 = vsel %vm865, %v4849, 0
      %v4927 = vsel %vm865, %v4850, 0
      %v4930 = vsel %vm865, %v4851, 0
      %4932 = vmatpush.bf16.msra.mxu0 0
      %4933 = vmatpush.bf16.msra.mxu0 0
      %4934 = vmatpush.bf16.msra.mxu0 0
      %4935 = vmatpush.bf16.msra.mxu0 0
      %4936 = vmatpush.bf16.msra.mxu0 %v4879
      %4937 = vmatpush.bf16.msra.mxu0 %v4878
      %4938 = vmatpush.bf16.msra.mxu0 %v4877
      %4939 = vmatpush.bf16.msra.mxu0 %v4876
      %4940 = vmatmul.bf16.gmra.mxu0 %v4885
      %v4941 = vpop.f32.mrf.mxu0
      %v4942 = vadd.f32 0.0, %v4941
      %v4943 = vpop.f32.mrf.mxu0
      %v4944 = vadd.f32 0.0, %v4943
      %4945 = vmatmul.bf16.gmra.mxu0 %v4888
      %v4946 = vpop.f32.mrf.mxu0
      %v4947 = vadd.f32 0.0, %v4946
      %v4948 = vpop.f32.mrf.mxu0
      %v4949 = vadd.f32 0.0, %v4948
      %4950 = vmatmul.bf16.gmra.mxu0 %v4891
      %v4951 = vpop.f32.mrf.mxu0
      %v4952 = vadd.f32 0.0, %v4951
      %v4953 = vpop.f32.mrf.mxu0
      %v4954 = vadd.f32 0.0, %v4953
      %4955 = vmatmul.bf16.gmra.mxu0 %v4894
      %v4956 = vpop.f32.mrf.mxu0
      %v4957 = vadd.f32 0.0, %v4956
      %v4958 = vpop.f32.mrf.mxu0
      %v4959 = vadd.f32 0.0, %v4958
      %4960 = vmatmul.bf16.gmra.mxu0 %v4897
      %v4961 = vpop.f32.mrf.mxu0
      %v4962 = vadd.f32 0.0, %v4961
      %v4963 = vpop.f32.mrf.mxu0
      %v4964 = vadd.f32 0.0, %v4963
      %4965 = vmatmul.bf16.gmra.mxu0 %v4900
      %v4966 = vpop.f32.mrf.mxu0
      %v4967 = vadd.f32 0.0, %v4966
      %v4968 = vpop.f32.mrf.mxu0
      %v4969 = vadd.f32 0.0, %v4968
      %4970 = vmatmul.bf16.gmra.mxu0 %v4903
      %v4971 = vpop.f32.mrf.mxu0
      %v4972 = vadd.f32 0.0, %v4971
      %v4973 = vpop.f32.mrf.mxu0
      %v4974 = vadd.f32 0.0, %v4973
      %4975 = vmatmul.bf16.gmra.mxu0 %v4906
      %v4976 = vpop.f32.mrf.mxu0
      %v4977 = vadd.f32 0.0, %v4976
      %v4978 = vpop.f32.mrf.mxu0
      %v4979 = vadd.f32 0.0, %v4978
      %4980 = vmatmul.bf16.gmra.mxu0 %v4909
      %v4981 = vpop.f32.mrf.mxu0
      %v4982 = vadd.f32 0.0, %v4981
      %v4983 = vpop.f32.mrf.mxu0
      %v4984 = vadd.f32 0.0, %v4983
      %4985 = vmatmul.bf16.gmra.mxu0 %v4912
      %v4986 = vpop.f32.mrf.mxu0
      %v4987 = vadd.f32 0.0, %v4986
      %v4988 = vpop.f32.mrf.mxu0
      %v4989 = vadd.f32 0.0, %v4988
      %4990 = vmatmul.bf16.gmra.mxu0 %v4915
      %v4991 = vpop.f32.mrf.mxu0
      %v4992 = vadd.f32 0.0, %v4991
      %v4993 = vpop.f32.mrf.mxu0
      %v4994 = vadd.f32 0.0, %v4993
      %4995 = vmatmul.bf16.gmra.mxu0 %v4918
      %v4996 = vpop.f32.mrf.mxu0
      %v4997 = vadd.f32 0.0, %v4996
      %v4998 = vpop.f32.mrf.mxu0
      %v4999 = vadd.f32 0.0, %v4998
      %5000 = vmatmul.bf16.gmra.mxu0 %v4921
      %v5001 = vpop.f32.mrf.mxu0
      %v5002 = vadd.f32 0.0, %v5001
      %v5003 = vpop.f32.mrf.mxu0
      %v5004 = vadd.f32 0.0, %v5003
      %5005 = vmatmul.bf16.gmra.mxu0 %v4924
      %v5006 = vpop.f32.mrf.mxu0
      %v5007 = vadd.f32 0.0, %v5006
      %v5008 = vpop.f32.mrf.mxu0
      %v5009 = vadd.f32 0.0, %v5008
      %5010 = vmatmul.bf16.gmra.mxu0 %v4927
      %v5011 = vpop.f32.mrf.mxu0
      %v5012 = vadd.f32 0.0, %v5011
      %v5013 = vpop.f32.mrf.mxu0
      %v5014 = vadd.f32 0.0, %v5013
      %5015 = vmatmul.bf16.gmra.mxu0 %v4930
      %v5016 = vpop.f32.mrf.mxu0
      %v5017 = vadd.f32 0.0, %v5016
      %v5018 = vpop.f32.mrf.mxu0
      %v5019 = vadd.f32 0.0, %v5018
      %5020 = vdwg.mxu0
      %v5021 = vadd.f32 %v4804, %v4942
      %v5022 = vadd.f32 %v4805, %v4944
      %v5023 = vadd.f32 %v4806, %v4947
      %v5024 = vadd.f32 %v4807, %v4949
      %v5025 = vadd.f32 %v4808, %v4952
      %v5026 = vadd.f32 %v4809, %v4954
      %v5027 = vadd.f32 %v4810, %v4957
      %v5028 = vadd.f32 %v4811, %v4959
      %v5029 = vadd.f32 %v4812, %v4962
      %v5030 = vadd.f32 %v4813, %v4964
      %v5031 = vadd.f32 %v4814, %v4967
      %v5032 = vadd.f32 %v4815, %v4969
      %v5033 = vadd.f32 %v4816, %v4972
      %v5034 = vadd.f32 %v4817, %v4974
      %v5035 = vadd.f32 %v4818, %v4977
      %v5036 = vadd.f32 %v4819, %v4979
      %v5037 = vadd.f32 %v4820, %v4982
      %v5038 = vadd.f32 %v4821, %v4984
      %v5039 = vadd.f32 %v4822, %v4987
      %v5040 = vadd.f32 %v4823, %v4989
      %v5041 = vadd.f32 %v4824, %v4992
      %v5042 = vadd.f32 %v4825, %v4994
      %v5043 = vadd.f32 %v4826, %v4997
      %v5044 = vadd.f32 %v4827, %v4999
      %v5045 = vadd.f32 %v4828, %v5002
      %v5046 = vadd.f32 %v4829, %v5004
      %v5047 = vadd.f32 %v4830, %v5007
      %v5048 = vadd.f32 %v4831, %v5009
      %v5049 = vadd.f32 %v4832, %v5012
      %v5050 = vadd.f32 %v4833, %v5014
      %v5051 = vadd.f32 %v4834, %v5017
      %v5052 = vadd.f32 %v4835, %v5019
      %v5053 = vmul.f32 %v4336, %v2202
      %v5054 = vmul.f32 %v4335, %v2206
      %v5055 = vmul.f32 %v4334, %v2210
      %v5056 = vmul.f32 %v4333, %v2214
      %v5057 = vmul.f32 %v4332, %v2218
      %v5058 = vmul.f32 %v4331, %v2222
      %v5059 = vmul.f32 %v4330, %v2226
      %v5060 = vmul.f32 %v4329, %v2230
      %v5061 = vmul.f32 %v4328, %v2234
      %v5062 = vmul.f32 %v4327, %v2238
      %v5063 = vmul.f32 %v4326, %v2242
      %v5064 = vmul.f32 %v4325, %v2246
      %v5065 = vmul.f32 %v4324, %v2250
      %v5066 = vmul.f32 %v4323, %v2254
      %v5067 = vmul.f32 %v4322, %v2258
      %v5068 = vmul.f32 %v4321, %v2262
      %v5069 = vmul.f32 %v4320, %v2266
      %v5070 = vmul.f32 %v4319, %v2270
      %v5071 = vmul.f32 %v4318, %v2274
      %v5072 = vmul.f32 %v4317, %v2278
      %v5073 = vmul.f32 %v4316, %v2282
      %v5074 = vmul.f32 %v4315, %v2286
      %v5075 = vmul.f32 %v4314, %v2290
      %v5076 = vmul.f32 %v4313, %v2294
      %v5077 = vmul.f32 %v4312, %v2298
      %v5078 = vmul.f32 %v4311, %v2302
      %v5079 = vmul.f32 %v4310, %v2306
      %v5080 = vmul.f32 %v4309, %v2310
      %v5081 = vmul.f32 %v4308, %v2314
      %v5082 = vmul.f32 %v4307, %v2318
      %v5083 = vmul.f32 %v4306, %v2322
      %v5084 = vmul.f32 %v4337, %v2326
      %v5085 = vpack.c.bf16 %v5054, %v5053
      %v5086 = vpack.c.bf16 %v5056, %v5055
      %v5087 = vpack.c.bf16 %v5058, %v5057
      %v5088 = vpack.c.bf16 %v5060, %v5059
      %v5089 = vpack.c.bf16 %v5062, %v5061
      %v5090 = vpack.c.bf16 %v5064, %v5063
      %v5091 = vpack.c.bf16 %v5066, %v5065
      %v5092 = vpack.c.bf16 %v5068, %v5067
      %v5093 = vpack.c.bf16 %v5070, %v5069
      %v5094 = vpack.c.bf16 %v5072, %v5071
      %v5095 = vpack.c.bf16 %v5074, %v5073
      %v5096 = vpack.c.bf16 %v5076, %v5075
      %v5097 = vpack.c.bf16 %v5078, %v5077
      %v5098 = vpack.c.bf16 %v5080, %v5079
      %v5099 = vpack.c.bf16 %v5082, %v5081
      %v5100 = vpack.c.bf16 %v5084, %v5083
      %v5101 = vld [vmem:[%s4 + $0xa0] sm:$0xf]
      %v5102 = vld [vmem:[%s4 + $0xa4] sm:$0xf]
      %v5103 = vld [vmem:[%s4 + $0xa8] sm:$0xf]
      %v5104 = vld [vmem:[%s4 + $0xac] sm:$0xf]
      %v5105 = vld [vmem:[%s4 + $0xb0] sm:$0xf]
      %v5106 = vld [vmem:[%s4 + $0xb4] sm:$0xf]
      %v5107 = vld [vmem:[%s4 + $0xb8] sm:$0xf]
      %v5108 = vld [vmem:[%s4 + $0xbc] sm:$0xf]
      %v5117 = vunpack.c.l.b16 %v5101
      %v5118 = vunpack.c.l.b16 %v5102
      %v5119 = vunpack.c.l.b16 %v5103
      %v5120 = vunpack.c.l.b16 %v5104
      %v5121 = vunpack.c.l.b16 %v5105
      %v5122 = vunpack.c.l.b16 %v5106
      %v5123 = vunpack.c.l.b16 %v5107
      %v5124 = vunpack.c.l.b16 %v5108
      %v5125 = vpack.c.b16 %v5118, %v5117
      %v5126 = vpack.c.b16 %v5120, %v5119
      %v5127 = vpack.c.b16 %v5122, %v5121
      %v5128 = vpack.c.b16 %v5124, %v5123
      %v5134 = vsel %vm865, %v5085, 0
      %v5137 = vsel %vm865, %v5086, 0
      %v5140 = vsel %vm865, %v5087, 0
      %v5143 = vsel %vm865, %v5088, 0
      %v5146 = vsel %vm865, %v5089, 0
      %v5149 = vsel %vm865, %v5090, 0
      %v5152 = vsel %vm865, %v5091, 0
      %v5155 = vsel %vm865, %v5092, 0
      %v5158 = vsel %vm865, %v5093, 0
      %v5161 = vsel %vm865, %v5094, 0
      %v5164 = vsel %vm865, %v5095, 0
      %v5167 = vsel %vm865, %v5096, 0
      %v5170 = vsel %vm865, %v5097, 0
      %v5173 = vsel %vm865, %v5098, 0
      %v5176 = vsel %vm865, %v5099, 0
      %v5179 = vsel %vm865, %v5100, 0
      %5181 = vmatpush.bf16.msra.mxu0 0
      %5182 = vmatpush.bf16.msra.mxu0 0
      %5183 = vmatpush.bf16.msra.mxu0 0
      %5184 = vmatpush.bf16.msra.mxu0 0
      %5185 = vmatpush.bf16.msra.mxu0 %v5128
      %5186 = vmatpush.bf16.msra.mxu0 %v5127
      %5187 = vmatpush.bf16.msra.mxu0 %v5126
      %5188 = vmatpush.bf16.msra.mxu0 %v5125
      %5189 = vmatmul.bf16.gmra.mxu0 %v5134
      %v5190 = vpop.f32.mrf.mxu0
      %v5191 = vadd.f32 0.0, %v5190
      %v5192 = vpop.f32.mrf.mxu0
      %v5193 = vadd.f32 0.0, %v5192
      %5194 = vmatmul.bf16.gmra.mxu0 %v5137
      %v5195 = vpop.f32.mrf.mxu0
      %v5196 = vadd.f32 0.0, %v5195
      %v5197 = vpop.f32.mrf.mxu0
      %v5198 = vadd.f32 0.0, %v5197
      %5199 = vmatmul.bf16.gmra.mxu0 %v5140
      %v5200 = vpop.f32.mrf.mxu0
      %v5201 = vadd.f32 0.0, %v5200
      %v5202 = vpop.f32.mrf.mxu0
      %v5203 = vadd.f32 0.0, %v5202
      %5204 = vmatmul.bf16.gmra.mxu0 %v5143
      %v5205 = vpop.f32.mrf.mxu0
      %v5206 = vadd.f32 0.0, %v5205
      %v5207 = vpop.f32.mrf.mxu0
      %v5208 = vadd.f32 0.0, %v5207
      %5209 = vmatmul.bf16.gmra.mxu0 %v5146
      %v5210 = vpop.f32.mrf.mxu0
      %v5211 = vadd.f32 0.0, %v5210
      %v5212 = vpop.f32.mrf.mxu0
      %v5213 = vadd.f32 0.0, %v5212
      %5214 = vmatmul.bf16.gmra.mxu0 %v5149
      %v5215 = vpop.f32.mrf.mxu0
      %v5216 = vadd.f32 0.0, %v5215
      %v5217 = vpop.f32.mrf.mxu0
      %v5218 = vadd.f32 0.0, %v5217
      %5219 = vmatmul.bf16.gmra.mxu0 %v5152
      %v5220 = vpop.f32.mrf.mxu0
      %v5221 = vadd.f32 0.0, %v5220
      %v5222 = vpop.f32.mrf.mxu0
      %v5223 = vadd.f32 0.0, %v5222
      %5224 = vmatmul.bf16.gmra.mxu0 %v5155
      %v5225 = vpop.f32.mrf.mxu0
      %v5226 = vadd.f32 0.0, %v5225
      %v5227 = vpop.f32.mrf.mxu0
      %v5228 = vadd.f32 0.0, %v5227
      %5229 = vmatmul.bf16.gmra.mxu0 %v5158
      %v5230 = vpop.f32.mrf.mxu0
      %v5231 = vadd.f32 0.0, %v5230
      %v5232 = vpop.f32.mrf.mxu0
      %v5233 = vadd.f32 0.0, %v5232
      %5234 = vmatmul.bf16.gmra.mxu0 %v5161
      %v5235 = vpop.f32.mrf.mxu0
      %v5236 = vadd.f32 0.0, %v5235
      %v5237 = vpop.f32.mrf.mxu0
      %v5238 = vadd.f32 0.0, %v5237
      %5239 = vmatmul.bf16.gmra.mxu0 %v5164
      %v5240 = vpop.f32.mrf.mxu0
      %v5241 = vadd.f32 0.0, %v5240
      %v5242 = vpop.f32.mrf.mxu0
      %v5243 = vadd.f32 0.0, %v5242
      %5244 = vmatmul.bf16.gmra.mxu0 %v5167
      %v5245 = vpop.f32.mrf.mxu0
      %v5246 = vadd.f32 0.0, %v5245
      %v5247 = vpop.f32.mrf.mxu0
      %v5248 = vadd.f32 0.0, %v5247
      %5249 = vmatmul.bf16.gmra.mxu0 %v5170
      %v5250 = vpop.f32.mrf.mxu0
      %v5251 = vadd.f32 0.0, %v5250
      %v5252 = vpop.f32.mrf.mxu0
      %v5253 = vadd.f32 0.0, %v5252
      %5254 = vmatmul.bf16.gmra.mxu0 %v5173
      %v5255 = vpop.f32.mrf.mxu0
      %v5256 = vadd.f32 0.0, %v5255
      %v5257 = vpop.f32.mrf.mxu0
      %v5258 = vadd.f32 0.0, %v5257
      %5259 = vmatmul.bf16.gmra.mxu0 %v5176
      %v5260 = vpop.f32.mrf.mxu0
      %v5261 = vadd.f32 0.0, %v5260
      %v5262 = vpop.f32.mrf.mxu0
      %v5263 = vadd.f32 0.0, %v5262
      %5264 = vmatmul.bf16.gmra.mxu0 %v5179
      %v5265 = vpop.f32.mrf.mxu0
      %v5266 = vadd.f32 0.0, %v5265
      %v5267 = vpop.f32.mrf.mxu0
      %v5268 = vadd.f32 0.0, %v5267
      %5269 = vdwg.mxu0
      %v5270 = vadd.f32 %v5021, %v5191
      %v5271 = vadd.f32 %v5022, %v5193
      %v5272 = vadd.f32 %v5023, %v5196
      %v5273 = vadd.f32 %v5024, %v5198
      %v5274 = vadd.f32 %v5025, %v5201
      %v5275 = vadd.f32 %v5026, %v5203
      %v5276 = vadd.f32 %v5027, %v5206
      %v5277 = vadd.f32 %v5028, %v5208
      %v5278 = vadd.f32 %v5029, %v5211
      %v5279 = vadd.f32 %v5030, %v5213
      %v5280 = vadd.f32 %v5031, %v5216
      %v5281 = vadd.f32 %v5032, %v5218
      %v5282 = vadd.f32 %v5033, %v5221
      %v5283 = vadd.f32 %v5034, %v5223
      %v5284 = vadd.f32 %v5035, %v5226
      %v5285 = vadd.f32 %v5036, %v5228
      %v5286 = vadd.f32 %v5037, %v5231
      %v5287 = vadd.f32 %v5038, %v5233
      %v5288 = vadd.f32 %v5039, %v5236
      %v5289 = vadd.f32 %v5040, %v5238
      %v5290 = vadd.f32 %v5041, %v5241
      %v5291 = vadd.f32 %v5042, %v5243
      %v5292 = vadd.f32 %v5043, %v5246
      %v5293 = vadd.f32 %v5044, %v5248
      %v5294 = vadd.f32 %v5045, %v5251
      %v5295 = vadd.f32 %v5046, %v5253
      %v5296 = vadd.f32 %v5047, %v5256
      %v5297 = vadd.f32 %v5048, %v5258
      %v5298 = vadd.f32 %v5049, %v5261
      %v5299 = vadd.f32 %v5050, %v5263
      %v5300 = vadd.f32 %v5051, %v5266
      %v5301 = vadd.f32 %v5052, %v5268
      %v5302 = vmul.f32 %v3837, %v2579
      %v5303 = vmul.f32 %v3836, %v2583
      %v5304 = vmul.f32 %v3835, %v2587
      %v5305 = vmul.f32 %v3834, %v2591
      %v5306 = vmul.f32 %v3833, %v2595
      %v5307 = vmul.f32 %v3832, %v2599
      %v5308 = vmul.f32 %v3831, %v2603
      %v5309 = vmul.f32 %v3830, %v2607
      %v5310 = vmul.f32 %v3829, %v2611
      %v5311 = vmul.f32 %v3828, %v2615
      %v5312 = vmul.f32 %v3827, %v2619
      %v5313 = vmul.f32 %v3826, %v2623
      %v5314 = vmul.f32 %v3825, %v2627
      %v5315 = vmul.f32 %v3824, %v2631
      %v5316 = vmul.f32 %v3823, %v2635
      %v5317 = vmul.f32 %v3822, %v2639
      %v5318 = vmul.f32 %v3821, %v2643
      %v5319 = vmul.f32 %v3820, %v2647
      %v5320 = vmul.f32 %v3819, %v2651
      %v5321 = vmul.f32 %v3818, %v2655
      %v5322 = vmul.f32 %v3817, %v2659
      %v5323 = vmul.f32 %v3816, %v2663
      %v5324 = vmul.f32 %v3815, %v2667
      %v5325 = vmul.f32 %v3814, %v2671
      %v5326 = vmul.f32 %v3813, %v2675
      %v5327 = vmul.f32 %v3812, %v2679
      %v5328 = vmul.f32 %v3811, %v2683
      %v5329 = vmul.f32 %v3810, %v2687
      %v5330 = vmul.f32 %v3809, %v2691
      %v5331 = vmul.f32 %v3808, %v2695
      %v5332 = vmul.f32 %v3839, %v2699
      %v5333 = vmul.f32 %v3838, %v2703
      %v5334 = vpack.c.bf16 %v5303, %v5302
      %v5335 = vpack.c.bf16 %v5305, %v5304
      %v5336 = vpack.c.bf16 %v5307, %v5306
      %v5337 = vpack.c.bf16 %v5309, %v5308
      %v5338 = vpack.c.bf16 %v5311, %v5310
      %v5339 = vpack.c.bf16 %v5313, %v5312
      %v5340 = vpack.c.bf16 %v5315, %v5314
      %v5341 = vpack.c.bf16 %v5317, %v5316
      %v5342 = vpack.c.bf16 %v5319, %v5318
      %v5343 = vpack.c.bf16 %v5321, %v5320
      %v5344 = vpack.c.bf16 %v5323, %v5322
      %v5345 = vpack.c.bf16 %v5325, %v5324
      %v5346 = vpack.c.bf16 %v5327, %v5326
      %v5347 = vpack.c.bf16 %v5329, %v5328
      %v5348 = vpack.c.bf16 %v5331, %v5330
      %v5349 = vpack.c.bf16 %v5333, %v5332
      %v5350 = vld [vmem:[%s4 + $0xc0] sm:$0xf]
      %v5351 = vld [vmem:[%s4 + $0xc4] sm:$0xf]
      %v5352 = vld [vmem:[%s4 + $0xc8] sm:$0xf]
      %v5353 = vld [vmem:[%s4 + $0xcc] sm:$0xf]
      %v5354 = vld [vmem:[%s4 + $0xd0] sm:$0xf]
      %v5355 = vld [vmem:[%s4 + $0xd4] sm:$0xf]
      %v5356 = vld [vmem:[%s4 + $0xd8] sm:$0xf]
      %v5357 = vld [vmem:[%s4 + $0xdc] sm:$0xf]
      %v5366 = vunpack.c.l.b16 %v5350
      %v5367 = vunpack.c.l.b16 %v5351
      %v5368 = vunpack.c.l.b16 %v5352
      %v5369 = vunpack.c.l.b16 %v5353
      %v5370 = vunpack.c.l.b16 %v5354
      %v5371 = vunpack.c.l.b16 %v5355
      %v5372 = vunpack.c.l.b16 %v5356
      %v5373 = vunpack.c.l.b16 %v5357
      %v5374 = vpack.c.b16 %v5367, %v5366
      %v5375 = vpack.c.b16 %v5369, %v5368
      %v5376 = vpack.c.b16 %v5371, %v5370
      %v5377 = vpack.c.b16 %v5373, %v5372
      %v5383 = vsel %vm865, %v5334, 0
      %v5386 = vsel %vm865, %v5335, 0
      %v5389 = vsel %vm865, %v5336, 0
      %v5392 = vsel %vm865, %v5337, 0
      %v5395 = vsel %vm865, %v5338, 0
      %v5398 = vsel %vm865, %v5339, 0
      %v5401 = vsel %vm865, %v5340, 0
      %v5404 = vsel %vm865, %v5341, 0
      %v5407 = vsel %vm865, %v5342, 0
      %v5410 = vsel %vm865, %v5343, 0
      %v5413 = vsel %vm865, %v5344, 0
      %v5416 = vsel %vm865, %v5345, 0
      %v5419 = vsel %vm865, %v5346, 0
      %v5422 = vsel %vm865, %v5347, 0
      %v5425 = vsel %vm865, %v5348, 0
      %v5428 = vsel %vm865, %v5349, 0
      %5430 = vmatpush.bf16.msra.mxu0 0
      %5431 = vmatpush.bf16.msra.mxu0 0
      %5432 = vmatpush.bf16.msra.mxu0 0
      %5433 = vmatpush.bf16.msra.mxu0 0
      %5434 = vmatpush.bf16.msra.mxu0 %v5377
      %5435 = vmatpush.bf16.msra.mxu0 %v5376
      %5436 = vmatpush.bf16.msra.mxu0 %v5375
      %5437 = vmatpush.bf16.msra.mxu0 %v5374
      %5438 = vmatmul.bf16.gmra.mxu0 %v5383
      %v5439 = vpop.f32.mrf.mxu0
      %v5440 = vadd.f32 0.0, %v5439
      %v5441 = vpop.f32.mrf.mxu0
      %v5442 = vadd.f32 0.0, %v5441
      %5443 = vmatmul.bf16.gmra.mxu0 %v5386
      %v5444 = vpop.f32.mrf.mxu0
      %v5445 = vadd.f32 0.0, %v5444
      %v5446 = vpop.f32.mrf.mxu0
      %v5447 = vadd.f32 0.0, %v5446
      %5448 = vmatmul.bf16.gmra.mxu0 %v5389
      %v5449 = vpop.f32.mrf.mxu0
      %v5450 = vadd.f32 0.0, %v5449
      %v5451 = vpop.f32.mrf.mxu0
      %v5452 = vadd.f32 0.0, %v5451
      %5453 = vmatmul.bf16.gmra.mxu0 %v5392
      %v5454 = vpop.f32.mrf.mxu0
      %v5455 = vadd.f32 0.0, %v5454
      %v5456 = vpop.f32.mrf.mxu0
      %v5457 = vadd.f32 0.0, %v5456
      %5458 = vmatmul.bf16.gmra.mxu0 %v5395
      %v5459 = vpop.f32.mrf.mxu0
      %v5460 = vadd.f32 0.0, %v5459
      %v5461 = vpop.f32.mrf.mxu0
      %v5462 = vadd.f32 0.0, %v5461
      %5463 = vmatmul.bf16.gmra.mxu0 %v5398
      %v5464 = vpop.f32.mrf.mxu0
      %v5465 = vadd.f32 0.0, %v5464
      %v5466 = vpop.f32.mrf.mxu0
      %v5467 = vadd.f32 0.0, %v5466
      %5468 = vmatmul.bf16.gmra.mxu0 %v5401
      %v5469 = vpop.f32.mrf.mxu0
      %v5470 = vadd.f32 0.0, %v5469
      %v5471 = vpop.f32.mrf.mxu0
      %v5472 = vadd.f32 0.0, %v5471
      %5473 = vmatmul.bf16.gmra.mxu0 %v5404
      %v5474 = vpop.f32.mrf.mxu0
      %v5475 = vadd.f32 0.0, %v5474
      %v5476 = vpop.f32.mrf.mxu0
      %v5477 = vadd.f32 0.0, %v5476
      %5478 = vmatmul.bf16.gmra.mxu0 %v5407
      %v5479 = vpop.f32.mrf.mxu0
      %v5480 = vadd.f32 0.0, %v5479
      %v5481 = vpop.f32.mrf.mxu0
      %v5482 = vadd.f32 0.0, %v5481
      %5483 = vmatmul.bf16.gmra.mxu0 %v5410
      %v5484 = vpop.f32.mrf.mxu0
      %v5485 = vadd.f32 0.0, %v5484
      %v5486 = vpop.f32.mrf.mxu0
      %v5487 = vadd.f32 0.0, %v5486
      %5488 = vmatmul.bf16.gmra.mxu0 %v5413
      %v5489 = vpop.f32.mrf.mxu0
      %v5490 = vadd.f32 0.0, %v5489
      %v5491 = vpop.f32.mrf.mxu0
      %v5492 = vadd.f32 0.0, %v5491
      %5493 = vmatmul.bf16.gmra.mxu0 %v5416
      %v5494 = vpop.f32.mrf.mxu0
      %v5495 = vadd.f32 0.0, %v5494
      %v5496 = vpop.f32.mrf.mxu0
      %v5497 = vadd.f32 0.0, %v5496
      %5498 = vmatmul.bf16.gmra.mxu0 %v5419
      %v5499 = vpop.f32.mrf.mxu0
      %v5500 = vadd.f32 0.0, %v5499
      %v5501 = vpop.f32.mrf.mxu0
      %v5502 = vadd.f32 0.0, %v5501
      %5503 = vmatmul.bf16.gmra.mxu0 %v5422
      %v5504 = vpop.f32.mrf.mxu0
      %v5505 = vadd.f32 0.0, %v5504
      %v5506 = vpop.f32.mrf.mxu0
      %v5507 = vadd.f32 0.0, %v5506
      %5508 = vmatmul.bf16.gmra.mxu0 %v5425
      %v5509 = vpop.f32.mrf.mxu0
      %v5510 = vadd.f32 0.0, %v5509
      %v5511 = vpop.f32.mrf.mxu0
      %v5512 = vadd.f32 0.0, %v5511
      %5513 = vmatmul.bf16.gmra.mxu0 %v5428
      %v5514 = vpop.f32.mrf.mxu0
      %v5515 = vadd.f32 0.0, %v5514
      %v5516 = vpop.f32.mrf.mxu0
      %v5517 = vadd.f32 0.0, %v5516
      %5518 = vdwg.mxu0
      %v5519 = vadd.f32 %v5270, %v5440
      %v5520 = vadd.f32 %v5271, %v5442
      %v5521 = vadd.f32 %v5272, %v5445
      %v5522 = vadd.f32 %v5273, %v5447
      %v5523 = vadd.f32 %v5274, %v5450
      %v5524 = vadd.f32 %v5275, %v5452
      %v5525 = vadd.f32 %v5276, %v5455
      %v5526 = vadd.f32 %v5277, %v5457
      %v5527 = vadd.f32 %v5278, %v5460
      %v5528 = vadd.f32 %v5279, %v5462
      %v5529 = vadd.f32 %v5280, %v5465
      %v5530 = vadd.f32 %v5281, %v5467
      %v5531 = vadd.f32 %v5282, %v5470
      %v5532 = vadd.f32 %v5283, %v5472
      %v5533 = vadd.f32 %v5284, %v5475
      %v5534 = vadd.f32 %v5285, %v5477
      %v5535 = vadd.f32 %v5286, %v5480
      %v5536 = vadd.f32 %v5287, %v5482
      %v5537 = vadd.f32 %v5288, %v5485
      %v5538 = vadd.f32 %v5289, %v5487
      %v5539 = vadd.f32 %v5290, %v5490
      %v5540 = vadd.f32 %v5291, %v5492
      %v5541 = vadd.f32 %v5292, %v5495
      %v5542 = vadd.f32 %v5293, %v5497
      %v5543 = vadd.f32 %v5294, %v5500
      %v5544 = vadd.f32 %v5295, %v5502
      %v5545 = vadd.f32 %v5296, %v5505
      %v5546 = vadd.f32 %v5297, %v5507
      %v5547 = vadd.f32 %v5298, %v5510
      %v5548 = vadd.f32 %v5299, %v5512
      %v5549 = vadd.f32 %v5300, %v5515
      %v5550 = vadd.f32 %v5301, %v5517
      %v5551 = vmul.f32 %v3746, %v2956
      %v5552 = vmul.f32 %v3747, %v2960
      %v5553 = vmul.f32 %v3748, %v2964
      %v5554 = vmul.f32 %v3749, %v2968
      %v5555 = vmul.f32 %v3750, %v2972
      %v5556 = vmul.f32 %v3751, %v2976
      %v5557 = vmul.f32 %v3752, %v2980
      %v5558 = vmul.f32 %v3753, %v2984
      %v5559 = vmul.f32 %v3754, %v2988
      %v5560 = vmul.f32 %v3755, %v2992
      %v5561 = vmul.f32 %v3756, %v2996
      %v5562 = vmul.f32 %v3757, %v3000
      %v5563 = vmul.f32 %v3758, %v3004
      %v5564 = vmul.f32 %v3759, %v3008
      %v5565 = vmul.f32 %v3760, %v3012
      %v5566 = vmul.f32 %v3761, %v3016
      %v5567 = vmul.f32 %v3762, %v3020
      %v5568 = vmul.f32 %v3763, %v3024
      %v5569 = vmul.f32 %v3764, %v3028
      %v5570 = vmul.f32 %v3765, %v3032
      %v5571 = vmul.f32 %v3766, %v3036
      %v5572 = vmul.f32 %v3767, %v3040
      %v5573 = vmul.f32 %v3768, %v3044
      %v5574 = vmul.f32 %v3769, %v3048
      %v5575 = vmul.f32 %v3770, %v3052
      %v5576 = vmul.f32 %v3771, %v3056
      %v5577 = vmul.f32 %v3772, %v3060
      %v5578 = vmul.f32 %v3773, %v3064
      %v5579 = vmul.f32 %v3774, %v3068
      %v5580 = vmul.f32 %v3775, %v3072
      %v5581 = vmul.f32 %v3744, %v3076
      %v5582 = vmul.f32 %v3745, %v3080
      %v5583 = vpack.c.bf16 %v5552, %v5551
      %v5584 = vpack.c.bf16 %v5554, %v5553
      %v5585 = vpack.c.bf16 %v5556, %v5555
      %v5586 = vpack.c.bf16 %v5558, %v5557
      %v5587 = vpack.c.bf16 %v5560, %v5559
      %v5588 = vpack.c.bf16 %v5562, %v5561
      %v5589 = vpack.c.bf16 %v5564, %v5563
      %v5590 = vpack.c.bf16 %v5566, %v5565
      %v5591 = vpack.c.bf16 %v5568, %v5567
      %v5592 = vpack.c.bf16 %v5570, %v5569
      %v5593 = vpack.c.bf16 %v5572, %v5571
      %v5594 = vpack.c.bf16 %v5574, %v5573
      %v5595 = vpack.c.bf16 %v5576, %v5575
      %v5596 = vpack.c.bf16 %v5578, %v5577
      %v5597 = vpack.c.bf16 %v5580, %v5579
      %v5598 = vpack.c.bf16 %v5582, %v5581
      %v5599 = vld [vmem:[%s4 + $0xe0] sm:$0xf]
      %v5600 = vld [vmem:[%s4 + $0xe4] sm:$0xf]
      %v5601 = vld [vmem:[%s4 + $0xe8] sm:$0xf]
      %v5602 = vld [vmem:[%s4 + $0xec] sm:$0xf]
      %v5603 = vld [vmem:[%s4 + $0xf0] sm:$0xf]
      %v5604 = vld [vmem:[%s4 + $0xf4] sm:$0xf]
      %v5605 = vld [vmem:[%s4 + $0xf8] sm:$0xf]
      %v5606 = vld [vmem:[%s4 + $0xfc] sm:$0xf]
      %v5615 = vunpack.c.l.b16 %v5599
      %v5616 = vunpack.c.l.b16 %v5600
      %v5617 = vunpack.c.l.b16 %v5601
      %v5618 = vunpack.c.l.b16 %v5602
      %v5619 = vunpack.c.l.b16 %v5603
      %v5620 = vunpack.c.l.b16 %v5604
      %v5621 = vunpack.c.l.b16 %v5605
      %v5622 = vunpack.c.l.b16 %v5606
      %v5623 = vpack.c.b16 %v5616, %v5615
      %v5624 = vpack.c.b16 %v5618, %v5617
      %v5625 = vpack.c.b16 %v5620, %v5619
      %v5626 = vpack.c.b16 %v5622, %v5621
      %v5632 = vsel %vm865, %v5583, 0
      %v5635 = vsel %vm865, %v5584, 0
      %v5638 = vsel %vm865, %v5585, 0
      %v5641 = vsel %vm865, %v5586, 0
      %v5644 = vsel %vm865, %v5587, 0
      %v5647 = vsel %vm865, %v5588, 0
      %v5650 = vsel %vm865, %v5589, 0
      %v5653 = vsel %vm865, %v5590, 0
      %v5656 = vsel %vm865, %v5591, 0
      %v5659 = vsel %vm865, %v5592, 0
      %v5662 = vsel %vm865, %v5593, 0
      %v5665 = vsel %vm865, %v5594, 0
      %v5668 = vsel %vm865, %v5595, 0
      %v5671 = vsel %vm865, %v5596, 0
      %v5674 = vsel %vm865, %v5597, 0
      %v5677 = vsel %vm865, %v5598, 0
      %5679 = vmatpush.bf16.msra.mxu0 0
      %5680 = vmatpush.bf16.msra.mxu0 0
      %5681 = vmatpush.bf16.msra.mxu0 0
      %5682 = vmatpush.bf16.msra.mxu0 0
      %5683 = vmatpush.bf16.msra.mxu0 %v5626
      %5684 = vmatpush.bf16.msra.mxu0 %v5625
      %5685 = vmatpush.bf16.msra.mxu0 %v5624
      %5686 = vmatpush.bf16.msra.mxu0 %v5623
      %5687 = vmatmul.bf16.gmra.mxu0 %v5632
      %v5688 = vpop.f32.mrf.mxu0
      %v5689 = vadd.f32 0.0, %v5688
      %v5690 = vpop.f32.mrf.mxu0
      %v5691 = vadd.f32 0.0, %v5690
      %5692 = vmatmul.bf16.gmra.mxu0 %v5635
      %v5693 = vpop.f32.mrf.mxu0
      %v5694 = vadd.f32 0.0, %v5693
      %v5695 = vpop.f32.mrf.mxu0
      %v5696 = vadd.f32 0.0, %v5695
      %5697 = vmatmul.bf16.gmra.mxu0 %v5638
      %v5698 = vpop.f32.mrf.mxu0
      %v5699 = vadd.f32 0.0, %v5698
      %v5700 = vpop.f32.mrf.mxu0
      %v5701 = vadd.f32 0.0, %v5700
      %5702 = vmatmul.bf16.gmra.mxu0 %v5641
      %v5703 = vpop.f32.mrf.mxu0
      %v5704 = vadd.f32 0.0, %v5703
      %v5705 = vpop.f32.mrf.mxu0
      %v5706 = vadd.f32 0.0, %v5705
      %5707 = vmatmul.bf16.gmra.mxu0 %v5644
      %v5708 = vpop.f32.mrf.mxu0
      %v5709 = vadd.f32 0.0, %v5708
      %v5710 = vpop.f32.mrf.mxu0
      %v5711 = vadd.f32 0.0, %v5710
      %5712 = vmatmul.bf16.gmra.mxu0 %v5647
      %v5713 = vpop.f32.mrf.mxu0
      %v5714 = vadd.f32 0.0, %v5713
      %v5715 = vpop.f32.mrf.mxu0
      %v5716 = vadd.f32 0.0, %v5715
      %5717 = vmatmul.bf16.gmra.mxu0 %v5650
      %v5718 = vpop.f32.mrf.mxu0
      %v5719 = vadd.f32 0.0, %v5718
      %v5720 = vpop.f32.mrf.mxu0
      %v5721 = vadd.f32 0.0, %v5720
      %5722 = vmatmul.bf16.gmra.mxu0 %v5653
      %v5723 = vpop.f32.mrf.mxu0
      %v5724 = vadd.f32 0.0, %v5723
      %v5725 = vpop.f32.mrf.mxu0
      %v5726 = vadd.f32 0.0, %v5725
      %5727 = vmatmul.bf16.gmra.mxu0 %v5656
      %v5728 = vpop.f32.mrf.mxu0
      %v5729 = vadd.f32 0.0, %v5728
      %v5730 = vpop.f32.mrf.mxu0
      %v5731 = vadd.f32 0.0, %v5730
      %5732 = vmatmul.bf16.gmra.mxu0 %v5659
      %v5733 = vpop.f32.mrf.mxu0
      %v5734 = vadd.f32 0.0, %v5733
      %v5735 = vpop.f32.mrf.mxu0
      %v5736 = vadd.f32 0.0, %v5735
      %5737 = vmatmul.bf16.gmra.mxu0 %v5662
      %v5738 = vpop.f32.mrf.mxu0
      %v5739 = vadd.f32 0.0, %v5738
      %v5740 = vpop.f32.mrf.mxu0
      %v5741 = vadd.f32 0.0, %v5740
      %5742 = vmatmul.bf16.gmra.mxu0 %v5665
      %v5743 = vpop.f32.mrf.mxu0
      %v5744 = vadd.f32 0.0, %v5743
      %v5745 = vpop.f32.mrf.mxu0
      %v5746 = vadd.f32 0.0, %v5745
      %5747 = vmatmul.bf16.gmra.mxu0 %v5668
      %v5748 = vpop.f32.mrf.mxu0
      %v5749 = vadd.f32 0.0, %v5748
      %v5750 = vpop.f32.mrf.mxu0
      %v5751 = vadd.f32 0.0, %v5750
      %5752 = vmatmul.bf16.gmra.mxu0 %v5671
      %v5753 = vpop.f32.mrf.mxu0
      %v5754 = vadd.f32 0.0, %v5753
      %v5755 = vpop.f32.mrf.mxu0
      %v5756 = vadd.f32 0.0, %v5755
      %5757 = vmatmul.bf16.gmra.mxu0 %v5674
      %v5758 = vpop.f32.mrf.mxu0
      %v5759 = vadd.f32 0.0, %v5758
      %v5760 = vpop.f32.mrf.mxu0
      %v5761 = vadd.f32 0.0, %v5760
      %5762 = vmatmul.bf16.gmra.mxu0 %v5677
      %v5763 = vpop.f32.mrf.mxu0
      %v5764 = vadd.f32 0.0, %v5763
      %v5765 = vpop.f32.mrf.mxu0
      %v5766 = vadd.f32 0.0, %v5765
      %5767 = vdwg.mxu0
      %v5768 = vadd.f32 %v5519, %v5689
      %v5769 = vadd.f32 %v5520, %v5691
      %v5770 = vadd.f32 %v5521, %v5694
      %v5771 = vadd.f32 %v5522, %v5696
      %v5772 = vadd.f32 %v5523, %v5699
      %v5773 = vadd.f32 %v5524, %v5701
      %v5774 = vadd.f32 %v5525, %v5704
      %v5775 = vadd.f32 %v5526, %v5706
      %v5776 = vadd.f32 %v5527, %v5709
      %v5777 = vadd.f32 %v5528, %v5711
      %v5778 = vadd.f32 %v5529, %v5714
      %v5779 = vadd.f32 %v5530, %v5716
      %v5780 = vadd.f32 %v5531, %v5719
      %v5781 = vadd.f32 %v5532, %v5721
      %v5782 = vadd.f32 %v5533, %v5724
      %v5783 = vadd.f32 %v5534, %v5726
      %v5784 = vadd.f32 %v5535, %v5729
      %v5785 = vadd.f32 %v5536, %v5731
      %v5786 = vadd.f32 %v5537, %v5734
      %v5787 = vadd.f32 %v5538, %v5736
      %v5788 = vadd.f32 %v5539, %v5739
      %v5789 = vadd.f32 %v5540, %v5741
      %v5790 = vadd.f32 %v5541, %v5744
      %v5791 = vadd.f32 %v5542, %v5746
      %v5792 = vadd.f32 %v5543, %v5749
      %v5793 = vadd.f32 %v5544, %v5751
      %v5794 = vadd.f32 %v5545, %v5754
      %v5795 = vadd.f32 %v5546, %v5756
      %v5796 = vadd.f32 %v5547, %v5759
      %v5797 = vadd.f32 %v5548, %v5761
      %v5798 = vadd.f32 %v5549, %v5764
      %v5799 = vadd.f32 %v5550, %v5766
      %v5800 = vmul.f32 %v4334, %v3333
      %v5801 = vmul.f32 %v4333, %v3337
      %v5802 = vmul.f32 %v4332, %v3341
      %v5803 = vmul.f32 %v4331, %v3345
      %v5804 = vmul.f32 %v4330, %v3349
      %v5805 = vmul.f32 %v4329, %v3353
      %v5806 = vmul.f32 %v4328, %v3357
      %v5807 = vmul.f32 %v4327, %v3361
      %v5808 = vmul.f32 %v4326, %v3365
      %v5809 = vmul.f32 %v4325, %v3369
      %v5810 = vmul.f32 %v4324, %v3373
      %v5811 = vmul.f32 %v4323, %v3377
      %v5812 = vmul.f32 %v4322, %v3381
      %v5813 = vmul.f32 %v4321, %v3385
      %v5814 = vmul.f32 %v4320, %v3389
      %v5815 = vmul.f32 %v4319, %v3393
      %v5816 = vmul.f32 %v4318, %v3397
      %v5817 = vmul.f32 %v4317, %v3401
      %v5818 = vmul.f32 %v4316, %v3405
      %v5819 = vmul.f32 %v4315, %v3409
      %v5820 = vmul.f32 %v4314, %v3413
      %v5821 = vmul.f32 %v4313, %v3417
      %v5822 = vmul.f32 %v4312, %v3421
      %v5823 = vmul.f32 %v4311, %v3425
      %v5824 = vmul.f32 %v4310, %v3429
      %v5825 = vmul.f32 %v4309, %v3433
      %v5826 = vmul.f32 %v4308, %v3437
      %v5827 = vmul.f32 %v4307, %v3441
      %v5828 = vmul.f32 %v4306, %v3445
      %v5829 = vmul.f32 %v4337, %v3449
      %v5830 = vmul.f32 %v4336, %v3453
      %v5831 = vmul.f32 %v4335, %v3457
      %v5832 = vpack.c.bf16 %v5801, %v5800
      %v5833 = vpack.c.bf16 %v5803, %v5802
      %v5834 = vpack.c.bf16 %v5805, %v5804
      %v5835 = vpack.c.bf16 %v5807, %v5806
      %v5836 = vpack.c.bf16 %v5809, %v5808
      %v5837 = vpack.c.bf16 %v5811, %v5810
      %v5838 = vpack.c.bf16 %v5813, %v5812
      %v5839 = vpack.c.bf16 %v5815, %v5814
      %v5840 = vpack.c.bf16 %v5817, %v5816
      %v5841 = vpack.c.bf16 %v5819, %v5818
      %v5842 = vpack.c.bf16 %v5821, %v5820
      %v5843 = vpack.c.bf16 %v5823, %v5822
      %v5844 = vpack.c.bf16 %v5825, %v5824
      %v5845 = vpack.c.bf16 %v5827, %v5826
      %v5846 = vpack.c.bf16 %v5829, %v5828
      %v5847 = vpack.c.bf16 %v5831, %v5830
      %v5848 = vld [vmem:[%s4 + $0x100] sm:$0xf]
      %v5849 = vld [vmem:[%s4 + $0x104] sm:$0xf]
      %v5850 = vld [vmem:[%s4 + $0x108] sm:$0xf]
      %v5851 = vld [vmem:[%s4 + $0x10c] sm:$0xf]
      %v5852 = vld [vmem:[%s4 + $0x110] sm:$0xf]
      %v5853 = vld [vmem:[%s4 + $0x114] sm:$0xf]
      %v5854 = vld [vmem:[%s4 + $0x118] sm:$0xf]
      %v5855 = vld [vmem:[%s4 + $0x11c] sm:$0xf]
      %v5864 = vunpack.c.l.b16 %v5848
      %v5865 = vunpack.c.l.b16 %v5849
      %v5866 = vunpack.c.l.b16 %v5850
      %v5867 = vunpack.c.l.b16 %v5851
      %v5868 = vunpack.c.l.b16 %v5852
      %v5869 = vunpack.c.l.b16 %v5853
      %v5870 = vunpack.c.l.b16 %v5854
      %v5871 = vunpack.c.l.b16 %v5855
      %v5872 = vpack.c.b16 %v5865, %v5864
      %v5873 = vpack.c.b16 %v5867, %v5866
      %v5874 = vpack.c.b16 %v5869, %v5868
      %v5875 = vpack.c.b16 %v5871, %v5870
      %v5881 = vsel %vm865, %v5832, 0
      %v5884 = vsel %vm865, %v5833, 0
      %v5887 = vsel %vm865, %v5834, 0
      %v5890 = vsel %vm865, %v5835, 0
      %v5893 = vsel %vm865, %v5836, 0
      %v5896 = vsel %vm865, %v5837, 0
      %v5899 = vsel %vm865, %v5838, 0
      %v5902 = vsel %vm865, %v5839, 0
      %v5905 = vsel %vm865, %v5840, 0
      %v5908 = vsel %vm865, %v5841, 0
      %v5911 = vsel %vm865, %v5842, 0
      %v5914 = vsel %vm865, %v5843, 0
      %v5917 = vsel %vm865, %v5844, 0
      %v5920 = vsel %vm865, %v5845, 0
      %v5923 = vsel %vm865, %v5846, 0
      %v5926 = vsel %vm865, %v5847, 0
      %5928 = vmatpush.bf16.msra.mxu0 0
      %5929 = vmatpush.bf16.msra.mxu0 0
      %5930 = vmatpush.bf16.msra.mxu0 0
      %5931 = vmatpush.bf16.msra.mxu0 0
      %5932 = vmatpush.bf16.msra.mxu0 %v5875
      %5933 = vmatpush.bf16.msra.mxu0 %v5874
      %5934 = vmatpush.bf16.msra.mxu0 %v5873
      %5935 = vmatpush.bf16.msra.mxu0 %v5872
      %5936 = vmatmul.bf16.gmra.mxu0 %v5881
      %v5937 = vpop.f32.mrf.mxu0
      %v5938 = vadd.f32 0.0, %v5937
      %v5939 = vpop.f32.mrf.mxu0
      %v5940 = vadd.f32 0.0, %v5939
      %5941 = vmatmul.bf16.gmra.mxu0 %v5884
      %v5942 = vpop.f32.mrf.mxu0
      %v5943 = vadd.f32 0.0, %v5942
      %v5944 = vpop.f32.mrf.mxu0
      %v5945 = vadd.f32 0.0, %v5944
      %5946 = vmatmul.bf16.gmra.mxu0 %v5887
      %v5947 = vpop.f32.mrf.mxu0
      %v5948 = vadd.f32 0.0, %v5947
      %v5949 = vpop.f32.mrf.mxu0
      %v5950 = vadd.f32 0.0, %v5949
      %5951 = vmatmul.bf16.gmra.mxu0 %v5890
      %v5952 = vpop.f32.mrf.mxu0
      %v5953 = vadd.f32 0.0, %v5952
      %v5954 = vpop.f32.mrf.mxu0
      %v5955 = vadd.f32 0.0, %v5954
      %5956 = vmatmul.bf16.gmra.mxu0 %v5893
      %v5957 = vpop.f32.mrf.mxu0
      %v5958 = vadd.f32 0.0, %v5957
      %v5959 = vpop.f32.mrf.mxu0
      %v5960 = vadd.f32 0.0, %v5959
      %5961 = vmatmul.bf16.gmra.mxu0 %v5896
      %v5962 = vpop.f32.mrf.mxu0
      %v5963 = vadd.f32 0.0, %v5962
      %v5964 = vpop.f32.mrf.mxu0
      %v5965 = vadd.f32 0.0, %v5964
      %5966 = vmatmul.bf16.gmra.mxu0 %v5899
      %v5967 = vpop.f32.mrf.mxu0
      %v5968 = vadd.f32 0.0, %v5967
      %v5969 = vpop.f32.mrf.mxu0
      %v5970 = vadd.f32 0.0, %v5969
      %5971 = vmatmul.bf16.gmra.mxu0 %v5902
      %v5972 = vpop.f32.mrf.mxu0
      %v5973 = vadd.f32 0.0, %v5972
      %v5974 = vpop.f32.mrf.mxu0
      %v5975 = vadd.f32 0.0, %v5974
      %5976 = vmatmul.bf16.gmra.mxu0 %v5905
      %v5977 = vpop.f32.mrf.mxu0
      %v5978 = vadd.f32 0.0, %v5977
      %v5979 = vpop.f32.mrf.mxu0
      %v5980 = vadd.f32 0.0, %v5979
      %5981 = vmatmul.bf16.gmra.mxu0 %v5908
      %v5982 = vpop.f32.mrf.mxu0
      %v5983 = vadd.f32 0.0, %v5982
      %v5984 = vpop.f32.mrf.mxu0
      %v5985 = vadd.f32 0.0, %v5984
      %5986 = vmatmul.bf16.gmra.mxu0 %v5911
      %v5987 = vpop.f32.mrf.mxu0
      %v5988 = vadd.f32 0.0, %v5987
      %v5989 = vpop.f32.mrf.mxu0
      %v5990 = vadd.f32 0.0, %v5989
      %5991 = vmatmul.bf16.gmra.mxu0 %v5914
      %v5992 = vpop.f32.mrf.mxu0
      %v5993 = vadd.f32 0.0, %v5992
      %v5994 = vpop.f32.mrf.mxu0
      %v5995 = vadd.f32 0.0, %v5994
      %5996 = vmatmul.bf16.gmra.mxu0 %v5917
      %v5997 = vpop.f32.mrf.mxu0
      %v5998 = vadd.f32 0.0, %v5997
      %v5999 = vpop.f32.mrf.mxu0
      %v6000 = vadd.f32 0.0, %v5999
      %6001 = vmatmul.bf16.gmra.mxu0 %v5920
      %v6002 = vpop.f32.mrf.mxu0
      %v6003 = vadd.f32 0.0, %v6002
      %v6004 = vpop.f32.mrf.mxu0
      %v6005 = vadd.f32 0.0, %v6004
      %6006 = vmatmul.bf16.gmra.mxu0 %v5923
      %v6007 = vpop.f32.mrf.mxu0
      %v6008 = vadd.f32 0.0, %v6007
      %v6009 = vpop.f32.mrf.mxu0
      %v6010 = vadd.f32 0.0, %v6009
      %6011 = vmatmul.bf16.gmra.mxu0 %v5926
      %v6012 = vpop.f32.mrf.mxu0
      %v6013 = vadd.f32 0.0, %v6012
      %v6014 = vpop.f32.mrf.mxu0
      %v6015 = vadd.f32 0.0, %v6014
      %6016 = vdwg.mxu0
      %v6017 = vadd.f32 %v5768, %v5938
      %v6018 = vadd.f32 %v5769, %v5940
      %v6019 = vadd.f32 %v5770, %v5943
      %v6020 = vadd.f32 %v5771, %v5945
      %v6021 = vadd.f32 %v5772, %v5948
      %v6022 = vadd.f32 %v5773, %v5950
      %v6023 = vadd.f32 %v5774, %v5953
      %v6024 = vadd.f32 %v5775, %v5955
      %v6025 = vadd.f32 %v5776, %v5958
      %v6026 = vadd.f32 %v5777, %v5960
      %v6027 = vadd.f32 %v5778, %v5963
      %v6028 = vadd.f32 %v5779, %v5965
      %v6029 = vadd.f32 %v5780, %v5968
      %v6030 = vadd.f32 %v5781, %v5970
      %v6031 = vadd.f32 %v5782, %v5973
      %v6032 = vadd.f32 %v5783, %v5975
      %v6033 = vadd.f32 %v5784, %v5978
      %v6034 = vadd.f32 %v5785, %v5980
      %v6035 = vadd.f32 %v5786, %v5983
      %v6036 = vadd.f32 %v5787, %v5985
      %v6037 = vadd.f32 %v5788, %v5988
      %v6038 = vadd.f32 %v5789, %v5990
      %v6039 = vadd.f32 %v5790, %v5993
      %v6040 = vadd.f32 %v5791, %v5995
      %v6041 = vadd.f32 %v5792, %v5998
      %v6042 = vadd.f32 %v5793, %v6000
      %v6043 = vadd.f32 %v5794, %v6003
      %v6044 = vadd.f32 %v5795, %v6005
      %v6045 = vadd.f32 %v5796, %v6008
      %v6046 = vadd.f32 %v5797, %v6010
      %v6047 = vadd.f32 %v5798, %v6013
      %v6048 = vadd.f32 %v5799, %v6015
      %v6049 = vld [vmem:[%s5] sm:$0x1]
      %v6051 = vperm.slane %v6049, 0
      %v6053 = vadd.f32 %v6017, %v6051
      %v6054 = vadd.f32 %v6018, %v6051
      %v6055 = vadd.f32 %v6019, %v6051
      %v6056 = vadd.f32 %v6020, %v6051
      %v6057 = vadd.f32 %v6021, %v6051
      %v6058 = vadd.f32 %v6022, %v6051
      %v6059 = vadd.f32 %v6023, %v6051
      %v6060 = vadd.f32 %v6024, %v6051
      %v6061 = vadd.f32 %v6025, %v6051
      %v6062 = vadd.f32 %v6026, %v6051
      %v6063 = vadd.f32 %v6027, %v6051
      %v6064 = vadd.f32 %v6028, %v6051
      %v6065 = vadd.f32 %v6029, %v6051
      %v6066 = vadd.f32 %v6030, %v6051
      %v6067 = vadd.f32 %v6031, %v6051
      %v6068 = vadd.f32 %v6032, %v6051
      %v6069 = vadd.f32 %v6033, %v6051
      %v6070 = vadd.f32 %v6034, %v6051
      %v6071 = vadd.f32 %v6035, %v6051
      %v6072 = vadd.f32 %v6036, %v6051
      %v6073 = vadd.f32 %v6037, %v6051
      %v6074 = vadd.f32 %v6038, %v6051
      %v6075 = vadd.f32 %v6039, %v6051
      %v6076 = vadd.f32 %v6040, %v6051
      %v6077 = vadd.f32 %v6041, %v6051
      %v6078 = vadd.f32 %v6042, %v6051
      %v6079 = vadd.f32 %v6043, %v6051
      %v6080 = vadd.f32 %v6044, %v6051
      %v6081 = vadd.f32 %v6045, %v6051
      %v6082 = vadd.f32 %v6046, %v6051
      %v6083 = vadd.f32 %v6047, %v6051
      %v6084 = vadd.f32 %v6048, %v6051
      %v6085 = vmax.f32 %v6053, 0.0
      %v6086 = vmax.f32 %v6054, 0.0
      %v6087 = vmax.f32 %v6055, 0.0
      %v6088 = vmax.f32 %v6056, 0.0
      %v6089 = vmax.f32 %v6057, 0.0
      %v6090 = vmax.f32 %v6058, 0.0
      %v6091 = vmax.f32 %v6059, 0.0
      %v6092 = vmax.f32 %v6060, 0.0
      %v6093 = vmax.f32 %v6061, 0.0
      %v6094 = vmax.f32 %v6062, 0.0
      %v6095 = vmax.f32 %v6063, 0.0
      %v6096 = vmax.f32 %v6064, 0.0
      %v6097 = vmax.f32 %v6065, 0.0
      %v6098 = vmax.f32 %v6066, 0.0
      %v6099 = vmax.f32 %v6067, 0.0
      %v6100 = vmax.f32 %v6068, 0.0
      %v6101 = vmax.f32 %v6069, 0.0
      %v6102 = vmax.f32 %v6070, 0.0
      %v6103 = vmax.f32 %v6071, 0.0
      %v6104 = vmax.f32 %v6072, 0.0
      %v6105 = vmax.f32 %v6073, 0.0
      %v6106 = vmax.f32 %v6074, 0.0
      %v6107 = vmax.f32 %v6075, 0.0
      %v6108 = vmax.f32 %v6076, 0.0
      %v6109 = vmax.f32 %v6077, 0.0
      %v6110 = vmax.f32 %v6078, 0.0
      %v6111 = vmax.f32 %v6079, 0.0
      %v6112 = vmax.f32 %v6080, 0.0
      %v6113 = vmax.f32 %v6081, 0.0
      %v6114 = vmax.f32 %v6082, 0.0
      %v6115 = vmax.f32 %v6083, 0.0
      %v6116 = vmax.f32 %v6084, 0.0
      %v6117 = vrot.slane %v6085, 7
      %v6118 = vrot.slane %v6086, 7
      %v6119 = vrot.slane %v6087, 7
      %v6120 = vrot.slane %v6088, 7
      %v6121 = vrot.slane %v6089, 7
      %v6122 = vrot.slane %v6090, 7
      %v6123 = vrot.slane %v6091, 7
      %v6124 = vrot.slane %v6092, 7
      %v6125 = vrot.slane %v6093, 7
      %v6126 = vrot.slane %v6094, 7
      %v6127 = vrot.slane %v6095, 7
      %v6128 = vrot.slane %v6096, 7
      %v6129 = vrot.slane %v6097, 7
      %v6130 = vrot.slane %v6098, 7
      %v6131 = vrot.slane %v6099, 7
      %v6132 = vrot.slane %v6100, 7
      %v6133 = vrot.slane %v6101, 7
      %v6134 = vrot.slane %v6102, 7
      %v6135 = vrot.slane %v6103, 7
      %v6136 = vrot.slane %v6104, 7
      %v6137 = vrot.slane %v6105, 7
      %v6138 = vrot.slane %v6106, 7
      %v6139 = vrot.slane %v6107, 7
      %v6140 = vrot.slane %v6108, 7
      %v6141 = vrot.slane %v6109, 7
      %v6142 = vrot.slane %v6110, 7
      %v6143 = vrot.slane %v6111, 7
      %v6144 = vrot.slane %v6112, 7
      %v6145 = vrot.slane %v6113, 7
      %v6146 = vrot.slane %v6114, 7
      %v6147 = vrot.slane %v6115, 7
      %v6148 = vrot.slane %v6116, 7
      %v6149 = vsel %vm408, %v6147, %v6148
      %v6150 = vsel %vm408, %v6146, %v6147
      %v6151 = vsel %vm408, %v6145, %v6146
      %v6152 = vsel %vm408, %v6144, %v6145
      %v6153 = vsel %vm408, %v6143, %v6144
      %v6154 = vsel %vm408, %v6142, %v6143
      %v6155 = vsel %vm408, %v6141, %v6142
      %v6156 = vsel %vm408, %v6140, %v6141
      %v6157 = vsel %vm408, %v6139, %v6140
      %v6158 = vsel %vm408, %v6138, %v6139
      %v6159 = vsel %vm408, %v6137, %v6138
      %v6160 = vsel %vm408, %v6136, %v6137
      %v6161 = vsel %vm408, %v6135, %v6136
      %v6162 = vsel %vm408, %v6134, %v6135
      %v6163 = vsel %vm408, %v6133, %v6134
      %v6164 = vsel %vm408, %v6132, %v6133
      %v6165 = vsel %vm408, %v6131, %v6132
      %v6166 = vsel %vm408, %v6130, %v6131
      %v6167 = vsel %vm408, %v6129, %v6130
      %v6168 = vsel %vm408, %v6128, %v6129
      %v6169 = vsel %vm408, %v6127, %v6128
      %v6170 = vsel %vm408, %v6126, %v6127
      %v6171 = vsel %vm408, %v6125, %v6126
      %v6172 = vsel %vm408, %v6124, %v6125
      %v6173 = vsel %vm408, %v6123, %v6124
      %v6174 = vsel %vm408, %v6122, %v6123
      %v6175 = vsel %vm408, %v6121, %v6122
      %v6176 = vsel %vm408, %v6120, %v6121
      %v6177 = vsel %vm408, %v6119, %v6120
      %v6178 = vsel %vm408, %v6118, %v6119
      %v6179 = vsel %vm408, %v6117, %v6118
      %v6180 = vsel %vm408, %v6148, %v6117
      %v6181 = vmul.f32 %v6150, %v444
      %v6182 = vmul.f32 %v6149, %v449
      %v6183 = vmul.f32 %v6180, %v454
      %v6184 = vmul.f32 %v6179, %v459
      %v6185 = vmul.f32 %v6178, %v464
      %v6186 = vmul.f32 %v6177, %v469
      %v6187 = vmul.f32 %v6176, %v474
      %v6188 = vmul.f32 %v6175, %v479
      %v6189 = vmul.f32 %v6174, %v484
      %v6190 = vmul.f32 %v6173, %v489
      %v6191 = vmul.f32 %v6172, %v494
      %v6192 = vmul.f32 %v6171, %v499
      %v6193 = vmul.f32 %v6170, %v504
      %v6194 = vmul.f32 %v6169, %v509
      %v6195 = vmul.f32 %v6168, %v514
      %v6196 = vmul.f32 %v6167, %v519
      %v6197 = vmul.f32 %v6166, %v524
      %v6198 = vmul.f32 %v6165, %v529
      %v6199 = vmul.f32 %v6164, %v534
      %v6200 = vmul.f32 %v6163, %v539
      %v6201 = vmul.f32 %v6162, %v544
      %v6202 = vmul.f32 %v6161, %v549
      %v6203 = vmul.f32 %v6160, %v554
      %v6204 = vmul.f32 %v6159, %v559
      %v6205 = vmul.f32 %v6158, %v564
      %v6206 = vmul.f32 %v6157, %v569
      %v6207 = vmul.f32 %v6156, %v574
      %v6208 = vmul.f32 %v6155, %v579
      %v6209 = vmul.f32 %v6154, %v584
      %v6210 = vmul.f32 %v6153, %v589
      %v6211 = vmul.f32 %v6152, %v594
      %v6212 = vmul.f32 %v6151, %v599
      %v6213 = vpack.c.bf16 %v6182, %v6181
      %v6214 = vpack.c.bf16 %v6184, %v6183
      %v6215 = vpack.c.bf16 %v6186, %v6185
      %v6216 = vpack.c.bf16 %v6188, %v6187
      %v6217 = vpack.c.bf16 %v6190, %v6189
      %v6218 = vpack.c.bf16 %v6192, %v6191
      %v6219 = vpack.c.bf16 %v6194, %v6193
      %v6220 = vpack.c.bf16 %v6196, %v6195
      %v6221 = vpack.c.bf16 %v6198, %v6197
      %v6222 = vpack.c.bf16 %v6200, %v6199
      %v6223 = vpack.c.bf16 %v6202, %v6201
      %v6224 = vpack.c.bf16 %v6204, %v6203
      %v6225 = vpack.c.bf16 %v6206, %v6205
      %v6226 = vpack.c.bf16 %v6208, %v6207
      %v6227 = vpack.c.bf16 %v6210, %v6209
      %v6228 = vpack.c.bf16 %v6212, %v6211
      %v6229 = vld [vmem:[%s6] sm:$0xf]
      %v6230 = vld [vmem:[%s6 + $0x4] sm:$0xf]
      %v6231 = vld [vmem:[%s6 + $0x8] sm:$0xf]
      %v6232 = vld [vmem:[%s6 + $0xc] sm:$0xf]
      %v6233 = vld [vmem:[%s6 + $0x10] sm:$0xf]
      %v6234 = vld [vmem:[%s6 + $0x14] sm:$0xf]
      %v6235 = vld [vmem:[%s6 + $0x18] sm:$0xf]
      %v6236 = vld [vmem:[%s6 + $0x1c] sm:$0xf]
      %v6237 = vmul.f32 %v6115, %v659
      %v6238 = vmul.f32 %v6116, %v663
      %v6239 = vmul.f32 %v6085, %v667
      %v6240 = vmul.f32 %v6086, %v671
      %v6241 = vmul.f32 %v6087, %v675
      %v6242 = vmul.f32 %v6088, %v679
      %v6243 = vmul.f32 %v6089, %v683
      %v6244 = vmul.f32 %v6090, %v687
      %v6245 = vmul.f32 %v6091, %v691
      %v6246 = vmul.f32 %v6092, %v695
      %v6247 = vmul.f32 %v6093, %v699
      %v6248 = vmul.f32 %v6094, %v703
      %v6249 = vmul.f32 %v6095, %v707
      %v6250 = vmul.f32 %v6096, %v711
      %v6251 = vmul.f32 %v6097, %v715
      %v6252 = vmul.f32 %v6098, %v719
      %v6253 = vmul.f32 %v6099, %v723
      %v6254 = vmul.f32 %v6100, %v727
      %v6255 = vmul.f32 %v6101, %v731
      %v6256 = vmul.f32 %v6102, %v735
      %v6257 = vmul.f32 %v6103, %v739
      %v6258 = vmul.f32 %v6104, %v743
      %v6259 = vmul.f32 %v6105, %v747
      %v6260 = vmul.f32 %v6106, %v751
      %v6261 = vmul.f32 %v6107, %v755
      %v6262 = vmul.f32 %v6108, %v759
      %v6263 = vmul.f32 %v6109, %v763
      %v6264 = vmul.f32 %v6110, %v767
      %v6265 = vmul.f32 %v6111, %v771
      %v6266 = vmul.f32 %v6112, %v775
      %v6267 = vmul.f32 %v6113, %v779
      %v6268 = vmul.f32 %v6114, %v783
      %v6269 = vpack.c.bf16 %v6238, %v6237
      %v6270 = vpack.c.bf16 %v6240, %v6239
      %v6271 = vpack.c.bf16 %v6242, %v6241
      %v6272 = vpack.c.bf16 %v6244, %v6243
      %v6273 = vpack.c.bf16 %v6246, %v6245
      %v6274 = vpack.c.bf16 %v6248, %v6247
      %v6275 = vpack.c.bf16 %v6250, %v6249
      %v6276 = vpack.c.bf16 %v6252, %v6251
      %v6277 = vpack.c.bf16 %v6254, %v6253
      %v6278 = vpack.c.bf16 %v6256, %v6255
      %v6279 = vpack.c.bf16 %v6258, %v6257
      %v6280 = vpack.c.bf16 %v6260, %v6259
      %v6281 = vpack.c.bf16 %v6262, %v6261
      %v6282 = vpack.c.bf16 %v6264, %v6263
      %v6283 = vpack.c.bf16 %v6266, %v6265
      %v6284 = vpack.c.bf16 %v6268, %v6267
      %v6285 = vld [vmem:[%s6 + $0x20] sm:$0xf]
      %v6286 = vld [vmem:[%s6 + $0x24] sm:$0xf]
      %v6287 = vld [vmem:[%s6 + $0x28] sm:$0xf]
      %v6288 = vld [vmem:[%s6 + $0x2c] sm:$0xf]
      %v6289 = vld [vmem:[%s6 + $0x30] sm:$0xf]
      %v6290 = vld [vmem:[%s6 + $0x34] sm:$0xf]
      %v6291 = vld [vmem:[%s6 + $0x38] sm:$0xf]
      %v6292 = vld [vmem:[%s6 + $0x3c] sm:$0xf]
      %v6301 = vunpack.c.l.b16 %v6285
      %v6302 = vunpack.c.l.b16 %v6286
      %v6303 = vunpack.c.l.b16 %v6287
      %v6304 = vunpack.c.l.b16 %v6288
      %v6305 = vunpack.c.l.b16 %v6289
      %v6306 = vunpack.c.l.b16 %v6290
      %v6307 = vunpack.c.l.b16 %v6291
      %v6308 = vunpack.c.l.b16 %v6292
      %v6309 = vpack.c.b16 %v6302, %v6301
      %v6310 = vpack.c.b16 %v6304, %v6303
      %v6311 = vpack.c.b16 %v6306, %v6305
      %v6312 = vpack.c.b16 %v6308, %v6307
      %v6318 = vsel %vm865, %v6269, 0
      %v6321 = vsel %vm865, %v6270, 0
      %v6324 = vsel %vm865, %v6271, 0
      %v6327 = vsel %vm865, %v6272, 0
      %v6330 = vsel %vm865, %v6273, 0
      %v6333 = vsel %vm865, %v6274, 0
      %v6336 = vsel %vm865, %v6275, 0
      %v6339 = vsel %vm865, %v6276, 0
      %v6342 = vsel %vm865, %v6277, 0
      %v6345 = vsel %vm865, %v6278, 0
      %v6348 = vsel %vm865, %v6279, 0
      %v6351 = vsel %vm865, %v6280, 0
      %v6354 = vsel %vm865, %v6281, 0
      %v6357 = vsel %vm865, %v6282, 0
      %v6360 = vsel %vm865, %v6283, 0
      %v6363 = vsel %vm865, %v6284, 0
      %6365 = vmatpush.bf16.msra.mxu0 0
      %6366 = vmatpush.bf16.msra.mxu0 0
      %6367 = vmatpush.bf16.msra.mxu0 0
      %6368 = vmatpush.bf16.msra.mxu0 0
      %6369 = vmatpush.bf16.msra.mxu0 %v6312
      %6370 = vmatpush.bf16.msra.mxu0 %v6311
      %6371 = vmatpush.bf16.msra.mxu0 %v6310
      %6372 = vmatpush.bf16.msra.mxu0 %v6309
      %6373 = vmatmul.bf16.gmra.mxu0 %v6318
      %v6374 = vpop.f32.mrf.mxu0
      %v6375 = vadd.f32 0.0, %v6374
      %v6376 = vpop.f32.mrf.mxu0
      %v6377 = vadd.f32 0.0, %v6376
      %6378 = vmatmul.bf16.gmra.mxu0 %v6321
      %v6379 = vpop.f32.mrf.mxu0
      %v6380 = vadd.f32 0.0, %v6379
      %v6381 = vpop.f32.mrf.mxu0
      %v6382 = vadd.f32 0.0, %v6381
      %6383 = vmatmul.bf16.gmra.mxu0 %v6324
      %v6384 = vpop.f32.mrf.mxu0
      %v6385 = vadd.f32 0.0, %v6384
      %v6386 = vpop.f32.mrf.mxu0
      %v6387 = vadd.f32 0.0, %v6386
      %6388 = vmatmul.bf16.gmra.mxu0 %v6327
      %v6389 = vpop.f32.mrf.mxu0
      %v6390 = vadd.f32 0.0, %v6389
      %v6391 = vpop.f32.mrf.mxu0
      %v6392 = vadd.f32 0.0, %v6391
      %6393 = vmatmul.bf16.gmra.mxu0 %v6330
      %v6394 = vpop.f32.mrf.mxu0
      %v6395 = vadd.f32 0.0, %v6394
      %v6396 = vpop.f32.mrf.mxu0
      %v6397 = vadd.f32 0.0, %v6396
      %6398 = vmatmul.bf16.gmra.mxu0 %v6333
      %v6399 = vpop.f32.mrf.mxu0
      %v6400 = vadd.f32 0.0, %v6399
      %v6401 = vpop.f32.mrf.mxu0
      %v6402 = vadd.f32 0.0, %v6401
      %6403 = vmatmul.bf16.gmra.mxu0 %v6336
      %v6404 = vpop.f32.mrf.mxu0
      %v6405 = vadd.f32 0.0, %v6404
      %v6406 = vpop.f32.mrf.mxu0
      %v6407 = vadd.f32 0.0, %v6406
      %6408 = vmatmul.bf16.gmra.mxu0 %v6339
      %v6409 = vpop.f32.mrf.mxu0
      %v6410 = vadd.f32 0.0, %v6409
      %v6411 = vpop.f32.mrf.mxu0
      %v6412 = vadd.f32 0.0, %v6411
      %6413 = vmatmul.bf16.gmra.mxu0 %v6342
      %v6414 = vpop.f32.mrf.mxu0
      %v6415 = vadd.f32 0.0, %v6414
      %v6416 = vpop.f32.mrf.mxu0
      %v6417 = vadd.f32 0.0, %v6416
      %6418 = vmatmul.bf16.gmra.mxu0 %v6345
      %v6419 = vpop.f32.mrf.mxu0
      %v6420 = vadd.f32 0.0, %v6419
      %v6421 = vpop.f32.mrf.mxu0
      %v6422 = vadd.f32 0.0, %v6421
      %6423 = vmatmul.bf16.gmra.mxu0 %v6348
      %v6424 = vpop.f32.mrf.mxu0
      %v6425 = vadd.f32 0.0, %v6424
      %v6426 = vpop.f32.mrf.mxu0
      %v6427 = vadd.f32 0.0, %v6426
      %6428 = vmatmul.bf16.gmra.mxu0 %v6351
      %v6429 = vpop.f32.mrf.mxu0
      %v6430 = vadd.f32 0.0, %v6429
      %v6431 = vpop.f32.mrf.mxu0
      %v6432 = vadd.f32 0.0, %v6431
      %6433 = vmatmul.bf16.gmra.mxu0 %v6354
      %v6434 = vpop.f32.mrf.mxu0
      %v6435 = vadd.f32 0.0, %v6434
      %v6436 = vpop.f32.mrf.mxu0
      %v6437 = vadd.f32 0.0, %v6436
      %6438 = vmatmul.bf16.gmra.mxu0 %v6357
      %v6439 = vpop.f32.mrf.mxu0
      %v6440 = vadd.f32 0.0, %v6439
      %v6441 = vpop.f32.mrf.mxu0
      %v6442 = vadd.f32 0.0, %v6441
      %6443 = vmatmul.bf16.gmra.mxu0 %v6360
      %v6444 = vpop.f32.mrf.mxu0
      %v6445 = vadd.f32 0.0, %v6444
      %v6446 = vpop.f32.mrf.mxu0
      %v6447 = vadd.f32 0.0, %v6446
      %6448 = vmatmul.bf16.gmra.mxu0 %v6363
      %v6449 = vpop.f32.mrf.mxu0
      %v6450 = vadd.f32 0.0, %v6449
      %v6451 = vpop.f32.mrf.mxu0
      %v6452 = vadd.f32 0.0, %v6451
      %6453 = vdwg.mxu0
      %v6462 = vunpack.c.l.b16 %v6229
      %v6463 = vunpack.c.l.b16 %v6230
      %v6464 = vunpack.c.l.b16 %v6231
      %v6465 = vunpack.c.l.b16 %v6232
      %v6466 = vunpack.c.l.b16 %v6233
      %v6467 = vunpack.c.l.b16 %v6234
      %v6468 = vunpack.c.l.b16 %v6235
      %v6469 = vunpack.c.l.b16 %v6236
      %v6470 = vpack.c.b16 %v6463, %v6462
      %v6471 = vpack.c.b16 %v6465, %v6464
      %v6472 = vpack.c.b16 %v6467, %v6466
      %v6473 = vpack.c.b16 %v6469, %v6468
      %v6479 = vsel %vm865, %v6213, 0
      %v6482 = vsel %vm865, %v6214, 0
      %v6485 = vsel %vm865, %v6215, 0
      %v6488 = vsel %vm865, %v6216, 0
      %v6491 = vsel %vm865, %v6217, 0
      %v6494 = vsel %vm865, %v6218, 0
      %v6497 = vsel %vm865, %v6219, 0
      %v6500 = vsel %vm865, %v6220, 0
      %v6503 = vsel %vm865, %v6221, 0
      %v6506 = vsel %vm865, %v6222, 0
      %v6509 = vsel %vm865, %v6223, 0
      %v6512 = vsel %vm865, %v6224, 0
      %v6515 = vsel %vm865, %v6225, 0
      %v6518 = vsel %vm865, %v6226, 0
      %v6521 = vsel %vm865, %v6227, 0
      %v6524 = vsel %vm865, %v6228, 0
      %6526 = vmatpush.bf16.msra.mxu0 0
      %6527 = vmatpush.bf16.msra.mxu0 0
      %6528 = vmatpush.bf16.msra.mxu0 0
      %6529 = vmatpush.bf16.msra.mxu0 0
      %6530 = vmatpush.bf16.msra.mxu0 %v6473
      %6531 = vmatpush.bf16.msra.mxu0 %v6472
      %6532 = vmatpush.bf16.msra.mxu0 %v6471
      %6533 = vmatpush.bf16.msra.mxu0 %v6470
      %6534 = vmatmul.bf16.gmra.mxu0 %v6479
      %v6535 = vpop.f32.mrf.mxu0
      %v6536 = vadd.f32 %v6375, %v6535
      %v6537 = vpop.f32.mrf.mxu0
      %v6538 = vadd.f32 %v6377, %v6537
      %6539 = vmatmul.bf16.gmra.mxu0 %v6482
      %v6540 = vpop.f32.mrf.mxu0
      %v6541 = vadd.f32 %v6380, %v6540
      %v6542 = vpop.f32.mrf.mxu0
      %v6543 = vadd.f32 %v6382, %v6542
      %6544 = vmatmul.bf16.gmra.mxu0 %v6485
      %v6545 = vpop.f32.mrf.mxu0
      %v6546 = vadd.f32 %v6385, %v6545
      %v6547 = vpop.f32.mrf.mxu0
      %v6548 = vadd.f32 %v6387, %v6547
      %6549 = vmatmul.bf16.gmra.mxu0 %v6488
      %v6550 = vpop.f32.mrf.mxu0
      %v6551 = vadd.f32 %v6390, %v6550
      %v6552 = vpop.f32.mrf.mxu0
      %v6553 = vadd.f32 %v6392, %v6552
      %6554 = vmatmul.bf16.gmra.mxu0 %v6491
      %v6555 = vpop.f32.mrf.mxu0
      %v6556 = vadd.f32 %v6395, %v6555
      %v6557 = vpop.f32.mrf.mxu0
      %v6558 = vadd.f32 %v6397, %v6557
      %6559 = vmatmul.bf16.gmra.mxu0 %v6494
      %v6560 = vpop.f32.mrf.mxu0
      %v6561 = vadd.f32 %v6400, %v6560
      %v6562 = vpop.f32.mrf.mxu0
      %v6563 = vadd.f32 %v6402, %v6562
      %6564 = vmatmul.bf16.gmra.mxu0 %v6497
      %v6565 = vpop.f32.mrf.mxu0
      %v6566 = vadd.f32 %v6405, %v6565
      %v6567 = vpop.f32.mrf.mxu0
      %v6568 = vadd.f32 %v6407, %v6567
      %6569 = vmatmul.bf16.gmra.mxu0 %v6500
      %v6570 = vpop.f32.mrf.mxu0
      %v6571 = vadd.f32 %v6410, %v6570
      %v6572 = vpop.f32.mrf.mxu0
      %v6573 = vadd.f32 %v6412, %v6572
      %6574 = vmatmul.bf16.gmra.mxu0 %v6503
      %v6575 = vpop.f32.mrf.mxu0
      %v6576 = vadd.f32 %v6415, %v6575
      %v6577 = vpop.f32.mrf.mxu0
      %v6578 = vadd.f32 %v6417, %v6577
      %6579 = vmatmul.bf16.gmra.mxu0 %v6506
      %v6580 = vpop.f32.mrf.mxu0
      %v6581 = vadd.f32 %v6420, %v6580
      %v6582 = vpop.f32.mrf.mxu0
      %v6583 = vadd.f32 %v6422, %v6582
      %6584 = vmatmul.bf16.gmra.mxu0 %v6509
      %v6585 = vpop.f32.mrf.mxu0
      %v6586 = vadd.f32 %v6425, %v6585
      %v6587 = vpop.f32.mrf.mxu0
      %v6588 = vadd.f32 %v6427, %v6587
      %6589 = vmatmul.bf16.gmra.mxu0 %v6512
      %v6590 = vpop.f32.mrf.mxu0
      %v6591 = vadd.f32 %v6430, %v6590
      %v6592 = vpop.f32.mrf.mxu0
      %v6593 = vadd.f32 %v6432, %v6592
      %6594 = vmatmul.bf16.gmra.mxu0 %v6515
      %v6595 = vpop.f32.mrf.mxu0
      %v6596 = vadd.f32 %v6435, %v6595
      %v6597 = vpop.f32.mrf.mxu0
      %v6598 = vadd.f32 %v6437, %v6597
      %6599 = vmatmul.bf16.gmra.mxu0 %v6518
      %v6600 = vpop.f32.mrf.mxu0
      %v6601 = vadd.f32 %v6440, %v6600
      %v6602 = vpop.f32.mrf.mxu0
      %v6603 = vadd.f32 %v6442, %v6602
      %6604 = vmatmul.bf16.gmra.mxu0 %v6521
      %v6605 = vpop.f32.mrf.mxu0
      %v6606 = vadd.f32 %v6445, %v6605
      %v6607 = vpop.f32.mrf.mxu0
      %v6608 = vadd.f32 %v6447, %v6607
      %6609 = vmatmul.bf16.gmra.mxu0 %v6524
      %v6610 = vpop.f32.mrf.mxu0
      %v6611 = vadd.f32 %v6450, %v6610
      %v6612 = vpop.f32.mrf.mxu0
      %v6613 = vadd.f32 %v6452, %v6612
      %6614 = vdwg.mxu0
      %v6615 = vrot.slane %v6085, 1
      %v6616 = vrot.slane %v6086, 1
      %v6617 = vrot.slane %v6087, 1
      %v6618 = vrot.slane %v6088, 1
      %v6619 = vrot.slane %v6089, 1
      %v6620 = vrot.slane %v6090, 1
      %v6621 = vrot.slane %v6091, 1
      %v6622 = vrot.slane %v6092, 1
      %v6623 = vrot.slane %v6093, 1
      %v6624 = vrot.slane %v6094, 1
      %v6625 = vrot.slane %v6095, 1
      %v6626 = vrot.slane %v6096, 1
      %v6627 = vrot.slane %v6097, 1
      %v6628 = vrot.slane %v6098, 1
      %v6629 = vrot.slane %v6099, 1
      %v6630 = vrot.slane %v6100, 1
      %v6631 = vrot.slane %v6101, 1
      %v6632 = vrot.slane %v6102, 1
      %v6633 = vrot.slane %v6103, 1
      %v6634 = vrot.slane %v6104, 1
      %v6635 = vrot.slane %v6105, 1
      %v6636 = vrot.slane %v6106, 1
      %v6637 = vrot.slane %v6107, 1
      %v6638 = vrot.slane %v6108, 1
      %v6639 = vrot.slane %v6109, 1
      %v6640 = vrot.slane %v6110, 1
      %v6641 = vrot.slane %v6111, 1
      %v6642 = vrot.slane %v6112, 1
      %v6643 = vrot.slane %v6113, 1
      %v6644 = vrot.slane %v6114, 1
      %v6645 = vrot.slane %v6115, 1
      %v6646 = vrot.slane %v6116, 1
      %v6647 = vsel %vm1196, %v6645, %v6646
      %v6648 = vsel %vm1196, %v6644, %v6645
      %v6649 = vsel %vm1196, %v6643, %v6644
      %v6650 = vsel %vm1196, %v6642, %v6643
      %v6651 = vsel %vm1196, %v6641, %v6642
      %v6652 = vsel %vm1196, %v6640, %v6641
      %v6653 = vsel %vm1196, %v6639, %v6640
      %v6654 = vsel %vm1196, %v6638, %v6639
      %v6655 = vsel %vm1196, %v6637, %v6638
      %v6656 = vsel %vm1196, %v6636, %v6637
      %v6657 = vsel %vm1196, %v6635, %v6636
      %v6658 = vsel %vm1196, %v6634, %v6635
      %v6659 = vsel %vm1196, %v6633, %v6634
      %v6660 = vsel %vm1196, %v6632, %v6633
      %v6661 = vsel %vm1196, %v6631, %v6632
      %v6662 = vsel %vm1196, %v6630, %v6631
      %v6663 = vsel %vm1196, %v6629, %v6630
      %v6664 = vsel %vm1196, %v6628, %v6629
      %v6665 = vsel %vm1196, %v6627, %v6628
      %v6666 = vsel %vm1196, %v6626, %v6627
      %v6667 = vsel %vm1196, %v6625, %v6626
      %v6668 = vsel %vm1196, %v6624, %v6625
      %v6669 = vsel %vm1196, %v6623, %v6624
      %v6670 = vsel %vm1196, %v6622, %v6623
      %v6671 = vsel %vm1196, %v6621, %v6622
      %v6672 = vsel %vm1196, %v6620, %v6621
      %v6673 = vsel %vm1196, %v6619, %v6620
      %v6674 = vsel %vm1196, %v6618, %v6619
      %v6675 = vsel %vm1196, %v6617, %v6618
      %v6676 = vsel %vm1196, %v6616, %v6617
      %v6677 = vsel %vm1196, %v6615, %v6616
      %v6678 = vsel %vm1196, %v6646, %v6615
      %v6679 = vmul.f32 %v6647, %v1231
      %v6680 = vmul.f32 %v6678, %v1235
      %v6681 = vmul.f32 %v6677, %v1239
      %v6682 = vmul.f32 %v6676, %v1243
      %v6683 = vmul.f32 %v6675, %v1247
      %v6684 = vmul.f32 %v6674, %v1251
      %v6685 = vmul.f32 %v6673, %v1255
      %v6686 = vmul.f32 %v6672, %v1259
      %v6687 = vmul.f32 %v6671, %v1263
      %v6688 = vmul.f32 %v6670, %v1267
      %v6689 = vmul.f32 %v6669, %v1271
      %v6690 = vmul.f32 %v6668, %v1275
      %v6691 = vmul.f32 %v6667, %v1279
      %v6692 = vmul.f32 %v6666, %v1283
      %v6693 = vmul.f32 %v6665, %v1287
      %v6694 = vmul.f32 %v6664, %v1291
      %v6695 = vmul.f32 %v6663, %v1295
      %v6696 = vmul.f32 %v6662, %v1299
      %v6697 = vmul.f32 %v6661, %v1303
      %v6698 = vmul.f32 %v6660, %v1307
      %v6699 = vmul.f32 %v6659, %v1311
      %v6700 = vmul.f32 %v6658, %v1315
      %v6701 = vmul.f32 %v6657, %v1319
      %v6702 = vmul.f32 %v6656, %v1323
      %v6703 = vmul.f32 %v6655, %v1327
      %v6704 = vmul.f32 %v6654, %v1331
      %v6705 = vmul.f32 %v6653, %v1335
      %v6706 = vmul.f32 %v6652, %v1339
      %v6707 = vmul.f32 %v6651, %v1343
      %v6708 = vmul.f32 %v6650, %v1347
      %v6709 = vmul.f32 %v6649, %v1351
      %v6710 = vmul.f32 %v6648, %v1355
      %v6711 = vpack.c.bf16 %v6680, %v6679
      %v6712 = vpack.c.bf16 %v6682, %v6681
      %v6713 = vpack.c.bf16 %v6684, %v6683
      %v6714 = vpack.c.bf16 %v6686, %v6685
      %v6715 = vpack.c.bf16 %v6688, %v6687
      %v6716 = vpack.c.bf16 %v6690, %v6689
      %v6717 = vpack.c.bf16 %v6692, %v6691
      %v6718 = vpack.c.bf16 %v6694, %v6693
      %v6719 = vpack.c.bf16 %v6696, %v6695
      %v6720 = vpack.c.bf16 %v6698, %v6697
      %v6721 = vpack.c.bf16 %v6700, %v6699
      %v6722 = vpack.c.bf16 %v6702, %v6701
      %v6723 = vpack.c.bf16 %v6704, %v6703
      %v6724 = vpack.c.bf16 %v6706, %v6705
      %v6725 = vpack.c.bf16 %v6708, %v6707
      %v6726 = vpack.c.bf16 %v6710, %v6709
      %v6727 = vld [vmem:[%s6 + $0x40] sm:$0xf]
      %v6728 = vld [vmem:[%s6 + $0x44] sm:$0xf]
      %v6729 = vld [vmem:[%s6 + $0x48] sm:$0xf]
      %v6730 = vld [vmem:[%s6 + $0x4c] sm:$0xf]
      %v6731 = vld [vmem:[%s6 + $0x50] sm:$0xf]
      %v6732 = vld [vmem:[%s6 + $0x54] sm:$0xf]
      %v6733 = vld [vmem:[%s6 + $0x58] sm:$0xf]
      %v6734 = vld [vmem:[%s6 + $0x5c] sm:$0xf]
      %v6743 = vunpack.c.l.b16 %v6727
      %v6744 = vunpack.c.l.b16 %v6728
      %v6745 = vunpack.c.l.b16 %v6729
      %v6746 = vunpack.c.l.b16 %v6730
      %v6747 = vunpack.c.l.b16 %v6731
      %v6748 = vunpack.c.l.b16 %v6732
      %v6749 = vunpack.c.l.b16 %v6733
      %v6750 = vunpack.c.l.b16 %v6734
      %v6751 = vpack.c.b16 %v6744, %v6743
      %v6752 = vpack.c.b16 %v6746, %v6745
      %v6753 = vpack.c.b16 %v6748, %v6747
      %v6754 = vpack.c.b16 %v6750, %v6749
      %v6760 = vsel %vm865, %v6711, 0
      %v6763 = vsel %vm865, %v6712, 0
      %v6766 = vsel %vm865, %v6713, 0
      %v6769 = vsel %vm865, %v6714, 0
      %v6772 = vsel %vm865, %v6715, 0
      %v6775 = vsel %vm865, %v6716, 0
      %v6778 = vsel %vm865, %v6717, 0
      %v6781 = vsel %vm865, %v6718, 0
      %v6784 = vsel %vm865, %v6719, 0
      %v6787 = vsel %vm865, %v6720, 0
      %v6790 = vsel %vm865, %v6721, 0
      %v6793 = vsel %vm865, %v6722, 0
      %v6796 = vsel %vm865, %v6723, 0
      %v6799 = vsel %vm865, %v6724, 0
      %v6802 = vsel %vm865, %v6725, 0
      %v6805 = vsel %vm865, %v6726, 0
      %6807 = vmatpush.bf16.msra.mxu0 0
      %6808 = vmatpush.bf16.msra.mxu0 0
      %6809 = vmatpush.bf16.msra.mxu0 0
      %6810 = vmatpush.bf16.msra.mxu0 0
      %6811 = vmatpush.bf16.msra.mxu0 %v6754
      %6812 = vmatpush.bf16.msra.mxu0 %v6753
      %6813 = vmatpush.bf16.msra.mxu0 %v6752
      %6814 = vmatpush.bf16.msra.mxu0 %v6751
      %6815 = vmatmul.bf16.gmra.mxu0 %v6760
      %v6816 = vpop.f32.mrf.mxu0
      %v6817 = vadd.f32 0.0, %v6816
      %v6818 = vpop.f32.mrf.mxu0
      %v6819 = vadd.f32 0.0, %v6818
      %6820 = vmatmul.bf16.gmra.mxu0 %v6763
      %v6821 = vpop.f32.mrf.mxu0
      %v6822 = vadd.f32 0.0, %v6821
      %v6823 = vpop.f32.mrf.mxu0
      %v6824 = vadd.f32 0.0, %v6823
      %6825 = vmatmul.bf16.gmra.mxu0 %v6766
      %v6826 = vpop.f32.mrf.mxu0
      %v6827 = vadd.f32 0.0, %v6826
      %v6828 = vpop.f32.mrf.mxu0
      %v6829 = vadd.f32 0.0, %v6828
      %6830 = vmatmul.bf16.gmra.mxu0 %v6769
      %v6831 = vpop.f32.mrf.mxu0
      %v6832 = vadd.f32 0.0, %v6831
      %v6833 = vpop.f32.mrf.mxu0
      %v6834 = vadd.f32 0.0, %v6833
      %6835 = vmatmul.bf16.gmra.mxu0 %v6772
      %v6836 = vpop.f32.mrf.mxu0
      %v6837 = vadd.f32 0.0, %v6836
      %v6838 = vpop.f32.mrf.mxu0
      %v6839 = vadd.f32 0.0, %v6838
      %6840 = vmatmul.bf16.gmra.mxu0 %v6775
      %v6841 = vpop.f32.mrf.mxu0
      %v6842 = vadd.f32 0.0, %v6841
      %v6843 = vpop.f32.mrf.mxu0
      %v6844 = vadd.f32 0.0, %v6843
      %6845 = vmatmul.bf16.gmra.mxu0 %v6778
      %v6846 = vpop.f32.mrf.mxu0
      %v6847 = vadd.f32 0.0, %v6846
      %v6848 = vpop.f32.mrf.mxu0
      %v6849 = vadd.f32 0.0, %v6848
      %6850 = vmatmul.bf16.gmra.mxu0 %v6781
      %v6851 = vpop.f32.mrf.mxu0
      %v6852 = vadd.f32 0.0, %v6851
      %v6853 = vpop.f32.mrf.mxu0
      %v6854 = vadd.f32 0.0, %v6853
      %6855 = vmatmul.bf16.gmra.mxu0 %v6784
      %v6856 = vpop.f32.mrf.mxu0
      %v6857 = vadd.f32 0.0, %v6856
      %v6858 = vpop.f32.mrf.mxu0
      %v6859 = vadd.f32 0.0, %v6858
      %6860 = vmatmul.bf16.gmra.mxu0 %v6787
      %v6861 = vpop.f32.mrf.mxu0
      %v6862 = vadd.f32 0.0, %v6861
      %v6863 = vpop.f32.mrf.mxu0
      %v6864 = vadd.f32 0.0, %v6863
      %6865 = vmatmul.bf16.gmra.mxu0 %v6790
      %v6866 = vpop.f32.mrf.mxu0
      %v6867 = vadd.f32 0.0, %v6866
      %v6868 = vpop.f32.mrf.mxu0
      %v6869 = vadd.f32 0.0, %v6868
      %6870 = vmatmul.bf16.gmra.mxu0 %v6793
      %v6871 = vpop.f32.mrf.mxu0
      %v6872 = vadd.f32 0.0, %v6871
      %v6873 = vpop.f32.mrf.mxu0
      %v6874 = vadd.f32 0.0, %v6873
      %6875 = vmatmul.bf16.gmra.mxu0 %v6796
      %v6876 = vpop.f32.mrf.mxu0
      %v6877 = vadd.f32 0.0, %v6876
      %v6878 = vpop.f32.mrf.mxu0
      %v6879 = vadd.f32 0.0, %v6878
      %6880 = vmatmul.bf16.gmra.mxu0 %v6799
      %v6881 = vpop.f32.mrf.mxu0
      %v6882 = vadd.f32 0.0, %v6881
      %v6883 = vpop.f32.mrf.mxu0
      %v6884 = vadd.f32 0.0, %v6883
      %6885 = vmatmul.bf16.gmra.mxu0 %v6802
      %v6886 = vpop.f32.mrf.mxu0
      %v6887 = vadd.f32 0.0, %v6886
      %v6888 = vpop.f32.mrf.mxu0
      %v6889 = vadd.f32 0.0, %v6888
      %6890 = vmatmul.bf16.gmra.mxu0 %v6805
      %v6891 = vpop.f32.mrf.mxu0
      %v6892 = vadd.f32 0.0, %v6891
      %v6893 = vpop.f32.mrf.mxu0
      %v6894 = vadd.f32 0.0, %v6893
      %6895 = vdwg.mxu0
      %v6896 = vadd.f32 %v6536, %v6817
      %v6897 = vadd.f32 %v6538, %v6819
      %v6898 = vadd.f32 %v6541, %v6822
      %v6899 = vadd.f32 %v6543, %v6824
      %v6900 = vadd.f32 %v6546, %v6827
      %v6901 = vadd.f32 %v6548, %v6829
      %v6902 = vadd.f32 %v6551, %v6832
      %v6903 = vadd.f32 %v6553, %v6834
      %v6904 = vadd.f32 %v6556, %v6837
      %v6905 = vadd.f32 %v6558, %v6839
      %v6906 = vadd.f32 %v6561, %v6842
      %v6907 = vadd.f32 %v6563, %v6844
      %v6908 = vadd.f32 %v6566, %v6847
      %v6909 = vadd.f32 %v6568, %v6849
      %v6910 = vadd.f32 %v6571, %v6852
      %v6911 = vadd.f32 %v6573, %v6854
      %v6912 = vadd.f32 %v6576, %v6857
      %v6913 = vadd.f32 %v6578, %v6859
      %v6914 = vadd.f32 %v6581, %v6862
      %v6915 = vadd.f32 %v6583, %v6864
      %v6916 = vadd.f32 %v6586, %v6867
      %v6917 = vadd.f32 %v6588, %v6869
      %v6918 = vadd.f32 %v6591, %v6872
      %v6919 = vadd.f32 %v6593, %v6874
      %v6920 = vadd.f32 %v6596, %v6877
      %v6921 = vadd.f32 %v6598, %v6879
      %v6922 = vadd.f32 %v6601, %v6882
      %v6923 = vadd.f32 %v6603, %v6884
      %v6924 = vadd.f32 %v6606, %v6887
      %v6925 = vadd.f32 %v6608, %v6889
      %v6926 = vadd.f32 %v6611, %v6892
      %v6927 = vadd.f32 %v6613, %v6894
      %v6928 = vmul.f32 %v6180, %v1608
      %v6929 = vmul.f32 %v6179, %v1612
      %v6930 = vmul.f32 %v6178, %v1616
      %v6931 = vmul.f32 %v6177, %v1620
      %v6932 = vmul.f32 %v6176, %v1624
      %v6933 = vmul.f32 %v6175, %v1628
      %v6934 = vmul.f32 %v6174, %v1632
      %v6935 = vmul.f32 %v6173, %v1636
      %v6936 = vmul.f32 %v6172, %v1640
      %v6937 = vmul.f32 %v6171, %v1644
      %v6938 = vmul.f32 %v6170, %v1648
      %v6939 = vmul.f32 %v6169, %v1652
      %v6940 = vmul.f32 %v6168, %v1656
      %v6941 = vmul.f32 %v6167, %v1660
      %v6942 = vmul.f32 %v6166, %v1664
      %v6943 = vmul.f32 %v6165, %v1668
      %v6944 = vmul.f32 %v6164, %v1672
      %v6945 = vmul.f32 %v6163, %v1676
      %v6946 = vmul.f32 %v6162, %v1680
      %v6947 = vmul.f32 %v6161, %v1684
      %v6948 = vmul.f32 %v6160, %v1688
      %v6949 = vmul.f32 %v6159, %v1692
      %v6950 = vmul.f32 %v6158, %v1696
      %v6951 = vmul.f32 %v6157, %v1700
      %v6952 = vmul.f32 %v6156, %v1704
      %v6953 = vmul.f32 %v6155, %v1708
      %v6954 = vmul.f32 %v6154, %v1712
      %v6955 = vmul.f32 %v6153, %v1716
      %v6956 = vmul.f32 %v6152, %v1720
      %v6957 = vmul.f32 %v6151, %v1724
      %v6958 = vmul.f32 %v6150, %v1728
      %v6959 = vmul.f32 %v6149, %v1732
      %v6960 = vpack.c.bf16 %v6929, %v6928
      %v6961 = vpack.c.bf16 %v6931, %v6930
      %v6962 = vpack.c.bf16 %v6933, %v6932
      %v6963 = vpack.c.bf16 %v6935, %v6934
      %v6964 = vpack.c.bf16 %v6937, %v6936
      %v6965 = vpack.c.bf16 %v6939, %v6938
      %v6966 = vpack.c.bf16 %v6941, %v6940
      %v6967 = vpack.c.bf16 %v6943, %v6942
      %v6968 = vpack.c.bf16 %v6945, %v6944
      %v6969 = vpack.c.bf16 %v6947, %v6946
      %v6970 = vpack.c.bf16 %v6949, %v6948
      %v6971 = vpack.c.bf16 %v6951, %v6950
      %v6972 = vpack.c.bf16 %v6953, %v6952
      %v6973 = vpack.c.bf16 %v6955, %v6954
      %v6974 = vpack.c.bf16 %v6957, %v6956
      %v6975 = vpack.c.bf16 %v6959, %v6958
      %v6976 = vld [vmem:[%s6 + $0x60] sm:$0xf]
      %v6977 = vld [vmem:[%s6 + $0x64] sm:$0xf]
      %v6978 = vld [vmem:[%s6 + $0x68] sm:$0xf]
      %v6979 = vld [vmem:[%s6 + $0x6c] sm:$0xf]
      %v6980 = vld [vmem:[%s6 + $0x70] sm:$0xf]
      %v6981 = vld [vmem:[%s6 + $0x74] sm:$0xf]
      %v6982 = vld [vmem:[%s6 + $0x78] sm:$0xf]
      %v6983 = vld [vmem:[%s6 + $0x7c] sm:$0xf]
      %v6992 = vunpack.c.l.b16 %v6976
      %v6993 = vunpack.c.l.b16 %v6977
      %v6994 = vunpack.c.l.b16 %v6978
      %v6995 = vunpack.c.l.b16 %v6979
      %v6996 = vunpack.c.l.b16 %v6980
      %v6997 = vunpack.c.l.b16 %v6981
      %v6998 = vunpack.c.l.b16 %v6982
      %v6999 = vunpack.c.l.b16 %v6983
      %v7000 = vpack.c.b16 %v6993, %v6992
      %v7001 = vpack.c.b16 %v6995, %v6994
      %v7002 = vpack.c.b16 %v6997, %v6996
      %v7003 = vpack.c.b16 %v6999, %v6998
      %v7009 = vsel %vm865, %v6960, 0
      %v7012 = vsel %vm865, %v6961, 0
      %v7015 = vsel %vm865, %v6962, 0
      %v7018 = vsel %vm865, %v6963, 0
      %v7021 = vsel %vm865, %v6964, 0
      %v7024 = vsel %vm865, %v6965, 0
      %v7027 = vsel %vm865, %v6966, 0
      %v7030 = vsel %vm865, %v6967, 0
      %v7033 = vsel %vm865, %v6968, 0
      %v7036 = vsel %vm865, %v6969, 0
      %v7039 = vsel %vm865, %v6970, 0
      %v7042 = vsel %vm865, %v6971, 0
      %v7045 = vsel %vm865, %v6972, 0
      %v7048 = vsel %vm865, %v6973, 0
      %v7051 = vsel %vm865, %v6974, 0
      %v7054 = vsel %vm865, %v6975, 0
      %7056 = vmatpush.bf16.msra.mxu0 0
      %7057 = vmatpush.bf16.msra.mxu0 0
      %7058 = vmatpush.bf16.msra.mxu0 0
      %7059 = vmatpush.bf16.msra.mxu0 0
      %7060 = vmatpush.bf16.msra.mxu0 %v7003
      %7061 = vmatpush.bf16.msra.mxu0 %v7002
      %7062 = vmatpush.bf16.msra.mxu0 %v7001
      %7063 = vmatpush.bf16.msra.mxu0 %v7000
      %7064 = vmatmul.bf16.gmra.mxu0 %v7009
      %v7065 = vpop.f32.mrf.mxu0
      %v7066 = vadd.f32 0.0, %v7065
      %v7067 = vpop.f32.mrf.mxu0
      %v7068 = vadd.f32 0.0, %v7067
      %7069 = vmatmul.bf16.gmra.mxu0 %v7012
      %v7070 = vpop.f32.mrf.mxu0
      %v7071 = vadd.f32 0.0, %v7070
      %v7072 = vpop.f32.mrf.mxu0
      %v7073 = vadd.f32 0.0, %v7072
      %7074 = vmatmul.bf16.gmra.mxu0 %v7015
      %v7075 = vpop.f32.mrf.mxu0
      %v7076 = vadd.f32 0.0, %v7075
      %v7077 = vpop.f32.mrf.mxu0
      %v7078 = vadd.f32 0.0, %v7077
      %7079 = vmatmul.bf16.gmra.mxu0 %v7018
      %v7080 = vpop.f32.mrf.mxu0
      %v7081 = vadd.f32 0.0, %v7080
      %v7082 = vpop.f32.mrf.mxu0
      %v7083 = vadd.f32 0.0, %v7082
      %7084 = vmatmul.bf16.gmra.mxu0 %v7021
      %v7085 = vpop.f32.mrf.mxu0
      %v7086 = vadd.f32 0.0, %v7085
      %v7087 = vpop.f32.mrf.mxu0
      %v7088 = vadd.f32 0.0, %v7087
      %7089 = vmatmul.bf16.gmra.mxu0 %v7024
      %v7090 = vpop.f32.mrf.mxu0
      %v7091 = vadd.f32 0.0, %v7090
      %v7092 = vpop.f32.mrf.mxu0
      %v7093 = vadd.f32 0.0, %v7092
      %7094 = vmatmul.bf16.gmra.mxu0 %v7027
      %v7095 = vpop.f32.mrf.mxu0
      %v7096 = vadd.f32 0.0, %v7095
      %v7097 = vpop.f32.mrf.mxu0
      %v7098 = vadd.f32 0.0, %v7097
      %7099 = vmatmul.bf16.gmra.mxu0 %v7030
      %v7100 = vpop.f32.mrf.mxu0
      %v7101 = vadd.f32 0.0, %v7100
      %v7102 = vpop.f32.mrf.mxu0
      %v7103 = vadd.f32 0.0, %v7102
      %7104 = vmatmul.bf16.gmra.mxu0 %v7033
      %v7105 = vpop.f32.mrf.mxu0
      %v7106 = vadd.f32 0.0, %v7105
      %v7107 = vpop.f32.mrf.mxu0
      %v7108 = vadd.f32 0.0, %v7107
      %7109 = vmatmul.bf16.gmra.mxu0 %v7036
      %v7110 = vpop.f32.mrf.mxu0
      %v7111 = vadd.f32 0.0, %v7110
      %v7112 = vpop.f32.mrf.mxu0
      %v7113 = vadd.f32 0.0, %v7112
      %7114 = vmatmul.bf16.gmra.mxu0 %v7039
      %v7115 = vpop.f32.mrf.mxu0
      %v7116 = vadd.f32 0.0, %v7115
      %v7117 = vpop.f32.mrf.mxu0
      %v7118 = vadd.f32 0.0, %v7117
      %7119 = vmatmul.bf16.gmra.mxu0 %v7042
      %v7120 = vpop.f32.mrf.mxu0
      %v7121 = vadd.f32 0.0, %v7120
      %v7122 = vpop.f32.mrf.mxu0
      %v7123 = vadd.f32 0.0, %v7122
      %7124 = vmatmul.bf16.gmra.mxu0 %v7045
      %v7125 = vpop.f32.mrf.mxu0
      %v7126 = vadd.f32 0.0, %v7125
      %v7127 = vpop.f32.mrf.mxu0
      %v7128 = vadd.f32 0.0, %v7127
      %7129 = vmatmul.bf16.gmra.mxu0 %v7048
      %v7130 = vpop.f32.mrf.mxu0
      %v7131 = vadd.f32 0.0, %v7130
      %v7132 = vpop.f32.mrf.mxu0
      %v7133 = vadd.f32 0.0, %v7132
      %7134 = vmatmul.bf16.gmra.mxu0 %v7051
      %v7135 = vpop.f32.mrf.mxu0
      %v7136 = vadd.f32 0.0, %v7135
      %v7137 = vpop.f32.mrf.mxu0
      %v7138 = vadd.f32 0.0, %v7137
      %7139 = vmatmul.bf16.gmra.mxu0 %v7054
      %v7140 = vpop.f32.mrf.mxu0
      %v7141 = vadd.f32 0.0, %v7140
      %v7142 = vpop.f32.mrf.mxu0
      %v7143 = vadd.f32 0.0, %v7142
      %7144 = vdwg.mxu0
      %v7145 = vadd.f32 %v6896, %v7066
      %v7146 = vadd.f32 %v6897, %v7068
      %v7147 = vadd.f32 %v6898, %v7071
      %v7148 = vadd.f32 %v6899, %v7073
      %v7149 = vadd.f32 %v6900, %v7076
      %v7150 = vadd.f32 %v6901, %v7078
      %v7151 = vadd.f32 %v6902, %v7081
      %v7152 = vadd.f32 %v6903, %v7083
      %v7153 = vadd.f32 %v6904, %v7086
      %v7154 = vadd.f32 %v6905, %v7088
      %v7155 = vadd.f32 %v6906, %v7091
      %v7156 = vadd.f32 %v6907, %v7093
      %v7157 = vadd.f32 %v6908, %v7096
      %v7158 = vadd.f32 %v6909, %v7098
      %v7159 = vadd.f32 %v6910, %v7101
      %v7160 = vadd.f32 %v6911, %v7103
      %v7161 = vadd.f32 %v6912, %v7106
      %v7162 = vadd.f32 %v6913, %v7108
      %v7163 = vadd.f32 %v6914, %v7111
      %v7164 = vadd.f32 %v6915, %v7113
      %v7165 = vadd.f32 %v6916, %v7116
      %v7166 = vadd.f32 %v6917, %v7118
      %v7167 = vadd.f32 %v6918, %v7121
      %v7168 = vadd.f32 %v6919, %v7123
      %v7169 = vadd.f32 %v6920, %v7126
      %v7170 = vadd.f32 %v6921, %v7128
      %v7171 = vadd.f32 %v6922, %v7131
      %v7172 = vadd.f32 %v6923, %v7133
      %v7173 = vadd.f32 %v6924, %v7136
      %v7174 = vadd.f32 %v6925, %v7138
      %v7175 = vadd.f32 %v6926, %v7141
      %v7176 = vadd.f32 %v6927, %v7143
      %v7177 = vpack.c.bf16 %v6086, %v6085
      %v7178 = vpack.c.bf16 %v6088, %v6087
      %v7179 = vpack.c.bf16 %v6090, %v6089
      %v7180 = vpack.c.bf16 %v6092, %v6091
      %v7181 = vpack.c.bf16 %v6094, %v6093
      %v7182 = vpack.c.bf16 %v6096, %v6095
      %v7183 = vpack.c.bf16 %v6098, %v6097
      %v7184 = vpack.c.bf16 %v6100, %v6099
      %v7185 = vpack.c.bf16 %v6102, %v6101
      %v7186 = vpack.c.bf16 %v6104, %v6103
      %v7187 = vpack.c.bf16 %v6106, %v6105
      %v7188 = vpack.c.bf16 %v6108, %v6107
      %v7189 = vpack.c.bf16 %v6110, %v6109
      %v7190 = vpack.c.bf16 %v6112, %v6111
      %v7191 = vpack.c.bf16 %v6114, %v6113
      %v7192 = vpack.c.bf16 %v6116, %v6115
      %v7193 = vld [vmem:[%s6 + $0x80] sm:$0xf]
      %v7194 = vld [vmem:[%s6 + $0x84] sm:$0xf]
      %v7195 = vld [vmem:[%s6 + $0x88] sm:$0xf]
      %v7196 = vld [vmem:[%s6 + $0x8c] sm:$0xf]
      %v7197 = vld [vmem:[%s6 + $0x90] sm:$0xf]
      %v7198 = vld [vmem:[%s6 + $0x94] sm:$0xf]
      %v7199 = vld [vmem:[%s6 + $0x98] sm:$0xf]
      %v7200 = vld [vmem:[%s6 + $0x9c] sm:$0xf]
      %v7209 = vunpack.c.l.b16 %v7193
      %v7210 = vunpack.c.l.b16 %v7194
      %v7211 = vunpack.c.l.b16 %v7195
      %v7212 = vunpack.c.l.b16 %v7196
      %v7213 = vunpack.c.l.b16 %v7197
      %v7214 = vunpack.c.l.b16 %v7198
      %v7215 = vunpack.c.l.b16 %v7199
      %v7216 = vunpack.c.l.b16 %v7200
      %v7217 = vpack.c.b16 %v7210, %v7209
      %v7218 = vpack.c.b16 %v7212, %v7211
      %v7219 = vpack.c.b16 %v7214, %v7213
      %v7220 = vpack.c.b16 %v7216, %v7215
      %v7226 = vsel %vm865, %v7177, 0
      %v7229 = vsel %vm865, %v7178, 0
      %v7232 = vsel %vm865, %v7179, 0
      %v7235 = vsel %vm865, %v7180, 0
      %v7238 = vsel %vm865, %v7181, 0
      %v7241 = vsel %vm865, %v7182, 0
      %v7244 = vsel %vm865, %v7183, 0
      %v7247 = vsel %vm865, %v7184, 0
      %v7250 = vsel %vm865, %v7185, 0
      %v7253 = vsel %vm865, %v7186, 0
      %v7256 = vsel %vm865, %v7187, 0
      %v7259 = vsel %vm865, %v7188, 0
      %v7262 = vsel %vm865, %v7189, 0
      %v7265 = vsel %vm865, %v7190, 0
      %v7268 = vsel %vm865, %v7191, 0
      %v7271 = vsel %vm865, %v7192, 0
      %7273 = vmatpush.bf16.msra.mxu0 0
      %7274 = vmatpush.bf16.msra.mxu0 0
      %7275 = vmatpush.bf16.msra.mxu0 0
      %7276 = vmatpush.bf16.msra.mxu0 0
      %7277 = vmatpush.bf16.msra.mxu0 %v7220
      %7278 = vmatpush.bf16.msra.mxu0 %v7219
      %7279 = vmatpush.bf16.msra.mxu0 %v7218
      %7280 = vmatpush.bf16.msra.mxu0 %v7217
      %7281 = vmatmul.bf16.gmra.mxu0 %v7226
      %v7282 = vpop.f32.mrf.mxu0
      %v7283 = vadd.f32 0.0, %v7282
      %v7284 = vpop.f32.mrf.mxu0
      %v7285 = vadd.f32 0.0, %v7284
      %7286 = vmatmul.bf16.gmra.mxu0 %v7229
      %v7287 = vpop.f32.mrf.mxu0
      %v7288 = vadd.f32 0.0, %v7287
      %v7289 = vpop.f32.mrf.mxu0
      %v7290 = vadd.f32 0.0, %v7289
      %7291 = vmatmul.bf16.gmra.mxu0 %v7232
      %v7292 = vpop.f32.mrf.mxu0
      %v7293 = vadd.f32 0.0, %v7292
      %v7294 = vpop.f32.mrf.mxu0
      %v7295 = vadd.f32 0.0, %v7294
      %7296 = vmatmul.bf16.gmra.mxu0 %v7235
      %v7297 = vpop.f32.mrf.mxu0
      %v7298 = vadd.f32 0.0, %v7297
      %v7299 = vpop.f32.mrf.mxu0
      %v7300 = vadd.f32 0.0, %v7299
      %7301 = vmatmul.bf16.gmra.mxu0 %v7238
      %v7302 = vpop.f32.mrf.mxu0
      %v7303 = vadd.f32 0.0, %v7302
      %v7304 = vpop.f32.mrf.mxu0
      %v7305 = vadd.f32 0.0, %v7304
      %7306 = vmatmul.bf16.gmra.mxu0 %v7241
      %v7307 = vpop.f32.mrf.mxu0
      %v7308 = vadd.f32 0.0, %v7307
      %v7309 = vpop.f32.mrf.mxu0
      %v7310 = vadd.f32 0.0, %v7309
      %7311 = vmatmul.bf16.gmra.mxu0 %v7244
      %v7312 = vpop.f32.mrf.mxu0
      %v7313 = vadd.f32 0.0, %v7312
      %v7314 = vpop.f32.mrf.mxu0
      %v7315 = vadd.f32 0.0, %v7314
      %7316 = vmatmul.bf16.gmra.mxu0 %v7247
      %v7317 = vpop.f32.mrf.mxu0
      %v7318 = vadd.f32 0.0, %v7317
      %v7319 = vpop.f32.mrf.mxu0
      %v7320 = vadd.f32 0.0, %v7319
      %7321 = vmatmul.bf16.gmra.mxu0 %v7250
      %v7322 = vpop.f32.mrf.mxu0
      %v7323 = vadd.f32 0.0, %v7322
      %v7324 = vpop.f32.mrf.mxu0
      %v7325 = vadd.f32 0.0, %v7324
      %7326 = vmatmul.bf16.gmra.mxu0 %v7253
      %v7327 = vpop.f32.mrf.mxu0
      %v7328 = vadd.f32 0.0, %v7327
      %v7329 = vpop.f32.mrf.mxu0
      %v7330 = vadd.f32 0.0, %v7329
      %7331 = vmatmul.bf16.gmra.mxu0 %v7256
      %v7332 = vpop.f32.mrf.mxu0
      %v7333 = vadd.f32 0.0, %v7332
      %v7334 = vpop.f32.mrf.mxu0
      %v7335 = vadd.f32 0.0, %v7334
      %7336 = vmatmul.bf16.gmra.mxu0 %v7259
      %v7337 = vpop.f32.mrf.mxu0
      %v7338 = vadd.f32 0.0, %v7337
      %v7339 = vpop.f32.mrf.mxu0
      %v7340 = vadd.f32 0.0, %v7339
      %7341 = vmatmul.bf16.gmra.mxu0 %v7262
      %v7342 = vpop.f32.mrf.mxu0
      %v7343 = vadd.f32 0.0, %v7342
      %v7344 = vpop.f32.mrf.mxu0
      %v7345 = vadd.f32 0.0, %v7344
      %7346 = vmatmul.bf16.gmra.mxu0 %v7265
      %v7347 = vpop.f32.mrf.mxu0
      %v7348 = vadd.f32 0.0, %v7347
      %v7349 = vpop.f32.mrf.mxu0
      %v7350 = vadd.f32 0.0, %v7349
      %7351 = vmatmul.bf16.gmra.mxu0 %v7268
      %v7352 = vpop.f32.mrf.mxu0
      %v7353 = vadd.f32 0.0, %v7352
      %v7354 = vpop.f32.mrf.mxu0
      %v7355 = vadd.f32 0.0, %v7354
      %7356 = vmatmul.bf16.gmra.mxu0 %v7271
      %v7357 = vpop.f32.mrf.mxu0
      %v7358 = vadd.f32 0.0, %v7357
      %v7359 = vpop.f32.mrf.mxu0
      %v7360 = vadd.f32 0.0, %v7359
      %7361 = vdwg.mxu0
      %v7362 = vadd.f32 %v7145, %v7283
      %v7363 = vadd.f32 %v7146, %v7285
      %v7364 = vadd.f32 %v7147, %v7288
      %v7365 = vadd.f32 %v7148, %v7290
      %v7366 = vadd.f32 %v7149, %v7293
      %v7367 = vadd.f32 %v7150, %v7295
      %v7368 = vadd.f32 %v7151, %v7298
      %v7369 = vadd.f32 %v7152, %v7300
      %v7370 = vadd.f32 %v7153, %v7303
      %v7371 = vadd.f32 %v7154, %v7305
      %v7372 = vadd.f32 %v7155, %v7308
      %v7373 = vadd.f32 %v7156, %v7310
      %v7374 = vadd.f32 %v7157, %v7313
      %v7375 = vadd.f32 %v7158, %v7315
      %v7376 = vadd.f32 %v7159, %v7318
      %v7377 = vadd.f32 %v7160, %v7320
      %v7378 = vadd.f32 %v7161, %v7323
      %v7379 = vadd.f32 %v7162, %v7325
      %v7380 = vadd.f32 %v7163, %v7328
      %v7381 = vadd.f32 %v7164, %v7330
      %v7382 = vadd.f32 %v7165, %v7333
      %v7383 = vadd.f32 %v7166, %v7335
      %v7384 = vadd.f32 %v7167, %v7338
      %v7385 = vadd.f32 %v7168, %v7340
      %v7386 = vadd.f32 %v7169, %v7343
      %v7387 = vadd.f32 %v7170, %v7345
      %v7388 = vadd.f32 %v7171, %v7348
      %v7389 = vadd.f32 %v7172, %v7350
      %v7390 = vadd.f32 %v7173, %v7353
      %v7391 = vadd.f32 %v7174, %v7355
      %v7392 = vadd.f32 %v7175, %v7358
      %v7393 = vadd.f32 %v7176, %v7360
      %v7394 = vmul.f32 %v6677, %v2202
      %v7395 = vmul.f32 %v6676, %v2206
      %v7396 = vmul.f32 %v6675, %v2210
      %v7397 = vmul.f32 %v6674, %v2214
      %v7398 = vmul.f32 %v6673, %v2218
      %v7399 = vmul.f32 %v6672, %v2222
      %v7400 = vmul.f32 %v6671, %v2226
      %v7401 = vmul.f32 %v6670, %v2230
      %v7402 = vmul.f32 %v6669, %v2234
      %v7403 = vmul.f32 %v6668, %v2238
      %v7404 = vmul.f32 %v6667, %v2242
      %v7405 = vmul.f32 %v6666, %v2246
      %v7406 = vmul.f32 %v6665, %v2250
      %v7407 = vmul.f32 %v6664, %v2254
      %v7408 = vmul.f32 %v6663, %v2258
      %v7409 = vmul.f32 %v6662, %v2262
      %v7410 = vmul.f32 %v6661, %v2266
      %v7411 = vmul.f32 %v6660, %v2270
      %v7412 = vmul.f32 %v6659, %v2274
      %v7413 = vmul.f32 %v6658, %v2278
      %v7414 = vmul.f32 %v6657, %v2282
      %v7415 = vmul.f32 %v6656, %v2286
      %v7416 = vmul.f32 %v6655, %v2290
      %v7417 = vmul.f32 %v6654, %v2294
      %v7418 = vmul.f32 %v6653, %v2298
      %v7419 = vmul.f32 %v6652, %v2302
      %v7420 = vmul.f32 %v6651, %v2306
      %v7421 = vmul.f32 %v6650, %v2310
      %v7422 = vmul.f32 %v6649, %v2314
      %v7423 = vmul.f32 %v6648, %v2318
      %v7424 = vmul.f32 %v6647, %v2322
      %v7425 = vmul.f32 %v6678, %v2326
      %v7426 = vpack.c.bf16 %v7395, %v7394
      %v7427 = vpack.c.bf16 %v7397, %v7396
      %v7428 = vpack.c.bf16 %v7399, %v7398
      %v7429 = vpack.c.bf16 %v7401, %v7400
      %v7430 = vpack.c.bf16 %v7403, %v7402
      %v7431 = vpack.c.bf16 %v7405, %v7404
      %v7432 = vpack.c.bf16 %v7407, %v7406
      %v7433 = vpack.c.bf16 %v7409, %v7408
      %v7434 = vpack.c.bf16 %v7411, %v7410
      %v7435 = vpack.c.bf16 %v7413, %v7412
      %v7436 = vpack.c.bf16 %v7415, %v7414
      %v7437 = vpack.c.bf16 %v7417, %v7416
      %v7438 = vpack.c.bf16 %v7419, %v7418
      %v7439 = vpack.c.bf16 %v7421, %v7420
      %v7440 = vpack.c.bf16 %v7423, %v7422
      %v7441 = vpack.c.bf16 %v7425, %v7424
      %v7442 = vld [vmem:[%s6 + $0xa0] sm:$0xf]
      %v7443 = vld [vmem:[%s6 + $0xa4] sm:$0xf]
      %v7444 = vld [vmem:[%s6 + $0xa8] sm:$0xf]
      %v7445 = vld [vmem:[%s6 + $0xac] sm:$0xf]
      %v7446 = vld [vmem:[%s6 + $0xb0] sm:$0xf]
      %v7447 = vld [vmem:[%s6 + $0xb4] sm:$0xf]
      %v7448 = vld [vmem:[%s6 + $0xb8] sm:$0xf]
      %v7449 = vld [vmem:[%s6 + $0xbc] sm:$0xf]
      %v7458 = vunpack.c.l.b16 %v7442
      %v7459 = vunpack.c.l.b16 %v7443
      %v7460 = vunpack.c.l.b16 %v7444
      %v7461 = vunpack.c.l.b16 %v7445
      %v7462 = vunpack.c.l.b16 %v7446
      %v7463 = vunpack.c.l.b16 %v7447
      %v7464 = vunpack.c.l.b16 %v7448
      %v7465 = vunpack.c.l.b16 %v7449
      %v7466 = vpack.c.b16 %v7459, %v7458
      %v7467 = vpack.c.b16 %v7461, %v7460
      %v7468 = vpack.c.b16 %v7463, %v7462
      %v7469 = vpack.c.b16 %v7465, %v7464
      %v7475 = vsel %vm865, %v7426, 0
      %v7478 = vsel %vm865, %v7427, 0
      %v7481 = vsel %vm865, %v7428, 0
      %v7484 = vsel %vm865, %v7429, 0
      %v7487 = vsel %vm865, %v7430, 0
      %v7490 = vsel %vm865, %v7431, 0
      %v7493 = vsel %vm865, %v7432, 0
      %v7496 = vsel %vm865, %v7433, 0
      %v7499 = vsel %vm865, %v7434, 0
      %v7502 = vsel %vm865, %v7435, 0
      %v7505 = vsel %vm865, %v7436, 0
      %v7508 = vsel %vm865, %v7437, 0
      %v7511 = vsel %vm865, %v7438, 0
      %v7514 = vsel %vm865, %v7439, 0
      %v7517 = vsel %vm865, %v7440, 0
      %v7520 = vsel %vm865, %v7441, 0
      %7522 = vmatpush.bf16.msra.mxu0 0
      %7523 = vmatpush.bf16.msra.mxu0 0
      %7524 = vmatpush.bf16.msra.mxu0 0
      %7525 = vmatpush.bf16.msra.mxu0 0
      %7526 = vmatpush.bf16.msra.mxu0 %v7469
      %7527 = vmatpush.bf16.msra.mxu0 %v7468
      %7528 = vmatpush.bf16.msra.mxu0 %v7467
      %7529 = vmatpush.bf16.msra.mxu0 %v7466
      %7530 = vmatmul.bf16.gmra.mxu0 %v7475
      %v7531 = vpop.f32.mrf.mxu0
      %v7532 = vadd.f32 0.0, %v7531
      %v7533 = vpop.f32.mrf.mxu0
      %v7534 = vadd.f32 0.0, %v7533
      %7535 = vmatmul.bf16.gmra.mxu0 %v7478
      %v7536 = vpop.f32.mrf.mxu0
      %v7537 = vadd.f32 0.0, %v7536
      %v7538 = vpop.f32.mrf.mxu0
      %v7539 = vadd.f32 0.0, %v7538
      %7540 = vmatmul.bf16.gmra.mxu0 %v7481
      %v7541 = vpop.f32.mrf.mxu0
      %v7542 = vadd.f32 0.0, %v7541
      %v7543 = vpop.f32.mrf.mxu0
      %v7544 = vadd.f32 0.0, %v7543
      %7545 = vmatmul.bf16.gmra.mxu0 %v7484
      %v7546 = vpop.f32.mrf.mxu0
      %v7547 = vadd.f32 0.0, %v7546
      %v7548 = vpop.f32.mrf.mxu0
      %v7549 = vadd.f32 0.0, %v7548
      %7550 = vmatmul.bf16.gmra.mxu0 %v7487
      %v7551 = vpop.f32.mrf.mxu0
      %v7552 = vadd.f32 0.0, %v7551
      %v7553 = vpop.f32.mrf.mxu0
      %v7554 = vadd.f32 0.0, %v7553
      %7555 = vmatmul.bf16.gmra.mxu0 %v7490
      %v7556 = vpop.f32.mrf.mxu0
      %v7557 = vadd.f32 0.0, %v7556
      %v7558 = vpop.f32.mrf.mxu0
      %v7559 = vadd.f32 0.0, %v7558
      %7560 = vmatmul.bf16.gmra.mxu0 %v7493
      %v7561 = vpop.f32.mrf.mxu0
      %v7562 = vadd.f32 0.0, %v7561
      %v7563 = vpop.f32.mrf.mxu0
      %v7564 = vadd.f32 0.0, %v7563
      %7565 = vmatmul.bf16.gmra.mxu0 %v7496
      %v7566 = vpop.f32.mrf.mxu0
      %v7567 = vadd.f32 0.0, %v7566
      %v7568 = vpop.f32.mrf.mxu0
      %v7569 = vadd.f32 0.0, %v7568
      %7570 = vmatmul.bf16.gmra.mxu0 %v7499
      %v7571 = vpop.f32.mrf.mxu0
      %v7572 = vadd.f32 0.0, %v7571
      %v7573 = vpop.f32.mrf.mxu0
      %v7574 = vadd.f32 0.0, %v7573
      %7575 = vmatmul.bf16.gmra.mxu0 %v7502
      %v7576 = vpop.f32.mrf.mxu0
      %v7577 = vadd.f32 0.0, %v7576
      %v7578 = vpop.f32.mrf.mxu0
      %v7579 = vadd.f32 0.0, %v7578
      %7580 = vmatmul.bf16.gmra.mxu0 %v7505
      %v7581 = vpop.f32.mrf.mxu0
      %v7582 = vadd.f32 0.0, %v7581
      %v7583 = vpop.f32.mrf.mxu0
      %v7584 = vadd.f32 0.0, %v7583
      %7585 = vmatmul.bf16.gmra.mxu0 %v7508
      %v7586 = vpop.f32.mrf.mxu0
      %v7587 = vadd.f32 0.0, %v7586
      %v7588 = vpop.f32.mrf.mxu0
      %v7589 = vadd.f32 0.0, %v7588
      %7590 = vmatmul.bf16.gmra.mxu0 %v7511
      %v7591 = vpop.f32.mrf.mxu0
      %v7592 = vadd.f32 0.0, %v7591
      %v7593 = vpop.f32.mrf.mxu0
      %v7594 = vadd.f32 0.0, %v7593
      %7595 = vmatmul.bf16.gmra.mxu0 %v7514
      %v7596 = vpop.f32.mrf.mxu0
      %v7597 = vadd.f32 0.0, %v7596
      %v7598 = vpop.f32.mrf.mxu0
      %v7599 = vadd.f32 0.0, %v7598
      %7600 = vmatmul.bf16.gmra.mxu0 %v7517
      %v7601 = vpop.f32.mrf.mxu0
      %v7602 = vadd.f32 0.0, %v7601
      %v7603 = vpop.f32.mrf.mxu0
      %v7604 = vadd.f32 0.0, %v7603
      %7605 = vmatmul.bf16.gmra.mxu0 %v7520
      %v7606 = vpop.f32.mrf.mxu0
      %v7607 = vadd.f32 0.0, %v7606
      %v7608 = vpop.f32.mrf.mxu0
      %v7609 = vadd.f32 0.0, %v7608
      %7610 = vdwg.mxu0
      %v7611 = vadd.f32 %v7362, %v7532
      %v7612 = vadd.f32 %v7363, %v7534
      %v7613 = vadd.f32 %v7364, %v7537
      %v7614 = vadd.f32 %v7365, %v7539
      %v7615 = vadd.f32 %v7366, %v7542
      %v7616 = vadd.f32 %v7367, %v7544
      %v7617 = vadd.f32 %v7368, %v7547
      %v7618 = vadd.f32 %v7369, %v7549
      %v7619 = vadd.f32 %v7370, %v7552
      %v7620 = vadd.f32 %v7371, %v7554
      %v7621 = vadd.f32 %v7372, %v7557
      %v7622 = vadd.f32 %v7373, %v7559
      %v7623 = vadd.f32 %v7374, %v7562
      %v7624 = vadd.f32 %v7375, %v7564
      %v7625 = vadd.f32 %v7376, %v7567
      %v7626 = vadd.f32 %v7377, %v7569
      %v7627 = vadd.f32 %v7378, %v7572
      %v7628 = vadd.f32 %v7379, %v7574
      %v7629 = vadd.f32 %v7380, %v7577
      %v7630 = vadd.f32 %v7381, %v7579
      %v7631 = vadd.f32 %v7382, %v7582
      %v7632 = vadd.f32 %v7383, %v7584
      %v7633 = vadd.f32 %v7384, %v7587
      %v7634 = vadd.f32 %v7385, %v7589
      %v7635 = vadd.f32 %v7386, %v7592
      %v7636 = vadd.f32 %v7387, %v7594
      %v7637 = vadd.f32 %v7388, %v7597
      %v7638 = vadd.f32 %v7389, %v7599
      %v7639 = vadd.f32 %v7390, %v7602
      %v7640 = vadd.f32 %v7391, %v7604
      %v7641 = vadd.f32 %v7392, %v7607
      %v7642 = vadd.f32 %v7393, %v7609
      %v7643 = vmul.f32 %v6178, %v2579
      %v7644 = vmul.f32 %v6177, %v2583
      %v7645 = vmul.f32 %v6176, %v2587
      %v7646 = vmul.f32 %v6175, %v2591
      %v7647 = vmul.f32 %v6174, %v2595
      %v7648 = vmul.f32 %v6173, %v2599
      %v7649 = vmul.f32 %v6172, %v2603
      %v7650 = vmul.f32 %v6171, %v2607
      %v7651 = vmul.f32 %v6170, %v2611
      %v7652 = vmul.f32 %v6169, %v2615
      %v7653 = vmul.f32 %v6168, %v2619
      %v7654 = vmul.f32 %v6167, %v2623
      %v7655 = vmul.f32 %v6166, %v2627
      %v7656 = vmul.f32 %v6165, %v2631
      %v7657 = vmul.f32 %v6164, %v2635
      %v7658 = vmul.f32 %v6163, %v2639
      %v7659 = vmul.f32 %v6162, %v2643
      %v7660 = vmul.f32 %v6161, %v2647
      %v7661 = vmul.f32 %v6160, %v2651
      %v7662 = vmul.f32 %v6159, %v2655
      %v7663 = vmul.f32 %v6158, %v2659
      %v7664 = vmul.f32 %v6157, %v2663
      %v7665 = vmul.f32 %v6156, %v2667
      %v7666 = vmul.f32 %v6155, %v2671
      %v7667 = vmul.f32 %v6154, %v2675
      %v7668 = vmul.f32 %v6153, %v2679
      %v7669 = vmul.f32 %v6152, %v2683
      %v7670 = vmul.f32 %v6151, %v2687
      %v7671 = vmul.f32 %v6150, %v2691
      %v7672 = vmul.f32 %v6149, %v2695
      %v7673 = vmul.f32 %v6180, %v2699
      %v7674 = vmul.f32 %v6179, %v2703
      %v7675 = vpack.c.bf16 %v7644, %v7643
      %v7676 = vpack.c.bf16 %v7646, %v7645
      %v7677 = vpack.c.bf16 %v7648, %v7647
      %v7678 = vpack.c.bf16 %v7650, %v7649
      %v7679 = vpack.c.bf16 %v7652, %v7651
      %v7680 = vpack.c.bf16 %v7654, %v7653
      %v7681 = vpack.c.bf16 %v7656, %v7655
      %v7682 = vpack.c.bf16 %v7658, %v7657
      %v7683 = vpack.c.bf16 %v7660, %v7659
      %v7684 = vpack.c.bf16 %v7662, %v7661
      %v7685 = vpack.c.bf16 %v7664, %v7663
      %v7686 = vpack.c.bf16 %v7666, %v7665
      %v7687 = vpack.c.bf16 %v7668, %v7667
      %v7688 = vpack.c.bf16 %v7670, %v7669
      %v7689 = vpack.c.bf16 %v7672, %v7671
      %v7690 = vpack.c.bf16 %v7674, %v7673
      %v7691 = vld [vmem:[%s6 + $0xc0] sm:$0xf]
      %v7692 = vld [vmem:[%s6 + $0xc4] sm:$0xf]
      %v7693 = vld [vmem:[%s6 + $0xc8] sm:$0xf]
      %v7694 = vld [vmem:[%s6 + $0xcc] sm:$0xf]
      %v7695 = vld [vmem:[%s6 + $0xd0] sm:$0xf]
      %v7696 = vld [vmem:[%s6 + $0xd4] sm:$0xf]
      %v7697 = vld [vmem:[%s6 + $0xd8] sm:$0xf]
      %v7698 = vld [vmem:[%s6 + $0xdc] sm:$0xf]
      %v7707 = vunpack.c.l.b16 %v7691
      %v7708 = vunpack.c.l.b16 %v7692
      %v7709 = vunpack.c.l.b16 %v7693
      %v7710 = vunpack.c.l.b16 %v7694
      %v7711 = vunpack.c.l.b16 %v7695
      %v7712 = vunpack.c.l.b16 %v7696
      %v7713 = vunpack.c.l.b16 %v7697
      %v7714 = vunpack.c.l.b16 %v7698
      %v7715 = vpack.c.b16 %v7708, %v7707
      %v7716 = vpack.c.b16 %v7710, %v7709
      %v7717 = vpack.c.b16 %v7712, %v7711
      %v7718 = vpack.c.b16 %v7714, %v7713
      %v7724 = vsel %vm865, %v7675, 0
      %v7727 = vsel %vm865, %v7676, 0
      %v7730 = vsel %vm865, %v7677, 0
      %v7733 = vsel %vm865, %v7678, 0
      %v7736 = vsel %vm865, %v7679, 0
      %v7739 = vsel %vm865, %v7680, 0
      %v7742 = vsel %vm865, %v7681, 0
      %v7745 = vsel %vm865, %v7682, 0
      %v7748 = vsel %vm865, %v7683, 0
      %v7751 = vsel %vm865, %v7684, 0
      %v7754 = vsel %vm865, %v7685, 0
      %v7757 = vsel %vm865, %v7686, 0
      %v7760 = vsel %vm865, %v7687, 0
      %v7763 = vsel %vm865, %v7688, 0
      %v7766 = vsel %vm865, %v7689, 0
      %v7769 = vsel %vm865, %v7690, 0
      %7771 = vmatpush.bf16.msra.mxu0 0
      %7772 = vmatpush.bf16.msra.mxu0 0
      %7773 = vmatpush.bf16.msra.mxu0 0
      %7774 = vmatpush.bf16.msra.mxu0 0
      %7775 = vmatpush.bf16.msra.mxu0 %v7718
      %7776 = vmatpush.bf16.msra.mxu0 %v7717
      %7777 = vmatpush.bf16.msra.mxu0 %v7716
      %7778 = vmatpush.bf16.msra.mxu0 %v7715
      %7779 = vmatmul.bf16.gmra.mxu0 %v7724
      %v7780 = vpop.f32.mrf.mxu0
      %v7781 = vadd.f32 0.0, %v7780
      %v7782 = vpop.f32.mrf.mxu0
      %v7783 = vadd.f32 0.0, %v7782
      %7784 = vmatmul.bf16.gmra.mxu0 %v7727
      %v7785 = vpop.f32.mrf.mxu0
      %v7786 = vadd.f32 0.0, %v7785
      %v7787 = vpop.f32.mrf.mxu0
      %v7788 = vadd.f32 0.0, %v7787
      %7789 = vmatmul.bf16.gmra.mxu0 %v7730
      %v7790 = vpop.f32.mrf.mxu0
      %v7791 = vadd.f32 0.0, %v7790
      %v7792 = vpop.f32.mrf.mxu0
      %v7793 = vadd.f32 0.0, %v7792
      %7794 = vmatmul.bf16.gmra.mxu0 %v7733
      %v7795 = vpop.f32.mrf.mxu0
      %v7796 = vadd.f32 0.0, %v7795
      %v7797 = vpop.f32.mrf.mxu0
      %v7798 = vadd.f32 0.0, %v7797
      %7799 = vmatmul.bf16.gmra.mxu0 %v7736
      %v7800 = vpop.f32.mrf.mxu0
      %v7801 = vadd.f32 0.0, %v7800
      %v7802 = vpop.f32.mrf.mxu0
      %v7803 = vadd.f32 0.0, %v7802
      %7804 = vmatmul.bf16.gmra.mxu0 %v7739
      %v7805 = vpop.f32.mrf.mxu0
      %v7806 = vadd.f32 0.0, %v7805
      %v7807 = vpop.f32.mrf.mxu0
      %v7808 = vadd.f32 0.0, %v7807
      %7809 = vmatmul.bf16.gmra.mxu0 %v7742
      %v7810 = vpop.f32.mrf.mxu0
      %v7811 = vadd.f32 0.0, %v7810
      %v7812 = vpop.f32.mrf.mxu0
      %v7813 = vadd.f32 0.0, %v7812
      %7814 = vmatmul.bf16.gmra.mxu0 %v7745
      %v7815 = vpop.f32.mrf.mxu0
      %v7816 = vadd.f32 0.0, %v7815
      %v7817 = vpop.f32.mrf.mxu0
      %v7818 = vadd.f32 0.0, %v7817
      %7819 = vmatmul.bf16.gmra.mxu0 %v7748
      %v7820 = vpop.f32.mrf.mxu0
      %v7821 = vadd.f32 0.0, %v7820
      %v7822 = vpop.f32.mrf.mxu0
      %v7823 = vadd.f32 0.0, %v7822
      %7824 = vmatmul.bf16.gmra.mxu0 %v7751
      %v7825 = vpop.f32.mrf.mxu0
      %v7826 = vadd.f32 0.0, %v7825
      %v7827 = vpop.f32.mrf.mxu0
      %v7828 = vadd.f32 0.0, %v7827
      %7829 = vmatmul.bf16.gmra.mxu0 %v7754
      %v7830 = vpop.f32.mrf.mxu0
      %v7831 = vadd.f32 0.0, %v7830
      %v7832 = vpop.f32.mrf.mxu0
      %v7833 = vadd.f32 0.0, %v7832
      %7834 = vmatmul.bf16.gmra.mxu0 %v7757
      %v7835 = vpop.f32.mrf.mxu0
      %v7836 = vadd.f32 0.0, %v7835
      %v7837 = vpop.f32.mrf.mxu0
      %v7838 = vadd.f32 0.0, %v7837
      %7839 = vmatmul.bf16.gmra.mxu0 %v7760
      %v7840 = vpop.f32.mrf.mxu0
      %v7841 = vadd.f32 0.0, %v7840
      %v7842 = vpop.f32.mrf.mxu0
      %v7843 = vadd.f32 0.0, %v7842
      %7844 = vmatmul.bf16.gmra.mxu0 %v7763
      %v7845 = vpop.f32.mrf.mxu0
      %v7846 = vadd.f32 0.0, %v7845
      %v7847 = vpop.f32.mrf.mxu0
      %v7848 = vadd.f32 0.0, %v7847
      %7849 = vmatmul.bf16.gmra.mxu0 %v7766
      %v7850 = vpop.f32.mrf.mxu0
      %v7851 = vadd.f32 0.0, %v7850
      %v7852 = vpop.f32.mrf.mxu0
      %v7853 = vadd.f32 0.0, %v7852
      %7854 = vmatmul.bf16.gmra.mxu0 %v7769
      %v7855 = vpop.f32.mrf.mxu0
      %v7856 = vadd.f32 0.0, %v7855
      %v7857 = vpop.f32.mrf.mxu0
      %v7858 = vadd.f32 0.0, %v7857
      %7859 = vdwg.mxu0
      %v7860 = vadd.f32 %v7611, %v7781
      %v7861 = vadd.f32 %v7612, %v7783
      %v7862 = vadd.f32 %v7613, %v7786
      %v7863 = vadd.f32 %v7614, %v7788
      %v7864 = vadd.f32 %v7615, %v7791
      %v7865 = vadd.f32 %v7616, %v7793
      %v7866 = vadd.f32 %v7617, %v7796
      %v7867 = vadd.f32 %v7618, %v7798
      %v7868 = vadd.f32 %v7619, %v7801
      %v7869 = vadd.f32 %v7620, %v7803
      %v7870 = vadd.f32 %v7621, %v7806
      %v7871 = vadd.f32 %v7622, %v7808
      %v7872 = vadd.f32 %v7623, %v7811
      %v7873 = vadd.f32 %v7624, %v7813
      %v7874 = vadd.f32 %v7625, %v7816
      %v7875 = vadd.f32 %v7626, %v7818
      %v7876 = vadd.f32 %v7627, %v7821
      %v7877 = vadd.f32 %v7628, %v7823
      %v7878 = vadd.f32 %v7629, %v7826
      %v7879 = vadd.f32 %v7630, %v7828
      %v7880 = vadd.f32 %v7631, %v7831
      %v7881 = vadd.f32 %v7632, %v7833
      %v7882 = vadd.f32 %v7633, %v7836
      %v7883 = vadd.f32 %v7634, %v7838
      %v7884 = vadd.f32 %v7635, %v7841
      %v7885 = vadd.f32 %v7636, %v7843
      %v7886 = vadd.f32 %v7637, %v7846
      %v7887 = vadd.f32 %v7638, %v7848
      %v7888 = vadd.f32 %v7639, %v7851
      %v7889 = vadd.f32 %v7640, %v7853
      %v7890 = vadd.f32 %v7641, %v7856
      %v7891 = vadd.f32 %v7642, %v7858
      %v7892 = vmul.f32 %v6087, %v2956
      %v7893 = vmul.f32 %v6088, %v2960
      %v7894 = vmul.f32 %v6089, %v2964
      %v7895 = vmul.f32 %v6090, %v2968
      %v7896 = vmul.f32 %v6091, %v2972
      %v7897 = vmul.f32 %v6092, %v2976
      %v7898 = vmul.f32 %v6093, %v2980
      %v7899 = vmul.f32 %v6094, %v2984
      %v7900 = vmul.f32 %v6095, %v2988
      %v7901 = vmul.f32 %v6096, %v2992
      %v7902 = vmul.f32 %v6097, %v2996
      %v7903 = vmul.f32 %v6098, %v3000
      %v7904 = vmul.f32 %v6099, %v3004
      %v7905 = vmul.f32 %v6100, %v3008
      %v7906 = vmul.f32 %v6101, %v3012
      %v7907 = vmul.f32 %v6102, %v3016
      %v7908 = vmul.f32 %v6103, %v3020
      %v7909 = vmul.f32 %v6104, %v3024
      %v7910 = vmul.f32 %v6105, %v3028
      %v7911 = vmul.f32 %v6106, %v3032
      %v7912 = vmul.f32 %v6107, %v3036
      %v7913 = vmul.f32 %v6108, %v3040
      %v7914 = vmul.f32 %v6109, %v3044
      %v7915 = vmul.f32 %v6110, %v3048
      %v7916 = vmul.f32 %v6111, %v3052
      %v7917 = vmul.f32 %v6112, %v3056
      %v7918 = vmul.f32 %v6113, %v3060
      %v7919 = vmul.f32 %v6114, %v3064
      %v7920 = vmul.f32 %v6115, %v3068
      %v7921 = vmul.f32 %v6116, %v3072
      %v7922 = vmul.f32 %v6085, %v3076
      %v7923 = vmul.f32 %v6086, %v3080
      %v7924 = vpack.c.bf16 %v7893, %v7892
      %v7925 = vpack.c.bf16 %v7895, %v7894
      %v7926 = vpack.c.bf16 %v7897, %v7896
      %v7927 = vpack.c.bf16 %v7899, %v7898
      %v7928 = vpack.c.bf16 %v7901, %v7900
      %v7929 = vpack.c.bf16 %v7903, %v7902
      %v7930 = vpack.c.bf16 %v7905, %v7904
      %v7931 = vpack.c.bf16 %v7907, %v7906
      %v7932 = vpack.c.bf16 %v7909, %v7908
      %v7933 = vpack.c.bf16 %v7911, %v7910
      %v7934 = vpack.c.bf16 %v7913, %v7912
      %v7935 = vpack.c.bf16 %v7915, %v7914
      %v7936 = vpack.c.bf16 %v7917, %v7916
      %v7937 = vpack.c.bf16 %v7919, %v7918
      %v7938 = vpack.c.bf16 %v7921, %v7920
      %v7939 = vpack.c.bf16 %v7923, %v7922
      %v7940 = vld [vmem:[%s6 + $0xe0] sm:$0xf]
      %v7941 = vld [vmem:[%s6 + $0xe4] sm:$0xf]
      %v7942 = vld [vmem:[%s6 + $0xe8] sm:$0xf]
      %v7943 = vld [vmem:[%s6 + $0xec] sm:$0xf]
      %v7944 = vld [vmem:[%s6 + $0xf0] sm:$0xf]
      %v7945 = vld [vmem:[%s6 + $0xf4] sm:$0xf]
      %v7946 = vld [vmem:[%s6 + $0xf8] sm:$0xf]
      %v7947 = vld [vmem:[%s6 + $0xfc] sm:$0xf]
      %v7956 = vunpack.c.l.b16 %v7940
      %v7957 = vunpack.c.l.b16 %v7941
      %v7958 = vunpack.c.l.b16 %v7942
      %v7959 = vunpack.c.l.b16 %v7943
      %v7960 = vunpack.c.l.b16 %v7944
      %v7961 = vunpack.c.l.b16 %v7945
      %v7962 = vunpack.c.l.b16 %v7946
      %v7963 = vunpack.c.l.b16 %v7947
      %v7964 = vpack.c.b16 %v7957, %v7956
      %v7965 = vpack.c.b16 %v7959, %v7958
      %v7966 = vpack.c.b16 %v7961, %v7960
      %v7967 = vpack.c.b16 %v7963, %v7962
      %v7973 = vsel %vm865, %v7924, 0
      %v7976 = vsel %vm865, %v7925, 0
      %v7979 = vsel %vm865, %v7926, 0
      %v7982 = vsel %vm865, %v7927, 0
      %v7985 = vsel %vm865, %v7928, 0
      %v7988 = vsel %vm865, %v7929, 0
      %v7991 = vsel %vm865, %v7930, 0
      %v7994 = vsel %vm865, %v7931, 0
      %v7997 = vsel %vm865, %v7932, 0
      %v8000 = vsel %vm865, %v7933, 0
      %v8003 = vsel %vm865, %v7934, 0
      %v8006 = vsel %vm865, %v7935, 0
      %v8009 = vsel %vm865, %v7936, 0
      %v8012 = vsel %vm865, %v7937, 0
      %v8015 = vsel %vm865, %v7938, 0
      %v8018 = vsel %vm865, %v7939, 0
      %8020 = vmatpush.bf16.msra.mxu0 0
      %8021 = vmatpush.bf16.msra.mxu0 0
      %8022 = vmatpush.bf16.msra.mxu0 0
      %8023 = vmatpush.bf16.msra.mxu0 0
      %8024 = vmatpush.bf16.msra.mxu0 %v7967
      %8025 = vmatpush.bf16.msra.mxu0 %v7966
      %8026 = vmatpush.bf16.msra.mxu0 %v7965
      %8027 = vmatpush.bf16.msra.mxu0 %v7964
      %8028 = vmatmul.bf16.gmra.mxu0 %v7973
      %v8029 = vpop.f32.mrf.mxu0
      %v8030 = vadd.f32 0.0, %v8029
      %v8031 = vpop.f32.mrf.mxu0
      %v8032 = vadd.f32 0.0, %v8031
      %8033 = vmatmul.bf16.gmra.mxu0 %v7976
      %v8034 = vpop.f32.mrf.mxu0
      %v8035 = vadd.f32 0.0, %v8034
      %v8036 = vpop.f32.mrf.mxu0
      %v8037 = vadd.f32 0.0, %v8036
      %8038 = vmatmul.bf16.gmra.mxu0 %v7979
      %v8039 = vpop.f32.mrf.mxu0
      %v8040 = vadd.f32 0.0, %v8039
      %v8041 = vpop.f32.mrf.mxu0
      %v8042 = vadd.f32 0.0, %v8041
      %8043 = vmatmul.bf16.gmra.mxu0 %v7982
      %v8044 = vpop.f32.mrf.mxu0
      %v8045 = vadd.f32 0.0, %v8044
      %v8046 = vpop.f32.mrf.mxu0
      %v8047 = vadd.f32 0.0, %v8046
      %8048 = vmatmul.bf16.gmra.mxu0 %v7985
      %v8049 = vpop.f32.mrf.mxu0
      %v8050 = vadd.f32 0.0, %v8049
      %v8051 = vpop.f32.mrf.mxu0
      %v8052 = vadd.f32 0.0, %v8051
      %8053 = vmatmul.bf16.gmra.mxu0 %v7988
      %v8054 = vpop.f32.mrf.mxu0
      %v8055 = vadd.f32 0.0, %v8054
      %v8056 = vpop.f32.mrf.mxu0
      %v8057 = vadd.f32 0.0, %v8056
      %8058 = vmatmul.bf16.gmra.mxu0 %v7991
      %v8059 = vpop.f32.mrf.mxu0
      %v8060 = vadd.f32 0.0, %v8059
      %v8061 = vpop.f32.mrf.mxu0
      %v8062 = vadd.f32 0.0, %v8061
      %8063 = vmatmul.bf16.gmra.mxu0 %v7994
      %v8064 = vpop.f32.mrf.mxu0
      %v8065 = vadd.f32 0.0, %v8064
      %v8066 = vpop.f32.mrf.mxu0
      %v8067 = vadd.f32 0.0, %v8066
      %8068 = vmatmul.bf16.gmra.mxu0 %v7997
      %v8069 = vpop.f32.mrf.mxu0
      %v8070 = vadd.f32 0.0, %v8069
      %v8071 = vpop.f32.mrf.mxu0
      %v8072 = vadd.f32 0.0, %v8071
      %8073 = vmatmul.bf16.gmra.mxu0 %v8000
      %v8074 = vpop.f32.mrf.mxu0
      %v8075 = vadd.f32 0.0, %v8074
      %v8076 = vpop.f32.mrf.mxu0
      %v8077 = vadd.f32 0.0, %v8076
      %8078 = vmatmul.bf16.gmra.mxu0 %v8003
      %v8079 = vpop.f32.mrf.mxu0
      %v8080 = vadd.f32 0.0, %v8079
      %v8081 = vpop.f32.mrf.mxu0
      %v8082 = vadd.f32 0.0, %v8081
      %8083 = vmatmul.bf16.gmra.mxu0 %v8006
      %v8084 = vpop.f32.mrf.mxu0
      %v8085 = vadd.f32 0.0, %v8084
      %v8086 = vpop.f32.mrf.mxu0
      %v8087 = vadd.f32 0.0, %v8086
      %8088 = vmatmul.bf16.gmra.mxu0 %v8009
      %v8089 = vpop.f32.mrf.mxu0
      %v8090 = vadd.f32 0.0, %v8089
      %v8091 = vpop.f32.mrf.mxu0
      %v8092 = vadd.f32 0.0, %v8091
      %8093 = vmatmul.bf16.gmra.mxu0 %v8012
      %v8094 = vpop.f32.mrf.mxu0
      %v8095 = vadd.f32 0.0, %v8094
      %v8096 = vpop.f32.mrf.mxu0
      %v8097 = vadd.f32 0.0, %v8096
      %8098 = vmatmul.bf16.gmra.mxu0 %v8015
      %v8099 = vpop.f32.mrf.mxu0
      %v8100 = vadd.f32 0.0, %v8099
      %v8101 = vpop.f32.mrf.mxu0
      %v8102 = vadd.f32 0.0, %v8101
      %8103 = vmatmul.bf16.gmra.mxu0 %v8018
      %v8104 = vpop.f32.mrf.mxu0
      %v8105 = vadd.f32 0.0, %v8104
      %v8106 = vpop.f32.mrf.mxu0
      %v8107 = vadd.f32 0.0, %v8106
      %8108 = vdwg.mxu0
      %v8109 = vadd.f32 %v7860, %v8030
      %v8110 = vadd.f32 %v7861, %v8032
      %v8111 = vadd.f32 %v7862, %v8035
      %v8112 = vadd.f32 %v7863, %v8037
      %v8113 = vadd.f32 %v7864, %v8040
      %v8114 = vadd.f32 %v7865, %v8042
      %v8115 = vadd.f32 %v7866, %v8045
      %v8116 = vadd.f32 %v7867, %v8047
      %v8117 = vadd.f32 %v7868, %v8050
      %v8118 = vadd.f32 %v7869, %v8052
      %v8119 = vadd.f32 %v7870, %v8055
      %v8120 = vadd.f32 %v7871, %v8057
      %v8121 = vadd.f32 %v7872, %v8060
      %v8122 = vadd.f32 %v7873, %v8062
      %v8123 = vadd.f32 %v7874, %v8065
      %v8124 = vadd.f32 %v7875, %v8067
      %v8125 = vadd.f32 %v7876, %v8070
      %v8126 = vadd.f32 %v7877, %v8072
      %v8127 = vadd.f32 %v7878, %v8075
      %v8128 = vadd.f32 %v7879, %v8077
      %v8129 = vadd.f32 %v7880, %v8080
      %v8130 = vadd.f32 %v7881, %v8082
      %v8131 = vadd.f32 %v7882, %v8085
      %v8132 = vadd.f32 %v7883, %v8087
      %v8133 = vadd.f32 %v7884, %v8090
      %v8134 = vadd.f32 %v7885, %v8092
      %v8135 = vadd.f32 %v7886, %v8095
      %v8136 = vadd.f32 %v7887, %v8097
      %v8137 = vadd.f32 %v7888, %v8100
      %v8138 = vadd.f32 %v7889, %v8102
      %v8139 = vadd.f32 %v7890, %v8105
      %v8140 = vadd.f32 %v7891, %v8107
      %v8141 = vmul.f32 %v6675, %v3333
      %v8142 = vmul.f32 %v6674, %v3337
      %v8143 = vmul.f32 %v6673, %v3341
      %v8144 = vmul.f32 %v6672, %v3345
      %v8145 = vmul.f32 %v6671, %v3349
      %v8146 = vmul.f32 %v6670, %v3353
      %v8147 = vmul.f32 %v6669, %v3357
      %v8148 = vmul.f32 %v6668, %v3361
      %v8149 = vmul.f32 %v6667, %v3365
      %v8150 = vmul.f32 %v6666, %v3369
      %v8151 = vmul.f32 %v6665, %v3373
      %v8152 = vmul.f32 %v6664, %v3377
      %v8153 = vmul.f32 %v6663, %v3381
      %v8154 = vmul.f32 %v6662, %v3385
      %v8155 = vmul.f32 %v6661, %v3389
      %v8156 = vmul.f32 %v6660, %v3393
      %v8157 = vmul.f32 %v6659, %v3397
      %v8158 = vmul.f32 %v6658, %v3401
      %v8159 = vmul.f32 %v6657, %v3405
      %v8160 = vmul.f32 %v6656, %v3409
      %v8161 = vmul.f32 %v6655, %v3413
      %v8162 = vmul.f32 %v6654, %v3417
      %v8163 = vmul.f32 %v6653, %v3421
      %v8164 = vmul.f32 %v6652, %v3425
      %v8165 = vmul.f32 %v6651, %v3429
      %v8166 = vmul.f32 %v6650, %v3433
      %v8167 = vmul.f32 %v6649, %v3437
      %v8168 = vmul.f32 %v6648, %v3441
      %v8169 = vmul.f32 %v6647, %v3445
      %v8170 = vmul.f32 %v6678, %v3449
      %v8171 = vmul.f32 %v6677, %v3453
      %v8172 = vmul.f32 %v6676, %v3457
      %v8173 = vpack.c.bf16 %v8142, %v8141
      %v8174 = vpack.c.bf16 %v8144, %v8143
      %v8175 = vpack.c.bf16 %v8146, %v8145
      %v8176 = vpack.c.bf16 %v8148, %v8147
      %v8177 = vpack.c.bf16 %v8150, %v8149
      %v8178 = vpack.c.bf16 %v8152, %v8151
      %v8179 = vpack.c.bf16 %v8154, %v8153
      %v8180 = vpack.c.bf16 %v8156, %v8155
      %v8181 = vpack.c.bf16 %v8158, %v8157
      %v8182 = vpack.c.bf16 %v8160, %v8159
      %v8183 = vpack.c.bf16 %v8162, %v8161
      %v8184 = vpack.c.bf16 %v8164, %v8163
      %v8185 = vpack.c.bf16 %v8166, %v8165
      %v8186 = vpack.c.bf16 %v8168, %v8167
      %v8187 = vpack.c.bf16 %v8170, %v8169
      %v8188 = vpack.c.bf16 %v8172, %v8171
      %v8189 = vld [vmem:[%s6 + $0x100] sm:$0xf]
      %v8190 = vld [vmem:[%s6 + $0x104] sm:$0xf]
      %v8191 = vld [vmem:[%s6 + $0x108] sm:$0xf]
      %v8192 = vld [vmem:[%s6 + $0x10c] sm:$0xf]
      %v8193 = vld [vmem:[%s6 + $0x110] sm:$0xf]
      %v8194 = vld [vmem:[%s6 + $0x114] sm:$0xf]
      %v8195 = vld [vmem:[%s6 + $0x118] sm:$0xf]
      %v8196 = vld [vmem:[%s6 + $0x11c] sm:$0xf]
      %v8205 = vunpack.c.l.b16 %v8189
      %v8206 = vunpack.c.l.b16 %v8190
      %v8207 = vunpack.c.l.b16 %v8191
      %v8208 = vunpack.c.l.b16 %v8192
      %v8209 = vunpack.c.l.b16 %v8193
      %v8210 = vunpack.c.l.b16 %v8194
      %v8211 = vunpack.c.l.b16 %v8195
      %v8212 = vunpack.c.l.b16 %v8196
      %v8213 = vpack.c.b16 %v8206, %v8205
      %v8214 = vpack.c.b16 %v8208, %v8207
      %v8215 = vpack.c.b16 %v8210, %v8209
      %v8216 = vpack.c.b16 %v8212, %v8211
      %v8222 = vsel %vm865, %v8173, 0
      %v8225 = vsel %vm865, %v8174, 0
      %v8228 = vsel %vm865, %v8175, 0
      %v8231 = vsel %vm865, %v8176, 0
      %v8234 = vsel %vm865, %v8177, 0
      %v8237 = vsel %vm865, %v8178, 0
      %v8240 = vsel %vm865, %v8179, 0
      %v8243 = vsel %vm865, %v8180, 0
      %v8246 = vsel %vm865, %v8181, 0
      %v8249 = vsel %vm865, %v8182, 0
      %v8252 = vsel %vm865, %v8183, 0
      %v8255 = vsel %vm865, %v8184, 0
      %v8258 = vsel %vm865, %v8185, 0
      %v8261 = vsel %vm865, %v8186, 0
      %v8264 = vsel %vm865, %v8187, 0
      %v8267 = vsel %vm865, %v8188, 0
      %8269 = vmatpush.bf16.msra.mxu0 0
      %8270 = vmatpush.bf16.msra.mxu0 0
      %8271 = vmatpush.bf16.msra.mxu0 0
      %8272 = vmatpush.bf16.msra.mxu0 0
      %8273 = vmatpush.bf16.msra.mxu0 %v8216
      %8274 = vmatpush.bf16.msra.mxu0 %v8215
      %8275 = vmatpush.bf16.msra.mxu0 %v8214
      %8276 = vmatpush.bf16.msra.mxu0 %v8213
      %8277 = vmatmul.bf16.gmra.mxu0 %v8222
      %v8278 = vpop.f32.mrf.mxu0
      %v8279 = vadd.f32 0.0, %v8278
      %v8280 = vpop.f32.mrf.mxu0
      %v8281 = vadd.f32 0.0, %v8280
      %8282 = vmatmul.bf16.gmra.mxu0 %v8225
      %v8283 = vpop.f32.mrf.mxu0
      %v8284 = vadd.f32 0.0, %v8283
      %v8285 = vpop.f32.mrf.mxu0
      %v8286 = vadd.f32 0.0, %v8285
      %8287 = vmatmul.bf16.gmra.mxu0 %v8228
      %v8288 = vpop.f32.mrf.mxu0
      %v8289 = vadd.f32 0.0, %v8288
      %v8290 = vpop.f32.mrf.mxu0
      %v8291 = vadd.f32 0.0, %v8290
      %8292 = vmatmul.bf16.gmra.mxu0 %v8231
      %v8293 = vpop.f32.mrf.mxu0
      %v8294 = vadd.f32 0.0, %v8293
      %v8295 = vpop.f32.mrf.mxu0
      %v8296 = vadd.f32 0.0, %v8295
      %8297 = vmatmul.bf16.gmra.mxu0 %v8234
      %v8298 = vpop.f32.mrf.mxu0
      %v8299 = vadd.f32 0.0, %v8298
      %v8300 = vpop.f32.mrf.mxu0
      %v8301 = vadd.f32 0.0, %v8300
      %8302 = vmatmul.bf16.gmra.mxu0 %v8237
      %v8303 = vpop.f32.mrf.mxu0
      %v8304 = vadd.f32 0.0, %v8303
      %v8305 = vpop.f32.mrf.mxu0
      %v8306 = vadd.f32 0.0, %v8305
      %8307 = vmatmul.bf16.gmra.mxu0 %v8240
      %v8308 = vpop.f32.mrf.mxu0
      %v8309 = vadd.f32 0.0, %v8308
      %v8310 = vpop.f32.mrf.mxu0
      %v8311 = vadd.f32 0.0, %v8310
      %8312 = vmatmul.bf16.gmra.mxu0 %v8243
      %v8313 = vpop.f32.mrf.mxu0
      %v8314 = vadd.f32 0.0, %v8313
      %v8315 = vpop.f32.mrf.mxu0
      %v8316 = vadd.f32 0.0, %v8315
      %8317 = vmatmul.bf16.gmra.mxu0 %v8246
      %v8318 = vpop.f32.mrf.mxu0
      %v8319 = vadd.f32 0.0, %v8318
      %v8320 = vpop.f32.mrf.mxu0
      %v8321 = vadd.f32 0.0, %v8320
      %8322 = vmatmul.bf16.gmra.mxu0 %v8249
      %v8323 = vpop.f32.mrf.mxu0
      %v8324 = vadd.f32 0.0, %v8323
      %v8325 = vpop.f32.mrf.mxu0
      %v8326 = vadd.f32 0.0, %v8325
      %8327 = vmatmul.bf16.gmra.mxu0 %v8252
      %v8328 = vpop.f32.mrf.mxu0
      %v8329 = vadd.f32 0.0, %v8328
      %v8330 = vpop.f32.mrf.mxu0
      %v8331 = vadd.f32 0.0, %v8330
      %8332 = vmatmul.bf16.gmra.mxu0 %v8255
      %v8333 = vpop.f32.mrf.mxu0
      %v8334 = vadd.f32 0.0, %v8333
      %v8335 = vpop.f32.mrf.mxu0
      %v8336 = vadd.f32 0.0, %v8335
      %8337 = vmatmul.bf16.gmra.mxu0 %v8258
      %v8338 = vpop.f32.mrf.mxu0
      %v8339 = vadd.f32 0.0, %v8338
      %v8340 = vpop.f32.mrf.mxu0
      %v8341 = vadd.f32 0.0, %v8340
      %8342 = vmatmul.bf16.gmra.mxu0 %v8261
      %v8343 = vpop.f32.mrf.mxu0
      %v8344 = vadd.f32 0.0, %v8343
      %v8345 = vpop.f32.mrf.mxu0
      %v8346 = vadd.f32 0.0, %v8345
      %8347 = vmatmul.bf16.gmra.mxu0 %v8264
      %v8348 = vpop.f32.mrf.mxu0
      %v8349 = vadd.f32 0.0, %v8348
      %v8350 = vpop.f32.mrf.mxu0
      %v8351 = vadd.f32 0.0, %v8350
      %8352 = vmatmul.bf16.gmra.mxu0 %v8267
      %v8353 = vpop.f32.mrf.mxu0
      %v8354 = vadd.f32 0.0, %v8353
      %v8355 = vpop.f32.mrf.mxu0
      %v8356 = vadd.f32 0.0, %v8355
      %8357 = vdwg.mxu0
      %v8358 = vadd.f32 %v8109, %v8279
      %v8359 = vadd.f32 %v8110, %v8281
      %v8360 = vadd.f32 %v8111, %v8284
      %v8361 = vadd.f32 %v8112, %v8286
      %v8362 = vadd.f32 %v8113, %v8289
      %v8363 = vadd.f32 %v8114, %v8291
      %v8364 = vadd.f32 %v8115, %v8294
      %v8365 = vadd.f32 %v8116, %v8296
      %v8366 = vadd.f32 %v8117, %v8299
      %v8367 = vadd.f32 %v8118, %v8301
      %v8368 = vadd.f32 %v8119, %v8304
      %v8369 = vadd.f32 %v8120, %v8306
      %v8370 = vadd.f32 %v8121, %v8309
      %v8371 = vadd.f32 %v8122, %v8311
      %v8372 = vadd.f32 %v8123, %v8314
      %v8373 = vadd.f32 %v8124, %v8316
      %v8374 = vadd.f32 %v8125, %v8319
      %v8375 = vadd.f32 %v8126, %v8321
      %v8376 = vadd.f32 %v8127, %v8324
      %v8377 = vadd.f32 %v8128, %v8326
      %v8378 = vadd.f32 %v8129, %v8329
      %v8379 = vadd.f32 %v8130, %v8331
      %v8380 = vadd.f32 %v8131, %v8334
      %v8381 = vadd.f32 %v8132, %v8336
      %v8382 = vadd.f32 %v8133, %v8339
      %v8383 = vadd.f32 %v8134, %v8341
      %v8384 = vadd.f32 %v8135, %v8344
      %v8385 = vadd.f32 %v8136, %v8346
      %v8386 = vadd.f32 %v8137, %v8349
      %v8387 = vadd.f32 %v8138, %v8351
      %v8388 = vadd.f32 %v8139, %v8354
      %v8389 = vadd.f32 %v8140, %v8356
      %v8390 = vld [vmem:[%s7] sm:$0x1]
      %v8392 = vperm.slane %v8390, 0
      %v8394 = vadd.f32 %v8358, %v8392
      %v8395 = vadd.f32 %v8359, %v8392
      %v8396 = vadd.f32 %v8360, %v8392
      %v8397 = vadd.f32 %v8361, %v8392
      %v8398 = vadd.f32 %v8362, %v8392
      %v8399 = vadd.f32 %v8363, %v8392
      %v8400 = vadd.f32 %v8364, %v8392
      %v8401 = vadd.f32 %v8365, %v8392
      %v8402 = vadd.f32 %v8366, %v8392
      %v8403 = vadd.f32 %v8367, %v8392
      %v8404 = vadd.f32 %v8368, %v8392
      %v8405 = vadd.f32 %v8369, %v8392
      %v8406 = vadd.f32 %v8370, %v8392
      %v8407 = vadd.f32 %v8371, %v8392
      %v8408 = vadd.f32 %v8372, %v8392
      %v8409 = vadd.f32 %v8373, %v8392
      %v8410 = vadd.f32 %v8374, %v8392
      %v8411 = vadd.f32 %v8375, %v8392
      %v8412 = vadd.f32 %v8376, %v8392
      %v8413 = vadd.f32 %v8377, %v8392
      %v8414 = vadd.f32 %v8378, %v8392
      %v8415 = vadd.f32 %v8379, %v8392
      %v8416 = vadd.f32 %v8380, %v8392
      %v8417 = vadd.f32 %v8381, %v8392
      %v8418 = vadd.f32 %v8382, %v8392
      %v8419 = vadd.f32 %v8383, %v8392
      %v8420 = vadd.f32 %v8384, %v8392
      %v8421 = vadd.f32 %v8385, %v8392
      %v8422 = vadd.f32 %v8386, %v8392
      %v8423 = vadd.f32 %v8387, %v8392
      %v8424 = vadd.f32 %v8388, %v8392
      %v8425 = vadd.f32 %v8389, %v8392
      %8426 = vst [vmem:[%s307] sm:$0xff] %v8394
      %8427 = vst [vmem:[%s307 + $0x8] sm:$0xff] %v8395
      %8428 = vst [vmem:[%s307 + $0x10] sm:$0xff] %v8396
      %8429 = vst [vmem:[%s307 + $0x18] sm:$0xff] %v8397
      %8430 = vst [vmem:[%s307 + $0x20] sm:$0xff] %v8398
      %8431 = vst [vmem:[%s307 + $0x28] sm:$0xff] %v8399
      %8432 = vst [vmem:[%s307 + $0x30] sm:$0xff] %v8400
      %8433 = vst [vmem:[%s307 + $0x38] sm:$0xff] %v8401
      %8434 = vst [vmem:[%s307 + $0x40] sm:$0xff] %v8402
      %8435 = vst [vmem:[%s307 + $0x48] sm:$0xff] %v8403
      %8436 = vst [vmem:[%s307 + $0x50] sm:$0xff] %v8404
      %8437 = vst [vmem:[%s307 + $0x58] sm:$0xff] %v8405
      %8438 = vst [vmem:[%s307 + $0x60] sm:$0xff] %v8406
      %8439 = vst [vmem:[%s307 + $0x68] sm:$0xff] %v8407
      %8440 = vst [vmem:[%s307 + $0x70] sm:$0xff] %v8408
      %8441 = vst [vmem:[%s307 + $0x78] sm:$0xff] %v8409
      %8442 = vst [vmem:[%s307 + $0x80] sm:$0xff] %v8410
      %8443 = vst [vmem:[%s307 + $0x88] sm:$0xff] %v8411
      %8444 = vst [vmem:[%s307 + $0x90] sm:$0xff] %v8412
      %8445 = vst [vmem:[%s307 + $0x98] sm:$0xff] %v8413
      %8446 = vst [vmem:[%s307 + $0xa0] sm:$0xff] %v8414
      %8447 = vst [vmem:[%s307 + $0xa8] sm:$0xff] %v8415
      %8448 = vst [vmem:[%s307 + $0xb0] sm:$0xff] %v8416
      %8449 = vst [vmem:[%s307 + $0xb8] sm:$0xff] %v8417
      %8450 = vst [vmem:[%s307 + $0xc0] sm:$0xff] %v8418
      %8451 = vst [vmem:[%s307 + $0xc8] sm:$0xff] %v8419
      %8452 = vst [vmem:[%s307 + $0xd0] sm:$0xff] %v8420
      %8453 = vst [vmem:[%s307 + $0xd8] sm:$0xff] %v8421
      %8454 = vst [vmem:[%s307 + $0xe0] sm:$0xff] %v8422
      %8455 = vst [vmem:[%s307 + $0xe8] sm:$0xff] %v8423
      %8456 = vst [vmem:[%s307 + $0xf0] sm:$0xff] %v8424
      %8457 = vst [vmem:[%s307 + $0xf8] sm:$0xff] %v8425
      %s8458 = smul.u32 32, %s19
      %p8459 = scmp.lt.s32.totalorder %s8458, 63
      %s8460 = scalar_select %p8459, %s8458, 63
      %s8461 = smul.addr %s8460, 8
      %s8462 = scalar_lea.vmem %s8, %s8461
      // Predicated region
      $region53: #{cgnet_forward.1} parent=51 // pred_check
        %p8463 = pneg %p210
      $region54: #{cgnet_forward.1} parent=51 // pred_check_branch
        %8465 = sbr.rel (%p8463) target = $region56
      $region55: #{cgnet_forward.1} parent=51 // pred_region
        %s8466 = smul.u32 32, %s19
      $region56: #{cgnet_forward.1} parent=51 // pred_fallthru
        _
    $region52: #{cgnet_forward.1} parent=5 // pred_fallthru
      _
    %p8467 = scmp.le.s32.totalorder 2, %s14
    // Predicated region
    $region57: #{cgnet_forward.1} parent=5 // pred_check
      %p8468 = pneg %p8467
    $region58: #{cgnet_forward.1} parent=5 // pred_check_branch
      %8470 = sbr.rel (%p8468) target = $region60
    $region59: #{cgnet_forward.1} parent=5 // pred_region
      %s8471 = ssub.s32 %s14, 2
      // Predicated region
      $region61: #{cgnet_forward.1} parent=59 // pred_check
        %p8472 = pneg %p216
      $region62: #{cgnet_forward.1} parent=59 // pred_check_branch
        %8474 = sbr.rel (%p8472) target = $region64
      $region63: #{cgnet_forward.1} parent=59 // pred_region
        %s8475 = smul.u32 32, %s20
        %p8476 = scmp.lt.s32.totalorder %s8475, 63
        %s8477 = scalar_select %p8476, %s8475, 63
        %s8478 = smul.addr %s8477, 8
        %s8479 = scalar_lea.vmem %s8, %s8478
      $region64: #{cgnet_forward.1} parent=59 // pred_fallthru
        _
    $region60: #{cgnet_forward.1} parent=5 // pred_fallthru
      _
  $region6: #{cgnet_forward.1} parent=0 // loop_footer
    %s18 = sadd.s32 1, %s14
  $region7: #{cgnet_forward.1} parent=0 // loop_footer_branch
    %13 = sbr.rel target = $region3
  $region8: #{cgnet_forward.1} parent=0 // loop_exit
    _

</llo_original>
